<compile_context>
chip_gen: v6e
topology: v6e:2x2x1
jax: 0.10.0
libtpu: 0.0.40
codegen_flags: <defaults>
</compile_context>

<pallas_src>
import jax
import jax.numpy as jnp
from jax.experimental import pallas as pl
from jax.experimental.pallas import tpu as pltpu

EPS = 1e-5
SLOPE = 0.2


# ----------------------------------------------------------------------------
# In-kernel helpers
# ----------------------------------------------------------------------------
def _reflect_pad_store(xp_ref, x):
    """Store x:(N,H,W,C) into xp_ref:(N,H+2,W+2,C) with a 1-px reflect halo
    (PyTorch padding_mode='reflect').  All sources are register values, so
    the 9 stores are independent (no RAW read-back of xp_ref)."""
    _, H, W, _ = x.shape
    xp_ref[:, 1:H + 1, 1:W + 1, :] = x                               # interior
    xp_ref[:, 0:1, 1:W + 1, :] = x[:, 1:2]                           # top row
    xp_ref[:, H + 1:H + 2, 1:W + 1, :] = x[:, H - 2:H - 1]           # bottom
    xp_ref[:, 1:H + 1, 0:1, :] = x[:, :, 1:2]                        # left col
    xp_ref[:, 1:H + 1, W + 1:W + 2, :] = x[:, :, W - 2:W - 1]        # right col
    xp_ref[:, 0:1, 0:1, :] = x[:, 1:2, 1:2]                          # corners
    xp_ref[:, 0:1, W + 1:W + 2, :] = x[:, 1:2, W - 2:W - 1]
    xp_ref[:, H + 1:H + 2, 0:1, :] = x[:, H - 2:H - 1, 1:2]
    xp_ref[:, H + 1:H + 2, W + 1:W + 2, :] = x[:, H - 2:H - 1, W - 2:W - 1]


def _conv3x3(xp_ref, w_ref, M):
    """3x3 / stride-1 conv on the padded bf16 scratch as 9 accumulated
    sub-matmuls.  xp_ref: (N, H+2, W+2, Cin) bf16, w_ref: (9, Cin, Cout) bf16.
    Returns (M, Cout) f32 with M = N*H*W."""
    _, Hp, Wp, Cin = xp_ref.shape
    H, W = Hp - 2, Wp - 2
    Cout = w_ref.shape[-1]
    acc = jnp.zeros((M, Cout), jnp.float32)
    for t in range(9):                       # static unroll over the 9 taps
        kh, kw = divmod(t, 3)
        patch = xp_ref[:, kh:kh + H, kw:kw + W, :].reshape(M, Cin)   # bf16
        acc = acc + jnp.dot(patch, w_ref[t],
                            preferred_element_type=jnp.float32)
    return acc


def _bn_lrelu(c, gamma, beta):
    """Training-mode BatchNorm (batch stats, biased variance, two-pass) +
    LeakyReLU(0.2).  c: (M, C) f32; gamma/beta: (1, C) f32."""
    m = jnp.mean(c, axis=0, keepdims=True)
    v = jnp.mean((c - m) * (c - m), axis=0, keepdims=True)
    scale = gamma * jax.lax.rsqrt(v + EPS)
    y = (c - m) * scale + beta
    return jnp.where(y >= 0, y, SLOPE * y)


# ----------------------------------------------------------------------------
# Fused kernel
# ----------------------------------------------------------------------------
def _make_fused_kernel(N, H, W, C0, C1, C2):
    Ho, Wo = H // 2, W // 2
    M1 = N * H * W
    M2 = N * Ho * Wo

    def kernel(d_ref, w1_ref, w2_ref, g1_ref, b1_ref, g2_ref, b2_ref,
               o_ref, xp1_ref, xp2_ref):
        # ---- conv1: reflect pad (bf16) + 9 accumulated tap matmuls ----------
        _reflect_pad_store(xp1_ref, d_ref[...])                 # bf16 -> bf16
        c1 = _conv3x3(xp1_ref, w1_ref, M1)                      # (M1, C1) f32

        # ---- BN1 (fused batch stats) + LeakyReLU -----------------------------
        y1 = _bn_lrelu(c1, g1_ref[...], b1_ref[...])

        # ---- 2x2 max-pool (channel / lane axis untouched) --------------------
        t = y1.reshape(N * Ho, 2, Wo, 2, C1)
        p1 = jnp.max(jnp.max(t, axis=3), axis=1).reshape(N, Ho, Wo, C1)

        # ---- conv2: cast once to bf16, reflect pad, 9 tap matmuls ------------
        _reflect_pad_store(xp2_ref, p1.astype(jnp.bfloat16))
        c2 = _conv3x3(xp2_ref, w2_ref, M2)                      # (M2, C2) f32

        # ---- BN2 + LeakyReLU + store (output tiny: 4 KiB) --------------------
        y2 = _bn_lrelu(c2, g2_ref[...], b2_ref[...])
        o_ref[...] = y2.reshape(N, Ho, Wo, C2)

    return kernel


# ----------------------------------------------------------------------------
# ChangeNet forward (NCHW in, NCHW out, like PyTorch)
# ----------------------------------------------------------------------------
def changenet_forward(params, t0, t1):
    N, C0, H, W = t0.shape
    C1 = params["w1"].shape[-1]          # 64
    C2 = params["w2"].shape[-1]          # 32
    assert H % 2 == 0 and W % 2 == 0 and H >= 4 and W >= 4
    Ho, Wo = H // 2, W // 2

    # ONE fused producer op: f32 diff -> NHWC -> bf16.  Replaces the two
    # separate full-size f32 transposes and halves the kernel input bytes.
    d = jnp.transpose(t0.astype(jnp.float32) - t1.astype(jnp.float32),
                      (0, 2, 3, 1)).astype(jnp.bfloat16)

    # Weights as (9, Cin, Cout) bf16: clean leading-axis slice per tap
    # (avoids sublane-misaligned K-slicing, esp. conv2 offsets t*64).
    w1 = params["w1"].reshape(9, C0, C1).astype(jnp.bfloat16)
    w2 = params["w2"].reshape(9, C1, C2).astype(jnp.bfloat16)

    out = pl.pallas_call(
        _make_fused_kernel(N, H, W, C0, C1, C2),
        out_shape=jax.ShapeDtypeStruct((N, Ho, Wo, C2), jnp.float32),
        scratch_shapes=[
            pltpu.VMEM((N, H + 2, W + 2, C0), jnp.bfloat16),     # padded diff
            pltpu.VMEM((N, Ho + 2, Wo + 2, C1), jnp.bfloat16),   # padded pool1
        ],
    )(d, w1, w2, params["g1"], params["b1"], params["g2"], params["b2"])

    return jnp.transpose(out, (0, 3, 1, 2))                      # NHWC -> NCHW


# ----------------------------------------------------------------------------
# Pure-JAX f32 reference (for correctness check)
# ----------------------------------------------------------------------------
def reference_forward(params, t0, t1):
    x = jnp.transpose(t0 - t1, (0, 2, 3, 1)).astype(jnp.float32)

    def conv(x, w):
        xp = jnp.pad(x, ((0, 0), (1, 1), (1, 1), (0, 0)), mode="reflect")
        return jax.lax.conv_general_dilated(
            xp, w, window_strides=(1, 1), padding="VALID",
            dimension_numbers=("NHWC", "HWIO", "NHWC"))

    def bn_lr(x, g, b):
        m = jnp.mean(x, axis=(0, 1, 2), keepdims=True)
        v = jnp.mean((x - m) ** 2, axis=(0, 1, 2), keepdims=True)
        y = (x - m) * jax.lax.rsqrt(v + EPS) * g.reshape(1, 1, 1, -1) \
            + b.reshape(1, 1, 1, -1)
        return jnp.where(y >= 0, y, SLOPE * y)

    def pool(x):
        N, H, W, C = x.shape
        return jnp.max(x.reshape(N, H // 2, 2, W // 2, 2, C), axis=(2, 4))

    y = pool(bn_lr(conv(x, params["w1"]), params["g1"], params["b1"]))
    y = bn_lr(conv(y, params["w2"]), params["g2"], params["b2"])
    return jnp.transpose(y, (0, 3, 1, 2))


if __name__ == "__main__":
    key = jax.random.PRNGKey(0)
    k1, k2, k3, k4 = jax.random.split(key, 4)

    N, CIN, H, W = 2, 128, 8, 8   # conv1 of the module fixes CIN = 128

    params = {
        "w1": jax.random.normal(k1, (3, 3, 128, 64), jnp.float32) * 0.05,  # HWIO
        "g1": jnp.ones((1, 64), jnp.float32),    # BatchNorm2d default gamma=1
        "b1": jnp.zeros((1, 64), jnp.float32),   # BatchNorm2d default beta=0
        "w2": jax.random.normal(k2, (3, 3, 64, 32), jnp.float32) * 0.05,
        "g2": jnp.ones((1, 32), jnp.float32),
        "b2": jnp.zeros((1, 32), jnp.float32),
    }

    t0 = jax.random.normal(k3, (N, CIN, H, W), jnp.float32)
    t1 = jax.random.normal(k4, (N, CIN, H, W), jnp.float32)

    fwd = jax.jit(changenet_forward)
    out = jax.block_until_ready(fwd(params, t0, t1))

    ref = jax.block_until_ready(reference_forward(params, t0, t1))
    assert out.shape == (N, 32, H // 2, W // 2), out.shape
    if not jnp.allclose(out, ref, atol=5e-2, rtol=5e-2):
        err = float(jnp.max(jnp.abs(out - ref)))
        raise SystemExit(f"MISMATCH vs pure-JAX reference (max abs err {err:.4f})")

    print("KERNEL_OK")
</pallas_src>

<mosaic_0001>
module attributes {stable_mosaic.version = 11 : i64} {
  func.func @kernel(%arg0: memref<2x8x8x128xbf16, #tpu.memory_space<vmem>>, %arg1: memref<9x128x64xbf16, #tpu.memory_space<vmem>>, %arg2: memref<9x64x32xbf16, #tpu.memory_space<vmem>>, %arg3: memref<1x64xf32, #tpu.memory_space<vmem>>, %arg4: memref<1x64xf32, #tpu.memory_space<vmem>>, %arg5: memref<1x32xf32, #tpu.memory_space<vmem>>, %arg6: memref<1x32xf32, #tpu.memory_space<vmem>>, %arg7: memref<2x4x4x32xf32, #tpu.memory_space<vmem>>, %arg8: memref<2x10x10x128xbf16, #tpu.memory_space<vmem>>, %arg9: memref<2x6x6x64xbf16, #tpu.memory_space<vmem>>) attributes {dimension_semantics = [], scalar_prefetch = 0 : i64, scratch_operands = 2 : i64, tpu.core_type = #tpu.core_type<tc>} {
    %c0 = arith.constant 0 : index
    %c0_0 = arith.constant 0 : index
    %c0_1 = arith.constant 0 : index
    %c0_2 = arith.constant 0 : index
    %0 = vector.load %arg0[%c0, %c0_0, %c0_1, %c0_2] : memref<2x8x8x128xbf16, #tpu.memory_space<vmem>>, vector<2x8x8x128xbf16>
    %c0_3 = arith.constant 0 : index
    %c1 = arith.constant 1 : index
    %c1_4 = arith.constant 1 : index
    %c0_5 = arith.constant 0 : index
    %1 = vector.load %arg8[%c0_3, %c1, %c1_4, %c0_5] : memref<2x10x10x128xbf16, #tpu.memory_space<vmem>>, vector<2x8x8x128xbf16>
    tpu.vector_store %arg8[%c0_3, %c1, %c1_4, %c0_5], %0 {strides = array<i32>} : memref<2x10x10x128xbf16, #tpu.memory_space<vmem>>, vector<2x8x8x128xbf16>,
    %2 = vector.extract_strided_slice %0 {offsets = [0, 1, 0, 0], sizes = [2, 1, 8, 128], strides = [1, 1, 1, 1]} : vector<2x8x8x128xbf16> to vector<2x1x8x128xbf16>
    %c0_6 = arith.constant 0 : index
    %c0_7 = arith.constant 0 : index
    %c1_8 = arith.constant 1 : index
    %c0_9 = arith.constant 0 : index
    %3 = vector.load %arg8[%c0_6, %c0_7, %c1_8, %c0_9] : memref<2x10x10x128xbf16, #tpu.memory_space<vmem>>, vector<2x1x8x128xbf16>
    tpu.vector_store %arg8[%c0_6, %c0_7, %c1_8, %c0_9], %2 {strides = array<i32>} : memref<2x10x10x128xbf16, #tpu.memory_space<vmem>>, vector<2x1x8x128xbf16>,
    %4 = vector.extract_strided_slice %0 {offsets = [0, 6, 0, 0], sizes = [2, 1, 8, 128], strides = [1, 1, 1, 1]} : vector<2x8x8x128xbf16> to vector<2x1x8x128xbf16>
    %c0_10 = arith.constant 0 : index
    %c9 = arith.constant 9 : index
    %c1_11 = arith.constant 1 : index
    %c0_12 = arith.constant 0 : index
    %5 = vector.load %arg8[%c0_10, %c9, %c1_11, %c0_12] : memref<2x10x10x128xbf16, #tpu.memory_space<vmem>>, vector<2x1x8x128xbf16>
    tpu.vector_store %arg8[%c0_10, %c9, %c1_11, %c0_12], %4 {strides = array<i32>} : memref<2x10x10x128xbf16, #tpu.memory_space<vmem>>, vector<2x1x8x128xbf16>,
    %6 = vector.extract_strided_slice %0 {offsets = [0, 0, 1, 0], sizes = [2, 8, 1, 128], strides = [1, 1, 1, 1]} : vector<2x8x8x128xbf16> to vector<2x8x1x128xbf16>
    %c0_13 = arith.constant 0 : index
    %c1_14 = arith.constant 1 : index
    %c0_15 = arith.constant 0 : index
    %c0_16 = arith.constant 0 : index
    %7 = vector.load %arg8[%c0_13, %c1_14, %c0_15, %c0_16] : memref<2x10x10x128xbf16, #tpu.memory_space<vmem>>, vector<2x8x1x128xbf16>
    tpu.vector_store %arg8[%c0_13, %c1_14, %c0_15, %c0_16], %6 {strides = array<i32>} : memref<2x10x10x128xbf16, #tpu.memory_space<vmem>>, vector<2x8x1x128xbf16>,
    %8 = vector.extract_strided_slice %0 {offsets = [0, 0, 6, 0], sizes = [2, 8, 1, 128], strides = [1, 1, 1, 1]} : vector<2x8x8x128xbf16> to vector<2x8x1x128xbf16>
    %c0_17 = arith.constant 0 : index
    %c1_18 = arith.constant 1 : index
    %c9_19 = arith.constant 9 : index
    %c0_20 = arith.constant 0 : index
    %9 = vector.load %arg8[%c0_17, %c1_18, %c9_19, %c0_20] : memref<2x10x10x128xbf16, #tpu.memory_space<vmem>>, vector<2x8x1x128xbf16>
    tpu.vector_store %arg8[%c0_17, %c1_18, %c9_19, %c0_20], %8 {strides = array<i32>} : memref<2x10x10x128xbf16, #tpu.memory_space<vmem>>, vector<2x8x1x128xbf16>,
    %10 = vector.extract_strided_slice %0 {offsets = [0, 1, 1, 0], sizes = [2, 1, 1, 128], strides = [1, 1, 1, 1]} : vector<2x8x8x128xbf16> to vector<2x1x1x128xbf16>
    %c0_21 = arith.constant 0 : index
    %c0_22 = arith.constant 0 : index
    %c0_23 = arith.constant 0 : index
    %c0_24 = arith.constant 0 : index
    %11 = vector.load %arg8[%c0_21, %c0_22, %c0_23, %c0_24] : memref<2x10x10x128xbf16, #tpu.memory_space<vmem>>, vector<2x1x1x128xbf16>
    tpu.vector_store %arg8[%c0_21, %c0_22, %c0_23, %c0_24], %10 {strides = array<i32>} : memref<2x10x10x128xbf16, #tpu.memory_space<vmem>>, vector<2x1x1x128xbf16>,
    %12 = vector.extract_strided_slice %0 {offsets = [0, 1, 6, 0], sizes = [2, 1, 1, 128], strides = [1, 1, 1, 1]} : vector<2x8x8x128xbf16> to vector<2x1x1x128xbf16>
    %c0_25 = arith.constant 0 : index
    %c0_26 = arith.constant 0 : index
    %c9_27 = arith.constant 9 : index
    %c0_28 = arith.constant 0 : index
    %13 = vector.load %arg8[%c0_25, %c0_26, %c9_27, %c0_28] : memref<2x10x10x128xbf16, #tpu.memory_space<vmem>>, vector<2x1x1x128xbf16>
    tpu.vector_store %arg8[%c0_25, %c0_26, %c9_27, %c0_28], %12 {strides = array<i32>} : memref<2x10x10x128xbf16, #tpu.memory_space<vmem>>, vector<2x1x1x128xbf16>,
    %14 = vector.extract_strided_slice %0 {offsets = [0, 6, 1, 0], sizes = [2, 1, 1, 128], strides = [1, 1, 1, 1]} : vector<2x8x8x128xbf16> to vector<2x1x1x128xbf16>
    %c0_29 = arith.constant 0 : index
    %c9_30 = arith.constant 9 : index
    %c0_31 = arith.constant 0 : index
    %c0_32 = arith.constant 0 : index
    %15 = vector.load %arg8[%c0_29, %c9_30, %c0_31, %c0_32] : memref<2x10x10x128xbf16, #tpu.memory_space<vmem>>, vector<2x1x1x128xbf16>
    tpu.vector_store %arg8[%c0_29, %c9_30, %c0_31, %c0_32], %14 {strides = array<i32>} : memref<2x10x10x128xbf16, #tpu.memory_space<vmem>>, vector<2x1x1x128xbf16>,
    %16 = vector.extract_strided_slice %0 {offsets = [0, 6, 6, 0], sizes = [2, 1, 1, 128], strides = [1, 1, 1, 1]} : vector<2x8x8x128xbf16> to vector<2x1x1x128xbf16>
    %c0_33 = arith.constant 0 : index
    %c9_34 = arith.constant 9 : index
    %c9_35 = arith.constant 9 : index
    %c0_36 = arith.constant 0 : index
    %17 = vector.load %arg8[%c0_33, %c9_34, %c9_35, %c0_36] : memref<2x10x10x128xbf16, #tpu.memory_space<vmem>>, vector<2x1x1x128xbf16>
    tpu.vector_store %arg8[%c0_33, %c9_34, %c9_35, %c0_36], %16 {strides = array<i32>} : memref<2x10x10x128xbf16, #tpu.memory_space<vmem>>, vector<2x1x1x128xbf16>,
    %cst = arith.constant 0.000000e+00 : f32
    %18 = vector.broadcast %cst : f32 to vector<128x64xf32>
    %c0_37 = arith.constant 0 : index
    %c0_38 = arith.constant 0 : index
    %c0_39 = arith.constant 0 : index
    %c0_40 = arith.constant 0 : index
    %19 = vector.load %arg8[%c0_37, %c0_38, %c0_39, %c0_40] : memref<2x10x10x128xbf16, #tpu.memory_space<vmem>>, vector<2x8x8x128xbf16>
    %20 = vector.shape_cast %19 : vector<2x8x8x128xbf16> to vector<128x128xbf16>
    %c0_41 = arith.constant 0 : index
    %c0_42 = arith.constant 0 : index
    %c0_43 = arith.constant 0 : index
    %21 = vector.load %arg1[%c0_41, %c0_42, %c0_43] : memref<9x128x64xbf16, #tpu.memory_space<vmem>>, vector<1x128x64xbf16>
    %22 = vector.shape_cast %21 : vector<1x128x64xbf16> to vector<128x64xbf16>
    %cst_44 = arith.constant dense<0.000000e+00> : vector<128x64xf32>
    %23 = tpu.matmul %20, %22, %cst_44 {dimension_numbers = #tpu.dot_dimension_numbers<[1], [0], [0], [1], [0, 0, 1, 1], [], []>} : vector<128x128xbf16>, vector<128x64xbf16>, vector<128x64xf32> -> vector<128x64xf32>
    %24 = arith.addf %18, %23 : vector<128x64xf32>
    %c0_45 = arith.constant 0 : index
    %c0_46 = arith.constant 0 : index
    %c1_47 = arith.constant 1 : index
    %c0_48 = arith.constant 0 : index
    %25 = vector.load %arg8[%c0_45, %c0_46, %c1_47, %c0_48] : memref<2x10x10x128xbf16, #tpu.memory_space<vmem>>, vector<2x8x8x128xbf16>
    %26 = vector.shape_cast %25 : vector<2x8x8x128xbf16> to vector<128x128xbf16>
    %c1_49 = arith.constant 1 : index
    %c0_50 = arith.constant 0 : index
    %c0_51 = arith.constant 0 : index
    %27 = vector.load %arg1[%c1_49, %c0_50, %c0_51] : memref<9x128x64xbf16, #tpu.memory_space<vmem>>, vector<1x128x64xbf16>
    %28 = vector.shape_cast %27 : vector<1x128x64xbf16> to vector<128x64xbf16>
    %cst_52 = arith.constant dense<0.000000e+00> : vector<128x64xf32>
    %29 = tpu.matmul %26, %28, %cst_52 {dimension_numbers = #tpu.dot_dimension_numbers<[1], [0], [0], [1], [0, 0, 1, 1], [], []>} : vector<128x128xbf16>, vector<128x64xbf16>, vector<128x64xf32> -> vector<128x64xf32>
    %30 = arith.addf %24, %29 : vector<128x64xf32>
    %c0_53 = arith.constant 0 : index
    %c0_54 = arith.constant 0 : index
    %c2 = arith.constant 2 : index
    %c0_55 = arith.constant 0 : index
    %31 = vector.load %arg8[%c0_53, %c0_54, %c2, %c0_55] : memref<2x10x10x128xbf16, #tpu.memory_space<vmem>>, vector<2x8x8x128xbf16>
    %32 = vector.shape_cast %31 : vector<2x8x8x128xbf16> to vector<128x128xbf16>
    %c2_56 = arith.constant 2 : index
    %c0_57 = arith.constant 0 : index
    %c0_58 = arith.constant 0 : index
    %33 = vector.load %arg1[%c2_56, %c0_57, %c0_58] : memref<9x128x64xbf16, #tpu.memory_space<vmem>>, vector<1x128x64xbf16>
    %34 = vector.shape_cast %33 : vector<1x128x64xbf16> to vector<128x64xbf16>
    %cst_59 = arith.constant dense<0.000000e+00> : vector<128x64xf32>
    %35 = tpu.matmul %32, %34, %cst_59 {dimension_numbers = #tpu.dot_dimension_numbers<[1], [0], [0], [1], [0, 0, 1, 1], [], []>} : vector<128x128xbf16>, vector<128x64xbf16>, vector<128x64xf32> -> vector<128x64xf32>
    %36 = arith.addf %30, %35 : vector<128x64xf32>
    %c0_60 = arith.constant 0 : index
    %c1_61 = arith.constant 1 : index
    %c0_62 = arith.constant 0 : index
    %c0_63 = arith.constant 0 : index
    %37 = vector.load %arg8[%c0_60, %c1_61, %c0_62, %c0_63] : memref<2x10x10x128xbf16, #tpu.memory_space<vmem>>, vector<2x8x8x128xbf16>
    %38 = vector.shape_cast %37 : vector<2x8x8x128xbf16> to vector<128x128xbf16>
    %c3 = arith.constant 3 : index
    %c0_64 = arith.constant 0 : index
    %c0_65 = arith.constant 0 : index
    %39 = vector.load %arg1[%c3, %c0_64, %c0_65] : memref<9x128x64xbf16, #tpu.memory_space<vmem>>, vector<1x128x64xbf16>
    %40 = vector.shape_cast %39 : vector<1x128x64xbf16> to vector<128x64xbf16>
    %cst_66 = arith.constant dense<0.000000e+00> : vector<128x64xf32>
    %41 = tpu.matmul %38, %40, %cst_66 {dimension_numbers = #tpu.dot_dimension_numbers<[1], [0], [0], [1], [0, 0, 1, 1], [], []>} : vector<128x128xbf16>, vector<128x64xbf16>, vector<128x64xf32> -> vector<128x64xf32>
    %42 = arith.addf %36, %41 : vector<128x64xf32>
    %c0_67 = arith.constant 0 : index
    %c1_68 = arith.constant 1 : index
    %c1_69 = arith.constant 1 : index
    %c0_70 = arith.constant 0 : index
    %43 = vector.load %arg8[%c0_67, %c1_68, %c1_69, %c0_70] : memref<2x10x10x128xbf16, #tpu.memory_space<vmem>>, vector<2x8x8x128xbf16>
    %44 = vector.shape_cast %43 : vector<2x8x8x128xbf16> to vector<128x128xbf16>
    %c4 = arith.constant 4 : index
    %c0_71 = arith.constant 0 : index
    %c0_72 = arith.constant 0 : index
    %45 = vector.load %arg1[%c4, %c0_71, %c0_72] : memref<9x128x64xbf16, #tpu.memory_space<vmem>>, vector<1x128x64xbf16>
    %46 = vector.shape_cast %45 : vector<1x128x64xbf16> to vector<128x64xbf16>
    %cst_73 = arith.constant dense<0.000000e+00> : vector<128x64xf32>
    %47 = tpu.matmul %44, %46, %cst_73 {dimension_numbers = #tpu.dot_dimension_numbers<[1], [0], [0], [1], [0, 0, 1, 1], [], []>} : vector<128x128xbf16>, vector<128x64xbf16>, vector<128x64xf32> -> vector<128x64xf32>
    %48 = arith.addf %42, %47 : vector<128x64xf32>
    %c0_74 = arith.constant 0 : index
    %c1_75 = arith.constant 1 : index
    %c2_76 = arith.constant 2 : index
    %c0_77 = arith.constant 0 : index
    %49 = vector.load %arg8[%c0_74, %c1_75, %c2_76, %c0_77] : memref<2x10x10x128xbf16, #tpu.memory_space<vmem>>, vector<2x8x8x128xbf16>
    %50 = vector.shape_cast %49 : vector<2x8x8x128xbf16> to vector<128x128xbf16>
    %c5 = arith.constant 5 : index
    %c0_78 = arith.constant 0 : index
    %c0_79 = arith.constant 0 : index
    %51 = vector.load %arg1[%c5, %c0_78, %c0_79] : memref<9x128x64xbf16, #tpu.memory_space<vmem>>, vector<1x128x64xbf16>
    %52 = vector.shape_cast %51 : vector<1x128x64xbf16> to vector<128x64xbf16>
    %cst_80 = arith.constant dense<0.000000e+00> : vector<128x64xf32>
    %53 = tpu.matmul %50, %52, %cst_80 {dimension_numbers = #tpu.dot_dimension_numbers<[1], [0], [0], [1], [0, 0, 1, 1], [], []>} : vector<128x128xbf16>, vector<128x64xbf16>, vector<128x64xf32> -> vector<128x64xf32>
    %54 = arith.addf %48, %53 : vector<128x64xf32>
    %c0_81 = arith.constant 0 : index
    %c2_82 = arith.constant 2 : index
    %c0_83 = arith.constant 0 : index
    %c0_84 = arith.constant 0 : index
    %55 = vector.load %arg8[%c0_81, %c2_82, %c0_83, %c0_84] : memref<2x10x10x128xbf16, #tpu.memory_space<vmem>>, vector<2x8x8x128xbf16>
    %56 = vector.shape_cast %55 : vector<2x8x8x128xbf16> to vector<128x128xbf16>
    %c6 = arith.constant 6 : index
    %c0_85 = arith.constant 0 : index
    %c0_86 = arith.constant 0 : index
    %57 = vector.load %arg1[%c6, %c0_85, %c0_86] : memref<9x128x64xbf16, #tpu.memory_space<vmem>>, vector<1x128x64xbf16>
    %58 = vector.shape_cast %57 : vector<1x128x64xbf16> to vector<128x64xbf16>
    %cst_87 = arith.constant dense<0.000000e+00> : vector<128x64xf32>
    %59 = tpu.matmul %56, %58, %cst_87 {dimension_numbers = #tpu.dot_dimension_numbers<[1], [0], [0], [1], [0, 0, 1, 1], [], []>} : vector<128x128xbf16>, vector<128x64xbf16>, vector<128x64xf32> -> vector<128x64xf32>
    %60 = arith.addf %54, %59 : vector<128x64xf32>
    %c0_88 = arith.constant 0 : index
    %c2_89 = arith.constant 2 : index
    %c1_90 = arith.constant 1 : index
    %c0_91 = arith.constant 0 : index
    %61 = vector.load %arg8[%c0_88, %c2_89, %c1_90, %c0_91] : memref<2x10x10x128xbf16, #tpu.memory_space<vmem>>, vector<2x8x8x128xbf16>
    %62 = vector.shape_cast %61 : vector<2x8x8x128xbf16> to vector<128x128xbf16>
    %c7 = arith.constant 7 : index
    %c0_92 = arith.constant 0 : index
    %c0_93 = arith.constant 0 : index
    %63 = vector.load %arg1[%c7, %c0_92, %c0_93] : memref<9x128x64xbf16, #tpu.memory_space<vmem>>, vector<1x128x64xbf16>
    %64 = vector.shape_cast %63 : vector<1x128x64xbf16> to vector<128x64xbf16>
    %cst_94 = arith.constant dense<0.000000e+00> : vector<128x64xf32>
    %65 = tpu.matmul %62, %64, %cst_94 {dimension_numbers = #tpu.dot_dimension_numbers<[1], [0], [0], [1], [0, 0, 1, 1], [], []>} : vector<128x128xbf16>, vector<128x64xbf16>, vector<128x64xf32> -> vector<128x64xf32>
    %66 = arith.addf %60, %65 : vector<128x64xf32>
    %c0_95 = arith.constant 0 : index
    %c2_96 = arith.constant 2 : index
    %c2_97 = arith.constant 2 : index
    %c0_98 = arith.constant 0 : index
    %67 = vector.load %arg8[%c0_95, %c2_96, %c2_97, %c0_98] : memref<2x10x10x128xbf16, #tpu.memory_space<vmem>>, vector<2x8x8x128xbf16>
    %68 = vector.shape_cast %67 : vector<2x8x8x128xbf16> to vector<128x128xbf16>
    %c8 = arith.constant 8 : index
    %c0_99 = arith.constant 0 : index
    %c0_100 = arith.constant 0 : index
    %69 = vector.load %arg1[%c8, %c0_99, %c0_100] : memref<9x128x64xbf16, #tpu.memory_space<vmem>>, vector<1x128x64xbf16>
    %70 = vector.shape_cast %69 : vector<1x128x64xbf16> to vector<128x64xbf16>
    %cst_101 = arith.constant dense<0.000000e+00> : vector<128x64xf32>
    %71 = tpu.matmul %68, %70, %cst_101 {dimension_numbers = #tpu.dot_dimension_numbers<[1], [0], [0], [1], [0, 0, 1, 1], [], []>} : vector<128x128xbf16>, vector<128x64xbf16>, vector<128x64xf32> -> vector<128x64xf32>
    %72 = arith.addf %66, %71 : vector<128x64xf32>
    %c0_102 = arith.constant 0 : index
    %c0_103 = arith.constant 0 : index
    %73 = vector.load %arg3[%c0_102, %c0_103] : memref<1x64xf32, #tpu.memory_space<vmem>>, vector<1x64xf32>
    %c0_104 = arith.constant 0 : index
    %c0_105 = arith.constant 0 : index
    %74 = vector.load %arg4[%c0_104, %c0_105] : memref<1x64xf32, #tpu.memory_space<vmem>>, vector<1x64xf32>
    %cst_106 = arith.constant dense<0.000000e+00> : vector<64xf32>
    %75 = vector.multi_reduction <add>, %72, %cst_106 [0] : vector<128x64xf32> to vector<64xf32>
    %76 = vector.shape_cast %75 : vector<64xf32> to vector<1x64xf32>
    %cst_107 = arith.constant 1.280000e+02 : f32
    %77 = vector.broadcast %cst_107 : f32 to vector<1x64xf32>
    %78 = arith.divf %76, %77 : vector<1x64xf32>
    %79 = vector.broadcast %78 : vector<1x64xf32> to vector<128x64xf32>
    %80 = arith.subf %72, %79 : vector<128x64xf32>
    %81 = vector.broadcast %78 : vector<1x64xf32> to vector<128x64xf32>
    %82 = arith.subf %72, %81 : vector<128x64xf32>
    %83 = arith.mulf %80, %82 : vector<128x64xf32>
    %cst_108 = arith.constant dense<0.000000e+00> : vector<64xf32>
    %84 = vector.multi_reduction <add>, %83, %cst_108 [0] : vector<128x64xf32> to vector<64xf32>
    %85 = vector.shape_cast %84 : vector<64xf32> to vector<1x64xf32>
    %cst_109 = arith.constant 1.280000e+02 : f32
    %86 = vector.broadcast %cst_109 : f32 to vector<1x64xf32>
    %87 = arith.divf %85, %86 : vector<1x64xf32>
    %cst_110 = arith.constant 9.99999974E-6 : f32
    %88 = vector.broadcast %cst_110 : f32 to vector<1x64xf32>
    %89 = arith.addf %87, %88 : vector<1x64xf32>
    %90 = math.rsqrt %89 : vector<1x64xf32>
    %91 = arith.mulf %73, %90 : vector<1x64xf32>
    %92 = vector.broadcast %78 : vector<1x64xf32> to vector<128x64xf32>
    %93 = arith.subf %72, %92 : vector<128x64xf32>
    %94 = vector.broadcast %91 : vector<1x64xf32> to vector<128x64xf32>
    %95 = arith.mulf %93, %94 : vector<128x64xf32>
    %96 = vector.broadcast %74 : vector<1x64xf32> to vector<128x64xf32>
    %97 = arith.addf %95, %96 : vector<128x64xf32>
    %cst_111 = arith.constant 0.000000e+00 : f32
    %98 = vector.broadcast %cst_111 : f32 to vector<128x64xf32>
    %99 = arith.cmpf oge, %97, %98 : vector<128x64xf32>
    %cst_112 = arith.constant 2.000000e-01 : f32
    %100 = vector.broadcast %cst_112 : f32 to vector<128x64xf32>
    %101 = arith.mulf %100, %97 : vector<128x64xf32>
    %102 = arith.select %99, %97, %101 : vector<128x64xi1>, vector<128x64xf32>
    %103 = vector.shape_cast %102 : vector<128x64xf32> to vector<8x2x4x2x64xf32>
    %cst_113 = arith.constant dense<0xFF800000> : vector<8x2x4x64xf32>
    %104 = vector.multi_reduction <maximumf>, %103, %cst_113 [3] : vector<8x2x4x2x64xf32> to vector<8x2x4x64xf32>
    %cst_114 = arith.constant dense<0xFF800000> : vector<8x4x64xf32>
    %105 = vector.multi_reduction <maximumf>, %104, %cst_114 [1] : vector<8x2x4x64xf32> to vector<8x4x64xf32>
    %106 = vector.shape_cast %105 : vector<8x4x64xf32> to vector<2x4x4x64xf32>
    %107 = arith.truncf %106 : vector<2x4x4x64xf32> to vector<2x4x4x64xbf16>
    %c0_115 = arith.constant 0 : index
    %c1_116 = arith.constant 1 : index
    %c1_117 = arith.constant 1 : index
    %c0_118 = arith.constant 0 : index
    %108 = vector.load %arg9[%c0_115, %c1_116, %c1_117, %c0_118] : memref<2x6x6x64xbf16, #tpu.memory_space<vmem>>, vector<2x4x4x64xbf16>
    tpu.vector_store %arg9[%c0_115, %c1_116, %c1_117, %c0_118], %107 {strides = array<i32>} : memref<2x6x6x64xbf16, #tpu.memory_space<vmem>>, vector<2x4x4x64xbf16>,
    %109 = vector.extract_strided_slice %107 {offsets = [0, 1, 0, 0], sizes = [2, 1, 4, 64], strides = [1, 1, 1, 1]} : vector<2x4x4x64xbf16> to vector<2x1x4x64xbf16>
    %c0_119 = arith.constant 0 : index
    %c0_120 = arith.constant 0 : index
    %c1_121 = arith.constant 1 : index
    %c0_122 = arith.constant 0 : index
    %110 = vector.load %arg9[%c0_119, %c0_120, %c1_121, %c0_122] : memref<2x6x6x64xbf16, #tpu.memory_space<vmem>>, vector<2x1x4x64xbf16>
    tpu.vector_store %arg9[%c0_119, %c0_120, %c1_121, %c0_122], %109 {strides = array<i32>} : memref<2x6x6x64xbf16, #tpu.memory_space<vmem>>, vector<2x1x4x64xbf16>,
    %111 = vector.extract_strided_slice %107 {offsets = [0, 2, 0, 0], sizes = [2, 1, 4, 64], strides = [1, 1, 1, 1]} : vector<2x4x4x64xbf16> to vector<2x1x4x64xbf16>
    %c0_123 = arith.constant 0 : index
    %c5_124 = arith.constant 5 : index
    %c1_125 = arith.constant 1 : index
    %c0_126 = arith.constant 0 : index
    %112 = vector.load %arg9[%c0_123, %c5_124, %c1_125, %c0_126] : memref<2x6x6x64xbf16, #tpu.memory_space<vmem>>, vector<2x1x4x64xbf16>
    tpu.vector_store %arg9[%c0_123, %c5_124, %c1_125, %c0_126], %111 {strides = array<i32>} : memref<2x6x6x64xbf16, #tpu.memory_space<vmem>>, vector<2x1x4x64xbf16>,
    %113 = vector.extract_strided_slice %107 {offsets = [0, 0, 1, 0], sizes = [2, 4, 1, 64], strides = [1, 1, 1, 1]} : vector<2x4x4x64xbf16> to vector<2x4x1x64xbf16>
    %c0_127 = arith.constant 0 : index
    %c1_128 = arith.constant 1 : index
    %c0_129 = arith.constant 0 : index
    %c0_130 = arith.constant 0 : index
    %114 = vector.load %arg9[%c0_127, %c1_128, %c0_129, %c0_130] : memref<2x6x6x64xbf16, #tpu.memory_space<vmem>>, vector<2x4x1x64xbf16>
    tpu.vector_store %arg9[%c0_127, %c1_128, %c0_129, %c0_130], %113 {strides = array<i32>} : memref<2x6x6x64xbf16, #tpu.memory_space<vmem>>, vector<2x4x1x64xbf16>,
    %115 = vector.extract_strided_slice %107 {offsets = [0, 0, 2, 0], sizes = [2, 4, 1, 64], strides = [1, 1, 1, 1]} : vector<2x4x4x64xbf16> to vector<2x4x1x64xbf16>
    %c0_131 = arith.constant 0 : index
    %c1_132 = arith.constant 1 : index
    %c5_133 = arith.constant 5 : index
    %c0_134 = arith.constant 0 : index
    %116 = vector.load %arg9[%c0_131, %c1_132, %c5_133, %c0_134] : memref<2x6x6x64xbf16, #tpu.memory_space<vmem>>, vector<2x4x1x64xbf16>
    tpu.vector_store %arg9[%c0_131, %c1_132, %c5_133, %c0_134], %115 {strides = array<i32>} : memref<2x6x6x64xbf16, #tpu.memory_space<vmem>>, vector<2x4x1x64xbf16>,
    %117 = vector.extract_strided_slice %107 {offsets = [0, 1, 1, 0], sizes = [2, 1, 1, 64], strides = [1, 1, 1, 1]} : vector<2x4x4x64xbf16> to vector<2x1x1x64xbf16>
    %c0_135 = arith.constant 0 : index
    %c0_136 = arith.constant 0 : index
    %c0_137 = arith.constant 0 : index
    %c0_138 = arith.constant 0 : index
    %118 = vector.load %arg9[%c0_135, %c0_136, %c0_137, %c0_138] : memref<2x6x6x64xbf16, #tpu.memory_space<vmem>>, vector<2x1x1x64xbf16>
    tpu.vector_store %arg9[%c0_135, %c0_136, %c0_137, %c0_138], %117 {strides = array<i32>} : memref<2x6x6x64xbf16, #tpu.memory_space<vmem>>, vector<2x1x1x64xbf16>,
    %119 = vector.extract_strided_slice %107 {offsets = [0, 1, 2, 0], sizes = [2, 1, 1, 64], strides = [1, 1, 1, 1]} : vector<2x4x4x64xbf16> to vector<2x1x1x64xbf16>
    %c0_139 = arith.constant 0 : index
    %c0_140 = arith.constant 0 : index
    %c5_141 = arith.constant 5 : index
    %c0_142 = arith.constant 0 : index
    %120 = vector.load %arg9[%c0_139, %c0_140, %c5_141, %c0_142] : memref<2x6x6x64xbf16, #tpu.memory_space<vmem>>, vector<2x1x1x64xbf16>
    tpu.vector_store %arg9[%c0_139, %c0_140, %c5_141, %c0_142], %119 {strides = array<i32>} : memref<2x6x6x64xbf16, #tpu.memory_space<vmem>>, vector<2x1x1x64xbf16>,
    %121 = vector.extract_strided_slice %107 {offsets = [0, 2, 1, 0], sizes = [2, 1, 1, 64], strides = [1, 1, 1, 1]} : vector<2x4x4x64xbf16> to vector<2x1x1x64xbf16>
    %c0_143 = arith.constant 0 : index
    %c5_144 = arith.constant 5 : index
    %c0_145 = arith.constant 0 : index
    %c0_146 = arith.constant 0 : index
    %122 = vector.load %arg9[%c0_143, %c5_144, %c0_145, %c0_146] : memref<2x6x6x64xbf16, #tpu.memory_space<vmem>>, vector<2x1x1x64xbf16>
    tpu.vector_store %arg9[%c0_143, %c5_144, %c0_145, %c0_146], %121 {strides = array<i32>} : memref<2x6x6x64xbf16, #tpu.memory_space<vmem>>, vector<2x1x1x64xbf16>,
    %123 = vector.extract_strided_slice %107 {offsets = [0, 2, 2, 0], sizes = [2, 1, 1, 64], strides = [1, 1, 1, 1]} : vector<2x4x4x64xbf16> to vector<2x1x1x64xbf16>
    %c0_147 = arith.constant 0 : index
    %c5_148 = arith.constant 5 : index
    %c5_149 = arith.constant 5 : index
    %c0_150 = arith.constant 0 : index
    %124 = vector.load %arg9[%c0_147, %c5_148, %c5_149, %c0_150] : memref<2x6x6x64xbf16, #tpu.memory_space<vmem>>, vector<2x1x1x64xbf16>
    tpu.vector_store %arg9[%c0_147, %c5_148, %c5_149, %c0_150], %123 {strides = array<i32>} : memref<2x6x6x64xbf16, #tpu.memory_space<vmem>>, vector<2x1x1x64xbf16>,
    %cst_151 = arith.constant 0.000000e+00 : f32
    %125 = vector.broadcast %cst_151 : f32 to vector<32x32xf32>
    %c0_152 = arith.constant 0 : index
    %c0_153 = arith.constant 0 : index
    %c0_154 = arith.constant 0 : index
    %c0_155 = arith.constant 0 : index
    %126 = vector.load %arg9[%c0_152, %c0_153, %c0_154, %c0_155] : memref<2x6x6x64xbf16, #tpu.memory_space<vmem>>, vector<2x4x4x64xbf16>
    %127 = vector.shape_cast %126 : vector<2x4x4x64xbf16> to vector<32x64xbf16>
    %c0_156 = arith.constant 0 : index
    %c0_157 = arith.constant 0 : index
    %c0_158 = arith.constant 0 : index
    %128 = vector.load %arg2[%c0_156, %c0_157, %c0_158] : memref<9x64x32xbf16, #tpu.memory_space<vmem>>, vector<1x64x32xbf16>
    %129 = vector.shape_cast %128 : vector<1x64x32xbf16> to vector<64x32xbf16>
    %cst_159 = arith.constant dense<0.000000e+00> : vector<32x32xf32>
    %130 = tpu.matmul %127, %129, %cst_159 {dimension_numbers = #tpu.dot_dimension_numbers<[1], [0], [0], [1], [0, 0, 1, 1], [], []>} : vector<32x64xbf16>, vector<64x32xbf16>, vector<32x32xf32> -> vector<32x32xf32>
    %131 = arith.addf %125, %130 : vector<32x32xf32>
    %c0_160 = arith.constant 0 : index
    %c0_161 = arith.constant 0 : index
    %c1_162 = arith.constant 1 : index
    %c0_163 = arith.constant 0 : index
    %132 = vector.load %arg9[%c0_160, %c0_161, %c1_162, %c0_163] : memref<2x6x6x64xbf16, #tpu.memory_space<vmem>>, vector<2x4x4x64xbf16>
    %133 = vector.shape_cast %132 : vector<2x4x4x64xbf16> to vector<32x64xbf16>
    %c1_164 = arith.constant 1 : index
    %c0_165 = arith.constant 0 : index
    %c0_166 = arith.constant 0 : index
    %134 = vector.load %arg2[%c1_164, %c0_165, %c0_166] : memref<9x64x32xbf16, #tpu.memory_space<vmem>>, vector<1x64x32xbf16>
    %135 = vector.shape_cast %134 : vector<1x64x32xbf16> to vector<64x32xbf16>
    %cst_167 = arith.constant dense<0.000000e+00> : vector<32x32xf32>
    %136 = tpu.matmul %133, %135, %cst_167 {dimension_numbers = #tpu.dot_dimension_numbers<[1], [0], [0], [1], [0, 0, 1, 1], [], []>} : vector<32x64xbf16>, vector<64x32xbf16>, vector<32x32xf32> -> vector<32x32xf32>
    %137 = arith.addf %131, %136 : vector<32x32xf32>
    %c0_168 = arith.constant 0 : index
    %c0_169 = arith.constant 0 : index
    %c2_170 = arith.constant 2 : index
    %c0_171 = arith.constant 0 : index
    %138 = vector.load %arg9[%c0_168, %c0_169, %c2_170, %c0_171] : memref<2x6x6x64xbf16, #tpu.memory_space<vmem>>, vector<2x4x4x64xbf16>
    %139 = vector.shape_cast %138 : vector<2x4x4x64xbf16> to vector<32x64xbf16>
    %c2_172 = arith.constant 2 : index
    %c0_173 = arith.constant 0 : index
    %c0_174 = arith.constant 0 : index
    %140 = vector.load %arg2[%c2_172, %c0_173, %c0_174] : memref<9x64x32xbf16, #tpu.memory_space<vmem>>, vector<1x64x32xbf16>
    %141 = vector.shape_cast %140 : vector<1x64x32xbf16> to vector<64x32xbf16>
    %cst_175 = arith.constant dense<0.000000e+00> : vector<32x32xf32>
    %142 = tpu.matmul %139, %141, %cst_175 {dimension_numbers = #tpu.dot_dimension_numbers<[1], [0], [0], [1], [0, 0, 1, 1], [], []>} : vector<32x64xbf16>, vector<64x32xbf16>, vector<32x32xf32> -> vector<32x32xf32>
    %143 = arith.addf %137, %142 : vector<32x32xf32>
    %c0_176 = arith.constant 0 : index
    %c1_177 = arith.constant 1 : index
    %c0_178 = arith.constant 0 : index
    %c0_179 = arith.constant 0 : index
    %144 = vector.load %arg9[%c0_176, %c1_177, %c0_178, %c0_179] : memref<2x6x6x64xbf16, #tpu.memory_space<vmem>>, vector<2x4x4x64xbf16>
    %145 = vector.shape_cast %144 : vector<2x4x4x64xbf16> to vector<32x64xbf16>
    %c3_180 = arith.constant 3 : index
    %c0_181 = arith.constant 0 : index
    %c0_182 = arith.constant 0 : index
    %146 = vector.load %arg2[%c3_180, %c0_181, %c0_182] : memref<9x64x32xbf16, #tpu.memory_space<vmem>>, vector<1x64x32xbf16>
    %147 = vector.shape_cast %146 : vector<1x64x32xbf16> to vector<64x32xbf16>
    %cst_183 = arith.constant dense<0.000000e+00> : vector<32x32xf32>
    %148 = tpu.matmul %145, %147, %cst_183 {dimension_numbers = #tpu.dot_dimension_numbers<[1], [0], [0], [1], [0, 0, 1, 1], [], []>} : vector<32x64xbf16>, vector<64x32xbf16>, vector<32x32xf32> -> vector<32x32xf32>
    %149 = arith.addf %143, %148 : vector<32x32xf32>
    %c0_184 = arith.constant 0 : index
    %c1_185 = arith.constant 1 : index
    %c1_186 = arith.constant 1 : index
    %c0_187 = arith.constant 0 : index
    %150 = vector.load %arg9[%c0_184, %c1_185, %c1_186, %c0_187] : memref<2x6x6x64xbf16, #tpu.memory_space<vmem>>, vector<2x4x4x64xbf16>
    %151 = vector.shape_cast %150 : vector<2x4x4x64xbf16> to vector<32x64xbf16>
    %c4_188 = arith.constant 4 : index
    %c0_189 = arith.constant 0 : index
    %c0_190 = arith.constant 0 : index
    %152 = vector.load %arg2[%c4_188, %c0_189, %c0_190] : memref<9x64x32xbf16, #tpu.memory_space<vmem>>, vector<1x64x32xbf16>
    %153 = vector.shape_cast %152 : vector<1x64x32xbf16> to vector<64x32xbf16>
    %cst_191 = arith.constant dense<0.000000e+00> : vector<32x32xf32>
    %154 = tpu.matmul %151, %153, %cst_191 {dimension_numbers = #tpu.dot_dimension_numbers<[1], [0], [0], [1], [0, 0, 1, 1], [], []>} : vector<32x64xbf16>, vector<64x32xbf16>, vector<32x32xf32> -> vector<32x32xf32>
    %155 = arith.addf %149, %154 : vector<32x32xf32>
    %c0_192 = arith.constant 0 : index
    %c1_193 = arith.constant 1 : index
    %c2_194 = arith.constant 2 : index
    %c0_195 = arith.constant 0 : index
    %156 = vector.load %arg9[%c0_192, %c1_193, %c2_194, %c0_195] : memref<2x6x6x64xbf16, #tpu.memory_space<vmem>>, vector<2x4x4x64xbf16>
    %157 = vector.shape_cast %156 : vector<2x4x4x64xbf16> to vector<32x64xbf16>
    %c5_196 = arith.constant 5 : index
    %c0_197 = arith.constant 0 : index
    %c0_198 = arith.constant 0 : index
    %158 = vector.load %arg2[%c5_196, %c0_197, %c0_198] : memref<9x64x32xbf16, #tpu.memory_space<vmem>>, vector<1x64x32xbf16>
    %159 = vector.shape_cast %158 : vector<1x64x32xbf16> to vector<64x32xbf16>
    %cst_199 = arith.constant dense<0.000000e+00> : vector<32x32xf32>
    %160 = tpu.matmul %157, %159, %cst_199 {dimension_numbers = #tpu.dot_dimension_numbers<[1], [0], [0], [1], [0, 0, 1, 1], [], []>} : vector<32x64xbf16>, vector<64x32xbf16>, vector<32x32xf32> -> vector<32x32xf32>
    %161 = arith.addf %155, %160 : vector<32x32xf32>
    %c0_200 = arith.constant 0 : index
    %c2_201 = arith.constant 2 : index
    %c0_202 = arith.constant 0 : index
    %c0_203 = arith.constant 0 : index
    %162 = vector.load %arg9[%c0_200, %c2_201, %c0_202, %c0_203] : memref<2x6x6x64xbf16, #tpu.memory_space<vmem>>, vector<2x4x4x64xbf16>
    %163 = vector.shape_cast %162 : vector<2x4x4x64xbf16> to vector<32x64xbf16>
    %c6_204 = arith.constant 6 : index
    %c0_205 = arith.constant 0 : index
    %c0_206 = arith.constant 0 : index
    %164 = vector.load %arg2[%c6_204, %c0_205, %c0_206] : memref<9x64x32xbf16, #tpu.memory_space<vmem>>, vector<1x64x32xbf16>
    %165 = vector.shape_cast %164 : vector<1x64x32xbf16> to vector<64x32xbf16>
    %cst_207 = arith.constant dense<0.000000e+00> : vector<32x32xf32>
    %166 = tpu.matmul %163, %165, %cst_207 {dimension_numbers = #tpu.dot_dimension_numbers<[1], [0], [0], [1], [0, 0, 1, 1], [], []>} : vector<32x64xbf16>, vector<64x32xbf16>, vector<32x32xf32> -> vector<32x32xf32>
    %167 = arith.addf %161, %166 : vector<32x32xf32>
    %c0_208 = arith.constant 0 : index
    %c2_209 = arith.constant 2 : index
    %c1_210 = arith.constant 1 : index
    %c0_211 = arith.constant 0 : index
    %168 = vector.load %arg9[%c0_208, %c2_209, %c1_210, %c0_211] : memref<2x6x6x64xbf16, #tpu.memory_space<vmem>>, vector<2x4x4x64xbf16>
    %169 = vector.shape_cast %168 : vector<2x4x4x64xbf16> to vector<32x64xbf16>
    %c7_212 = arith.constant 7 : index
    %c0_213 = arith.constant 0 : index
    %c0_214 = arith.constant 0 : index
    %170 = vector.load %arg2[%c7_212, %c0_213, %c0_214] : memref<9x64x32xbf16, #tpu.memory_space<vmem>>, vector<1x64x32xbf16>
    %171 = vector.shape_cast %170 : vector<1x64x32xbf16> to vector<64x32xbf16>
    %cst_215 = arith.constant dense<0.000000e+00> : vector<32x32xf32>
    %172 = tpu.matmul %169, %171, %cst_215 {dimension_numbers = #tpu.dot_dimension_numbers<[1], [0], [0], [1], [0, 0, 1, 1], [], []>} : vector<32x64xbf16>, vector<64x32xbf16>, vector<32x32xf32> -> vector<32x32xf32>
    %173 = arith.addf %167, %172 : vector<32x32xf32>
    %c0_216 = arith.constant 0 : index
    %c2_217 = arith.constant 2 : index
    %c2_218 = arith.constant 2 : index
    %c0_219 = arith.constant 0 : index
    %174 = vector.load %arg9[%c0_216, %c2_217, %c2_218, %c0_219] : memref<2x6x6x64xbf16, #tpu.memory_space<vmem>>, vector<2x4x4x64xbf16>
    %175 = vector.shape_cast %174 : vector<2x4x4x64xbf16> to vector<32x64xbf16>
    %c8_220 = arith.constant 8 : index
    %c0_221 = arith.constant 0 : index
    %c0_222 = arith.constant 0 : index
    %176 = vector.load %arg2[%c8_220, %c0_221, %c0_222] : memref<9x64x32xbf16, #tpu.memory_space<vmem>>, vector<1x64x32xbf16>
    %177 = vector.shape_cast %176 : vector<1x64x32xbf16> to vector<64x32xbf16>
    %cst_223 = arith.constant dense<0.000000e+00> : vector<32x32xf32>
    %178 = tpu.matmul %175, %177, %cst_223 {dimension_numbers = #tpu.dot_dimension_numbers<[1], [0], [0], [1], [0, 0, 1, 1], [], []>} : vector<32x64xbf16>, vector<64x32xbf16>, vector<32x32xf32> -> vector<32x32xf32>
    %179 = arith.addf %173, %178 : vector<32x32xf32>
    %c0_224 = arith.constant 0 : index
    %c0_225 = arith.constant 0 : index
    %180 = vector.load %arg5[%c0_224, %c0_225] : memref<1x32xf32, #tpu.memory_space<vmem>>, vector<1x32xf32>
    %c0_226 = arith.constant 0 : index
    %c0_227 = arith.constant 0 : index
    %181 = vector.load %arg6[%c0_226, %c0_227] : memref<1x32xf32, #tpu.memory_space<vmem>>, vector<1x32xf32>
    %cst_228 = arith.constant dense<0.000000e+00> : vector<32xf32>
    %182 = vector.multi_reduction <add>, %179, %cst_228 [0] : vector<32x32xf32> to vector<32xf32>
    %183 = vector.shape_cast %182 : vector<32xf32> to vector<1x32xf32>
    %cst_229 = arith.constant 3.200000e+01 : f32
    %184 = vector.broadcast %cst_229 : f32 to vector<1x32xf32>
    %185 = arith.divf %183, %184 : vector<1x32xf32>
    %186 = vector.broadcast %185 : vector<1x32xf32> to vector<32x32xf32>
    %187 = arith.subf %179, %186 : vector<32x32xf32>
    %188 = vector.broadcast %185 : vector<1x32xf32> to vector<32x32xf32>
    %189 = arith.subf %179, %188 : vector<32x32xf32>
    %190 = arith.mulf %187, %189 : vector<32x32xf32>
    %cst_230 = arith.constant dense<0.000000e+00> : vector<32xf32>
    %191 = vector.multi_reduction <add>, %190, %cst_230 [0] : vector<32x32xf32> to vector<32xf32>
    %192 = vector.shape_cast %191 : vector<32xf32> to vector<1x32xf32>
    %cst_231 = arith.constant 3.200000e+01 : f32
    %193 = vector.broadcast %cst_231 : f32 to vector<1x32xf32>
    %194 = arith.divf %192, %193 : vector<1x32xf32>
    %cst_232 = arith.constant 9.99999974E-6 : f32
    %195 = vector.broadcast %cst_232 : f32 to vector<1x32xf32>
    %196 = arith.addf %194, %195 : vector<1x32xf32>
    %197 = math.rsqrt %196 : vector<1x32xf32>
    %198 = arith.mulf %180, %197 : vector<1x32xf32>
    %199 = vector.broadcast %185 : vector<1x32xf32> to vector<32x32xf32>
    %200 = arith.subf %179, %199 : vector<32x32xf32>
    %201 = vector.broadcast %198 : vector<1x32xf32> to vector<32x32xf32>
    %202 = arith.mulf %200, %201 : vector<32x32xf32>
    %203 = vector.broadcast %181 : vector<1x32xf32> to vector<32x32xf32>
    %204 = arith.addf %202, %203 : vector<32x32xf32>
    %cst_233 = arith.constant 0.000000e+00 : f32
    %205 = vector.broadcast %cst_233 : f32 to vector<32x32xf32>
    %206 = arith.cmpf oge, %204, %205 : vector<32x32xf32>
    %cst_234 = arith.constant 2.000000e-01 : f32
    %207 = vector.broadcast %cst_234 : f32 to vector<32x32xf32>
    %208 = arith.mulf %207, %204 : vector<32x32xf32>
    %209 = arith.select %206, %204, %208 : vector<32x32xi1>, vector<32x32xf32>
    %210 = vector.shape_cast %209 : vector<32x32xf32> to vector<2x4x4x32xf32>
    %c0_235 = arith.constant 0 : index
    %c0_236 = arith.constant 0 : index
    %c0_237 = arith.constant 0 : index
    %c0_238 = arith.constant 0 : index
    %211 = vector.load %arg7[%c0_235, %c0_236, %c0_237, %c0_238] : memref<2x4x4x32xf32, #tpu.memory_space<vmem>>, vector<2x4x4x32xf32>
    tpu.vector_store %arg7[%c0_235, %c0_236, %c0_237, %c0_238], %210 {strides = array<i32>} : memref<2x4x4x32xf32, #tpu.memory_space<vmem>>, vector<2x4x4x32xf32>,
    return
  }
}

</mosaic_0001>

<llo_original>
// kernel: changenet_forward.1
$region0: #{changenet_forward.1}
  #allocation0 [shape = 'u32[]', space=smem, size = 0x4, offset = 0x4, fixed_abs, tag = 'smem constant byte address 0x4 - core index']
  #allocation1 [shape = 'u32[144,128]{1,0:T(1,128)}', space=vmem, size = 0x12000, scoped, tag = 'internal scratch']
  #allocation2 [shape = 'bf16[2,10,10,128]{3,2,1,0:T(8,128)(2,1)}', space=vmem, size = 0x14000, scoped, tag = 'scratch operand']
  #allocation3 [shape = 'bf16[2,6,6,64]{3,2,1,0:T(8,128)(2,1)}', space=vmem, size = 0x6000, scoped, tag = 'scratch operand']
  %s0 = inlined_call_operand.vmem [shape: bf16[2,8,8,128], index: 0, kind: input, shape index: {}]
  %s1 = inlined_call_operand.vmem [shape: bf16[9,128,64], index: 1, kind: input, shape index: {}]
  %s2 = inlined_call_operand.vmem [shape: bf16[9,64,32], index: 2, kind: input, shape index: {}]
  %s3 = inlined_call_operand.vmem [shape: f32[1,64], index: 3, kind: input, shape index: {}]
  %s4 = inlined_call_operand.vmem [shape: f32[1,64], index: 4, kind: input, shape index: {}]
  %s5 = inlined_call_operand.vmem [shape: f32[1,32], index: 5, kind: input, shape index: {}]
  %s6 = inlined_call_operand.vmem [shape: f32[1,32], index: 6, kind: input, shape index: {}]
  %s7 = inlined_call_operand.hbm [shape: f32[2,4,4,32], index: 7, kind: output, shape index: {}]
  %s8 = sld [smem:[#allocation0]]
  $region38: #{changenet_forward.1} parent=0
    _
  %s10 = ssub.s32 1, %s8
  %s11 = scalar_select 0, %s10, %s8
  $region1: #{changenet_forward.1} parent=0
    #allocation4 [shape = 'u8[16384]{0}', space=vmem, size = 0x4000, scoped, tag = 'output window, operand 0, single buffered']
    #allocation5 [shape = 's32[1]{0}', space=sflag, size = 0x4, scoped, tag = 'scoped memory for changenet_forward.1']
    %12 = vsyncpa [#allocation5], 0
    // Predicated region
    $region2: #{changenet_forward.1} parent=1 // pred_check
      _
    $region3: #{changenet_forward.1} parent=1 // pred_check_branch
      %14 = sbr.rel (0) target = $region5
    $region4: #{changenet_forward.1} parent=1 // pred_region
      _
    $region5: #{changenet_forward.1} parent=1 // pred_fallthru
      _
    // Predicated region
    $region6: #{changenet_forward.1} parent=1 // pred_check
      _
    $region7: #{changenet_forward.1} parent=1 // pred_check_branch
      %16 = sbr.rel (0) target = $region9
    $region8: #{changenet_forward.1} parent=1 // pred_region
      _
    $region9: #{changenet_forward.1} parent=1 // pred_fallthru
      _
    // Predicated region
    $region10: #{changenet_forward.1} parent=1 // pred_check
      _
    $region11: #{changenet_forward.1} parent=1 // pred_check_branch
      %18 = sbr.rel (0) target = $region13
    $region12: #{changenet_forward.1} parent=1 // pred_region
      _
    $region13: #{changenet_forward.1} parent=1 // pred_fallthru
      _
    // Predicated region
    $region14: #{changenet_forward.1} parent=1 // pred_check
      _
    $region15: #{changenet_forward.1} parent=1 // pred_check_branch
      %20 = sbr.rel (0) target = $region17
    $region16: #{changenet_forward.1} parent=1 // pred_region
      _
    $region17: #{changenet_forward.1} parent=1 // pred_fallthru
      _
    // Predicated region
    $region18: #{changenet_forward.1} parent=1 // pred_check
      _
    $region19: #{changenet_forward.1} parent=1 // pred_check_branch
      %22 = sbr.rel (0) target = $region21
    $region20: #{changenet_forward.1} parent=1 // pred_region
      _
    $region21: #{changenet_forward.1} parent=1 // pred_fallthru
      _
    // Predicated region
    $region22: #{changenet_forward.1} parent=1 // pred_check
      _
    $region23: #{changenet_forward.1} parent=1 // pred_check_branch
      %24 = sbr.rel (0) target = $region25
    $region24: #{changenet_forward.1} parent=1 // pred_region
      _
    $region25: #{changenet_forward.1} parent=1 // pred_fallthru
      _
    // Predicated region
    $region26: #{changenet_forward.1} parent=1 // pred_check
      _
    $region27: #{changenet_forward.1} parent=1 // pred_check_branch
      %26 = sbr.rel (0) target = $region29
    $region28: #{changenet_forward.1} parent=1 // pred_region
      _
    $region29: #{changenet_forward.1} parent=1 // pred_fallthru
      _
    %v28 = vld [vmem:[%s0] sm:$0xf]
    %v29 = vld [vmem:[%s0 + $0x4] sm:$0xf]
    %v30 = vld [vmem:[%s0 + $0x8] sm:$0xf]
    %v31 = vld [vmem:[%s0 + $0xc] sm:$0xf]
    %v32 = vld [vmem:[%s0 + $0x10] sm:$0xf]
    %v33 = vld [vmem:[%s0 + $0x14] sm:$0xf]
    %v34 = vld [vmem:[%s0 + $0x18] sm:$0xf]
    %v35 = vld [vmem:[%s0 + $0x1c] sm:$0xf]
    %v36 = vld [vmem:[%s0 + $0x20] sm:$0xf]
    %v37 = vld [vmem:[%s0 + $0x24] sm:$0xf]
    %v38 = vld [vmem:[%s0 + $0x28] sm:$0xf]
    %v39 = vld [vmem:[%s0 + $0x2c] sm:$0xf]
    %v40 = vld [vmem:[%s0 + $0x30] sm:$0xf]
    %v41 = vld [vmem:[%s0 + $0x34] sm:$0xf]
    %v42 = vld [vmem:[%s0 + $0x38] sm:$0xf]
    %v43 = vld [vmem:[%s0 + $0x3c] sm:$0xf]
    %v45 = vshrl.u32 %v28, 16
    %v47 = vrot.slane %v45, 7
    %v48 = vshll.u32 %v28, 16
    %v50 = vor.u32 %v47, %v48
    %v51 = vrot.slane %v47, 4
    %v53 = vshrl.u32 %v29, 16
    %v55 = vrot.slane %v53, 7
    %v56 = vshll.u32 %v29, 16
    %v58 = vor.u32 %v55, %v56
    %v59 = vrot.slane %v55, 4
    %v61 = vshrl.u32 %v30, 16
    %v63 = vrot.slane %v61, 7
    %v64 = vshll.u32 %v30, 16
    %v66 = vor.u32 %v63, %v64
    %v67 = vrot.slane %v63, 4
    %v69 = vshrl.u32 %v31, 16
    %v71 = vrot.slane %v69, 7
    %v72 = vshll.u32 %v31, 16
    %v74 = vor.u32 %v71, %v72
    %v75 = vrot.slane %v71, 4
    %v77 = vshrl.u32 %v32, 16
    %v79 = vrot.slane %v77, 7
    %v80 = vshll.u32 %v32, 16
    %v82 = vor.u32 %v79, %v80
    %v83 = vrot.slane %v79, 4
    %v85 = vshrl.u32 %v33, 16
    %v87 = vrot.slane %v85, 7
    %v88 = vshll.u32 %v33, 16
    %v90 = vor.u32 %v87, %v88
    %v91 = vrot.slane %v87, 4
    %v93 = vshrl.u32 %v34, 16
    %v95 = vrot.slane %v93, 7
    %v96 = vshll.u32 %v34, 16
    %v98 = vor.u32 %v95, %v96
    %v99 = vrot.slane %v95, 4
    %v101 = vshrl.u32 %v35, 16
    %v103 = vrot.slane %v101, 7
    %v104 = vshll.u32 %v35, 16
    %v106 = vor.u32 %v103, %v104
    %v107 = vrot.slane %v103, 4
    %v109 = vshrl.u32 %v36, 16
    %v111 = vrot.slane %v109, 7
    %v112 = vshll.u32 %v36, 16
    %v114 = vor.u32 %v111, %v112
    %v115 = vrot.slane %v111, 4
    %v117 = vshrl.u32 %v37, 16
    %v119 = vrot.slane %v117, 7
    %v120 = vshll.u32 %v37, 16
    %v122 = vor.u32 %v119, %v120
    %v123 = vrot.slane %v119, 4
    %v125 = vshrl.u32 %v38, 16
    %v127 = vrot.slane %v125, 7
    %v128 = vshll.u32 %v38, 16
    %v130 = vor.u32 %v127, %v128
    %v131 = vrot.slane %v127, 4
    %v133 = vshrl.u32 %v39, 16
    %v135 = vrot.slane %v133, 7
    %v136 = vshll.u32 %v39, 16
    %v138 = vor.u32 %v135, %v136
    %v139 = vrot.slane %v135, 4
    %v141 = vshrl.u32 %v40, 16
    %v143 = vrot.slane %v141, 7
    %v144 = vshll.u32 %v40, 16
    %v146 = vor.u32 %v143, %v144
    %v147 = vrot.slane %v143, 4
    %v149 = vshrl.u32 %v41, 16
    %v151 = vrot.slane %v149, 7
    %v152 = vshll.u32 %v41, 16
    %v154 = vor.u32 %v151, %v152
    %v155 = vrot.slane %v151, 4
    %v157 = vshrl.u32 %v42, 16
    %v159 = vrot.slane %v157, 7
    %v160 = vshll.u32 %v42, 16
    %v162 = vor.u32 %v159, %v160
    %v163 = vrot.slane %v159, 4
    %v165 = vshrl.u32 %v43, 16
    %v167 = vrot.slane %v165, 7
    %v168 = vshll.u32 %v43, 16
    %v170 = vor.u32 %v167, %v168
    %v171 = vrot.slane %v167, 4
    %s204 = scalar_lea.vmem [#allocation2], 8
    %vm205 = vcmask 1043456
    %vm206 = vsmask.f32 7938
    %vm207 = vmand %vm205, %vm206
    %v208 = vld [vmem:[%s204] sm:$0xf]
    %v209 = vsel %vm207, %v50, %v208
    %210 = vst [vmem:[%s204] sm:$0xf] %v209
    %vm211 = vcmask 1040384
    %vm212 = vsmask.f32 256
    %vm213 = vmand %vm211, %vm212
    %v214 = vld [vmem:[%s204 + $0x4] sm:$0x1]
    %v215 = vsel %vm213, %v51, %v214
    %216 = vst [vmem:[%s204 + $0x4] sm:$0x1] %v215
    %v217 = vld [vmem:[%s204 + $0x8] sm:$0xf]
    %v218 = vsel %vm207, %v58, %v217
    %219 = vst [vmem:[%s204 + $0x8] sm:$0xf] %v218
    %v220 = vld [vmem:[%s204 + $0xc] sm:$0x1]
    %v221 = vsel %vm213, %v59, %v220
    %222 = vst [vmem:[%s204 + $0xc] sm:$0x1] %v221
    %v223 = vld [vmem:[%s204 + $0x10] sm:$0xf]
    %v224 = vsel %vm207, %v66, %v223
    %225 = vst [vmem:[%s204 + $0x10] sm:$0xf] %v224
    %v226 = vld [vmem:[%s204 + $0x14] sm:$0x1]
    %v227 = vsel %vm213, %v67, %v226
    %228 = vst [vmem:[%s204 + $0x14] sm:$0x1] %v227
    %v229 = vld [vmem:[%s204 + $0x18] sm:$0xf]
    %v230 = vsel %vm207, %v74, %v229
    %231 = vst [vmem:[%s204 + $0x18] sm:$0xf] %v230
    %v232 = vld [vmem:[%s204 + $0x1c] sm:$0x1]
    %v233 = vsel %vm213, %v75, %v232
    %234 = vst [vmem:[%s204 + $0x1c] sm:$0x1] %v233
    %v235 = vld [vmem:[%s204 + $0x20] sm:$0xf]
    %v236 = vsel %vm207, %v82, %v235
    %237 = vst [vmem:[%s204 + $0x20] sm:$0xf] %v236
    %v238 = vld [vmem:[%s204 + $0x24] sm:$0x1]
    %v239 = vsel %vm213, %v83, %v238
    %240 = vst [vmem:[%s204 + $0x24] sm:$0x1] %v239
    %v241 = vld [vmem:[%s204 + $0x28] sm:$0xf]
    %v242 = vsel %vm207, %v90, %v241
    %243 = vst [vmem:[%s204 + $0x28] sm:$0xf] %v242
    %v244 = vld [vmem:[%s204 + $0x2c] sm:$0x1]
    %v245 = vsel %vm213, %v91, %v244
    %246 = vst [vmem:[%s204 + $0x2c] sm:$0x1] %v245
    %v247 = vld [vmem:[%s204 + $0x30] sm:$0xf]
    %v248 = vsel %vm207, %v98, %v247
    %249 = vst [vmem:[%s204 + $0x30] sm:$0xf] %v248
    %v250 = vld [vmem:[%s204 + $0x34] sm:$0x1]
    %v251 = vsel %vm213, %v99, %v250
    %252 = vst [vmem:[%s204 + $0x34] sm:$0x1] %v251
    %v253 = vld [vmem:[%s204 + $0x38] sm:$0xf]
    %v254 = vsel %vm207, %v106, %v253
    %255 = vst [vmem:[%s204 + $0x38] sm:$0xf] %v254
    %v256 = vld [vmem:[%s204 + $0x3c] sm:$0x1]
    %v257 = vsel %vm213, %v107, %v256
    %258 = vst [vmem:[%s204 + $0x3c] sm:$0x1] %v257
    %v259 = vld [vmem:[%s204 + $0x50] sm:$0xf]
    %v260 = vsel %vm207, %v114, %v259
    %261 = vst [vmem:[%s204 + $0x50] sm:$0xf] %v260
    %v262 = vld [vmem:[%s204 + $0x54] sm:$0x1]
    %v263 = vsel %vm213, %v115, %v262
    %264 = vst [vmem:[%s204 + $0x54] sm:$0x1] %v263
    %v265 = vld [vmem:[%s204 + $0x58] sm:$0xf]
    %v266 = vsel %vm207, %v122, %v265
    %267 = vst [vmem:[%s204 + $0x58] sm:$0xf] %v266
    %v268 = vld [vmem:[%s204 + $0x5c] sm:$0x1]
    %v269 = vsel %vm213, %v123, %v268
    %270 = vst [vmem:[%s204 + $0x5c] sm:$0x1] %v269
    %v271 = vld [vmem:[%s204 + $0x60] sm:$0xf]
    %v272 = vsel %vm207, %v130, %v271
    %273 = vst [vmem:[%s204 + $0x60] sm:$0xf] %v272
    %v274 = vld [vmem:[%s204 + $0x64] sm:$0x1]
    %v275 = vsel %vm213, %v131, %v274
    %276 = vst [vmem:[%s204 + $0x64] sm:$0x1] %v275
    %v277 = vld [vmem:[%s204 + $0x68] sm:$0xf]
    %v278 = vsel %vm207, %v138, %v277
    %279 = vst [vmem:[%s204 + $0x68] sm:$0xf] %v278
    %v280 = vld [vmem:[%s204 + $0x6c] sm:$0x1]
    %v281 = vsel %vm213, %v139, %v280
    %282 = vst [vmem:[%s204 + $0x6c] sm:$0x1] %v281
    %v283 = vld [vmem:[%s204 + $0x70] sm:$0xf]
    %v284 = vsel %vm207, %v146, %v283
    %285 = vst [vmem:[%s204 + $0x70] sm:$0xf] %v284
    %v286 = vld [vmem:[%s204 + $0x74] sm:$0x1]
    %v287 = vsel %vm213, %v147, %v286
    %288 = vst [vmem:[%s204 + $0x74] sm:$0x1] %v287
    %v289 = vld [vmem:[%s204 + $0x78] sm:$0xf]
    %v290 = vsel %vm207, %v154, %v289
    %291 = vst [vmem:[%s204 + $0x78] sm:$0xf] %v290
    %v292 = vld [vmem:[%s204 + $0x7c] sm:$0x1]
    %v293 = vsel %vm213, %v155, %v292
    %294 = vst [vmem:[%s204 + $0x7c] sm:$0x1] %v293
    %v295 = vld [vmem:[%s204 + $0x80] sm:$0xf]
    %v296 = vsel %vm207, %v162, %v295
    %297 = vst [vmem:[%s204 + $0x80] sm:$0xf] %v296
    %v298 = vld [vmem:[%s204 + $0x84] sm:$0x1]
    %v299 = vsel %vm213, %v163, %v298
    %300 = vst [vmem:[%s204 + $0x84] sm:$0x1] %v299
    %v301 = vld [vmem:[%s204 + $0x88] sm:$0xf]
    %v302 = vsel %vm207, %v170, %v301
    %303 = vst [vmem:[%s204 + $0x88] sm:$0xf] %v302
    %v304 = vld [vmem:[%s204 + $0x8c] sm:$0x1]
    %v305 = vsel %vm213, %v171, %v304
    %306 = vst [vmem:[%s204 + $0x8c] sm:$0x1] %v305
    %v307 = vld [vmem:[#allocation2] sm:$0xf]
    %v308 = vsel %vm207, %v58, %v307
    %309 = vst [vmem:[#allocation2] sm:$0xf] %v308
    %v310 = vld [vmem:[#allocation2 + $0x4] sm:$0x1]
    %v311 = vsel %vm213, %v59, %v310
    %312 = vst [vmem:[#allocation2 + $0x4] sm:$0x1] %v311
    %v313 = vld [vmem:[#allocation2 + $0x50] sm:$0xf]
    %v314 = vsel %vm207, %v122, %v313
    %315 = vst [vmem:[#allocation2 + $0x50] sm:$0xf] %v314
    %v316 = vld [vmem:[#allocation2 + $0x54] sm:$0x1]
    %v317 = vsel %vm213, %v123, %v316
    %318 = vst [vmem:[#allocation2 + $0x54] sm:$0x1] %v317
    %s319 = scalar_lea.vmem [#allocation2], 72
    %v320 = vld [vmem:[%s319] sm:$0xf]
    %v321 = vsel %vm207, %v98, %v320
    %322 = vst [vmem:[%s319] sm:$0xf] %v321
    %v323 = vld [vmem:[%s319 + $0x4] sm:$0x1]
    %v324 = vsel %vm213, %v99, %v323
    %325 = vst [vmem:[%s319 + $0x4] sm:$0x1] %v324
    %v326 = vld [vmem:[%s319 + $0x50] sm:$0xf]
    %v327 = vsel %vm207, %v162, %v326
    %328 = vst [vmem:[%s319 + $0x50] sm:$0xf] %v327
    %v329 = vld [vmem:[%s319 + $0x54] sm:$0x1]
    %v330 = vsel %vm213, %v163, %v329
    %331 = vst [vmem:[%s319 + $0x54] sm:$0x1] %v330
    %v332 = vrot.slane %v45, 4
    %v333 = vrot.slane %v332, 4
    %v334 = vrot.slane %v53, 4
    %v335 = vrot.slane %v334, 4
    %v336 = vrot.slane %v61, 4
    %v337 = vrot.slane %v336, 4
    %v338 = vrot.slane %v69, 4
    %v339 = vrot.slane %v338, 4
    %v340 = vrot.slane %v77, 4
    %v341 = vrot.slane %v340, 4
    %v342 = vrot.slane %v85, 4
    %v343 = vrot.slane %v342, 4
    %v344 = vrot.slane %v93, 4
    %v345 = vrot.slane %v344, 4
    %v346 = vrot.slane %v101, 4
    %v347 = vrot.slane %v346, 4
    %v348 = vrot.slane %v109, 4
    %v349 = vrot.slane %v348, 4
    %v350 = vrot.slane %v117, 4
    %v351 = vrot.slane %v350, 4
    %v352 = vrot.slane %v125, 4
    %v353 = vrot.slane %v352, 4
    %v354 = vrot.slane %v133, 4
    %v355 = vrot.slane %v354, 4
    %v356 = vrot.slane %v141, 4
    %v357 = vrot.slane %v356, 4
    %v358 = vrot.slane %v149, 4
    %v359 = vrot.slane %v358, 4
    %v360 = vrot.slane %v157, 4
    %v361 = vrot.slane %v360, 4
    %v362 = vrot.slane %v165, 4
    %v363 = vrot.slane %v362, 4
    %v380 = vld [vmem:[%s204] sm:$0x1]
    %v381 = vsel %vm213, %v333, %v380
    %382 = vst [vmem:[%s204] sm:$0x1] %v381
    %v383 = vld [vmem:[%s204 + $0x8] sm:$0x1]
    %v384 = vsel %vm213, %v335, %v383
    %385 = vst [vmem:[%s204 + $0x8] sm:$0x1] %v384
    %v386 = vld [vmem:[%s204 + $0x10] sm:$0x1]
    %v387 = vsel %vm213, %v337, %v386
    %388 = vst [vmem:[%s204 + $0x10] sm:$0x1] %v387
    %v389 = vld [vmem:[%s204 + $0x18] sm:$0x1]
    %v390 = vsel %vm213, %v339, %v389
    %391 = vst [vmem:[%s204 + $0x18] sm:$0x1] %v390
    %v392 = vld [vmem:[%s204 + $0x20] sm:$0x1]
    %v393 = vsel %vm213, %v341, %v392
    %394 = vst [vmem:[%s204 + $0x20] sm:$0x1] %v393
    %v395 = vld [vmem:[%s204 + $0x28] sm:$0x1]
    %v396 = vsel %vm213, %v343, %v395
    %397 = vst [vmem:[%s204 + $0x28] sm:$0x1] %v396
    %v398 = vld [vmem:[%s204 + $0x30] sm:$0x1]
    %v399 = vsel %vm213, %v345, %v398
    %400 = vst [vmem:[%s204 + $0x30] sm:$0x1] %v399
    %v401 = vld [vmem:[%s204 + $0x38] sm:$0x1]
    %v402 = vsel %vm213, %v347, %v401
    %403 = vst [vmem:[%s204 + $0x38] sm:$0x1] %v402
    %v404 = vld [vmem:[%s204 + $0x50] sm:$0x1]
    %v405 = vsel %vm213, %v349, %v404
    %406 = vst [vmem:[%s204 + $0x50] sm:$0x1] %v405
    %v407 = vld [vmem:[%s204 + $0x58] sm:$0x1]
    %v408 = vsel %vm213, %v351, %v407
    %409 = vst [vmem:[%s204 + $0x58] sm:$0x1] %v408
    %v410 = vld [vmem:[%s204 + $0x60] sm:$0x1]
    %v411 = vsel %vm213, %v353, %v410
    %412 = vst [vmem:[%s204 + $0x60] sm:$0x1] %v411
    %v413 = vld [vmem:[%s204 + $0x68] sm:$0x1]
    %v414 = vsel %vm213, %v355, %v413
    %415 = vst [vmem:[%s204 + $0x68] sm:$0x1] %v414
    %v416 = vld [vmem:[%s204 + $0x70] sm:$0x1]
    %v417 = vsel %vm213, %v357, %v416
    %418 = vst [vmem:[%s204 + $0x70] sm:$0x1] %v417
    %v419 = vld [vmem:[%s204 + $0x78] sm:$0x1]
    %v420 = vsel %vm213, %v359, %v419
    %421 = vst [vmem:[%s204 + $0x78] sm:$0x1] %v420
    %v422 = vld [vmem:[%s204 + $0x80] sm:$0x1]
    %v423 = vsel %vm213, %v361, %v422
    %424 = vst [vmem:[%s204 + $0x80] sm:$0x1] %v423
    %v425 = vld [vmem:[%s204 + $0x88] sm:$0x1]
    %v426 = vsel %vm213, %v363, %v425
    %427 = vst [vmem:[%s204 + $0x88] sm:$0x1] %v426
    %v428 = vrot.slane %v48, 7
    %v429 = vrot.slane %v428, 4
    %v430 = vrot.slane %v56, 7
    %v431 = vrot.slane %v430, 4
    %v432 = vrot.slane %v64, 7
    %v433 = vrot.slane %v432, 4
    %v434 = vrot.slane %v72, 7
    %v435 = vrot.slane %v434, 4
    %v436 = vrot.slane %v80, 7
    %v437 = vrot.slane %v436, 4
    %v438 = vrot.slane %v88, 7
    %v439 = vrot.slane %v438, 4
    %v440 = vrot.slane %v96, 7
    %v441 = vrot.slane %v440, 4
    %v442 = vrot.slane %v104, 7
    %v443 = vrot.slane %v442, 4
    %v444 = vrot.slane %v112, 7
    %v445 = vrot.slane %v444, 4
    %v446 = vrot.slane %v120, 7
    %v447 = vrot.slane %v446, 4
    %v448 = vrot.slane %v128, 7
    %v449 = vrot.slane %v448, 4
    %v450 = vrot.slane %v136, 7
    %v451 = vrot.slane %v450, 4
    %v452 = vrot.slane %v144, 7
    %v453 = vrot.slane %v452, 4
    %v454 = vrot.slane %v152, 7
    %v455 = vrot.slane %v454, 4
    %v456 = vrot.slane %v160, 7
    %v457 = vrot.slane %v456, 4
    %v458 = vrot.slane %v168, 7
    %v459 = vrot.slane %v458, 4
    %vm476 = vmand %vm211, %vm206
    %v477 = vld [vmem:[%s204 + $0x4] sm:$0x1]
    %v478 = vsel %vm476, %v429, %v477
    %479 = vst [vmem:[%s204 + $0x4] sm:$0x1] %v478
    %v480 = vld [vmem:[%s204 + $0xc] sm:$0x1]
    %v481 = vsel %vm476, %v431, %v480
    %482 = vst [vmem:[%s204 + $0xc] sm:$0x1] %v481
    %v483 = vld [vmem:[%s204 + $0x14] sm:$0x1]
    %v484 = vsel %vm476, %v433, %v483
    %485 = vst [vmem:[%s204 + $0x14] sm:$0x1] %v484
    %v486 = vld [vmem:[%s204 + $0x1c] sm:$0x1]
    %v487 = vsel %vm476, %v435, %v486
    %488 = vst [vmem:[%s204 + $0x1c] sm:$0x1] %v487
    %v489 = vld [vmem:[%s204 + $0x24] sm:$0x1]
    %v490 = vsel %vm476, %v437, %v489
    %491 = vst [vmem:[%s204 + $0x24] sm:$0x1] %v490
    %v492 = vld [vmem:[%s204 + $0x2c] sm:$0x1]
    %v493 = vsel %vm476, %v439, %v492
    %494 = vst [vmem:[%s204 + $0x2c] sm:$0x1] %v493
    %v495 = vld [vmem:[%s204 + $0x34] sm:$0x1]
    %v496 = vsel %vm476, %v441, %v495
    %497 = vst [vmem:[%s204 + $0x34] sm:$0x1] %v496
    %v498 = vld [vmem:[%s204 + $0x3c] sm:$0x1]
    %v499 = vsel %vm476, %v443, %v498
    %500 = vst [vmem:[%s204 + $0x3c] sm:$0x1] %v499
    %v501 = vld [vmem:[%s204 + $0x54] sm:$0x1]
    %v502 = vsel %vm476, %v445, %v501
    %503 = vst [vmem:[%s204 + $0x54] sm:$0x1] %v502
    %v504 = vld [vmem:[%s204 + $0x5c] sm:$0x1]
    %v505 = vsel %vm476, %v447, %v504
    %506 = vst [vmem:[%s204 + $0x5c] sm:$0x1] %v505
    %v507 = vld [vmem:[%s204 + $0x64] sm:$0x1]
    %v508 = vsel %vm476, %v449, %v507
    %509 = vst [vmem:[%s204 + $0x64] sm:$0x1] %v508
    %v510 = vld [vmem:[%s204 + $0x6c] sm:$0x1]
    %v511 = vsel %vm476, %v451, %v510
    %512 = vst [vmem:[%s204 + $0x6c] sm:$0x1] %v511
    %v513 = vld [vmem:[%s204 + $0x74] sm:$0x1]
    %v514 = vsel %vm476, %v453, %v513
    %515 = vst [vmem:[%s204 + $0x74] sm:$0x1] %v514
    %v516 = vld [vmem:[%s204 + $0x7c] sm:$0x1]
    %v517 = vsel %vm476, %v455, %v516
    %518 = vst [vmem:[%s204 + $0x7c] sm:$0x1] %v517
    %v519 = vld [vmem:[%s204 + $0x84] sm:$0x1]
    %v520 = vsel %vm476, %v457, %v519
    %521 = vst [vmem:[%s204 + $0x84] sm:$0x1] %v520
    %v522 = vld [vmem:[%s204 + $0x8c] sm:$0x1]
    %v523 = vsel %vm476, %v459, %v522
    %524 = vst [vmem:[%s204 + $0x8c] sm:$0x1] %v523
    %v525 = vld [vmem:[#allocation2] sm:$0x1]
    %v526 = vsel %vm213, %v335, %v525
    %527 = vst [vmem:[#allocation2] sm:$0x1] %v526
    %v528 = vld [vmem:[#allocation2 + $0x50] sm:$0x1]
    %v529 = vsel %vm213, %v351, %v528
    %530 = vst [vmem:[#allocation2 + $0x50] sm:$0x1] %v529
    %v531 = vld [vmem:[#allocation2 + $0x4] sm:$0x1]
    %v532 = vsel %vm476, %v431, %v531
    %533 = vst [vmem:[#allocation2 + $0x4] sm:$0x1] %v532
    %v534 = vld [vmem:[#allocation2 + $0x54] sm:$0x1]
    %v535 = vsel %vm476, %v447, %v534
    %536 = vst [vmem:[#allocation2 + $0x54] sm:$0x1] %v535
    %v537 = vld [vmem:[%s319] sm:$0x1]
    %v538 = vsel %vm213, %v345, %v537
    %539 = vst [vmem:[%s319] sm:$0x1] %v538
    %v540 = vld [vmem:[%s319 + $0x50] sm:$0x1]
    %v541 = vsel %vm213, %v361, %v540
    %542 = vst [vmem:[%s319 + $0x50] sm:$0x1] %v541
    %v543 = vld [vmem:[%s319 + $0x4] sm:$0x1]
    %v544 = vsel %vm476, %v441, %v543
    %545 = vst [vmem:[%s319 + $0x4] sm:$0x1] %v544
    %v546 = vld [vmem:[%s319 + $0x54] sm:$0x1]
    %v547 = vsel %vm476, %v457, %v546
    %548 = vst [vmem:[%s319 + $0x54] sm:$0x1] %v547
    %v549 = vld [vmem:[#allocation2] sm:$0xf]
    %v550 = vld [vmem:[#allocation2 + $0x8] sm:$0xf]
    %v551 = vld [vmem:[#allocation2 + $0x10] sm:$0xf]
    %v552 = vld [vmem:[#allocation2 + $0x18] sm:$0xf]
    %v553 = vld [vmem:[#allocation2 + $0x20] sm:$0xf]
    %v554 = vld [vmem:[#allocation2 + $0x28] sm:$0xf]
    %v555 = vld [vmem:[#allocation2 + $0x30] sm:$0xf]
    %v556 = vld [vmem:[#allocation2 + $0x38] sm:$0xf]
    %v557 = vld [vmem:[#allocation2 + $0x50] sm:$0xf]
    %v558 = vld [vmem:[#allocation2 + $0x58] sm:$0xf]
    %v559 = vld [vmem:[#allocation2 + $0x60] sm:$0xf]
    %v560 = vld [vmem:[#allocation2 + $0x68] sm:$0xf]
    %v561 = vld [vmem:[#allocation2 + $0x70] sm:$0xf]
    %v562 = vld [vmem:[#allocation2 + $0x78] sm:$0xf]
    %v563 = vld [vmem:[#allocation2 + $0x80] sm:$0xf]
    %v564 = vld [vmem:[#allocation2 + $0x88] sm:$0xf]
    %v565 = vld [vmem:[%s1] sm:$0xf]
    %v566 = vld [vmem:[%s1 + $0x4] sm:$0xf]
    %v567 = vld [vmem:[%s1 + $0x8] sm:$0xf]
    %v568 = vld [vmem:[%s1 + $0xc] sm:$0xf]
    %v569 = vld [vmem:[%s1 + $0x10] sm:$0xf]
    %v570 = vld [vmem:[%s1 + $0x14] sm:$0xf]
    %v571 = vld [vmem:[%s1 + $0x18] sm:$0xf]
    %v572 = vld [vmem:[%s1 + $0x1c] sm:$0xf]
    %v573 = vld [vmem:[%s1 + $0x20] sm:$0xf]
    %v574 = vld [vmem:[%s1 + $0x24] sm:$0xf]
    %v575 = vld [vmem:[%s1 + $0x28] sm:$0xf]
    %v576 = vld [vmem:[%s1 + $0x2c] sm:$0xf]
    %v577 = vld [vmem:[%s1 + $0x30] sm:$0xf]
    %v578 = vld [vmem:[%s1 + $0x34] sm:$0xf]
    %v579 = vld [vmem:[%s1 + $0x38] sm:$0xf]
    %v580 = vld [vmem:[%s1 + $0x3c] sm:$0xf]
    %v581 = vld [vmem:[#allocation2 + $0x4] sm:$0x1]
    %v582 = vld [vmem:[#allocation2 + $0xc] sm:$0x1]
    %v583 = vld [vmem:[#allocation2 + $0x14] sm:$0x1]
    %v584 = vld [vmem:[#allocation2 + $0x1c] sm:$0x1]
    %v585 = vld [vmem:[#allocation2 + $0x24] sm:$0x1]
    %v586 = vld [vmem:[#allocation2 + $0x2c] sm:$0x1]
    %v587 = vld [vmem:[#allocation2 + $0x34] sm:$0x1]
    %v588 = vld [vmem:[#allocation2 + $0x3c] sm:$0x1]
    %v589 = vld [vmem:[#allocation2 + $0x54] sm:$0x1]
    %v590 = vld [vmem:[#allocation2 + $0x5c] sm:$0x1]
    %v591 = vld [vmem:[#allocation2 + $0x64] sm:$0x1]
    %v592 = vld [vmem:[#allocation2 + $0x6c] sm:$0x1]
    %v593 = vld [vmem:[#allocation2 + $0x74] sm:$0x1]
    %v594 = vld [vmem:[#allocation2 + $0x7c] sm:$0x1]
    %v595 = vld [vmem:[#allocation2 + $0x84] sm:$0x1]
    %v596 = vld [vmem:[#allocation2 + $0x8c] sm:$0x1]
    %vm597 = vsmask.f32 3328
    %vm598 = vsmask.f32 7440
    %vm599 = vmor %vm597, %vm598
    %v601 = vshrl.u32 %v549, 16
    %v603 = vrot.slane %v601, 4
    %v604 = vshll.u32 %v549, 16
    %v606 = vrot.slane %v604, 5
    %v607 = vor.u32 %v603, %v606
    %v608 = vrot.slane %v607, 4
    %v610 = vshll.u32 %v581, 16
    %v612 = vrot.slane %v610, 5
    %v613 = vsel %vm599, %v608, %v612
    %v615 = vshrl.u32 %v550, 16
    %v617 = vrot.slane %v615, 4
    %v618 = vshll.u32 %v550, 16
    %v620 = vrot.slane %v618, 5
    %v621 = vor.u32 %v617, %v620
    %v622 = vrot.slane %v621, 4
    %v624 = vshll.u32 %v582, 16
    %v626 = vrot.slane %v624, 5
    %v627 = vsel %vm599, %v622, %v626
    %v629 = vshrl.u32 %v551, 16
    %v631 = vrot.slane %v629, 4
    %v632 = vshll.u32 %v551, 16
    %v634 = vrot.slane %v632, 5
    %v635 = vor.u32 %v631, %v634
    %v636 = vrot.slane %v635, 4
    %v638 = vshll.u32 %v583, 16
    %v640 = vrot.slane %v638, 5
    %v641 = vsel %vm599, %v636, %v640
    %v643 = vshrl.u32 %v552, 16
    %v645 = vrot.slane %v643, 4
    %v646 = vshll.u32 %v552, 16
    %v648 = vrot.slane %v646, 5
    %v649 = vor.u32 %v645, %v648
    %v650 = vrot.slane %v649, 4
    %v652 = vshll.u32 %v584, 16
    %v654 = vrot.slane %v652, 5
    %v655 = vsel %vm599, %v650, %v654
    %v657 = vshrl.u32 %v553, 16
    %v659 = vrot.slane %v657, 4
    %v660 = vshll.u32 %v553, 16
    %v662 = vrot.slane %v660, 5
    %v663 = vor.u32 %v659, %v662
    %v664 = vrot.slane %v663, 4
    %v666 = vshll.u32 %v585, 16
    %v668 = vrot.slane %v666, 5
    %v669 = vsel %vm599, %v664, %v668
    %v671 = vshrl.u32 %v554, 16
    %v673 = vrot.slane %v671, 4
    %v674 = vshll.u32 %v554, 16
    %v676 = vrot.slane %v674, 5
    %v677 = vor.u32 %v673, %v676
    %v678 = vrot.slane %v677, 4
    %v680 = vshll.u32 %v586, 16
    %v682 = vrot.slane %v680, 5
    %v683 = vsel %vm599, %v678, %v682
    %v685 = vshrl.u32 %v555, 16
    %v687 = vrot.slane %v685, 4
    %v688 = vshll.u32 %v555, 16
    %v690 = vrot.slane %v688, 5
    %v691 = vor.u32 %v687, %v690
    %v692 = vrot.slane %v691, 4
    %v694 = vshll.u32 %v587, 16
    %v696 = vrot.slane %v694, 5
    %v697 = vsel %vm599, %v692, %v696
    %v699 = vshrl.u32 %v556, 16
    %v701 = vrot.slane %v699, 4
    %v702 = vshll.u32 %v556, 16
    %v704 = vrot.slane %v702, 5
    %v705 = vor.u32 %v701, %v704
    %v706 = vrot.slane %v705, 4
    %v708 = vshll.u32 %v588, 16
    %v710 = vrot.slane %v708, 5
    %v711 = vsel %vm599, %v706, %v710
    %v713 = vshrl.u32 %v557, 16
    %v715 = vrot.slane %v713, 4
    %v716 = vshll.u32 %v557, 16
    %v718 = vrot.slane %v716, 5
    %v719 = vor.u32 %v715, %v718
    %v720 = vrot.slane %v719, 4
    %v722 = vshll.u32 %v589, 16
    %v724 = vrot.slane %v722, 5
    %v725 = vsel %vm599, %v720, %v724
    %v727 = vshrl.u32 %v558, 16
    %v729 = vrot.slane %v727, 4
    %v730 = vshll.u32 %v558, 16
    %v732 = vrot.slane %v730, 5
    %v733 = vor.u32 %v729, %v732
    %v734 = vrot.slane %v733, 4
    %v736 = vshll.u32 %v590, 16
    %v738 = vrot.slane %v736, 5
    %v739 = vsel %vm599, %v734, %v738
    %v741 = vshrl.u32 %v559, 16
    %v743 = vrot.slane %v741, 4
    %v744 = vshll.u32 %v559, 16
    %v746 = vrot.slane %v744, 5
    %v747 = vor.u32 %v743, %v746
    %v748 = vrot.slane %v747, 4
    %v750 = vshll.u32 %v591, 16
    %v752 = vrot.slane %v750, 5
    %v753 = vsel %vm599, %v748, %v752
    %v755 = vshrl.u32 %v560, 16
    %v757 = vrot.slane %v755, 4
    %v758 = vshll.u32 %v560, 16
    %v760 = vrot.slane %v758, 5
    %v761 = vor.u32 %v757, %v760
    %v762 = vrot.slane %v761, 4
    %v764 = vshll.u32 %v592, 16
    %v766 = vrot.slane %v764, 5
    %v767 = vsel %vm599, %v762, %v766
    %v769 = vshrl.u32 %v561, 16
    %v771 = vrot.slane %v769, 4
    %v772 = vshll.u32 %v561, 16
    %v774 = vrot.slane %v772, 5
    %v775 = vor.u32 %v771, %v774
    %v776 = vrot.slane %v775, 4
    %v778 = vshll.u32 %v593, 16
    %v780 = vrot.slane %v778, 5
    %v781 = vsel %vm599, %v776, %v780
    %v783 = vshrl.u32 %v562, 16
    %v785 = vrot.slane %v783, 4
    %v786 = vshll.u32 %v562, 16
    %v788 = vrot.slane %v786, 5
    %v789 = vor.u32 %v785, %v788
    %v790 = vrot.slane %v789, 4
    %v792 = vshll.u32 %v594, 16
    %v794 = vrot.slane %v792, 5
    %v795 = vsel %vm599, %v790, %v794
    %v797 = vshrl.u32 %v563, 16
    %v799 = vrot.slane %v797, 4
    %v800 = vshll.u32 %v563, 16
    %v802 = vrot.slane %v800, 5
    %v803 = vor.u32 %v799, %v802
    %v804 = vrot.slane %v803, 4
    %v806 = vshll.u32 %v595, 16
    %v808 = vrot.slane %v806, 5
    %v809 = vsel %vm599, %v804, %v808
    %v811 = vshrl.u32 %v564, 16
    %v813 = vrot.slane %v811, 4
    %v814 = vshll.u32 %v564, 16
    %v816 = vrot.slane %v814, 5
    %v817 = vor.u32 %v813, %v816
    %v818 = vrot.slane %v817, 4
    %v820 = vshll.u32 %v596, 16
    %v822 = vrot.slane %v820, 5
    %v823 = vsel %vm599, %v818, %v822
    %s824 = scalar_lea.vmem %s1, 64
    %v825 = vld [vmem:[%s824] sm:$0xf]
    %v826 = vld [vmem:[%s824 + $0x4] sm:$0xf]
    %v827 = vld [vmem:[%s824 + $0x8] sm:$0xf]
    %v828 = vld [vmem:[%s824 + $0xc] sm:$0xf]
    %v829 = vld [vmem:[%s824 + $0x10] sm:$0xf]
    %v830 = vld [vmem:[%s824 + $0x14] sm:$0xf]
    %v831 = vld [vmem:[%s824 + $0x18] sm:$0xf]
    %v832 = vld [vmem:[%s824 + $0x1c] sm:$0xf]
    %v833 = vld [vmem:[%s824 + $0x20] sm:$0xf]
    %v834 = vld [vmem:[%s824 + $0x24] sm:$0xf]
    %v835 = vld [vmem:[%s824 + $0x28] sm:$0xf]
    %v836 = vld [vmem:[%s824 + $0x2c] sm:$0xf]
    %v837 = vld [vmem:[%s824 + $0x30] sm:$0xf]
    %v838 = vld [vmem:[%s824 + $0x34] sm:$0xf]
    %v839 = vld [vmem:[%s824 + $0x38] sm:$0xf]
    %v840 = vld [vmem:[%s824 + $0x3c] sm:$0xf]
    %v841 = vunpack.c.l.b16 %v613
    %v842 = vunpack.c.l.b16 %v627
    %v843 = vunpack.c.l.b16 %v641
    %v844 = vunpack.c.l.b16 %v655
    %v845 = vunpack.c.l.b16 %v669
    %v846 = vunpack.c.l.b16 %v683
    %v847 = vunpack.c.l.b16 %v697
    %v848 = vunpack.c.l.b16 %v711
    %v849 = vunpack.c.l.b16 %v725
    %v850 = vunpack.c.l.b16 %v739
    %v851 = vunpack.c.l.b16 %v753
    %v852 = vunpack.c.l.b16 %v767
    %v853 = vunpack.c.l.b16 %v781
    %v854 = vunpack.c.l.b16 %v795
    %v855 = vunpack.c.l.b16 %v809
    %v856 = vunpack.c.l.b16 %v823
    %v857 = vpack.c.b16 %v842, %v841
    %v858 = vpack.c.b16 %v844, %v843
    %v859 = vpack.c.b16 %v846, %v845
    %v860 = vpack.c.b16 %v848, %v847
    %v861 = vpack.c.b16 %v850, %v849
    %v862 = vpack.c.b16 %v852, %v851
    %v863 = vpack.c.b16 %v854, %v853
    %v864 = vpack.c.b16 %v856, %v855
    %v889 = vunpack.c.l.b16 %v825
    %v890 = vunpack.c.l.b16 %v826
    %v891 = vunpack.c.l.b16 %v827
    %v892 = vunpack.c.l.b16 %v828
    %v893 = vunpack.c.l.b16 %v829
    %v894 = vunpack.c.l.b16 %v830
    %v895 = vunpack.c.l.b16 %v831
    %v896 = vunpack.c.l.b16 %v832
    %v897 = vunpack.c.l.b16 %v833
    %v898 = vunpack.c.l.b16 %v834
    %v899 = vunpack.c.l.b16 %v835
    %v900 = vunpack.c.l.b16 %v836
    %v901 = vunpack.c.l.b16 %v837
    %v902 = vunpack.c.l.b16 %v838
    %v903 = vunpack.c.l.b16 %v839
    %v904 = vunpack.c.l.b16 %v840
    %v905 = vpack.c.b16 %v890, %v889
    %v906 = vpack.c.b16 %v892, %v891
    %v907 = vpack.c.b16 %v894, %v893
    %v908 = vpack.c.b16 %v896, %v895
    %v909 = vpack.c.b16 %v898, %v897
    %v910 = vpack.c.b16 %v900, %v899
    %v911 = vpack.c.b16 %v902, %v901
    %v912 = vpack.c.b16 %v904, %v903
    %921 = vmatprep.subr.bf16.mxu0 0
    %922 = vmatpush1.bf16.msra.mxu0 %v912
    %923 = vmatprep.subr.bf16.mxu0 0
    %924 = vmatpush1.bf16.msra.mxu0 %v911
    %925 = vmatprep.subr.bf16.mxu0 0
    %926 = vmatpush1.bf16.msra.mxu0 %v910
    %927 = vmatprep.subr.bf16.mxu0 0
    %928 = vmatpush1.bf16.msra.mxu0 %v909
    %929 = vmatprep.subr.bf16.mxu0 0
    %930 = vmatpush1.bf16.msra.mxu0 %v908
    %931 = vmatprep.subr.bf16.mxu0 0
    %932 = vmatpush1.bf16.msra.mxu0 %v907
    %933 = vmatprep.subr.bf16.mxu0 0
    %934 = vmatpush1.bf16.msra.mxu0 %v906
    %935 = vmatprep.subr.bf16.mxu0 0
    %936 = vmatpush1.bf16.msra.mxu0 %v905
    %937 = vmatprep.subr.bf16.mxu0 0
    %938 = vmatpush2.bf16.msra.mxu0 0
    %939 = vmatprep.subr.bf16.mxu0 0
    %940 = vmatpush2.bf16.msra.mxu0 0
    %941 = vmatprep.subr.bf16.mxu0 0
    %942 = vmatpush2.bf16.msra.mxu0 0
    %943 = vmatprep.subr.bf16.mxu0 0
    %944 = vmatpush2.bf16.msra.mxu0 0
    %945 = vmatprep.subr.bf16.mxu0 0
    %946 = vmatpush2.bf16.msra.mxu0 0
    %947 = vmatprep.subr.bf16.mxu0 0
    %948 = vmatpush2.bf16.msra.mxu0 0
    %949 = vmatprep.subr.bf16.mxu0 0
    %950 = vmatpush2.bf16.msra.mxu0 0
    %951 = vmatprep.subr.bf16.mxu0 0
    %952 = vmatpush2.bf16.msra.mxu0 0
    %953 = vmatprep.mubr.bf16.mxu0 0
    %954 = vmatmul.mubr.bf16.gmra.mxu0 %v857
    %v955 = vpop.f32.mrf.mxu0
    %v956 = vadd.f32 0.0, %v955
    %v957 = vpop.f32.mrf.mxu0
    %v958 = vpop.f32.mrf.mxu0
    %v959 = vadd.f32 0.0, %v958
    %v960 = vpop.f32.mrf.mxu0
    %961 = vmatprep.mubr.bf16.mxu0 0
    %962 = vmatmul.mubr.bf16.gmra.mxu0 %v858
    %v963 = vpop.f32.mrf.mxu0
    %v964 = vadd.f32 0.0, %v963
    %v965 = vpop.f32.mrf.mxu0
    %v966 = vpop.f32.mrf.mxu0
    %v967 = vadd.f32 0.0, %v966
    %v968 = vpop.f32.mrf.mxu0
    %969 = vmatprep.mubr.bf16.mxu0 0
    %970 = vmatmul.mubr.bf16.gmra.mxu0 %v859
    %v971 = vpop.f32.mrf.mxu0
    %v972 = vadd.f32 0.0, %v971
    %v973 = vpop.f32.mrf.mxu0
    %v974 = vpop.f32.mrf.mxu0
    %v975 = vadd.f32 0.0, %v974
    %v976 = vpop.f32.mrf.mxu0
    %977 = vmatprep.mubr.bf16.mxu0 0
    %978 = vmatmul.mubr.bf16.gmra.mxu0 %v860
    %v979 = vpop.f32.mrf.mxu0
    %v980 = vadd.f32 0.0, %v979
    %v981 = vpop.f32.mrf.mxu0
    %v982 = vpop.f32.mrf.mxu0
    %v983 = vadd.f32 0.0, %v982
    %v984 = vpop.f32.mrf.mxu0
    %985 = vmatprep.mubr.bf16.mxu0 0
    %986 = vmatmul.mubr.bf16.gmra.mxu0 %v861
    %v987 = vpop.f32.mrf.mxu0
    %v988 = vadd.f32 0.0, %v987
    %v989 = vpop.f32.mrf.mxu0
    %v990 = vpop.f32.mrf.mxu0
    %v991 = vadd.f32 0.0, %v990
    %v992 = vpop.f32.mrf.mxu0
    %993 = vmatprep.mubr.bf16.mxu0 0
    %994 = vmatmul.mubr.bf16.gmra.mxu0 %v862
    %v995 = vpop.f32.mrf.mxu0
    %v996 = vadd.f32 0.0, %v995
    %v997 = vpop.f32.mrf.mxu0
    %v998 = vpop.f32.mrf.mxu0
    %v999 = vadd.f32 0.0, %v998
    %v1000 = vpop.f32.mrf.mxu0
    %1001 = vmatprep.mubr.bf16.mxu0 0
    %1002 = vmatmul.mubr.bf16.gmra.mxu0 %v863
    %v1003 = vpop.f32.mrf.mxu0
    %v1004 = vadd.f32 0.0, %v1003
    %v1005 = vpop.f32.mrf.mxu0
    %v1006 = vpop.f32.mrf.mxu0
    %v1007 = vadd.f32 0.0, %v1006
    %v1008 = vpop.f32.mrf.mxu0
    %1009 = vmatprep.mubr.bf16.mxu0 0
    %1010 = vmatmul.mubr.bf16.gmra.mxu0 %v864
    %v1011 = vpop.f32.mrf.mxu0
    %v1012 = vadd.f32 0.0, %v1011
    %v1013 = vpop.f32.mrf.mxu0
    %v1014 = vpop.f32.mrf.mxu0
    %v1015 = vadd.f32 0.0, %v1014
    %v1016 = vpop.f32.mrf.mxu0
    %1017 = vdwg.mxu0
    %v1034 = vunpack.c.l.b16 %v549
    %v1035 = vunpack.c.l.b16 %v550
    %v1036 = vunpack.c.l.b16 %v551
    %v1037 = vunpack.c.l.b16 %v552
    %v1038 = vunpack.c.l.b16 %v553
    %v1039 = vunpack.c.l.b16 %v554
    %v1040 = vunpack.c.l.b16 %v555
    %v1041 = vunpack.c.l.b16 %v556
    %v1042 = vunpack.c.l.b16 %v557
    %v1043 = vunpack.c.l.b16 %v558
    %v1044 = vunpack.c.l.b16 %v559
    %v1045 = vunpack.c.l.b16 %v560
    %v1046 = vunpack.c.l.b16 %v561
    %v1047 = vunpack.c.l.b16 %v562
    %v1048 = vunpack.c.l.b16 %v563
    %v1049 = vunpack.c.l.b16 %v564
    %v1050 = vpack.c.b16 %v1035, %v1034
    %v1051 = vpack.c.b16 %v1037, %v1036
    %v1052 = vpack.c.b16 %v1039, %v1038
    %v1053 = vpack.c.b16 %v1041, %v1040
    %v1054 = vpack.c.b16 %v1043, %v1042
    %v1055 = vpack.c.b16 %v1045, %v1044
    %v1056 = vpack.c.b16 %v1047, %v1046
    %v1057 = vpack.c.b16 %v1049, %v1048
    %v1082 = vunpack.c.l.b16 %v565
    %v1083 = vunpack.c.l.b16 %v566
    %v1084 = vunpack.c.l.b16 %v567
    %v1085 = vunpack.c.l.b16 %v568
    %v1086 = vunpack.c.l.b16 %v569
    %v1087 = vunpack.c.l.b16 %v570
    %v1088 = vunpack.c.l.b16 %v571
    %v1089 = vunpack.c.l.b16 %v572
    %v1090 = vunpack.c.l.b16 %v573
    %v1091 = vunpack.c.l.b16 %v574
    %v1092 = vunpack.c.l.b16 %v575
    %v1093 = vunpack.c.l.b16 %v576
    %v1094 = vunpack.c.l.b16 %v577
    %v1095 = vunpack.c.l.b16 %v578
    %v1096 = vunpack.c.l.b16 %v579
    %v1097 = vunpack.c.l.b16 %v580
    %v1098 = vpack.c.b16 %v1083, %v1082
    %v1099 = vpack.c.b16 %v1085, %v1084
    %v1100 = vpack.c.b16 %v1087, %v1086
    %v1101 = vpack.c.b16 %v1089, %v1088
    %v1102 = vpack.c.b16 %v1091, %v1090
    %v1103 = vpack.c.b16 %v1093, %v1092
    %v1104 = vpack.c.b16 %v1095, %v1094
    %v1105 = vpack.c.b16 %v1097, %v1096
    %1114 = vmatprep.subr.bf16.mxu0 0
    %1115 = vmatpush1.bf16.msra.mxu0 %v1105
    %1116 = vmatprep.subr.bf16.mxu0 0
    %1117 = vmatpush1.bf16.msra.mxu0 %v1104
    %1118 = vmatprep.subr.bf16.mxu0 0
    %1119 = vmatpush1.bf16.msra.mxu0 %v1103
    %1120 = vmatprep.subr.bf16.mxu0 0
    %1121 = vmatpush1.bf16.msra.mxu0 %v1102
    %1122 = vmatprep.subr.bf16.mxu0 0
    %1123 = vmatpush1.bf16.msra.mxu0 %v1101
    %1124 = vmatprep.subr.bf16.mxu0 0
    %1125 = vmatpush1.bf16.msra.mxu0 %v1100
    %1126 = vmatprep.subr.bf16.mxu0 0
    %1127 = vmatpush1.bf16.msra.mxu0 %v1099
    %1128 = vmatprep.subr.bf16.mxu0 0
    %1129 = vmatpush1.bf16.msra.mxu0 %v1098
    %1130 = vmatprep.subr.bf16.mxu0 0
    %1131 = vmatpush2.bf16.msra.mxu0 0
    %1132 = vmatprep.subr.bf16.mxu0 0
    %1133 = vmatpush2.bf16.msra.mxu0 0
    %1134 = vmatprep.subr.bf16.mxu0 0
    %1135 = vmatpush2.bf16.msra.mxu0 0
    %1136 = vmatprep.subr.bf16.mxu0 0
    %1137 = vmatpush2.bf16.msra.mxu0 0
    %1138 = vmatprep.subr.bf16.mxu0 0
    %1139 = vmatpush2.bf16.msra.mxu0 0
    %1140 = vmatprep.subr.bf16.mxu0 0
    %1141 = vmatpush2.bf16.msra.mxu0 0
    %1142 = vmatprep.subr.bf16.mxu0 0
    %1143 = vmatpush2.bf16.msra.mxu0 0
    %1144 = vmatprep.subr.bf16.mxu0 0
    %1145 = vmatpush2.bf16.msra.mxu0 0
    %1146 = vmatprep.mubr.bf16.mxu0 0
    %1147 = vmatmul.mubr.bf16.gmra.mxu0 %v1050
    %v1148 = vpop.f32.mrf.mxu0
    %v1149 = vadd.f32 %v956, %v1148
    %v1150 = vpop.f32.mrf.mxu0
    %v1151 = vpop.f32.mrf.mxu0
    %v1152 = vadd.f32 %v959, %v1151
    %v1153 = vpop.f32.mrf.mxu0
    %1154 = vmatprep.mubr.bf16.mxu0 0
    %1155 = vmatmul.mubr.bf16.gmra.mxu0 %v1051
    %v1156 = vpop.f32.mrf.mxu0
    %v1157 = vadd.f32 %v964, %v1156
    %v1158 = vpop.f32.mrf.mxu0
    %v1159 = vpop.f32.mrf.mxu0
    %v1160 = vadd.f32 %v967, %v1159
    %v1161 = vpop.f32.mrf.mxu0
    %1162 = vmatprep.mubr.bf16.mxu0 0
    %1163 = vmatmul.mubr.bf16.gmra.mxu0 %v1052
    %v1164 = vpop.f32.mrf.mxu0
    %v1165 = vadd.f32 %v972, %v1164
    %v1166 = vpop.f32.mrf.mxu0
    %v1167 = vpop.f32.mrf.mxu0
    %v1168 = vadd.f32 %v975, %v1167
    %v1169 = vpop.f32.mrf.mxu0
    %1170 = vmatprep.mubr.bf16.mxu0 0
    %1171 = vmatmul.mubr.bf16.gmra.mxu0 %v1053
    %v1172 = vpop.f32.mrf.mxu0
    %v1173 = vadd.f32 %v980, %v1172
    %v1174 = vpop.f32.mrf.mxu0
    %v1175 = vpop.f32.mrf.mxu0
    %v1176 = vadd.f32 %v983, %v1175
    %v1177 = vpop.f32.mrf.mxu0
    %1178 = vmatprep.mubr.bf16.mxu0 0
    %1179 = vmatmul.mubr.bf16.gmra.mxu0 %v1054
    %v1180 = vpop.f32.mrf.mxu0
    %v1181 = vadd.f32 %v988, %v1180
    %v1182 = vpop.f32.mrf.mxu0
    %v1183 = vpop.f32.mrf.mxu0
    %v1184 = vadd.f32 %v991, %v1183
    %v1185 = vpop.f32.mrf.mxu0
    %1186 = vmatprep.mubr.bf16.mxu0 0
    %1187 = vmatmul.mubr.bf16.gmra.mxu0 %v1055
    %v1188 = vpop.f32.mrf.mxu0
    %v1189 = vadd.f32 %v996, %v1188
    %v1190 = vpop.f32.mrf.mxu0
    %v1191 = vpop.f32.mrf.mxu0
    %v1192 = vadd.f32 %v999, %v1191
    %v1193 = vpop.f32.mrf.mxu0
    %1194 = vmatprep.mubr.bf16.mxu0 0
    %1195 = vmatmul.mubr.bf16.gmra.mxu0 %v1056
    %v1196 = vpop.f32.mrf.mxu0
    %v1197 = vadd.f32 %v1004, %v1196
    %v1198 = vpop.f32.mrf.mxu0
    %v1199 = vpop.f32.mrf.mxu0
    %v1200 = vadd.f32 %v1007, %v1199
    %v1201 = vpop.f32.mrf.mxu0
    %1202 = vmatprep.mubr.bf16.mxu0 0
    %1203 = vmatmul.mubr.bf16.gmra.mxu0 %v1057
    %v1204 = vpop.f32.mrf.mxu0
    %v1205 = vadd.f32 %v1012, %v1204
    %v1206 = vpop.f32.mrf.mxu0
    %v1207 = vpop.f32.mrf.mxu0
    %v1208 = vadd.f32 %v1015, %v1207
    %v1209 = vpop.f32.mrf.mxu0
    %1210 = vdwg.mxu0
    %v1211 = vld [vmem:[#allocation2] sm:$0xe]
    %v1212 = vld [vmem:[#allocation2 + $0x8] sm:$0xe]
    %v1213 = vld [vmem:[#allocation2 + $0x10] sm:$0xe]
    %v1214 = vld [vmem:[#allocation2 + $0x18] sm:$0xe]
    %v1215 = vld [vmem:[#allocation2 + $0x20] sm:$0xe]
    %v1216 = vld [vmem:[#allocation2 + $0x28] sm:$0xe]
    %v1217 = vld [vmem:[#allocation2 + $0x30] sm:$0xe]
    %v1218 = vld [vmem:[#allocation2 + $0x38] sm:$0xe]
    %v1219 = vld [vmem:[#allocation2 + $0x50] sm:$0xe]
    %v1220 = vld [vmem:[#allocation2 + $0x58] sm:$0xe]
    %v1221 = vld [vmem:[#allocation2 + $0x60] sm:$0xe]
    %v1222 = vld [vmem:[#allocation2 + $0x68] sm:$0xe]
    %v1223 = vld [vmem:[#allocation2 + $0x70] sm:$0xe]
    %v1224 = vld [vmem:[#allocation2 + $0x78] sm:$0xe]
    %v1225 = vld [vmem:[#allocation2 + $0x80] sm:$0xe]
    %v1226 = vld [vmem:[#allocation2 + $0x88] sm:$0xe]
    %vm1259 = vcmask 1042432
    %vm1260 = vcmask 1046532
    %vm1261 = vmor %vm1259, %vm1260
    %v1262 = vrot.slane %v1211, 5
    %v1263 = vrot.slane %v1262, 4
    %v1264 = vrot.slane %v581, 5
    %v1265 = vsel %vm1261, %v1263, %v1264
    %v1266 = vrot.slane %v1212, 5
    %v1267 = vrot.slane %v1266, 4
    %v1268 = vrot.slane %v582, 5
    %v1269 = vsel %vm1261, %v1267, %v1268
    %v1270 = vrot.slane %v1213, 5
    %v1271 = vrot.slane %v1270, 4
    %v1272 = vrot.slane %v583, 5
    %v1273 = vsel %vm1261, %v1271, %v1272
    %v1274 = vrot.slane %v1214, 5
    %v1275 = vrot.slane %v1274, 4
    %v1276 = vrot.slane %v584, 5
    %v1277 = vsel %vm1261, %v1275, %v1276
    %v1278 = vrot.slane %v1215, 5
    %v1279 = vrot.slane %v1278, 4
    %v1280 = vrot.slane %v585, 5
    %v1281 = vsel %vm1261, %v1279, %v1280
    %v1282 = vrot.slane %v1216, 5
    %v1283 = vrot.slane %v1282, 4
    %v1284 = vrot.slane %v586, 5
    %v1285 = vsel %vm1261, %v1283, %v1284
    %v1286 = vrot.slane %v1217, 5
    %v1287 = vrot.slane %v1286, 4
    %v1288 = vrot.slane %v587, 5
    %v1289 = vsel %vm1261, %v1287, %v1288
    %v1290 = vrot.slane %v1218, 5
    %v1291 = vrot.slane %v1290, 4
    %v1292 = vrot.slane %v588, 5
    %v1293 = vsel %vm1261, %v1291, %v1292
    %v1294 = vrot.slane %v1219, 5
    %v1295 = vrot.slane %v1294, 4
    %v1296 = vrot.slane %v589, 5
    %v1297 = vsel %vm1261, %v1295, %v1296
    %v1298 = vrot.slane %v1220, 5
    %v1299 = vrot.slane %v1298, 4
    %v1300 = vrot.slane %v590, 5
    %v1301 = vsel %vm1261, %v1299, %v1300
    %v1302 = vrot.slane %v1221, 5
    %v1303 = vrot.slane %v1302, 4
    %v1304 = vrot.slane %v591, 5
    %v1305 = vsel %vm1261, %v1303, %v1304
    %v1306 = vrot.slane %v1222, 5
    %v1307 = vrot.slane %v1306, 4
    %v1308 = vrot.slane %v592, 5
    %v1309 = vsel %vm1261, %v1307, %v1308
    %v1310 = vrot.slane %v1223, 5
    %v1311 = vrot.slane %v1310, 4
    %v1312 = vrot.slane %v593, 5
    %v1313 = vsel %vm1261, %v1311, %v1312
    %v1314 = vrot.slane %v1224, 5
    %v1315 = vrot.slane %v1314, 4
    %v1316 = vrot.slane %v594, 5
    %v1317 = vsel %vm1261, %v1315, %v1316
    %v1318 = vrot.slane %v1225, 5
    %v1319 = vrot.slane %v1318, 4
    %v1320 = vrot.slane %v595, 5
    %v1321 = vsel %vm1261, %v1319, %v1320
    %v1322 = vrot.slane %v1226, 5
    %v1323 = vrot.slane %v1322, 4
    %v1324 = vrot.slane %v596, 5
    %v1325 = vsel %vm1261, %v1323, %v1324
    %s1326 = scalar_lea.vmem %s1, 128
    %v1327 = vld [vmem:[%s1326] sm:$0xf]
    %v1328 = vld [vmem:[%s1326 + $0x4] sm:$0xf]
    %v1329 = vld [vmem:[%s1326 + $0x8] sm:$0xf]
    %v1330 = vld [vmem:[%s1326 + $0xc] sm:$0xf]
    %v1331 = vld [vmem:[%s1326 + $0x10] sm:$0xf]
    %v1332 = vld [vmem:[%s1326 + $0x14] sm:$0xf]
    %v1333 = vld [vmem:[%s1326 + $0x18] sm:$0xf]
    %v1334 = vld [vmem:[%s1326 + $0x1c] sm:$0xf]
    %v1335 = vld [vmem:[%s1326 + $0x20] sm:$0xf]
    %v1336 = vld [vmem:[%s1326 + $0x24] sm:$0xf]
    %v1337 = vld [vmem:[%s1326 + $0x28] sm:$0xf]
    %v1338 = vld [vmem:[%s1326 + $0x2c] sm:$0xf]
    %v1339 = vld [vmem:[%s1326 + $0x30] sm:$0xf]
    %v1340 = vld [vmem:[%s1326 + $0x34] sm:$0xf]
    %v1341 = vld [vmem:[%s1326 + $0x38] sm:$0xf]
    %v1342 = vld [vmem:[%s1326 + $0x3c] sm:$0xf]
    %v1343 = vunpack.c.l.b16 %v1265
    %v1344 = vunpack.c.l.b16 %v1269
    %v1345 = vunpack.c.l.b16 %v1273
    %v1346 = vunpack.c.l.b16 %v1277
    %v1347 = vunpack.c.l.b16 %v1281
    %v1348 = vunpack.c.l.b16 %v1285
    %v1349 = vunpack.c.l.b16 %v1289
    %v1350 = vunpack.c.l.b16 %v1293
    %v1351 = vunpack.c.l.b16 %v1297
    %v1352 = vunpack.c.l.b16 %v1301
    %v1353 = vunpack.c.l.b16 %v1305
    %v1354 = vunpack.c.l.b16 %v1309
    %v1355 = vunpack.c.l.b16 %v1313
    %v1356 = vunpack.c.l.b16 %v1317
    %v1357 = vunpack.c.l.b16 %v1321
    %v1358 = vunpack.c.l.b16 %v1325
    %v1359 = vpack.c.b16 %v1344, %v1343
    %v1360 = vpack.c.b16 %v1346, %v1345
    %v1361 = vpack.c.b16 %v1348, %v1347
    %v1362 = vpack.c.b16 %v1350, %v1349
    %v1363 = vpack.c.b16 %v1352, %v1351
    %v1364 = vpack.c.b16 %v1354, %v1353
    %v1365 = vpack.c.b16 %v1356, %v1355
    %v1366 = vpack.c.b16 %v1358, %v1357
    %v1391 = vunpack.c.l.b16 %v1327
    %v1392 = vunpack.c.l.b16 %v1328
    %v1393 = vunpack.c.l.b16 %v1329
    %v1394 = vunpack.c.l.b16 %v1330
    %v1395 = vunpack.c.l.b16 %v1331
    %v1396 = vunpack.c.l.b16 %v1332
    %v1397 = vunpack.c.l.b16 %v1333
    %v1398 = vunpack.c.l.b16 %v1334
    %v1399 = vunpack.c.l.b16 %v1335
    %v1400 = vunpack.c.l.b16 %v1336
    %v1401 = vunpack.c.l.b16 %v1337
    %v1402 = vunpack.c.l.b16 %v1338
    %v1403 = vunpack.c.l.b16 %v1339
    %v1404 = vunpack.c.l.b16 %v1340
    %v1405 = vunpack.c.l.b16 %v1341
    %v1406 = vunpack.c.l.b16 %v1342
    %v1407 = vpack.c.b16 %v1392, %v1391
    %v1408 = vpack.c.b16 %v1394, %v1393
    %v1409 = vpack.c.b16 %v1396, %v1395
    %v1410 = vpack.c.b16 %v1398, %v1397
    %v1411 = vpack.c.b16 %v1400, %v1399
    %v1412 = vpack.c.b16 %v1402, %v1401
    %v1413 = vpack.c.b16 %v1404, %v1403
    %v1414 = vpack.c.b16 %v1406, %v1405
    %1423 = vmatprep.subr.bf16.mxu0 0
    %1424 = vmatpush1.bf16.msra.mxu0 %v1414
    %1425 = vmatprep.subr.bf16.mxu0 0
    %1426 = vmatpush1.bf16.msra.mxu0 %v1413
    %1427 = vmatprep.subr.bf16.mxu0 0
    %1428 = vmatpush1.bf16.msra.mxu0 %v1412
    %1429 = vmatprep.subr.bf16.mxu0 0
    %1430 = vmatpush1.bf16.msra.mxu0 %v1411
    %1431 = vmatprep.subr.bf16.mxu0 0
    %1432 = vmatpush1.bf16.msra.mxu0 %v1410
    %1433 = vmatprep.subr.bf16.mxu0 0
    %1434 = vmatpush1.bf16.msra.mxu0 %v1409
    %1435 = vmatprep.subr.bf16.mxu0 0
    %1436 = vmatpush1.bf16.msra.mxu0 %v1408
    %1437 = vmatprep.subr.bf16.mxu0 0
    %1438 = vmatpush1.bf16.msra.mxu0 %v1407
    %1439 = vmatprep.subr.bf16.mxu0 0
    %1440 = vmatpush2.bf16.msra.mxu0 0
    %1441 = vmatprep.subr.bf16.mxu0 0
    %1442 = vmatpush2.bf16.msra.mxu0 0
    %1443 = vmatprep.subr.bf16.mxu0 0
    %1444 = vmatpush2.bf16.msra.mxu0 0
    %1445 = vmatprep.subr.bf16.mxu0 0
    %1446 = vmatpush2.bf16.msra.mxu0 0
    %1447 = vmatprep.subr.bf16.mxu0 0
    %1448 = vmatpush2.bf16.msra.mxu0 0
    %1449 = vmatprep.subr.bf16.mxu0 0
    %1450 = vmatpush2.bf16.msra.mxu0 0
    %1451 = vmatprep.subr.bf16.mxu0 0
    %1452 = vmatpush2.bf16.msra.mxu0 0
    %1453 = vmatprep.subr.bf16.mxu0 0
    %1454 = vmatpush2.bf16.msra.mxu0 0
    %1455 = vmatprep.mubr.bf16.mxu0 0
    %1456 = vmatmul.mubr.bf16.gmra.mxu0 %v1359
    %v1457 = vpop.f32.mrf.mxu0
    %v1458 = vadd.f32 0.0, %v1457
    %v1459 = vpop.f32.mrf.mxu0
    %v1460 = vpop.f32.mrf.mxu0
    %v1461 = vadd.f32 0.0, %v1460
    %v1462 = vpop.f32.mrf.mxu0
    %1463 = vmatprep.mubr.bf16.mxu0 0
    %1464 = vmatmul.mubr.bf16.gmra.mxu0 %v1360
    %v1465 = vpop.f32.mrf.mxu0
    %v1466 = vadd.f32 0.0, %v1465
    %v1467 = vpop.f32.mrf.mxu0
    %v1468 = vpop.f32.mrf.mxu0
    %v1469 = vadd.f32 0.0, %v1468
    %v1470 = vpop.f32.mrf.mxu0
    %1471 = vmatprep.mubr.bf16.mxu0 0
    %1472 = vmatmul.mubr.bf16.gmra.mxu0 %v1361
    %v1473 = vpop.f32.mrf.mxu0
    %v1474 = vadd.f32 0.0, %v1473
    %v1475 = vpop.f32.mrf.mxu0
    %v1476 = vpop.f32.mrf.mxu0
    %v1477 = vadd.f32 0.0, %v1476
    %v1478 = vpop.f32.mrf.mxu0
    %1479 = vmatprep.mubr.bf16.mxu0 0
    %1480 = vmatmul.mubr.bf16.gmra.mxu0 %v1362
    %v1481 = vpop.f32.mrf.mxu0
    %v1482 = vadd.f32 0.0, %v1481
    %v1483 = vpop.f32.mrf.mxu0
    %v1484 = vpop.f32.mrf.mxu0
    %v1485 = vadd.f32 0.0, %v1484
    %v1486 = vpop.f32.mrf.mxu0
    %1487 = vmatprep.mubr.bf16.mxu0 0
    %1488 = vmatmul.mubr.bf16.gmra.mxu0 %v1363
    %v1489 = vpop.f32.mrf.mxu0
    %v1490 = vadd.f32 0.0, %v1489
    %v1491 = vpop.f32.mrf.mxu0
    %v1492 = vpop.f32.mrf.mxu0
    %v1493 = vadd.f32 0.0, %v1492
    %v1494 = vpop.f32.mrf.mxu0
    %1495 = vmatprep.mubr.bf16.mxu0 0
    %1496 = vmatmul.mubr.bf16.gmra.mxu0 %v1364
    %v1497 = vpop.f32.mrf.mxu0
    %v1498 = vadd.f32 0.0, %v1497
    %v1499 = vpop.f32.mrf.mxu0
    %v1500 = vpop.f32.mrf.mxu0
    %v1501 = vadd.f32 0.0, %v1500
    %v1502 = vpop.f32.mrf.mxu0
    %1503 = vmatprep.mubr.bf16.mxu0 0
    %1504 = vmatmul.mubr.bf16.gmra.mxu0 %v1365
    %v1505 = vpop.f32.mrf.mxu0
    %v1506 = vadd.f32 0.0, %v1505
    %v1507 = vpop.f32.mrf.mxu0
    %v1508 = vpop.f32.mrf.mxu0
    %v1509 = vadd.f32 0.0, %v1508
    %v1510 = vpop.f32.mrf.mxu0
    %1511 = vmatprep.mubr.bf16.mxu0 0
    %1512 = vmatmul.mubr.bf16.gmra.mxu0 %v1366
    %v1513 = vpop.f32.mrf.mxu0
    %v1514 = vadd.f32 0.0, %v1513
    %v1515 = vpop.f32.mrf.mxu0
    %v1516 = vpop.f32.mrf.mxu0
    %v1517 = vadd.f32 0.0, %v1516
    %v1518 = vpop.f32.mrf.mxu0
    %1519 = vdwg.mxu0
    %v1520 = vadd.f32 %v1149, %v1458
    %v1521 = vadd.f32 %v1152, %v1461
    %v1522 = vadd.f32 %v1157, %v1466
    %v1523 = vadd.f32 %v1160, %v1469
    %v1524 = vadd.f32 %v1165, %v1474
    %v1525 = vadd.f32 %v1168, %v1477
    %v1526 = vadd.f32 %v1173, %v1482
    %v1527 = vadd.f32 %v1176, %v1485
    %v1528 = vadd.f32 %v1181, %v1490
    %v1529 = vadd.f32 %v1184, %v1493
    %v1530 = vadd.f32 %v1189, %v1498
    %v1531 = vadd.f32 %v1192, %v1501
    %v1532 = vadd.f32 %v1197, %v1506
    %v1533 = vadd.f32 %v1200, %v1509
    %v1534 = vadd.f32 %v1205, %v1514
    %v1535 = vadd.f32 %v1208, %v1517
    %v1536 = vld [vmem:[%s204] sm:$0xf]
    %v1537 = vld [vmem:[%s204 + $0x8] sm:$0xf]
    %v1538 = vld [vmem:[%s204 + $0x10] sm:$0xf]
    %v1539 = vld [vmem:[%s204 + $0x18] sm:$0xf]
    %v1540 = vld [vmem:[%s204 + $0x20] sm:$0xf]
    %v1541 = vld [vmem:[%s204 + $0x28] sm:$0xf]
    %v1542 = vld [vmem:[%s204 + $0x30] sm:$0xf]
    %v1543 = vld [vmem:[%s204 + $0x38] sm:$0xf]
    %v1544 = vld [vmem:[%s204 + $0x50] sm:$0xf]
    %v1545 = vld [vmem:[%s204 + $0x58] sm:$0xf]
    %v1546 = vld [vmem:[%s204 + $0x60] sm:$0xf]
    %v1547 = vld [vmem:[%s204 + $0x68] sm:$0xf]
    %v1548 = vld [vmem:[%s204 + $0x70] sm:$0xf]
    %v1549 = vld [vmem:[%s204 + $0x78] sm:$0xf]
    %v1550 = vld [vmem:[%s204 + $0x80] sm:$0xf]
    %v1551 = vld [vmem:[%s204 + $0x88] sm:$0xf]
    %s1552 = scalar_lea.vmem %s1, 192
    %v1553 = vld [vmem:[%s1552] sm:$0xf]
    %v1554 = vld [vmem:[%s1552 + $0x4] sm:$0xf]
    %v1555 = vld [vmem:[%s1552 + $0x8] sm:$0xf]
    %v1556 = vld [vmem:[%s1552 + $0xc] sm:$0xf]
    %v1557 = vld [vmem:[%s1552 + $0x10] sm:$0xf]
    %v1558 = vld [vmem:[%s1552 + $0x14] sm:$0xf]
    %v1559 = vld [vmem:[%s1552 + $0x18] sm:$0xf]
    %v1560 = vld [vmem:[%s1552 + $0x1c] sm:$0xf]
    %v1561 = vld [vmem:[%s1552 + $0x20] sm:$0xf]
    %v1562 = vld [vmem:[%s1552 + $0x24] sm:$0xf]
    %v1563 = vld [vmem:[%s1552 + $0x28] sm:$0xf]
    %v1564 = vld [vmem:[%s1552 + $0x2c] sm:$0xf]
    %v1565 = vld [vmem:[%s1552 + $0x30] sm:$0xf]
    %v1566 = vld [vmem:[%s1552 + $0x34] sm:$0xf]
    %v1567 = vld [vmem:[%s1552 + $0x38] sm:$0xf]
    %v1568 = vld [vmem:[%s1552 + $0x3c] sm:$0xf]
    %v1585 = vunpack.c.l.b16 %v1536
    %v1586 = vunpack.c.l.b16 %v1537
    %v1587 = vunpack.c.l.b16 %v1538
    %v1588 = vunpack.c.l.b16 %v1539
    %v1589 = vunpack.c.l.b16 %v1540
    %v1590 = vunpack.c.l.b16 %v1541
    %v1591 = vunpack.c.l.b16 %v1542
    %v1592 = vunpack.c.l.b16 %v1543
    %v1593 = vunpack.c.l.b16 %v1544
    %v1594 = vunpack.c.l.b16 %v1545
    %v1595 = vunpack.c.l.b16 %v1546
    %v1596 = vunpack.c.l.b16 %v1547
    %v1597 = vunpack.c.l.b16 %v1548
    %v1598 = vunpack.c.l.b16 %v1549
    %v1599 = vunpack.c.l.b16 %v1550
    %v1600 = vunpack.c.l.b16 %v1551
    %v1601 = vpack.c.b16 %v1586, %v1585
    %v1602 = vpack.c.b16 %v1588, %v1587
    %v1603 = vpack.c.b16 %v1590, %v1589
    %v1604 = vpack.c.b16 %v1592, %v1591
    %v1605 = vpack.c.b16 %v1594, %v1593
    %v1606 = vpack.c.b16 %v1596, %v1595
    %v1607 = vpack.c.b16 %v1598, %v1597
    %v1608 = vpack.c.b16 %v1600, %v1599
    %v1633 = vunpack.c.l.b16 %v1553
    %v1634 = vunpack.c.l.b16 %v1554
    %v1635 = vunpack.c.l.b16 %v1555
    %v1636 = vunpack.c.l.b16 %v1556
    %v1637 = vunpack.c.l.b16 %v1557
    %v1638 = vunpack.c.l.b16 %v1558
    %v1639 = vunpack.c.l.b16 %v1559
    %v1640 = vunpack.c.l.b16 %v1560
    %v1641 = vunpack.c.l.b16 %v1561
    %v1642 = vunpack.c.l.b16 %v1562
    %v1643 = vunpack.c.l.b16 %v1563
    %v1644 = vunpack.c.l.b16 %v1564
    %v1645 = vunpack.c.l.b16 %v1565
    %v1646 = vunpack.c.l.b16 %v1566
    %v1647 = vunpack.c.l.b16 %v1567
    %v1648 = vunpack.c.l.b16 %v1568
    %v1649 = vpack.c.b16 %v1634, %v1633
    %v1650 = vpack.c.b16 %v1636, %v1635
    %v1651 = vpack.c.b16 %v1638, %v1637
    %v1652 = vpack.c.b16 %v1640, %v1639
    %v1653 = vpack.c.b16 %v1642, %v1641
    %v1654 = vpack.c.b16 %v1644, %v1643
    %v1655 = vpack.c.b16 %v1646, %v1645
    %v1656 = vpack.c.b16 %v1648, %v1647
    %1665 = vmatprep.subr.bf16.mxu0 0
    %1666 = vmatpush1.bf16.msra.mxu0 %v1656
    %1667 = vmatprep.subr.bf16.mxu0 0
    %1668 = vmatpush1.bf16.msra.mxu0 %v1655
    %1669 = vmatprep.subr.bf16.mxu0 0
    %1670 = vmatpush1.bf16.msra.mxu0 %v1654
    %1671 = vmatprep.subr.bf16.mxu0 0
    %1672 = vmatpush1.bf16.msra.mxu0 %v1653
    %1673 = vmatprep.subr.bf16.mxu0 0
    %1674 = vmatpush1.bf16.msra.mxu0 %v1652
    %1675 = vmatprep.subr.bf16.mxu0 0
    %1676 = vmatpush1.bf16.msra.mxu0 %v1651
    %1677 = vmatprep.subr.bf16.mxu0 0
    %1678 = vmatpush1.bf16.msra.mxu0 %v1650
    %1679 = vmatprep.subr.bf16.mxu0 0
    %1680 = vmatpush1.bf16.msra.mxu0 %v1649
    %1681 = vmatprep.subr.bf16.mxu0 0
    %1682 = vmatpush2.bf16.msra.mxu0 0
    %1683 = vmatprep.subr.bf16.mxu0 0
    %1684 = vmatpush2.bf16.msra.mxu0 0
    %1685 = vmatprep.subr.bf16.mxu0 0
    %1686 = vmatpush2.bf16.msra.mxu0 0
    %1687 = vmatprep.subr.bf16.mxu0 0
    %1688 = vmatpush2.bf16.msra.mxu0 0
    %1689 = vmatprep.subr.bf16.mxu0 0
    %1690 = vmatpush2.bf16.msra.mxu0 0
    %1691 = vmatprep.subr.bf16.mxu0 0
    %1692 = vmatpush2.bf16.msra.mxu0 0
    %1693 = vmatprep.subr.bf16.mxu0 0
    %1694 = vmatpush2.bf16.msra.mxu0 0
    %1695 = vmatprep.subr.bf16.mxu0 0
    %1696 = vmatpush2.bf16.msra.mxu0 0
    %1697 = vmatprep.mubr.bf16.mxu0 0
    %1698 = vmatmul.mubr.bf16.gmra.mxu0 %v1601
    %v1699 = vpop.f32.mrf.mxu0
    %v1700 = vadd.f32 0.0, %v1699
    %v1701 = vpop.f32.mrf.mxu0
    %v1702 = vpop.f32.mrf.mxu0
    %v1703 = vadd.f32 0.0, %v1702
    %v1704 = vpop.f32.mrf.mxu0
    %1705 = vmatprep.mubr.bf16.mxu0 0
    %1706 = vmatmul.mubr.bf16.gmra.mxu0 %v1602
    %v1707 = vpop.f32.mrf.mxu0
    %v1708 = vadd.f32 0.0, %v1707
    %v1709 = vpop.f32.mrf.mxu0
    %v1710 = vpop.f32.mrf.mxu0
    %v1711 = vadd.f32 0.0, %v1710
    %v1712 = vpop.f32.mrf.mxu0
    %1713 = vmatprep.mubr.bf16.mxu0 0
    %1714 = vmatmul.mubr.bf16.gmra.mxu0 %v1603
    %v1715 = vpop.f32.mrf.mxu0
    %v1716 = vadd.f32 0.0, %v1715
    %v1717 = vpop.f32.mrf.mxu0
    %v1718 = vpop.f32.mrf.mxu0
    %v1719 = vadd.f32 0.0, %v1718
    %v1720 = vpop.f32.mrf.mxu0
    %1721 = vmatprep.mubr.bf16.mxu0 0
    %1722 = vmatmul.mubr.bf16.gmra.mxu0 %v1604
    %v1723 = vpop.f32.mrf.mxu0
    %v1724 = vadd.f32 0.0, %v1723
    %v1725 = vpop.f32.mrf.mxu0
    %v1726 = vpop.f32.mrf.mxu0
    %v1727 = vadd.f32 0.0, %v1726
    %v1728 = vpop.f32.mrf.mxu0
    %1729 = vmatprep.mubr.bf16.mxu0 0
    %1730 = vmatmul.mubr.bf16.gmra.mxu0 %v1605
    %v1731 = vpop.f32.mrf.mxu0
    %v1732 = vadd.f32 0.0, %v1731
    %v1733 = vpop.f32.mrf.mxu0
    %v1734 = vpop.f32.mrf.mxu0
    %v1735 = vadd.f32 0.0, %v1734
    %v1736 = vpop.f32.mrf.mxu0
    %1737 = vmatprep.mubr.bf16.mxu0 0
    %1738 = vmatmul.mubr.bf16.gmra.mxu0 %v1606
    %v1739 = vpop.f32.mrf.mxu0
    %v1740 = vadd.f32 0.0, %v1739
    %v1741 = vpop.f32.mrf.mxu0
    %v1742 = vpop.f32.mrf.mxu0
    %v1743 = vadd.f32 0.0, %v1742
    %v1744 = vpop.f32.mrf.mxu0
    %1745 = vmatprep.mubr.bf16.mxu0 0
    %1746 = vmatmul.mubr.bf16.gmra.mxu0 %v1607
    %v1747 = vpop.f32.mrf.mxu0
    %v1748 = vadd.f32 0.0, %v1747
    %v1749 = vpop.f32.mrf.mxu0
    %v1750 = vpop.f32.mrf.mxu0
    %v1751 = vadd.f32 0.0, %v1750
    %v1752 = vpop.f32.mrf.mxu0
    %1753 = vmatprep.mubr.bf16.mxu0 0
    %1754 = vmatmul.mubr.bf16.gmra.mxu0 %v1608
    %v1755 = vpop.f32.mrf.mxu0
    %v1756 = vadd.f32 0.0, %v1755
    %v1757 = vpop.f32.mrf.mxu0
    %v1758 = vpop.f32.mrf.mxu0
    %v1759 = vadd.f32 0.0, %v1758
    %v1760 = vpop.f32.mrf.mxu0
    %1761 = vdwg.mxu0
    %v1762 = vadd.f32 %v1520, %v1700
    %v1763 = vadd.f32 %v1521, %v1703
    %v1764 = vadd.f32 %v1522, %v1708
    %v1765 = vadd.f32 %v1523, %v1711
    %v1766 = vadd.f32 %v1524, %v1716
    %v1767 = vadd.f32 %v1525, %v1719
    %v1768 = vadd.f32 %v1526, %v1724
    %v1769 = vadd.f32 %v1527, %v1727
    %v1770 = vadd.f32 %v1528, %v1732
    %v1771 = vadd.f32 %v1529, %v1735
    %v1772 = vadd.f32 %v1530, %v1740
    %v1773 = vadd.f32 %v1531, %v1743
    %v1774 = vadd.f32 %v1532, %v1748
    %v1775 = vadd.f32 %v1533, %v1751
    %v1776 = vadd.f32 %v1534, %v1756
    %v1777 = vadd.f32 %v1535, %v1759
    %v1778 = vld [vmem:[%s204] sm:$0xf]
    %v1779 = vld [vmem:[%s204 + $0x4] sm:$0x1]
    %v1780 = vld [vmem:[%s204 + $0x8] sm:$0xf]
    %v1781 = vld [vmem:[%s204 + $0xc] sm:$0x1]
    %v1782 = vld [vmem:[%s204 + $0x10] sm:$0xf]
    %v1783 = vld [vmem:[%s204 + $0x14] sm:$0x1]
    %v1784 = vld [vmem:[%s204 + $0x18] sm:$0xf]
    %v1785 = vld [vmem:[%s204 + $0x1c] sm:$0x1]
    %v1786 = vld [vmem:[%s204 + $0x20] sm:$0xf]
    %v1787 = vld [vmem:[%s204 + $0x24] sm:$0x1]
    %v1788 = vld [vmem:[%s204 + $0x28] sm:$0xf]
    %v1789 = vld [vmem:[%s204 + $0x2c] sm:$0x1]
    %v1790 = vld [vmem:[%s204 + $0x30] sm:$0xf]
    %v1791 = vld [vmem:[%s204 + $0x34] sm:$0x1]
    %v1792 = vld [vmem:[%s204 + $0x38] sm:$0xf]
    %v1793 = vld [vmem:[%s204 + $0x3c] sm:$0x1]
    %v1794 = vld [vmem:[%s204 + $0x50] sm:$0xf]
    %v1795 = vld [vmem:[%s204 + $0x54] sm:$0x1]
    %v1796 = vld [vmem:[%s204 + $0x58] sm:$0xf]
    %v1797 = vld [vmem:[%s204 + $0x5c] sm:$0x1]
    %v1798 = vld [vmem:[%s204 + $0x60] sm:$0xf]
    %v1799 = vld [vmem:[%s204 + $0x64] sm:$0x1]
    %v1800 = vld [vmem:[%s204 + $0x68] sm:$0xf]
    %v1801 = vld [vmem:[%s204 + $0x6c] sm:$0x1]
    %v1802 = vld [vmem:[%s204 + $0x70] sm:$0xf]
    %v1803 = vld [vmem:[%s204 + $0x74] sm:$0x1]
    %v1804 = vld [vmem:[%s204 + $0x78] sm:$0xf]
    %v1805 = vld [vmem:[%s204 + $0x7c] sm:$0x1]
    %v1806 = vld [vmem:[%s204 + $0x80] sm:$0xf]
    %v1807 = vld [vmem:[%s204 + $0x84] sm:$0x1]
    %v1808 = vld [vmem:[%s204 + $0x88] sm:$0xf]
    %v1809 = vld [vmem:[%s204 + $0x8c] sm:$0x1]
    %v1811 = vshrl.u32 %v1778, 16
    %v1813 = vrot.slane %v1811, 4
    %v1814 = vshll.u32 %v1778, 16
    %v1816 = vrot.slane %v1814, 5
    %v1817 = vor.u32 %v1813, %v1816
    %v1818 = vrot.slane %v1817, 4
    %v1820 = vshll.u32 %v1779, 16
    %v1822 = vrot.slane %v1820, 5
    %v1823 = vsel %vm599, %v1818, %v1822
    %v1825 = vshrl.u32 %v1780, 16
    %v1827 = vrot.slane %v1825, 4
    %v1828 = vshll.u32 %v1780, 16
    %v1830 = vrot.slane %v1828, 5
    %v1831 = vor.u32 %v1827, %v1830
    %v1832 = vrot.slane %v1831, 4
    %v1834 = vshll.u32 %v1781, 16
    %v1836 = vrot.slane %v1834, 5
    %v1837 = vsel %vm599, %v1832, %v1836
    %v1839 = vshrl.u32 %v1782, 16
    %v1841 = vrot.slane %v1839, 4
    %v1842 = vshll.u32 %v1782, 16
    %v1844 = vrot.slane %v1842, 5
    %v1845 = vor.u32 %v1841, %v1844
    %v1846 = vrot.slane %v1845, 4
    %v1848 = vshll.u32 %v1783, 16
    %v1850 = vrot.slane %v1848, 5
    %v1851 = vsel %vm599, %v1846, %v1850
    %v1853 = vshrl.u32 %v1784, 16
    %v1855 = vrot.slane %v1853, 4
    %v1856 = vshll.u32 %v1784, 16
    %v1858 = vrot.slane %v1856, 5
    %v1859 = vor.u32 %v1855, %v1858
    %v1860 = vrot.slane %v1859, 4
    %v1862 = vshll.u32 %v1785, 16
    %v1864 = vrot.slane %v1862, 5
    %v1865 = vsel %vm599, %v1860, %v1864
    %v1867 = vshrl.u32 %v1786, 16
    %v1869 = vrot.slane %v1867, 4
    %v1870 = vshll.u32 %v1786, 16
    %v1872 = vrot.slane %v1870, 5
    %v1873 = vor.u32 %v1869, %v1872
    %v1874 = vrot.slane %v1873, 4
    %v1876 = vshll.u32 %v1787, 16
    %v1878 = vrot.slane %v1876, 5
    %v1879 = vsel %vm599, %v1874, %v1878
    %v1881 = vshrl.u32 %v1788, 16
    %v1883 = vrot.slane %v1881, 4
    %v1884 = vshll.u32 %v1788, 16
    %v1886 = vrot.slane %v1884, 5
    %v1887 = vor.u32 %v1883, %v1886
    %v1888 = vrot.slane %v1887, 4
    %v1890 = vshll.u32 %v1789, 16
    %v1892 = vrot.slane %v1890, 5
    %v1893 = vsel %vm599, %v1888, %v1892
    %v1895 = vshrl.u32 %v1790, 16
    %v1897 = vrot.slane %v1895, 4
    %v1898 = vshll.u32 %v1790, 16
    %v1900 = vrot.slane %v1898, 5
    %v1901 = vor.u32 %v1897, %v1900
    %v1902 = vrot.slane %v1901, 4
    %v1904 = vshll.u32 %v1791, 16
    %v1906 = vrot.slane %v1904, 5
    %v1907 = vsel %vm599, %v1902, %v1906
    %v1909 = vshrl.u32 %v1792, 16
    %v1911 = vrot.slane %v1909, 4
    %v1912 = vshll.u32 %v1792, 16
    %v1914 = vrot.slane %v1912, 5
    %v1915 = vor.u32 %v1911, %v1914
    %v1916 = vrot.slane %v1915, 4
    %v1918 = vshll.u32 %v1793, 16
    %v1920 = vrot.slane %v1918, 5
    %v1921 = vsel %vm599, %v1916, %v1920
    %v1923 = vshrl.u32 %v1794, 16
    %v1925 = vrot.slane %v1923, 4
    %v1926 = vshll.u32 %v1794, 16
    %v1928 = vrot.slane %v1926, 5
    %v1929 = vor.u32 %v1925, %v1928
    %v1930 = vrot.slane %v1929, 4
    %v1932 = vshll.u32 %v1795, 16
    %v1934 = vrot.slane %v1932, 5
    %v1935 = vsel %vm599, %v1930, %v1934
    %v1937 = vshrl.u32 %v1796, 16
    %v1939 = vrot.slane %v1937, 4
    %v1940 = vshll.u32 %v1796, 16
    %v1942 = vrot.slane %v1940, 5
    %v1943 = vor.u32 %v1939, %v1942
    %v1944 = vrot.slane %v1943, 4
    %v1946 = vshll.u32 %v1797, 16
    %v1948 = vrot.slane %v1946, 5
    %v1949 = vsel %vm599, %v1944, %v1948
    %v1951 = vshrl.u32 %v1798, 16
    %v1953 = vrot.slane %v1951, 4
    %v1954 = vshll.u32 %v1798, 16
    %v1956 = vrot.slane %v1954, 5
    %v1957 = vor.u32 %v1953, %v1956
    %v1958 = vrot.slane %v1957, 4
    %v1960 = vshll.u32 %v1799, 16
    %v1962 = vrot.slane %v1960, 5
    %v1963 = vsel %vm599, %v1958, %v1962
    %v1965 = vshrl.u32 %v1800, 16
    %v1967 = vrot.slane %v1965, 4
    %v1968 = vshll.u32 %v1800, 16
    %v1970 = vrot.slane %v1968, 5
    %v1971 = vor.u32 %v1967, %v1970
    %v1972 = vrot.slane %v1971, 4
    %v1974 = vshll.u32 %v1801, 16
    %v1976 = vrot.slane %v1974, 5
    %v1977 = vsel %vm599, %v1972, %v1976
    %v1979 = vshrl.u32 %v1802, 16
    %v1981 = vrot.slane %v1979, 4
    %v1982 = vshll.u32 %v1802, 16
    %v1984 = vrot.slane %v1982, 5
    %v1985 = vor.u32 %v1981, %v1984
    %v1986 = vrot.slane %v1985, 4
    %v1988 = vshll.u32 %v1803, 16
    %v1990 = vrot.slane %v1988, 5
    %v1991 = vsel %vm599, %v1986, %v1990
    %v1993 = vshrl.u32 %v1804, 16
    %v1995 = vrot.slane %v1993, 4
    %v1996 = vshll.u32 %v1804, 16
    %v1998 = vrot.slane %v1996, 5
    %v1999 = vor.u32 %v1995, %v1998
    %v2000 = vrot.slane %v1999, 4
    %v2002 = vshll.u32 %v1805, 16
    %v2004 = vrot.slane %v2002, 5
    %v2005 = vsel %vm599, %v2000, %v2004
    %v2007 = vshrl.u32 %v1806, 16
    %v2009 = vrot.slane %v2007, 4
    %v2010 = vshll.u32 %v1806, 16
    %v2012 = vrot.slane %v2010, 5
    %v2013 = vor.u32 %v2009, %v2012
    %v2014 = vrot.slane %v2013, 4
    %v2016 = vshll.u32 %v1807, 16
    %v2018 = vrot.slane %v2016, 5
    %v2019 = vsel %vm599, %v2014, %v2018
    %v2021 = vshrl.u32 %v1808, 16
    %v2023 = vrot.slane %v2021, 4
    %v2024 = vshll.u32 %v1808, 16
    %v2026 = vrot.slane %v2024, 5
    %v2027 = vor.u32 %v2023, %v2026
    %v2028 = vrot.slane %v2027, 4
    %v2030 = vshll.u32 %v1809, 16
    %v2032 = vrot.slane %v2030, 5
    %v2033 = vsel %vm599, %v2028, %v2032
    %s2034 = scalar_lea.vmem %s1, 256
    %v2035 = vld [vmem:[%s2034] sm:$0xf]
    %v2036 = vld [vmem:[%s2034 + $0x4] sm:$0xf]
    %v2037 = vld [vmem:[%s2034 + $0x8] sm:$0xf]
    %v2038 = vld [vmem:[%s2034 + $0xc] sm:$0xf]
    %v2039 = vld [vmem:[%s2034 + $0x10] sm:$0xf]
    %v2040 = vld [vmem:[%s2034 + $0x14] sm:$0xf]
    %v2041 = vld [vmem:[%s2034 + $0x18] sm:$0xf]
    %v2042 = vld [vmem:[%s2034 + $0x1c] sm:$0xf]
    %v2043 = vld [vmem:[%s2034 + $0x20] sm:$0xf]
    %v2044 = vld [vmem:[%s2034 + $0x24] sm:$0xf]
    %v2045 = vld [vmem:[%s2034 + $0x28] sm:$0xf]
    %v2046 = vld [vmem:[%s2034 + $0x2c] sm:$0xf]
    %v2047 = vld [vmem:[%s2034 + $0x30] sm:$0xf]
    %v2048 = vld [vmem:[%s2034 + $0x34] sm:$0xf]
    %v2049 = vld [vmem:[%s2034 + $0x38] sm:$0xf]
    %v2050 = vld [vmem:[%s2034 + $0x3c] sm:$0xf]
    %v2051 = vunpack.c.l.b16 %v1823
    %v2052 = vunpack.c.l.b16 %v1837
    %v2053 = vunpack.c.l.b16 %v1851
    %v2054 = vunpack.c.l.b16 %v1865
    %v2055 = vunpack.c.l.b16 %v1879
    %v2056 = vunpack.c.l.b16 %v1893
    %v2057 = vunpack.c.l.b16 %v1907
    %v2058 = vunpack.c.l.b16 %v1921
    %v2059 = vunpack.c.l.b16 %v1935
    %v2060 = vunpack.c.l.b16 %v1949
    %v2061 = vunpack.c.l.b16 %v1963
    %v2062 = vunpack.c.l.b16 %v1977
    %v2063 = vunpack.c.l.b16 %v1991
    %v2064 = vunpack.c.l.b16 %v2005
    %v2065 = vunpack.c.l.b16 %v2019
    %v2066 = vunpack.c.l.b16 %v2033
    %v2067 = vpack.c.b16 %v2052, %v2051
    %v2068 = vpack.c.b16 %v2054, %v2053
    %v2069 = vpack.c.b16 %v2056, %v2055
    %v2070 = vpack.c.b16 %v2058, %v2057
    %v2071 = vpack.c.b16 %v2060, %v2059
    %v2072 = vpack.c.b16 %v2062, %v2061
    %v2073 = vpack.c.b16 %v2064, %v2063
    %v2074 = vpack.c.b16 %v2066, %v2065
    %v2099 = vunpack.c.l.b16 %v2035
    %v2100 = vunpack.c.l.b16 %v2036
    %v2101 = vunpack.c.l.b16 %v2037
    %v2102 = vunpack.c.l.b16 %v2038
    %v2103 = vunpack.c.l.b16 %v2039
    %v2104 = vunpack.c.l.b16 %v2040
    %v2105 = vunpack.c.l.b16 %v2041
    %v2106 = vunpack.c.l.b16 %v2042
    %v2107 = vunpack.c.l.b16 %v2043
    %v2108 = vunpack.c.l.b16 %v2044
    %v2109 = vunpack.c.l.b16 %v2045
    %v2110 = vunpack.c.l.b16 %v2046
    %v2111 = vunpack.c.l.b16 %v2047
    %v2112 = vunpack.c.l.b16 %v2048
    %v2113 = vunpack.c.l.b16 %v2049
    %v2114 = vunpack.c.l.b16 %v2050
    %v2115 = vpack.c.b16 %v2100, %v2099
    %v2116 = vpack.c.b16 %v2102, %v2101
    %v2117 = vpack.c.b16 %v2104, %v2103
    %v2118 = vpack.c.b16 %v2106, %v2105
    %v2119 = vpack.c.b16 %v2108, %v2107
    %v2120 = vpack.c.b16 %v2110, %v2109
    %v2121 = vpack.c.b16 %v2112, %v2111
    %v2122 = vpack.c.b16 %v2114, %v2113
    %2131 = vmatprep.subr.bf16.mxu0 0
    %2132 = vmatpush1.bf16.msra.mxu0 %v2122
    %2133 = vmatprep.subr.bf16.mxu0 0
    %2134 = vmatpush1.bf16.msra.mxu0 %v2121
    %2135 = vmatprep.subr.bf16.mxu0 0
    %2136 = vmatpush1.bf16.msra.mxu0 %v2120
    %2137 = vmatprep.subr.bf16.mxu0 0
    %2138 = vmatpush1.bf16.msra.mxu0 %v2119
    %2139 = vmatprep.subr.bf16.mxu0 0
    %2140 = vmatpush1.bf16.msra.mxu0 %v2118
    %2141 = vmatprep.subr.bf16.mxu0 0
    %2142 = vmatpush1.bf16.msra.mxu0 %v2117
    %2143 = vmatprep.subr.bf16.mxu0 0
    %2144 = vmatpush1.bf16.msra.mxu0 %v2116
    %2145 = vmatprep.subr.bf16.mxu0 0
    %2146 = vmatpush1.bf16.msra.mxu0 %v2115
    %2147 = vmatprep.subr.bf16.mxu0 0
    %2148 = vmatpush2.bf16.msra.mxu0 0
    %2149 = vmatprep.subr.bf16.mxu0 0
    %2150 = vmatpush2.bf16.msra.mxu0 0
    %2151 = vmatprep.subr.bf16.mxu0 0
    %2152 = vmatpush2.bf16.msra.mxu0 0
    %2153 = vmatprep.subr.bf16.mxu0 0
    %2154 = vmatpush2.bf16.msra.mxu0 0
    %2155 = vmatprep.subr.bf16.mxu0 0
    %2156 = vmatpush2.bf16.msra.mxu0 0
    %2157 = vmatprep.subr.bf16.mxu0 0
    %2158 = vmatpush2.bf16.msra.mxu0 0
    %2159 = vmatprep.subr.bf16.mxu0 0
    %2160 = vmatpush2.bf16.msra.mxu0 0
    %2161 = vmatprep.subr.bf16.mxu0 0
    %2162 = vmatpush2.bf16.msra.mxu0 0
    %2163 = vmatprep.mubr.bf16.mxu0 0
    %2164 = vmatmul.mubr.bf16.gmra.mxu0 %v2067
    %v2165 = vpop.f32.mrf.mxu0
    %v2166 = vadd.f32 0.0, %v2165
    %v2167 = vpop.f32.mrf.mxu0
    %v2168 = vpop.f32.mrf.mxu0
    %v2169 = vadd.f32 0.0, %v2168
    %v2170 = vpop.f32.mrf.mxu0
    %2171 = vmatprep.mubr.bf16.mxu0 0
    %2172 = vmatmul.mubr.bf16.gmra.mxu0 %v2068
    %v2173 = vpop.f32.mrf.mxu0
    %v2174 = vadd.f32 0.0, %v2173
    %v2175 = vpop.f32.mrf.mxu0
    %v2176 = vpop.f32.mrf.mxu0
    %v2177 = vadd.f32 0.0, %v2176
    %v2178 = vpop.f32.mrf.mxu0
    %2179 = vmatprep.mubr.bf16.mxu0 0
    %2180 = vmatmul.mubr.bf16.gmra.mxu0 %v2069
    %v2181 = vpop.f32.mrf.mxu0
    %v2182 = vadd.f32 0.0, %v2181
    %v2183 = vpop.f32.mrf.mxu0
    %v2184 = vpop.f32.mrf.mxu0
    %v2185 = vadd.f32 0.0, %v2184
    %v2186 = vpop.f32.mrf.mxu0
    %2187 = vmatprep.mubr.bf16.mxu0 0
    %2188 = vmatmul.mubr.bf16.gmra.mxu0 %v2070
    %v2189 = vpop.f32.mrf.mxu0
    %v2190 = vadd.f32 0.0, %v2189
    %v2191 = vpop.f32.mrf.mxu0
    %v2192 = vpop.f32.mrf.mxu0
    %v2193 = vadd.f32 0.0, %v2192
    %v2194 = vpop.f32.mrf.mxu0
    %2195 = vmatprep.mubr.bf16.mxu0 0
    %2196 = vmatmul.mubr.bf16.gmra.mxu0 %v2071
    %v2197 = vpop.f32.mrf.mxu0
    %v2198 = vadd.f32 0.0, %v2197
    %v2199 = vpop.f32.mrf.mxu0
    %v2200 = vpop.f32.mrf.mxu0
    %v2201 = vadd.f32 0.0, %v2200
    %v2202 = vpop.f32.mrf.mxu0
    %2203 = vmatprep.mubr.bf16.mxu0 0
    %2204 = vmatmul.mubr.bf16.gmra.mxu0 %v2072
    %v2205 = vpop.f32.mrf.mxu0
    %v2206 = vadd.f32 0.0, %v2205
    %v2207 = vpop.f32.mrf.mxu0
    %v2208 = vpop.f32.mrf.mxu0
    %v2209 = vadd.f32 0.0, %v2208
    %v2210 = vpop.f32.mrf.mxu0
    %2211 = vmatprep.mubr.bf16.mxu0 0
    %2212 = vmatmul.mubr.bf16.gmra.mxu0 %v2073
    %v2213 = vpop.f32.mrf.mxu0
    %v2214 = vadd.f32 0.0, %v2213
    %v2215 = vpop.f32.mrf.mxu0
    %v2216 = vpop.f32.mrf.mxu0
    %v2217 = vadd.f32 0.0, %v2216
    %v2218 = vpop.f32.mrf.mxu0
    %2219 = vmatprep.mubr.bf16.mxu0 0
    %2220 = vmatmul.mubr.bf16.gmra.mxu0 %v2074
    %v2221 = vpop.f32.mrf.mxu0
    %v2222 = vadd.f32 0.0, %v2221
    %v2223 = vpop.f32.mrf.mxu0
    %v2224 = vpop.f32.mrf.mxu0
    %v2225 = vadd.f32 0.0, %v2224
    %v2226 = vpop.f32.mrf.mxu0
    %2227 = vdwg.mxu0
    %v2228 = vadd.f32 %v1762, %v2166
    %v2229 = vadd.f32 %v1763, %v2169
    %v2230 = vadd.f32 %v1764, %v2174
    %v2231 = vadd.f32 %v1765, %v2177
    %v2232 = vadd.f32 %v1766, %v2182
    %v2233 = vadd.f32 %v1767, %v2185
    %v2234 = vadd.f32 %v1768, %v2190
    %v2235 = vadd.f32 %v1769, %v2193
    %v2236 = vadd.f32 %v1770, %v2198
    %v2237 = vadd.f32 %v1771, %v2201
    %v2238 = vadd.f32 %v1772, %v2206
    %v2239 = vadd.f32 %v1773, %v2209
    %v2240 = vadd.f32 %v1774, %v2214
    %v2241 = vadd.f32 %v1775, %v2217
    %v2242 = vadd.f32 %v1776, %v2222
    %v2243 = vadd.f32 %v1777, %v2225
    %v2244 = vld [vmem:[%s204] sm:$0xe]
    %v2245 = vld [vmem:[%s204 + $0x8] sm:$0xe]
    %v2246 = vld [vmem:[%s204 + $0x10] sm:$0xe]
    %v2247 = vld [vmem:[%s204 + $0x18] sm:$0xe]
    %v2248 = vld [vmem:[%s204 + $0x20] sm:$0xe]
    %v2249 = vld [vmem:[%s204 + $0x28] sm:$0xe]
    %v2250 = vld [vmem:[%s204 + $0x30] sm:$0xe]
    %v2251 = vld [vmem:[%s204 + $0x38] sm:$0xe]
    %v2252 = vld [vmem:[%s204 + $0x50] sm:$0xe]
    %v2253 = vld [vmem:[%s204 + $0x58] sm:$0xe]
    %v2254 = vld [vmem:[%s204 + $0x60] sm:$0xe]
    %v2255 = vld [vmem:[%s204 + $0x68] sm:$0xe]
    %v2256 = vld [vmem:[%s204 + $0x70] sm:$0xe]
    %v2257 = vld [vmem:[%s204 + $0x78] sm:$0xe]
    %v2258 = vld [vmem:[%s204 + $0x80] sm:$0xe]
    %v2259 = vld [vmem:[%s204 + $0x88] sm:$0xe]
    %v2292 = vrot.slane %v2244, 5
    %v2293 = vrot.slane %v2292, 4
    %v2294 = vrot.slane %v1779, 5
    %v2295 = vsel %vm1261, %v2293, %v2294
    %v2296 = vrot.slane %v2245, 5
    %v2297 = vrot.slane %v2296, 4
    %v2298 = vrot.slane %v1781, 5
    %v2299 = vsel %vm1261, %v2297, %v2298
    %v2300 = vrot.slane %v2246, 5
    %v2301 = vrot.slane %v2300, 4
    %v2302 = vrot.slane %v1783, 5
    %v2303 = vsel %vm1261, %v2301, %v2302
    %v2304 = vrot.slane %v2247, 5
    %v2305 = vrot.slane %v2304, 4
    %v2306 = vrot.slane %v1785, 5
    %v2307 = vsel %vm1261, %v2305, %v2306
    %v2308 = vrot.slane %v2248, 5
    %v2309 = vrot.slane %v2308, 4
    %v2310 = vrot.slane %v1787, 5
    %v2311 = vsel %vm1261, %v2309, %v2310
    %v2312 = vrot.slane %v2249, 5
    %v2313 = vrot.slane %v2312, 4
    %v2314 = vrot.slane %v1789, 5
    %v2315 = vsel %vm1261, %v2313, %v2314
    %v2316 = vrot.slane %v2250, 5
    %v2317 = vrot.slane %v2316, 4
    %v2318 = vrot.slane %v1791, 5
    %v2319 = vsel %vm1261, %v2317, %v2318
    %v2320 = vrot.slane %v2251, 5
    %v2321 = vrot.slane %v2320, 4
    %v2322 = vrot.slane %v1793, 5
    %v2323 = vsel %vm1261, %v2321, %v2322
    %v2324 = vrot.slane %v2252, 5
    %v2325 = vrot.slane %v2324, 4
    %v2326 = vrot.slane %v1795, 5
    %v2327 = vsel %vm1261, %v2325, %v2326
    %v2328 = vrot.slane %v2253, 5
    %v2329 = vrot.slane %v2328, 4
    %v2330 = vrot.slane %v1797, 5
    %v2331 = vsel %vm1261, %v2329, %v2330
    %v2332 = vrot.slane %v2254, 5
    %v2333 = vrot.slane %v2332, 4
    %v2334 = vrot.slane %v1799, 5
    %v2335 = vsel %vm1261, %v2333, %v2334
    %v2336 = vrot.slane %v2255, 5
    %v2337 = vrot.slane %v2336, 4
    %v2338 = vrot.slane %v1801, 5
    %v2339 = vsel %vm1261, %v2337, %v2338
    %v2340 = vrot.slane %v2256, 5
    %v2341 = vrot.slane %v2340, 4
    %v2342 = vrot.slane %v1803, 5
    %v2343 = vsel %vm1261, %v2341, %v2342
    %v2344 = vrot.slane %v2257, 5
    %v2345 = vrot.slane %v2344, 4
    %v2346 = vrot.slane %v1805, 5
    %v2347 = vsel %vm1261, %v2345, %v2346
    %v2348 = vrot.slane %v2258, 5
    %v2349 = vrot.slane %v2348, 4
    %v2350 = vrot.slane %v1807, 5
    %v2351 = vsel %vm1261, %v2349, %v2350
    %v2352 = vrot.slane %v2259, 5
    %v2353 = vrot.slane %v2352, 4
    %v2354 = vrot.slane %v1809, 5
    %v2355 = vsel %vm1261, %v2353, %v2354
    %s2356 = scalar_lea.vmem %s1, 320
    %v2357 = vld [vmem:[%s2356] sm:$0xf]
    %v2358 = vld [vmem:[%s2356 + $0x4] sm:$0xf]
    %v2359 = vld [vmem:[%s2356 + $0x8] sm:$0xf]
    %v2360 = vld [vmem:[%s2356 + $0xc] sm:$0xf]
    %v2361 = vld [vmem:[%s2356 + $0x10] sm:$0xf]
    %v2362 = vld [vmem:[%s2356 + $0x14] sm:$0xf]
    %v2363 = vld [vmem:[%s2356 + $0x18] sm:$0xf]
    %v2364 = vld [vmem:[%s2356 + $0x1c] sm:$0xf]
    %v2365 = vld [vmem:[%s2356 + $0x20] sm:$0xf]
    %v2366 = vld [vmem:[%s2356 + $0x24] sm:$0xf]
    %v2367 = vld [vmem:[%s2356 + $0x28] sm:$0xf]
    %v2368 = vld [vmem:[%s2356 + $0x2c] sm:$0xf]
    %v2369 = vld [vmem:[%s2356 + $0x30] sm:$0xf]
    %v2370 = vld [vmem:[%s2356 + $0x34] sm:$0xf]
    %v2371 = vld [vmem:[%s2356 + $0x38] sm:$0xf]
    %v2372 = vld [vmem:[%s2356 + $0x3c] sm:$0xf]
    %v2373 = vunpack.c.l.b16 %v2295
    %v2374 = vunpack.c.l.b16 %v2299
    %v2375 = vunpack.c.l.b16 %v2303
    %v2376 = vunpack.c.l.b16 %v2307
    %v2377 = vunpack.c.l.b16 %v2311
    %v2378 = vunpack.c.l.b16 %v2315
    %v2379 = vunpack.c.l.b16 %v2319
    %v2380 = vunpack.c.l.b16 %v2323
    %v2381 = vunpack.c.l.b16 %v2327
    %v2382 = vunpack.c.l.b16 %v2331
    %v2383 = vunpack.c.l.b16 %v2335
    %v2384 = vunpack.c.l.b16 %v2339
    %v2385 = vunpack.c.l.b16 %v2343
    %v2386 = vunpack.c.l.b16 %v2347
    %v2387 = vunpack.c.l.b16 %v2351
    %v2388 = vunpack.c.l.b16 %v2355
    %v2389 = vpack.c.b16 %v2374, %v2373
    %v2390 = vpack.c.b16 %v2376, %v2375
    %v2391 = vpack.c.b16 %v2378, %v2377
    %v2392 = vpack.c.b16 %v2380, %v2379
    %v2393 = vpack.c.b16 %v2382, %v2381
    %v2394 = vpack.c.b16 %v2384, %v2383
    %v2395 = vpack.c.b16 %v2386, %v2385
    %v2396 = vpack.c.b16 %v2388, %v2387
    %v2421 = vunpack.c.l.b16 %v2357
    %v2422 = vunpack.c.l.b16 %v2358
    %v2423 = vunpack.c.l.b16 %v2359
    %v2424 = vunpack.c.l.b16 %v2360
    %v2425 = vunpack.c.l.b16 %v2361
    %v2426 = vunpack.c.l.b16 %v2362
    %v2427 = vunpack.c.l.b16 %v2363
    %v2428 = vunpack.c.l.b16 %v2364
    %v2429 = vunpack.c.l.b16 %v2365
    %v2430 = vunpack.c.l.b16 %v2366
    %v2431 = vunpack.c.l.b16 %v2367
    %v2432 = vunpack.c.l.b16 %v2368
    %v2433 = vunpack.c.l.b16 %v2369
    %v2434 = vunpack.c.l.b16 %v2370
    %v2435 = vunpack.c.l.b16 %v2371
    %v2436 = vunpack.c.l.b16 %v2372
    %v2437 = vpack.c.b16 %v2422, %v2421
    %v2438 = vpack.c.b16 %v2424, %v2423
    %v2439 = vpack.c.b16 %v2426, %v2425
    %v2440 = vpack.c.b16 %v2428, %v2427
    %v2441 = vpack.c.b16 %v2430, %v2429
    %v2442 = vpack.c.b16 %v2432, %v2431
    %v2443 = vpack.c.b16 %v2434, %v2433
    %v2444 = vpack.c.b16 %v2436, %v2435
    %2453 = vmatprep.subr.bf16.mxu0 0
    %2454 = vmatpush1.bf16.msra.mxu0 %v2444
    %2455 = vmatprep.subr.bf16.mxu0 0
    %2456 = vmatpush1.bf16.msra.mxu0 %v2443
    %2457 = vmatprep.subr.bf16.mxu0 0
    %2458 = vmatpush1.bf16.msra.mxu0 %v2442
    %2459 = vmatprep.subr.bf16.mxu0 0
    %2460 = vmatpush1.bf16.msra.mxu0 %v2441
    %2461 = vmatprep.subr.bf16.mxu0 0
    %2462 = vmatpush1.bf16.msra.mxu0 %v2440
    %2463 = vmatprep.subr.bf16.mxu0 0
    %2464 = vmatpush1.bf16.msra.mxu0 %v2439
    %2465 = vmatprep.subr.bf16.mxu0 0
    %2466 = vmatpush1.bf16.msra.mxu0 %v2438
    %2467 = vmatprep.subr.bf16.mxu0 0
    %2468 = vmatpush1.bf16.msra.mxu0 %v2437
    %2469 = vmatprep.subr.bf16.mxu0 0
    %2470 = vmatpush2.bf16.msra.mxu0 0
    %2471 = vmatprep.subr.bf16.mxu0 0
    %2472 = vmatpush2.bf16.msra.mxu0 0
    %2473 = vmatprep.subr.bf16.mxu0 0
    %2474 = vmatpush2.bf16.msra.mxu0 0
    %2475 = vmatprep.subr.bf16.mxu0 0
    %2476 = vmatpush2.bf16.msra.mxu0 0
    %2477 = vmatprep.subr.bf16.mxu0 0
    %2478 = vmatpush2.bf16.msra.mxu0 0
    %2479 = vmatprep.subr.bf16.mxu0 0
    %2480 = vmatpush2.bf16.msra.mxu0 0
    %2481 = vmatprep.subr.bf16.mxu0 0
    %2482 = vmatpush2.bf16.msra.mxu0 0
    %2483 = vmatprep.subr.bf16.mxu0 0
    %2484 = vmatpush2.bf16.msra.mxu0 0
    %2485 = vmatprep.mubr.bf16.mxu0 0
    %2486 = vmatmul.mubr.bf16.gmra.mxu0 %v2389
    %v2487 = vpop.f32.mrf.mxu0
    %v2488 = vadd.f32 0.0, %v2487
    %v2489 = vpop.f32.mrf.mxu0
    %v2490 = vpop.f32.mrf.mxu0
    %v2491 = vadd.f32 0.0, %v2490
    %v2492 = vpop.f32.mrf.mxu0
    %2493 = vmatprep.mubr.bf16.mxu0 0
    %2494 = vmatmul.mubr.bf16.gmra.mxu0 %v2390
    %v2495 = vpop.f32.mrf.mxu0
    %v2496 = vadd.f32 0.0, %v2495
    %v2497 = vpop.f32.mrf.mxu0
    %v2498 = vpop.f32.mrf.mxu0
    %v2499 = vadd.f32 0.0, %v2498
    %v2500 = vpop.f32.mrf.mxu0
    %2501 = vmatprep.mubr.bf16.mxu0 0
    %2502 = vmatmul.mubr.bf16.gmra.mxu0 %v2391
    %v2503 = vpop.f32.mrf.mxu0
    %v2504 = vadd.f32 0.0, %v2503
    %v2505 = vpop.f32.mrf.mxu0
    %v2506 = vpop.f32.mrf.mxu0
    %v2507 = vadd.f32 0.0, %v2506
    %v2508 = vpop.f32.mrf.mxu0
    %2509 = vmatprep.mubr.bf16.mxu0 0
    %2510 = vmatmul.mubr.bf16.gmra.mxu0 %v2392
    %v2511 = vpop.f32.mrf.mxu0
    %v2512 = vadd.f32 0.0, %v2511
    %v2513 = vpop.f32.mrf.mxu0
    %v2514 = vpop.f32.mrf.mxu0
    %v2515 = vadd.f32 0.0, %v2514
    %v2516 = vpop.f32.mrf.mxu0
    %2517 = vmatprep.mubr.bf16.mxu0 0
    %2518 = vmatmul.mubr.bf16.gmra.mxu0 %v2393
    %v2519 = vpop.f32.mrf.mxu0
    %v2520 = vadd.f32 0.0, %v2519
    %v2521 = vpop.f32.mrf.mxu0
    %v2522 = vpop.f32.mrf.mxu0
    %v2523 = vadd.f32 0.0, %v2522
    %v2524 = vpop.f32.mrf.mxu0
    %2525 = vmatprep.mubr.bf16.mxu0 0
    %2526 = vmatmul.mubr.bf16.gmra.mxu0 %v2394
    %v2527 = vpop.f32.mrf.mxu0
    %v2528 = vadd.f32 0.0, %v2527
    %v2529 = vpop.f32.mrf.mxu0
    %v2530 = vpop.f32.mrf.mxu0
    %v2531 = vadd.f32 0.0, %v2530
    %v2532 = vpop.f32.mrf.mxu0
    %2533 = vmatprep.mubr.bf16.mxu0 0
    %2534 = vmatmul.mubr.bf16.gmra.mxu0 %v2395
    %v2535 = vpop.f32.mrf.mxu0
    %v2536 = vadd.f32 0.0, %v2535
    %v2537 = vpop.f32.mrf.mxu0
    %v2538 = vpop.f32.mrf.mxu0
    %v2539 = vadd.f32 0.0, %v2538
    %v2540 = vpop.f32.mrf.mxu0
    %2541 = vmatprep.mubr.bf16.mxu0 0
    %2542 = vmatmul.mubr.bf16.gmra.mxu0 %v2396
    %v2543 = vpop.f32.mrf.mxu0
    %v2544 = vadd.f32 0.0, %v2543
    %v2545 = vpop.f32.mrf.mxu0
    %v2546 = vpop.f32.mrf.mxu0
    %v2547 = vadd.f32 0.0, %v2546
    %v2548 = vpop.f32.mrf.mxu0
    %2549 = vdwg.mxu0
    %v2550 = vadd.f32 %v2228, %v2488
    %v2551 = vadd.f32 %v2229, %v2491
    %v2552 = vadd.f32 %v2230, %v2496
    %v2553 = vadd.f32 %v2231, %v2499
    %v2554 = vadd.f32 %v2232, %v2504
    %v2555 = vadd.f32 %v2233, %v2507
    %v2556 = vadd.f32 %v2234, %v2512
    %v2557 = vadd.f32 %v2235, %v2515
    %v2558 = vadd.f32 %v2236, %v2520
    %v2559 = vadd.f32 %v2237, %v2523
    %v2560 = vadd.f32 %v2238, %v2528
    %v2561 = vadd.f32 %v2239, %v2531
    %v2562 = vadd.f32 %v2240, %v2536
    %v2563 = vadd.f32 %v2241, %v2539
    %v2564 = vadd.f32 %v2242, %v2544
    %v2565 = vadd.f32 %v2243, %v2547
    %s2566 = scalar_lea.vmem [#allocation2], 16
    %v2567 = vld [vmem:[%s2566] sm:$0xf]
    %v2568 = vld [vmem:[%s2566 + $0x8] sm:$0xf]
    %v2569 = vld [vmem:[%s2566 + $0x10] sm:$0xf]
    %v2570 = vld [vmem:[%s2566 + $0x18] sm:$0xf]
    %v2571 = vld [vmem:[%s2566 + $0x20] sm:$0xf]
    %v2572 = vld [vmem:[%s2566 + $0x28] sm:$0xf]
    %v2573 = vld [vmem:[%s2566 + $0x30] sm:$0xf]
    %v2574 = vld [vmem:[%s2566 + $0x38] sm:$0xf]
    %v2575 = vld [vmem:[%s2566 + $0x50] sm:$0xf]
    %v2576 = vld [vmem:[%s2566 + $0x58] sm:$0xf]
    %v2577 = vld [vmem:[%s2566 + $0x60] sm:$0xf]
    %v2578 = vld [vmem:[%s2566 + $0x68] sm:$0xf]
    %v2579 = vld [vmem:[%s2566 + $0x70] sm:$0xf]
    %v2580 = vld [vmem:[%s2566 + $0x78] sm:$0xf]
    %v2581 = vld [vmem:[%s2566 + $0x80] sm:$0xf]
    %v2582 = vld [vmem:[%s2566 + $0x88] sm:$0xf]
    %s2583 = scalar_lea.vmem %s1, 384
    %v2584 = vld [vmem:[%s2583] sm:$0xf]
    %v2585 = vld [vmem:[%s2583 + $0x4] sm:$0xf]
    %v2586 = vld [vmem:[%s2583 + $0x8] sm:$0xf]
    %v2587 = vld [vmem:[%s2583 + $0xc] sm:$0xf]
    %v2588 = vld [vmem:[%s2583 + $0x10] sm:$0xf]
    %v2589 = vld [vmem:[%s2583 + $0x14] sm:$0xf]
    %v2590 = vld [vmem:[%s2583 + $0x18] sm:$0xf]
    %v2591 = vld [vmem:[%s2583 + $0x1c] sm:$0xf]
    %v2592 = vld [vmem:[%s2583 + $0x20] sm:$0xf]
    %v2593 = vld [vmem:[%s2583 + $0x24] sm:$0xf]
    %v2594 = vld [vmem:[%s2583 + $0x28] sm:$0xf]
    %v2595 = vld [vmem:[%s2583 + $0x2c] sm:$0xf]
    %v2596 = vld [vmem:[%s2583 + $0x30] sm:$0xf]
    %v2597 = vld [vmem:[%s2583 + $0x34] sm:$0xf]
    %v2598 = vld [vmem:[%s2583 + $0x38] sm:$0xf]
    %v2599 = vld [vmem:[%s2583 + $0x3c] sm:$0xf]
    %v2616 = vunpack.c.l.b16 %v2567
    %v2617 = vunpack.c.l.b16 %v2568
    %v2618 = vunpack.c.l.b16 %v2569
    %v2619 = vunpack.c.l.b16 %v2570
    %v2620 = vunpack.c.l.b16 %v2571
    %v2621 = vunpack.c.l.b16 %v2572
    %v2622 = vunpack.c.l.b16 %v2573
    %v2623 = vunpack.c.l.b16 %v2574
    %v2624 = vunpack.c.l.b16 %v2575
    %v2625 = vunpack.c.l.b16 %v2576
    %v2626 = vunpack.c.l.b16 %v2577
    %v2627 = vunpack.c.l.b16 %v2578
    %v2628 = vunpack.c.l.b16 %v2579
    %v2629 = vunpack.c.l.b16 %v2580
    %v2630 = vunpack.c.l.b16 %v2581
    %v2631 = vunpack.c.l.b16 %v2582
    %v2632 = vpack.c.b16 %v2617, %v2616
    %v2633 = vpack.c.b16 %v2619, %v2618
    %v2634 = vpack.c.b16 %v2621, %v2620
    %v2635 = vpack.c.b16 %v2623, %v2622
    %v2636 = vpack.c.b16 %v2625, %v2624
    %v2637 = vpack.c.b16 %v2627, %v2626
    %v2638 = vpack.c.b16 %v2629, %v2628
    %v2639 = vpack.c.b16 %v2631, %v2630
    %v2664 = vunpack.c.l.b16 %v2584
    %v2665 = vunpack.c.l.b16 %v2585
    %v2666 = vunpack.c.l.b16 %v2586
    %v2667 = vunpack.c.l.b16 %v2587
    %v2668 = vunpack.c.l.b16 %v2588
    %v2669 = vunpack.c.l.b16 %v2589
    %v2670 = vunpack.c.l.b16 %v2590
    %v2671 = vunpack.c.l.b16 %v2591
    %v2672 = vunpack.c.l.b16 %v2592
    %v2673 = vunpack.c.l.b16 %v2593
    %v2674 = vunpack.c.l.b16 %v2594
    %v2675 = vunpack.c.l.b16 %v2595
    %v2676 = vunpack.c.l.b16 %v2596
    %v2677 = vunpack.c.l.b16 %v2597
    %v2678 = vunpack.c.l.b16 %v2598
    %v2679 = vunpack.c.l.b16 %v2599
    %v2680 = vpack.c.b16 %v2665, %v2664
    %v2681 = vpack.c.b16 %v2667, %v2666
    %v2682 = vpack.c.b16 %v2669, %v2668
    %v2683 = vpack.c.b16 %v2671, %v2670
    %v2684 = vpack.c.b16 %v2673, %v2672
    %v2685 = vpack.c.b16 %v2675, %v2674
    %v2686 = vpack.c.b16 %v2677, %v2676
    %v2687 = vpack.c.b16 %v2679, %v2678
    %2696 = vmatprep.subr.bf16.mxu0 0
    %2697 = vmatpush1.bf16.msra.mxu0 %v2687
    %2698 = vmatprep.subr.bf16.mxu0 0
    %2699 = vmatpush1.bf16.msra.mxu0 %v2686
    %2700 = vmatprep.subr.bf16.mxu0 0
    %2701 = vmatpush1.bf16.msra.mxu0 %v2685
    %2702 = vmatprep.subr.bf16.mxu0 0
    %2703 = vmatpush1.bf16.msra.mxu0 %v2684
    %2704 = vmatprep.subr.bf16.mxu0 0
    %2705 = vmatpush1.bf16.msra.mxu0 %v2683
    %2706 = vmatprep.subr.bf16.mxu0 0
    %2707 = vmatpush1.bf16.msra.mxu0 %v2682
    %2708 = vmatprep.subr.bf16.mxu0 0
    %2709 = vmatpush1.bf16.msra.mxu0 %v2681
    %2710 = vmatprep.subr.bf16.mxu0 0
    %2711 = vmatpush1.bf16.msra.mxu0 %v2680
    %2712 = vmatprep.subr.bf16.mxu0 0
    %2713 = vmatpush2.bf16.msra.mxu0 0
    %2714 = vmatprep.subr.bf16.mxu0 0
    %2715 = vmatpush2.bf16.msra.mxu0 0
    %2716 = vmatprep.subr.bf16.mxu0 0
    %2717 = vmatpush2.bf16.msra.mxu0 0
    %2718 = vmatprep.subr.bf16.mxu0 0
    %2719 = vmatpush2.bf16.msra.mxu0 0
    %2720 = vmatprep.subr.bf16.mxu0 0
    %2721 = vmatpush2.bf16.msra.mxu0 0
    %2722 = vmatprep.subr.bf16.mxu0 0
    %2723 = vmatpush2.bf16.msra.mxu0 0
    %2724 = vmatprep.subr.bf16.mxu0 0
    %2725 = vmatpush2.bf16.msra.mxu0 0
    %2726 = vmatprep.subr.bf16.mxu0 0
    %2727 = vmatpush2.bf16.msra.mxu0 0
    %2728 = vmatprep.mubr.bf16.mxu0 0
    %2729 = vmatmul.mubr.bf16.gmra.mxu0 %v2632
    %v2730 = vpop.f32.mrf.mxu0
    %v2731 = vadd.f32 0.0, %v2730
    %v2732 = vpop.f32.mrf.mxu0
    %v2733 = vpop.f32.mrf.mxu0
    %v2734 = vadd.f32 0.0, %v2733
    %v2735 = vpop.f32.mrf.mxu0
    %2736 = vmatprep.mubr.bf16.mxu0 0
    %2737 = vmatmul.mubr.bf16.gmra.mxu0 %v2633
    %v2738 = vpop.f32.mrf.mxu0
    %v2739 = vadd.f32 0.0, %v2738
    %v2740 = vpop.f32.mrf.mxu0
    %v2741 = vpop.f32.mrf.mxu0
    %v2742 = vadd.f32 0.0, %v2741
    %v2743 = vpop.f32.mrf.mxu0
    %2744 = vmatprep.mubr.bf16.mxu0 0
    %2745 = vmatmul.mubr.bf16.gmra.mxu0 %v2634
    %v2746 = vpop.f32.mrf.mxu0
    %v2747 = vadd.f32 0.0, %v2746
    %v2748 = vpop.f32.mrf.mxu0
    %v2749 = vpop.f32.mrf.mxu0
    %v2750 = vadd.f32 0.0, %v2749
    %v2751 = vpop.f32.mrf.mxu0
    %2752 = vmatprep.mubr.bf16.mxu0 0
    %2753 = vmatmul.mubr.bf16.gmra.mxu0 %v2635
    %v2754 = vpop.f32.mrf.mxu0
    %v2755 = vadd.f32 0.0, %v2754
    %v2756 = vpop.f32.mrf.mxu0
    %v2757 = vpop.f32.mrf.mxu0
    %v2758 = vadd.f32 0.0, %v2757
    %v2759 = vpop.f32.mrf.mxu0
    %2760 = vmatprep.mubr.bf16.mxu0 0
    %2761 = vmatmul.mubr.bf16.gmra.mxu0 %v2636
    %v2762 = vpop.f32.mrf.mxu0
    %v2763 = vadd.f32 0.0, %v2762
    %v2764 = vpop.f32.mrf.mxu0
    %v2765 = vpop.f32.mrf.mxu0
    %v2766 = vadd.f32 0.0, %v2765
    %v2767 = vpop.f32.mrf.mxu0
    %2768 = vmatprep.mubr.bf16.mxu0 0
    %2769 = vmatmul.mubr.bf16.gmra.mxu0 %v2637
    %v2770 = vpop.f32.mrf.mxu0
    %v2771 = vadd.f32 0.0, %v2770
    %v2772 = vpop.f32.mrf.mxu0
    %v2773 = vpop.f32.mrf.mxu0
    %v2774 = vadd.f32 0.0, %v2773
    %v2775 = vpop.f32.mrf.mxu0
    %2776 = vmatprep.mubr.bf16.mxu0 0
    %2777 = vmatmul.mubr.bf16.gmra.mxu0 %v2638
    %v2778 = vpop.f32.mrf.mxu0
    %v2779 = vadd.f32 0.0, %v2778
    %v2780 = vpop.f32.mrf.mxu0
    %v2781 = vpop.f32.mrf.mxu0
    %v2782 = vadd.f32 0.0, %v2781
    %v2783 = vpop.f32.mrf.mxu0
    %2784 = vmatprep.mubr.bf16.mxu0 0
    %2785 = vmatmul.mubr.bf16.gmra.mxu0 %v2639
    %v2786 = vpop.f32.mrf.mxu0
    %v2787 = vadd.f32 0.0, %v2786
    %v2788 = vpop.f32.mrf.mxu0
    %v2789 = vpop.f32.mrf.mxu0
    %v2790 = vadd.f32 0.0, %v2789
    %v2791 = vpop.f32.mrf.mxu0
    %2792 = vdwg.mxu0
    %v2793 = vadd.f32 %v2550, %v2731
    %v2794 = vadd.f32 %v2551, %v2734
    %v2795 = vadd.f32 %v2552, %v2739
    %v2796 = vadd.f32 %v2553, %v2742
    %v2797 = vadd.f32 %v2554, %v2747
    %v2798 = vadd.f32 %v2555, %v2750
    %v2799 = vadd.f32 %v2556, %v2755
    %v2800 = vadd.f32 %v2557, %v2758
    %v2801 = vadd.f32 %v2558, %v2763
    %v2802 = vadd.f32 %v2559, %v2766
    %v2803 = vadd.f32 %v2560, %v2771
    %v2804 = vadd.f32 %v2561, %v2774
    %v2805 = vadd.f32 %v2562, %v2779
    %v2806 = vadd.f32 %v2563, %v2782
    %v2807 = vadd.f32 %v2564, %v2787
    %v2808 = vadd.f32 %v2565, %v2790
    %v2809 = vld [vmem:[%s2566] sm:$0xf]
    %v2810 = vld [vmem:[%s2566 + $0x4] sm:$0x1]
    %v2811 = vld [vmem:[%s2566 + $0x8] sm:$0xf]
    %v2812 = vld [vmem:[%s2566 + $0xc] sm:$0x1]
    %v2813 = vld [vmem:[%s2566 + $0x10] sm:$0xf]
    %v2814 = vld [vmem:[%s2566 + $0x14] sm:$0x1]
    %v2815 = vld [vmem:[%s2566 + $0x18] sm:$0xf]
    %v2816 = vld [vmem:[%s2566 + $0x1c] sm:$0x1]
    %v2817 = vld [vmem:[%s2566 + $0x20] sm:$0xf]
    %v2818 = vld [vmem:[%s2566 + $0x24] sm:$0x1]
    %v2819 = vld [vmem:[%s2566 + $0x28] sm:$0xf]
    %v2820 = vld [vmem:[%s2566 + $0x2c] sm:$0x1]
    %v2821 = vld [vmem:[%s2566 + $0x30] sm:$0xf]
    %v2822 = vld [vmem:[%s2566 + $0x34] sm:$0x1]
    %v2823 = vld [vmem:[%s2566 + $0x38] sm:$0xf]
    %v2824 = vld [vmem:[%s2566 + $0x3c] sm:$0x1]
    %v2825 = vld [vmem:[%s2566 + $0x50] sm:$0xf]
    %v2826 = vld [vmem:[%s2566 + $0x54] sm:$0x1]
    %v2827 = vld [vmem:[%s2566 + $0x58] sm:$0xf]
    %v2828 = vld [vmem:[%s2566 + $0x5c] sm:$0x1]
    %v2829 = vld [vmem:[%s2566 + $0x60] sm:$0xf]
    %v2830 = vld [vmem:[%s2566 + $0x64] sm:$0x1]
    %v2831 = vld [vmem:[%s2566 + $0x68] sm:$0xf]
    %v2832 = vld [vmem:[%s2566 + $0x6c] sm:$0x1]
    %v2833 = vld [vmem:[%s2566 + $0x70] sm:$0xf]
    %v2834 = vld [vmem:[%s2566 + $0x74] sm:$0x1]
    %v2835 = vld [vmem:[%s2566 + $0x78] sm:$0xf]
    %v2836 = vld [vmem:[%s2566 + $0x7c] sm:$0x1]
    %v2837 = vld [vmem:[%s2566 + $0x80] sm:$0xf]
    %v2838 = vld [vmem:[%s2566 + $0x84] sm:$0x1]
    %v2839 = vld [vmem:[%s2566 + $0x88] sm:$0xf]
    %v2840 = vld [vmem:[%s2566 + $0x8c] sm:$0x1]
    %v2842 = vshrl.u32 %v2809, 16
    %v2844 = vrot.slane %v2842, 4
    %v2845 = vshll.u32 %v2809, 16
    %v2847 = vrot.slane %v2845, 5
    %v2848 = vor.u32 %v2844, %v2847
    %v2849 = vrot.slane %v2848, 4
    %v2851 = vshll.u32 %v2810, 16
    %v2853 = vrot.slane %v2851, 5
    %v2854 = vsel %vm599, %v2849, %v2853
    %v2856 = vshrl.u32 %v2811, 16
    %v2858 = vrot.slane %v2856, 4
    %v2859 = vshll.u32 %v2811, 16
    %v2861 = vrot.slane %v2859, 5
    %v2862 = vor.u32 %v2858, %v2861
    %v2863 = vrot.slane %v2862, 4
    %v2865 = vshll.u32 %v2812, 16
    %v2867 = vrot.slane %v2865, 5
    %v2868 = vsel %vm599, %v2863, %v2867
    %v2870 = vshrl.u32 %v2813, 16
    %v2872 = vrot.slane %v2870, 4
    %v2873 = vshll.u32 %v2813, 16
    %v2875 = vrot.slane %v2873, 5
    %v2876 = vor.u32 %v2872, %v2875
    %v2877 = vrot.slane %v2876, 4
    %v2879 = vshll.u32 %v2814, 16
    %v2881 = vrot.slane %v2879, 5
    %v2882 = vsel %vm599, %v2877, %v2881
    %v2884 = vshrl.u32 %v2815, 16
    %v2886 = vrot.slane %v2884, 4
    %v2887 = vshll.u32 %v2815, 16
    %v2889 = vrot.slane %v2887, 5
    %v2890 = vor.u32 %v2886, %v2889
    %v2891 = vrot.slane %v2890, 4
    %v2893 = vshll.u32 %v2816, 16
    %v2895 = vrot.slane %v2893, 5
    %v2896 = vsel %vm599, %v2891, %v2895
    %v2898 = vshrl.u32 %v2817, 16
    %v2900 = vrot.slane %v2898, 4
    %v2901 = vshll.u32 %v2817, 16
    %v2903 = vrot.slane %v2901, 5
    %v2904 = vor.u32 %v2900, %v2903
    %v2905 = vrot.slane %v2904, 4
    %v2907 = vshll.u32 %v2818, 16
    %v2909 = vrot.slane %v2907, 5
    %v2910 = vsel %vm599, %v2905, %v2909
    %v2912 = vshrl.u32 %v2819, 16
    %v2914 = vrot.slane %v2912, 4
    %v2915 = vshll.u32 %v2819, 16
    %v2917 = vrot.slane %v2915, 5
    %v2918 = vor.u32 %v2914, %v2917
    %v2919 = vrot.slane %v2918, 4
    %v2921 = vshll.u32 %v2820, 16
    %v2923 = vrot.slane %v2921, 5
    %v2924 = vsel %vm599, %v2919, %v2923
    %v2926 = vshrl.u32 %v2821, 16
    %v2928 = vrot.slane %v2926, 4
    %v2929 = vshll.u32 %v2821, 16
    %v2931 = vrot.slane %v2929, 5
    %v2932 = vor.u32 %v2928, %v2931
    %v2933 = vrot.slane %v2932, 4
    %v2935 = vshll.u32 %v2822, 16
    %v2937 = vrot.slane %v2935, 5
    %v2938 = vsel %vm599, %v2933, %v2937
    %v2940 = vshrl.u32 %v2823, 16
    %v2942 = vrot.slane %v2940, 4
    %v2943 = vshll.u32 %v2823, 16
    %v2945 = vrot.slane %v2943, 5
    %v2946 = vor.u32 %v2942, %v2945
    %v2947 = vrot.slane %v2946, 4
    %v2949 = vshll.u32 %v2824, 16
    %v2951 = vrot.slane %v2949, 5
    %v2952 = vsel %vm599, %v2947, %v2951
    %v2954 = vshrl.u32 %v2825, 16
    %v2956 = vrot.slane %v2954, 4
    %v2957 = vshll.u32 %v2825, 16
    %v2959 = vrot.slane %v2957, 5
    %v2960 = vor.u32 %v2956, %v2959
    %v2961 = vrot.slane %v2960, 4
    %v2963 = vshll.u32 %v2826, 16
    %v2965 = vrot.slane %v2963, 5
    %v2966 = vsel %vm599, %v2961, %v2965
    %v2968 = vshrl.u32 %v2827, 16
    %v2970 = vrot.slane %v2968, 4
    %v2971 = vshll.u32 %v2827, 16
    %v2973 = vrot.slane %v2971, 5
    %v2974 = vor.u32 %v2970, %v2973
    %v2975 = vrot.slane %v2974, 4
    %v2977 = vshll.u32 %v2828, 16
    %v2979 = vrot.slane %v2977, 5
    %v2980 = vsel %vm599, %v2975, %v2979
    %v2982 = vshrl.u32 %v2829, 16
    %v2984 = vrot.slane %v2982, 4
    %v2985 = vshll.u32 %v2829, 16
    %v2987 = vrot.slane %v2985, 5
    %v2988 = vor.u32 %v2984, %v2987
    %v2989 = vrot.slane %v2988, 4
    %v2991 = vshll.u32 %v2830, 16
    %v2993 = vrot.slane %v2991, 5
    %v2994 = vsel %vm599, %v2989, %v2993
    %v2996 = vshrl.u32 %v2831, 16
    %v2998 = vrot.slane %v2996, 4
    %v2999 = vshll.u32 %v2831, 16
    %v3001 = vrot.slane %v2999, 5
    %v3002 = vor.u32 %v2998, %v3001
    %v3003 = vrot.slane %v3002, 4
    %v3005 = vshll.u32 %v2832, 16
    %v3007 = vrot.slane %v3005, 5
    %v3008 = vsel %vm599, %v3003, %v3007
    %v3010 = vshrl.u32 %v2833, 16
    %v3012 = vrot.slane %v3010, 4
    %v3013 = vshll.u32 %v2833, 16
    %v3015 = vrot.slane %v3013, 5
    %v3016 = vor.u32 %v3012, %v3015
    %v3017 = vrot.slane %v3016, 4
    %v3019 = vshll.u32 %v2834, 16
    %v3021 = vrot.slane %v3019, 5
    %v3022 = vsel %vm599, %v3017, %v3021
    %v3024 = vshrl.u32 %v2835, 16
    %v3026 = vrot.slane %v3024, 4
    %v3027 = vshll.u32 %v2835, 16
    %v3029 = vrot.slane %v3027, 5
    %v3030 = vor.u32 %v3026, %v3029
    %v3031 = vrot.slane %v3030, 4
    %v3033 = vshll.u32 %v2836, 16
    %v3035 = vrot.slane %v3033, 5
    %v3036 = vsel %vm599, %v3031, %v3035
    %v3038 = vshrl.u32 %v2837, 16
    %v3040 = vrot.slane %v3038, 4
    %v3041 = vshll.u32 %v2837, 16
    %v3043 = vrot.slane %v3041, 5
    %v3044 = vor.u32 %v3040, %v3043
    %v3045 = vrot.slane %v3044, 4
    %v3047 = vshll.u32 %v2838, 16
    %v3049 = vrot.slane %v3047, 5
    %v3050 = vsel %vm599, %v3045, %v3049
    %v3052 = vshrl.u32 %v2839, 16
    %v3054 = vrot.slane %v3052, 4
    %v3055 = vshll.u32 %v2839, 16
    %v3057 = vrot.slane %v3055, 5
    %v3058 = vor.u32 %v3054, %v3057
    %v3059 = vrot.slane %v3058, 4
    %v3061 = vshll.u32 %v2840, 16
    %v3063 = vrot.slane %v3061, 5
    %v3064 = vsel %vm599, %v3059, %v3063
    %s3065 = scalar_lea.vmem %s1, 448
    %v3066 = vld [vmem:[%s3065] sm:$0xf]
    %v3067 = vld [vmem:[%s3065 + $0x4] sm:$0xf]
    %v3068 = vld [vmem:[%s3065 + $0x8] sm:$0xf]
    %v3069 = vld [vmem:[%s3065 + $0xc] sm:$0xf]
    %v3070 = vld [vmem:[%s3065 + $0x10] sm:$0xf]
    %v3071 = vld [vmem:[%s3065 + $0x14] sm:$0xf]
    %v3072 = vld [vmem:[%s3065 + $0x18] sm:$0xf]
    %v3073 = vld [vmem:[%s3065 + $0x1c] sm:$0xf]
    %v3074 = vld [vmem:[%s3065 + $0x20] sm:$0xf]
    %v3075 = vld [vmem:[%s3065 + $0x24] sm:$0xf]
    %v3076 = vld [vmem:[%s3065 + $0x28] sm:$0xf]
    %v3077 = vld [vmem:[%s3065 + $0x2c] sm:$0xf]
    %v3078 = vld [vmem:[%s3065 + $0x30] sm:$0xf]
    %v3079 = vld [vmem:[%s3065 + $0x34] sm:$0xf]
    %v3080 = vld [vmem:[%s3065 + $0x38] sm:$0xf]
    %v3081 = vld [vmem:[%s3065 + $0x3c] sm:$0xf]
    %v3082 = vunpack.c.l.b16 %v2854
    %v3083 = vunpack.c.l.b16 %v2868
    %v3084 = vunpack.c.l.b16 %v2882
    %v3085 = vunpack.c.l.b16 %v2896
    %v3086 = vunpack.c.l.b16 %v2910
    %v3087 = vunpack.c.l.b16 %v2924
    %v3088 = vunpack.c.l.b16 %v2938
    %v3089 = vunpack.c.l.b16 %v2952
    %v3090 = vunpack.c.l.b16 %v2966
    %v3091 = vunpack.c.l.b16 %v2980
    %v3092 = vunpack.c.l.b16 %v2994
    %v3093 = vunpack.c.l.b16 %v3008
    %v3094 = vunpack.c.l.b16 %v3022
    %v3095 = vunpack.c.l.b16 %v3036
    %v3096 = vunpack.c.l.b16 %v3050
    %v3097 = vunpack.c.l.b16 %v3064
    %v3098 = vpack.c.b16 %v3083, %v3082
    %v3099 = vpack.c.b16 %v3085, %v3084
    %v3100 = vpack.c.b16 %v3087, %v3086
    %v3101 = vpack.c.b16 %v3089, %v3088
    %v3102 = vpack.c.b16 %v3091, %v3090
    %v3103 = vpack.c.b16 %v3093, %v3092
    %v3104 = vpack.c.b16 %v3095, %v3094
    %v3105 = vpack.c.b16 %v3097, %v3096
    %v3130 = vunpack.c.l.b16 %v3066
    %v3131 = vunpack.c.l.b16 %v3067
    %v3132 = vunpack.c.l.b16 %v3068
    %v3133 = vunpack.c.l.b16 %v3069
    %v3134 = vunpack.c.l.b16 %v3070
    %v3135 = vunpack.c.l.b16 %v3071
    %v3136 = vunpack.c.l.b16 %v3072
    %v3137 = vunpack.c.l.b16 %v3073
    %v3138 = vunpack.c.l.b16 %v3074
    %v3139 = vunpack.c.l.b16 %v3075
    %v3140 = vunpack.c.l.b16 %v3076
    %v3141 = vunpack.c.l.b16 %v3077
    %v3142 = vunpack.c.l.b16 %v3078
    %v3143 = vunpack.c.l.b16 %v3079
    %v3144 = vunpack.c.l.b16 %v3080
    %v3145 = vunpack.c.l.b16 %v3081
    %v3146 = vpack.c.b16 %v3131, %v3130
    %v3147 = vpack.c.b16 %v3133, %v3132
    %v3148 = vpack.c.b16 %v3135, %v3134
    %v3149 = vpack.c.b16 %v3137, %v3136
    %v3150 = vpack.c.b16 %v3139, %v3138
    %v3151 = vpack.c.b16 %v3141, %v3140
    %v3152 = vpack.c.b16 %v3143, %v3142
    %v3153 = vpack.c.b16 %v3145, %v3144
    %3162 = vmatprep.subr.bf16.mxu0 0
    %3163 = vmatpush1.bf16.msra.mxu0 %v3153
    %3164 = vmatprep.subr.bf16.mxu0 0
    %3165 = vmatpush1.bf16.msra.mxu0 %v3152
    %3166 = vmatprep.subr.bf16.mxu0 0
    %3167 = vmatpush1.bf16.msra.mxu0 %v3151
    %3168 = vmatprep.subr.bf16.mxu0 0
    %3169 = vmatpush1.bf16.msra.mxu0 %v3150
    %3170 = vmatprep.subr.bf16.mxu0 0
    %3171 = vmatpush1.bf16.msra.mxu0 %v3149
    %3172 = vmatprep.subr.bf16.mxu0 0
    %3173 = vmatpush1.bf16.msra.mxu0 %v3148
    %3174 = vmatprep.subr.bf16.mxu0 0
    %3175 = vmatpush1.bf16.msra.mxu0 %v3147
    %3176 = vmatprep.subr.bf16.mxu0 0
    %3177 = vmatpush1.bf16.msra.mxu0 %v3146
    %3178 = vmatprep.subr.bf16.mxu0 0
    %3179 = vmatpush2.bf16.msra.mxu0 0
    %3180 = vmatprep.subr.bf16.mxu0 0
    %3181 = vmatpush2.bf16.msra.mxu0 0
    %3182 = vmatprep.subr.bf16.mxu0 0
    %3183 = vmatpush2.bf16.msra.mxu0 0
    %3184 = vmatprep.subr.bf16.mxu0 0
    %3185 = vmatpush2.bf16.msra.mxu0 0
    %3186 = vmatprep.subr.bf16.mxu0 0
    %3187 = vmatpush2.bf16.msra.mxu0 0
    %3188 = vmatprep.subr.bf16.mxu0 0
    %3189 = vmatpush2.bf16.msra.mxu0 0
    %3190 = vmatprep.subr.bf16.mxu0 0
    %3191 = vmatpush2.bf16.msra.mxu0 0
    %3192 = vmatprep.subr.bf16.mxu0 0
    %3193 = vmatpush2.bf16.msra.mxu0 0
    %3194 = vmatprep.mubr.bf16.mxu0 0
    %3195 = vmatmul.mubr.bf16.gmra.mxu0 %v3098
    %v3196 = vpop.f32.mrf.mxu0
    %v3197 = vadd.f32 0.0, %v3196
    %v3198 = vpop.f32.mrf.mxu0
    %v3199 = vpop.f32.mrf.mxu0
    %v3200 = vadd.f32 0.0, %v3199
    %v3201 = vpop.f32.mrf.mxu0
    %3202 = vmatprep.mubr.bf16.mxu0 0
    %3203 = vmatmul.mubr.bf16.gmra.mxu0 %v3099
    %v3204 = vpop.f32.mrf.mxu0
    %v3205 = vadd.f32 0.0, %v3204
    %v3206 = vpop.f32.mrf.mxu0
    %v3207 = vpop.f32.mrf.mxu0
    %v3208 = vadd.f32 0.0, %v3207
    %v3209 = vpop.f32.mrf.mxu0
    %3210 = vmatprep.mubr.bf16.mxu0 0
    %3211 = vmatmul.mubr.bf16.gmra.mxu0 %v3100
    %v3212 = vpop.f32.mrf.mxu0
    %v3213 = vadd.f32 0.0, %v3212
    %v3214 = vpop.f32.mrf.mxu0
    %v3215 = vpop.f32.mrf.mxu0
    %v3216 = vadd.f32 0.0, %v3215
    %v3217 = vpop.f32.mrf.mxu0
    %3218 = vmatprep.mubr.bf16.mxu0 0
    %3219 = vmatmul.mubr.bf16.gmra.mxu0 %v3101
    %v3220 = vpop.f32.mrf.mxu0
    %v3221 = vadd.f32 0.0, %v3220
    %v3222 = vpop.f32.mrf.mxu0
    %v3223 = vpop.f32.mrf.mxu0
    %v3224 = vadd.f32 0.0, %v3223
    %v3225 = vpop.f32.mrf.mxu0
    %3226 = vmatprep.mubr.bf16.mxu0 0
    %3227 = vmatmul.mubr.bf16.gmra.mxu0 %v3102
    %v3228 = vpop.f32.mrf.mxu0
    %v3229 = vadd.f32 0.0, %v3228
    %v3230 = vpop.f32.mrf.mxu0
    %v3231 = vpop.f32.mrf.mxu0
    %v3232 = vadd.f32 0.0, %v3231
    %v3233 = vpop.f32.mrf.mxu0
    %3234 = vmatprep.mubr.bf16.mxu0 0
    %3235 = vmatmul.mubr.bf16.gmra.mxu0 %v3103
    %v3236 = vpop.f32.mrf.mxu0
    %v3237 = vadd.f32 0.0, %v3236
    %v3238 = vpop.f32.mrf.mxu0
    %v3239 = vpop.f32.mrf.mxu0
    %v3240 = vadd.f32 0.0, %v3239
    %v3241 = vpop.f32.mrf.mxu0
    %3242 = vmatprep.mubr.bf16.mxu0 0
    %3243 = vmatmul.mubr.bf16.gmra.mxu0 %v3104
    %v3244 = vpop.f32.mrf.mxu0
    %v3245 = vadd.f32 0.0, %v3244
    %v3246 = vpop.f32.mrf.mxu0
    %v3247 = vpop.f32.mrf.mxu0
    %v3248 = vadd.f32 0.0, %v3247
    %v3249 = vpop.f32.mrf.mxu0
    %3250 = vmatprep.mubr.bf16.mxu0 0
    %3251 = vmatmul.mubr.bf16.gmra.mxu0 %v3105
    %v3252 = vpop.f32.mrf.mxu0
    %v3253 = vadd.f32 0.0, %v3252
    %v3254 = vpop.f32.mrf.mxu0
    %v3255 = vpop.f32.mrf.mxu0
    %v3256 = vadd.f32 0.0, %v3255
    %v3257 = vpop.f32.mrf.mxu0
    %3258 = vdwg.mxu0
    %v3259 = vadd.f32 %v2793, %v3197
    %v3260 = vadd.f32 %v2794, %v3200
    %v3261 = vadd.f32 %v2795, %v3205
    %v3262 = vadd.f32 %v2796, %v3208
    %v3263 = vadd.f32 %v2797, %v3213
    %v3264 = vadd.f32 %v2798, %v3216
    %v3265 = vadd.f32 %v2799, %v3221
    %v3266 = vadd.f32 %v2800, %v3224
    %v3267 = vadd.f32 %v2801, %v3229
    %v3268 = vadd.f32 %v2802, %v3232
    %v3269 = vadd.f32 %v2803, %v3237
    %v3270 = vadd.f32 %v2804, %v3240
    %v3271 = vadd.f32 %v2805, %v3245
    %v3272 = vadd.f32 %v2806, %v3248
    %v3273 = vadd.f32 %v2807, %v3253
    %v3274 = vadd.f32 %v2808, %v3256
    %v3275 = vld [vmem:[%s2566] sm:$0xe]
    %v3276 = vld [vmem:[%s2566 + $0x8] sm:$0xe]
    %v3277 = vld [vmem:[%s2566 + $0x10] sm:$0xe]
    %v3278 = vld [vmem:[%s2566 + $0x18] sm:$0xe]
    %v3279 = vld [vmem:[%s2566 + $0x20] sm:$0xe]
    %v3280 = vld [vmem:[%s2566 + $0x28] sm:$0xe]
    %v3281 = vld [vmem:[%s2566 + $0x30] sm:$0xe]
    %v3282 = vld [vmem:[%s2566 + $0x38] sm:$0xe]
    %v3283 = vld [vmem:[%s2566 + $0x50] sm:$0xe]
    %v3284 = vld [vmem:[%s2566 + $0x58] sm:$0xe]
    %v3285 = vld [vmem:[%s2566 + $0x60] sm:$0xe]
    %v3286 = vld [vmem:[%s2566 + $0x68] sm:$0xe]
    %v3287 = vld [vmem:[%s2566 + $0x70] sm:$0xe]
    %v3288 = vld [vmem:[%s2566 + $0x78] sm:$0xe]
    %v3289 = vld [vmem:[%s2566 + $0x80] sm:$0xe]
    %v3290 = vld [vmem:[%s2566 + $0x88] sm:$0xe]
    %v3323 = vrot.slane %v3275, 5
    %v3324 = vrot.slane %v3323, 4
    %v3325 = vrot.slane %v2810, 5
    %v3326 = vsel %vm1261, %v3324, %v3325
    %v3327 = vrot.slane %v3276, 5
    %v3328 = vrot.slane %v3327, 4
    %v3329 = vrot.slane %v2812, 5
    %v3330 = vsel %vm1261, %v3328, %v3329
    %v3331 = vrot.slane %v3277, 5
    %v3332 = vrot.slane %v3331, 4
    %v3333 = vrot.slane %v2814, 5
    %v3334 = vsel %vm1261, %v3332, %v3333
    %v3335 = vrot.slane %v3278, 5
    %v3336 = vrot.slane %v3335, 4
    %v3337 = vrot.slane %v2816, 5
    %v3338 = vsel %vm1261, %v3336, %v3337
    %v3339 = vrot.slane %v3279, 5
    %v3340 = vrot.slane %v3339, 4
    %v3341 = vrot.slane %v2818, 5
    %v3342 = vsel %vm1261, %v3340, %v3341
    %v3343 = vrot.slane %v3280, 5
    %v3344 = vrot.slane %v3343, 4
    %v3345 = vrot.slane %v2820, 5
    %v3346 = vsel %vm1261, %v3344, %v3345
    %v3347 = vrot.slane %v3281, 5
    %v3348 = vrot.slane %v3347, 4
    %v3349 = vrot.slane %v2822, 5
    %v3350 = vsel %vm1261, %v3348, %v3349
    %v3351 = vrot.slane %v3282, 5
    %v3352 = vrot.slane %v3351, 4
    %v3353 = vrot.slane %v2824, 5
    %v3354 = vsel %vm1261, %v3352, %v3353
    %v3355 = vrot.slane %v3283, 5
    %v3356 = vrot.slane %v3355, 4
    %v3357 = vrot.slane %v2826, 5
    %v3358 = vsel %vm1261, %v3356, %v3357
    %v3359 = vrot.slane %v3284, 5
    %v3360 = vrot.slane %v3359, 4
    %v3361 = vrot.slane %v2828, 5
    %v3362 = vsel %vm1261, %v3360, %v3361
    %v3363 = vrot.slane %v3285, 5
    %v3364 = vrot.slane %v3363, 4
    %v3365 = vrot.slane %v2830, 5
    %v3366 = vsel %vm1261, %v3364, %v3365
    %v3367 = vrot.slane %v3286, 5
    %v3368 = vrot.slane %v3367, 4
    %v3369 = vrot.slane %v2832, 5
    %v3370 = vsel %vm1261, %v3368, %v3369
    %v3371 = vrot.slane %v3287, 5
    %v3372 = vrot.slane %v3371, 4
    %v3373 = vrot.slane %v2834, 5
    %v3374 = vsel %vm1261, %v3372, %v3373
    %v3375 = vrot.slane %v3288, 5
    %v3376 = vrot.slane %v3375, 4
    %v3377 = vrot.slane %v2836, 5
    %v3378 = vsel %vm1261, %v3376, %v3377
    %v3379 = vrot.slane %v3289, 5
    %v3380 = vrot.slane %v3379, 4
    %v3381 = vrot.slane %v2838, 5
    %v3382 = vsel %vm1261, %v3380, %v3381
    %v3383 = vrot.slane %v3290, 5
    %v3384 = vrot.slane %v3383, 4
    %v3385 = vrot.slane %v2840, 5
    %v3386 = vsel %vm1261, %v3384, %v3385
    %s3387 = scalar_lea.vmem %s1, 512
    %v3388 = vld [vmem:[%s3387] sm:$0xf]
    %v3389 = vld [vmem:[%s3387 + $0x4] sm:$0xf]
    %v3390 = vld [vmem:[%s3387 + $0x8] sm:$0xf]
    %v3391 = vld [vmem:[%s3387 + $0xc] sm:$0xf]
    %v3392 = vld [vmem:[%s3387 + $0x10] sm:$0xf]
    %v3393 = vld [vmem:[%s3387 + $0x14] sm:$0xf]
    %v3394 = vld [vmem:[%s3387 + $0x18] sm:$0xf]
    %v3395 = vld [vmem:[%s3387 + $0x1c] sm:$0xf]
    %v3396 = vld [vmem:[%s3387 + $0x20] sm:$0xf]
    %v3397 = vld [vmem:[%s3387 + $0x24] sm:$0xf]
    %v3398 = vld [vmem:[%s3387 + $0x28] sm:$0xf]
    %v3399 = vld [vmem:[%s3387 + $0x2c] sm:$0xf]
    %v3400 = vld [vmem:[%s3387 + $0x30] sm:$0xf]
    %v3401 = vld [vmem:[%s3387 + $0x34] sm:$0xf]
    %v3402 = vld [vmem:[%s3387 + $0x38] sm:$0xf]
    %v3403 = vld [vmem:[%s3387 + $0x3c] sm:$0xf]
    %v3404 = vunpack.c.l.b16 %v3326
    %v3405 = vunpack.c.l.b16 %v3330
    %v3406 = vunpack.c.l.b16 %v3334
    %v3407 = vunpack.c.l.b16 %v3338
    %v3408 = vunpack.c.l.b16 %v3342
    %v3409 = vunpack.c.l.b16 %v3346
    %v3410 = vunpack.c.l.b16 %v3350
    %v3411 = vunpack.c.l.b16 %v3354
    %v3412 = vunpack.c.l.b16 %v3358
    %v3413 = vunpack.c.l.b16 %v3362
    %v3414 = vunpack.c.l.b16 %v3366
    %v3415 = vunpack.c.l.b16 %v3370
    %v3416 = vunpack.c.l.b16 %v3374
    %v3417 = vunpack.c.l.b16 %v3378
    %v3418 = vunpack.c.l.b16 %v3382
    %v3419 = vunpack.c.l.b16 %v3386
    %v3420 = vpack.c.b16 %v3405, %v3404
    %v3421 = vpack.c.b16 %v3407, %v3406
    %v3422 = vpack.c.b16 %v3409, %v3408
    %v3423 = vpack.c.b16 %v3411, %v3410
    %v3424 = vpack.c.b16 %v3413, %v3412
    %v3425 = vpack.c.b16 %v3415, %v3414
    %v3426 = vpack.c.b16 %v3417, %v3416
    %v3427 = vpack.c.b16 %v3419, %v3418
    %v3452 = vunpack.c.l.b16 %v3388
    %v3453 = vunpack.c.l.b16 %v3389
    %v3454 = vunpack.c.l.b16 %v3390
    %v3455 = vunpack.c.l.b16 %v3391
    %v3456 = vunpack.c.l.b16 %v3392
    %v3457 = vunpack.c.l.b16 %v3393
    %v3458 = vunpack.c.l.b16 %v3394
    %v3459 = vunpack.c.l.b16 %v3395
    %v3460 = vunpack.c.l.b16 %v3396
    %v3461 = vunpack.c.l.b16 %v3397
    %v3462 = vunpack.c.l.b16 %v3398
    %v3463 = vunpack.c.l.b16 %v3399
    %v3464 = vunpack.c.l.b16 %v3400
    %v3465 = vunpack.c.l.b16 %v3401
    %v3466 = vunpack.c.l.b16 %v3402
    %v3467 = vunpack.c.l.b16 %v3403
    %v3468 = vpack.c.b16 %v3453, %v3452
    %v3469 = vpack.c.b16 %v3455, %v3454
    %v3470 = vpack.c.b16 %v3457, %v3456
    %v3471 = vpack.c.b16 %v3459, %v3458
    %v3472 = vpack.c.b16 %v3461, %v3460
    %v3473 = vpack.c.b16 %v3463, %v3462
    %v3474 = vpack.c.b16 %v3465, %v3464
    %v3475 = vpack.c.b16 %v3467, %v3466
    %3484 = vmatprep.subr.bf16.mxu0 0
    %3485 = vmatpush1.bf16.msra.mxu0 %v3475
    %3486 = vmatprep.subr.bf16.mxu0 0
    %3487 = vmatpush1.bf16.msra.mxu0 %v3474
    %3488 = vmatprep.subr.bf16.mxu0 0
    %3489 = vmatpush1.bf16.msra.mxu0 %v3473
    %3490 = vmatprep.subr.bf16.mxu0 0
    %3491 = vmatpush1.bf16.msra.mxu0 %v3472
    %3492 = vmatprep.subr.bf16.mxu0 0
    %3493 = vmatpush1.bf16.msra.mxu0 %v3471
    %3494 = vmatprep.subr.bf16.mxu0 0
    %3495 = vmatpush1.bf16.msra.mxu0 %v3470
    %3496 = vmatprep.subr.bf16.mxu0 0
    %3497 = vmatpush1.bf16.msra.mxu0 %v3469
    %3498 = vmatprep.subr.bf16.mxu0 0
    %3499 = vmatpush1.bf16.msra.mxu0 %v3468
    %3500 = vmatprep.subr.bf16.mxu0 0
    %3501 = vmatpush2.bf16.msra.mxu0 0
    %3502 = vmatprep.subr.bf16.mxu0 0
    %3503 = vmatpush2.bf16.msra.mxu0 0
    %3504 = vmatprep.subr.bf16.mxu0 0
    %3505 = vmatpush2.bf16.msra.mxu0 0
    %3506 = vmatprep.subr.bf16.mxu0 0
    %3507 = vmatpush2.bf16.msra.mxu0 0
    %3508 = vmatprep.subr.bf16.mxu0 0
    %3509 = vmatpush2.bf16.msra.mxu0 0
    %3510 = vmatprep.subr.bf16.mxu0 0
    %3511 = vmatpush2.bf16.msra.mxu0 0
    %3512 = vmatprep.subr.bf16.mxu0 0
    %3513 = vmatpush2.bf16.msra.mxu0 0
    %3514 = vmatprep.subr.bf16.mxu0 0
    %3515 = vmatpush2.bf16.msra.mxu0 0
    %3516 = vmatprep.mubr.bf16.mxu0 0
    %3517 = vmatmul.mubr.bf16.gmra.mxu0 %v3420
    %v3518 = vpop.f32.mrf.mxu0
    %v3519 = vadd.f32 0.0, %v3518
    %v3520 = vpop.f32.mrf.mxu0
    %v3521 = vpop.f32.mrf.mxu0
    %v3522 = vadd.f32 0.0, %v3521
    %v3523 = vpop.f32.mrf.mxu0
    %3524 = vmatprep.mubr.bf16.mxu0 0
    %3525 = vmatmul.mubr.bf16.gmra.mxu0 %v3421
    %v3526 = vpop.f32.mrf.mxu0
    %v3527 = vadd.f32 0.0, %v3526
    %v3528 = vpop.f32.mrf.mxu0
    %v3529 = vpop.f32.mrf.mxu0
    %v3530 = vadd.f32 0.0, %v3529
    %v3531 = vpop.f32.mrf.mxu0
    %3532 = vmatprep.mubr.bf16.mxu0 0
    %3533 = vmatmul.mubr.bf16.gmra.mxu0 %v3422
    %v3534 = vpop.f32.mrf.mxu0
    %v3535 = vadd.f32 0.0, %v3534
    %v3536 = vpop.f32.mrf.mxu0
    %v3537 = vpop.f32.mrf.mxu0
    %v3538 = vadd.f32 0.0, %v3537
    %v3539 = vpop.f32.mrf.mxu0
    %3540 = vmatprep.mubr.bf16.mxu0 0
    %3541 = vmatmul.mubr.bf16.gmra.mxu0 %v3423
    %v3542 = vpop.f32.mrf.mxu0
    %v3543 = vadd.f32 0.0, %v3542
    %v3544 = vpop.f32.mrf.mxu0
    %v3545 = vpop.f32.mrf.mxu0
    %v3546 = vadd.f32 0.0, %v3545
    %v3547 = vpop.f32.mrf.mxu0
    %3548 = vmatprep.mubr.bf16.mxu0 0
    %3549 = vmatmul.mubr.bf16.gmra.mxu0 %v3424
    %v3550 = vpop.f32.mrf.mxu0
    %v3551 = vadd.f32 0.0, %v3550
    %v3552 = vpop.f32.mrf.mxu0
    %v3553 = vpop.f32.mrf.mxu0
    %v3554 = vadd.f32 0.0, %v3553
    %v3555 = vpop.f32.mrf.mxu0
    %3556 = vmatprep.mubr.bf16.mxu0 0
    %3557 = vmatmul.mubr.bf16.gmra.mxu0 %v3425
    %v3558 = vpop.f32.mrf.mxu0
    %v3559 = vadd.f32 0.0, %v3558
    %v3560 = vpop.f32.mrf.mxu0
    %v3561 = vpop.f32.mrf.mxu0
    %v3562 = vadd.f32 0.0, %v3561
    %v3563 = vpop.f32.mrf.mxu0
    %3564 = vmatprep.mubr.bf16.mxu0 0
    %3565 = vmatmul.mubr.bf16.gmra.mxu0 %v3426
    %v3566 = vpop.f32.mrf.mxu0
    %v3567 = vadd.f32 0.0, %v3566
    %v3568 = vpop.f32.mrf.mxu0
    %v3569 = vpop.f32.mrf.mxu0
    %v3570 = vadd.f32 0.0, %v3569
    %v3571 = vpop.f32.mrf.mxu0
    %3572 = vmatprep.mubr.bf16.mxu0 0
    %3573 = vmatmul.mubr.bf16.gmra.mxu0 %v3427
    %v3574 = vpop.f32.mrf.mxu0
    %v3575 = vadd.f32 0.0, %v3574
    %v3576 = vpop.f32.mrf.mxu0
    %v3577 = vpop.f32.mrf.mxu0
    %v3578 = vadd.f32 0.0, %v3577
    %v3579 = vpop.f32.mrf.mxu0
    %3580 = vdwg.mxu0
    %v3581 = vadd.f32 %v3259, %v3519
    %v3582 = vadd.f32 %v3260, %v3522
    %v3583 = vadd.f32 %v3261, %v3527
    %v3584 = vadd.f32 %v3262, %v3530
    %v3585 = vadd.f32 %v3263, %v3535
    %v3586 = vadd.f32 %v3264, %v3538
    %v3587 = vadd.f32 %v3265, %v3543
    %v3588 = vadd.f32 %v3266, %v3546
    %v3589 = vadd.f32 %v3267, %v3551
    %v3590 = vadd.f32 %v3268, %v3554
    %v3591 = vadd.f32 %v3269, %v3559
    %v3592 = vadd.f32 %v3270, %v3562
    %v3593 = vadd.f32 %v3271, %v3567
    %v3594 = vadd.f32 %v3272, %v3570
    %v3595 = vadd.f32 %v3273, %v3575
    %v3596 = vadd.f32 %v3274, %v3578
    %v3597 = vld [vmem:[%s3] sm:$0x1]
    %v3598 = vld [vmem:[%s4] sm:$0x1]
    %vm3599 = vcmask 523264
    %v3600 = vsel %vm3599, %v3581, 0.0
    %v3601 = vsel %vm3599, %v3582, 0.0
    %v3602 = vadd.f32 %v3600, %v3601
    %v3603 = vsel %vm3599, %v3583, 0.0
    %v3604 = vadd.f32 %v3602, %v3603
    %v3605 = vsel %vm3599, %v3584, 0.0
    %v3606 = vadd.f32 %v3604, %v3605
    %v3607 = vsel %vm3599, %v3585, 0.0
    %v3608 = vadd.f32 %v3606, %v3607
    %v3609 = vsel %vm3599, %v3586, 0.0
    %v3610 = vadd.f32 %v3608, %v3609
    %v3611 = vsel %vm3599, %v3587, 0.0
    %v3612 = vadd.f32 %v3610, %v3611
    %v3613 = vsel %vm3599, %v3588, 0.0
    %v3614 = vadd.f32 %v3612, %v3613
    %v3615 = vsel %vm3599, %v3589, 0.0
    %v3616 = vadd.f32 %v3614, %v3615
    %v3617 = vsel %vm3599, %v3590, 0.0
    %v3618 = vadd.f32 %v3616, %v3617
    %v3619 = vsel %vm3599, %v3591, 0.0
    %v3620 = vadd.f32 %v3618, %v3619
    %v3621 = vsel %vm3599, %v3592, 0.0
    %v3622 = vadd.f32 %v3620, %v3621
    %v3623 = vsel %vm3599, %v3593, 0.0
    %v3624 = vadd.f32 %v3622, %v3623
    %v3625 = vsel %vm3599, %v3594, 0.0
    %v3626 = vadd.f32 %v3624, %v3625
    %v3627 = vsel %vm3599, %v3595, 0.0
    %v3628 = vadd.f32 %v3626, %v3627
    %v3629 = vsel %vm3599, %v3596, 0.0
    %v3630 = vadd.f32 %v3628, %v3629
    %v3631 = vrot.slane %v3630, 4
    %v3632 = vadd.f32 %v3630, %v3631
    %v3633 = vrot.slane %v3632, 2
    %v3634 = vadd.f32 %v3632, %v3633
    %v3635 = vrot.slane %v3634, 1
    %v3636 = vadd.f32 %v3634, %v3635
    %v3637 = vrcp.pop 128.0
    %v3638 = vmul.f32 %v3636, %v3637
    %v3639 = vsub.f32 %v3581, %v3638
    %v3640 = vsub.f32 %v3582, %v3638
    %v3641 = vsub.f32 %v3583, %v3638
    %v3642 = vsub.f32 %v3584, %v3638
    %v3643 = vsub.f32 %v3585, %v3638
    %v3644 = vsub.f32 %v3586, %v3638
    %v3645 = vsub.f32 %v3587, %v3638
    %v3646 = vsub.f32 %v3588, %v3638
    %v3647 = vsub.f32 %v3589, %v3638
    %v3648 = vsub.f32 %v3590, %v3638
    %v3649 = vsub.f32 %v3591, %v3638
    %v3650 = vsub.f32 %v3592, %v3638
    %v3651 = vsub.f32 %v3593, %v3638
    %v3652 = vsub.f32 %v3594, %v3638
    %v3653 = vsub.f32 %v3595, %v3638
    %v3654 = vsub.f32 %v3596, %v3638
    %v3655 = vmul.f32 %v3639, %v3639
    %v3656 = vmul.f32 %v3640, %v3640
    %v3657 = vmul.f32 %v3641, %v3641
    %v3658 = vmul.f32 %v3642, %v3642
    %v3659 = vmul.f32 %v3643, %v3643
    %v3660 = vmul.f32 %v3644, %v3644
    %v3661 = vmul.f32 %v3645, %v3645
    %v3662 = vmul.f32 %v3646, %v3646
    %v3663 = vmul.f32 %v3647, %v3647
    %v3664 = vmul.f32 %v3648, %v3648
    %v3665 = vmul.f32 %v3649, %v3649
    %v3666 = vmul.f32 %v3650, %v3650
    %v3667 = vmul.f32 %v3651, %v3651
    %v3668 = vmul.f32 %v3652, %v3652
    %v3669 = vmul.f32 %v3653, %v3653
    %v3670 = vmul.f32 %v3654, %v3654
    %v3671 = vsel %vm3599, %v3655, 0.0
    %v3672 = vsel %vm3599, %v3656, 0.0
    %v3673 = vadd.f32 %v3671, %v3672
    %v3674 = vsel %vm3599, %v3657, 0.0
    %v3675 = vadd.f32 %v3673, %v3674
    %v3676 = vsel %vm3599, %v3658, 0.0
    %v3677 = vadd.f32 %v3675, %v3676
    %v3678 = vsel %vm3599, %v3659, 0.0
    %v3679 = vadd.f32 %v3677, %v3678
    %v3680 = vsel %vm3599, %v3660, 0.0
    %v3681 = vadd.f32 %v3679, %v3680
    %v3682 = vsel %vm3599, %v3661, 0.0
    %v3683 = vadd.f32 %v3681, %v3682
    %v3684 = vsel %vm3599, %v3662, 0.0
    %v3685 = vadd.f32 %v3683, %v3684
    %v3686 = vsel %vm3599, %v3663, 0.0
    %v3687 = vadd.f32 %v3685, %v3686
    %v3688 = vsel %vm3599, %v3664, 0.0
    %v3689 = vadd.f32 %v3687, %v3688
    %v3690 = vsel %vm3599, %v3665, 0.0
    %v3691 = vadd.f32 %v3689, %v3690
    %v3692 = vsel %vm3599, %v3666, 0.0
    %v3693 = vadd.f32 %v3691, %v3692
    %v3694 = vsel %vm3599, %v3667, 0.0
    %v3695 = vadd.f32 %v3693, %v3694
    %v3696 = vsel %vm3599, %v3668, 0.0
    %v3697 = vadd.f32 %v3695, %v3696
    %v3698 = vsel %vm3599, %v3669, 0.0
    %v3699 = vadd.f32 %v3697, %v3698
    %v3700 = vsel %vm3599, %v3670, 0.0
    %v3701 = vadd.f32 %v3699, %v3700
    %v3702 = vrot.slane %v3701, 4
    %v3703 = vadd.f32 %v3701, %v3702
    %v3704 = vrot.slane %v3703, 2
    %v3705 = vadd.f32 %v3703, %v3704
    %v3706 = vrot.slane %v3705, 1
    %v3707 = vadd.f32 %v3705, %v3706
    %v3708 = vmul.f32 %v3707, %v3637
    %v3709 = vadd.f32 %v3708, 1e-05
    %v3710 = vrsqrt.pop %v3709
    %v3711 = vmul.f32 %v3597, %v3710
    %v3713 = vlaneseq
    %v3714 = vshrl.u32 %v3713, 7
    %v3715 = vsub.s32 0, %v3714
    %v3716 = vrot.slane %v3711, %v3715
    %v3718 = vmul.f32 %v3639, %v3716
    %v3719 = vmul.f32 %v3640, %v3716
    %v3720 = vmul.f32 %v3641, %v3716
    %v3721 = vmul.f32 %v3642, %v3716
    %v3722 = vmul.f32 %v3643, %v3716
    %v3723 = vmul.f32 %v3644, %v3716
    %v3724 = vmul.f32 %v3645, %v3716
    %v3725 = vmul.f32 %v3646, %v3716
    %v3726 = vmul.f32 %v3647, %v3716
    %v3727 = vmul.f32 %v3648, %v3716
    %v3728 = vmul.f32 %v3649, %v3716
    %v3729 = vmul.f32 %v3650, %v3716
    %v3730 = vmul.f32 %v3651, %v3716
    %v3731 = vmul.f32 %v3652, %v3716
    %v3732 = vmul.f32 %v3653, %v3716
    %v3733 = vmul.f32 %v3654, %v3716
    %v3735 = vlaneseq
    %v3736 = vshrl.u32 %v3735, 7
    %v3737 = vsub.s32 0, %v3736
    %v3738 = vrot.slane %v3598, %v3737
    %v3740 = vadd.f32 %v3718, %v3738
    %v3741 = vadd.f32 %v3719, %v3738
    %v3742 = vadd.f32 %v3720, %v3738
    %v3743 = vadd.f32 %v3721, %v3738
    %v3744 = vadd.f32 %v3722, %v3738
    %v3745 = vadd.f32 %v3723, %v3738
    %v3746 = vadd.f32 %v3724, %v3738
    %v3747 = vadd.f32 %v3725, %v3738
    %v3748 = vadd.f32 %v3726, %v3738
    %v3749 = vadd.f32 %v3727, %v3738
    %v3750 = vadd.f32 %v3728, %v3738
    %v3751 = vadd.f32 %v3729, %v3738
    %v3752 = vadd.f32 %v3730, %v3738
    %v3753 = vadd.f32 %v3731, %v3738
    %v3754 = vadd.f32 %v3732, %v3738
    %v3755 = vadd.f32 %v3733, %v3738
    %vm3756 = vcmp.ge.f32.partialorder %v3740, 0.0
    %vm3757 = vcmp.ge.f32.partialorder %v3741, 0.0
    %vm3758 = vcmp.ge.f32.partialorder %v3742, 0.0
    %vm3759 = vcmp.ge.f32.partialorder %v3743, 0.0
    %vm3760 = vcmp.ge.f32.partialorder %v3744, 0.0
    %vm3761 = vcmp.ge.f32.partialorder %v3745, 0.0
    %vm3762 = vcmp.ge.f32.partialorder %v3746, 0.0
    %vm3763 = vcmp.ge.f32.partialorder %v3747, 0.0
    %vm3764 = vcmp.ge.f32.partialorder %v3748, 0.0
    %vm3765 = vcmp.ge.f32.partialorder %v3749, 0.0
    %vm3766 = vcmp.ge.f32.partialorder %v3750, 0.0
    %vm3767 = vcmp.ge.f32.partialorder %v3751, 0.0
    %vm3768 = vcmp.ge.f32.partialorder %v3752, 0.0
    %vm3769 = vcmp.ge.f32.partialorder %v3753, 0.0
    %vm3770 = vcmp.ge.f32.partialorder %v3754, 0.0
    %vm3771 = vcmp.ge.f32.partialorder %v3755, 0.0
    %v3772 = vmul.f32 %v3740, 0.2
    %v3773 = vmul.f32 %v3741, 0.2
    %v3774 = vmul.f32 %v3742, 0.2
    %v3775 = vmul.f32 %v3743, 0.2
    %v3776 = vmul.f32 %v3744, 0.2
    %v3777 = vmul.f32 %v3745, 0.2
    %v3778 = vmul.f32 %v3746, 0.2
    %v3779 = vmul.f32 %v3747, 0.2
    %v3780 = vmul.f32 %v3748, 0.2
    %v3781 = vmul.f32 %v3749, 0.2
    %v3782 = vmul.f32 %v3750, 0.2
    %v3783 = vmul.f32 %v3751, 0.2
    %v3784 = vmul.f32 %v3752, 0.2
    %v3785 = vmul.f32 %v3753, 0.2
    %v3786 = vmul.f32 %v3754, 0.2
    %v3787 = vmul.f32 %v3755, 0.2
    %v3788 = vsel %vm3756, %v3740, %v3772
    %v3789 = vsel %vm3757, %v3741, %v3773
    %v3790 = vsel %vm3758, %v3742, %v3774
    %v3791 = vsel %vm3759, %v3743, %v3775
    %v3792 = vsel %vm3760, %v3744, %v3776
    %v3793 = vsel %vm3761, %v3745, %v3777
    %v3794 = vsel %vm3762, %v3746, %v3778
    %v3795 = vsel %vm3763, %v3747, %v3779
    %v3796 = vsel %vm3764, %v3748, %v3780
    %v3797 = vsel %vm3765, %v3749, %v3781
    %v3798 = vsel %vm3766, %v3750, %v3782
    %v3799 = vsel %vm3767, %v3751, %v3783
    %v3800 = vsel %vm3768, %v3752, %v3784
    %v3801 = vsel %vm3769, %v3753, %v3785
    %v3802 = vsel %vm3770, %v3754, %v3786
    %v3803 = vsel %vm3771, %v3755, %v3787
    %v3820 = vcombine.high %v3788, %v3788
    %v3822 = vunpack.c.l.s4 1983009808
    %v3823 = vunpack.c.0.s8 %v3822
    %v3824 = vlaneseq
    %v3825 = vshrl.u32 %v3824, 7
    %v3826 = vsub.s32 %v3823, %v3825
    %v3827 = vrot.slane %v3788, %v3826
    %v3829 = vunpack.c.l.s4 1983009808
    %v3830 = vunpack.c.0.s8 %v3829
    %v3831 = vlaneseq
    %v3832 = vshrl.u32 %v3831, 7
    %v3833 = vsub.s32 %v3830, %v3832
    %v3834 = vrot.slane %v3820, %v3833
    %v3835 = vcombine.high %v3827, %v3827
    %v3836 = vcombine.high %v3834, %v3834
    %v3837 = vcombine.high %v3789, %v3789
    %v3839 = vunpack.c.l.s4 1983009808
    %v3840 = vunpack.c.0.s8 %v3839
    %v3841 = vlaneseq
    %v3842 = vshrl.u32 %v3841, 7
    %v3843 = vsub.s32 %v3840, %v3842
    %v3844 = vrot.slane %v3789, %v3843
    %v3846 = vunpack.c.l.s4 1983009808
    %v3847 = vunpack.c.0.s8 %v3846
    %v3848 = vlaneseq
    %v3849 = vshrl.u32 %v3848, 7
    %v3850 = vsub.s32 %v3847, %v3849
    %v3851 = vrot.slane %v3837, %v3850
    %v3852 = vcombine.high %v3844, %v3844
    %v3853 = vcombine.high %v3851, %v3851
    %v3854 = vcombine.high %v3790, %v3790
    %v3856 = vunpack.c.l.s4 1983009808
    %v3857 = vunpack.c.0.s8 %v3856
    %v3858 = vlaneseq
    %v3859 = vshrl.u32 %v3858, 7
    %v3860 = vsub.s32 %v3857, %v3859
    %v3861 = vrot.slane %v3790, %v3860
    %v3863 = vunpack.c.l.s4 1983009808
    %v3864 = vunpack.c.0.s8 %v3863
    %v3865 = vlaneseq
    %v3866 = vshrl.u32 %v3865, 7
    %v3867 = vsub.s32 %v3864, %v3866
    %v3868 = vrot.slane %v3854, %v3867
    %v3869 = vcombine.high %v3861, %v3861
    %v3870 = vcombine.high %v3868, %v3868
    %v3871 = vcombine.high %v3791, %v3791
    %v3873 = vunpack.c.l.s4 1983009808
    %v3874 = vunpack.c.0.s8 %v3873
    %v3875 = vlaneseq
    %v3876 = vshrl.u32 %v3875, 7
    %v3877 = vsub.s32 %v3874, %v3876
    %v3878 = vrot.slane %v3791, %v3877
    %v3880 = vunpack.c.l.s4 1983009808
    %v3881 = vunpack.c.0.s8 %v3880
    %v3882 = vlaneseq
    %v3883 = vshrl.u32 %v3882, 7
    %v3884 = vsub.s32 %v3881, %v3883
    %v3885 = vrot.slane %v3871, %v3884
    %v3886 = vcombine.high %v3878, %v3878
    %v3887 = vcombine.high %v3885, %v3885
    %v3888 = vcombine.high %v3792, %v3792
    %v3890 = vunpack.c.l.s4 1983009808
    %v3891 = vunpack.c.0.s8 %v3890
    %v3892 = vlaneseq
    %v3893 = vshrl.u32 %v3892, 7
    %v3894 = vsub.s32 %v3891, %v3893
    %v3895 = vrot.slane %v3792, %v3894
    %v3897 = vunpack.c.l.s4 1983009808
    %v3898 = vunpack.c.0.s8 %v3897
    %v3899 = vlaneseq
    %v3900 = vshrl.u32 %v3899, 7
    %v3901 = vsub.s32 %v3898, %v3900
    %v3902 = vrot.slane %v3888, %v3901
    %v3903 = vcombine.high %v3895, %v3895
    %v3904 = vcombine.high %v3902, %v3902
    %v3905 = vcombine.high %v3793, %v3793
    %v3907 = vunpack.c.l.s4 1983009808
    %v3908 = vunpack.c.0.s8 %v3907
    %v3909 = vlaneseq
    %v3910 = vshrl.u32 %v3909, 7
    %v3911 = vsub.s32 %v3908, %v3910
    %v3912 = vrot.slane %v3793, %v3911
    %v3914 = vunpack.c.l.s4 1983009808
    %v3915 = vunpack.c.0.s8 %v3914
    %v3916 = vlaneseq
    %v3917 = vshrl.u32 %v3916, 7
    %v3918 = vsub.s32 %v3915, %v3917
    %v3919 = vrot.slane %v3905, %v3918
    %v3920 = vcombine.high %v3912, %v3912
    %v3921 = vcombine.high %v3919, %v3919
    %v3922 = vcombine.high %v3794, %v3794
    %v3924 = vunpack.c.l.s4 1983009808
    %v3925 = vunpack.c.0.s8 %v3924
    %v3926 = vlaneseq
    %v3927 = vshrl.u32 %v3926, 7
    %v3928 = vsub.s32 %v3925, %v3927
    %v3929 = vrot.slane %v3794, %v3928
    %v3931 = vunpack.c.l.s4 1983009808
    %v3932 = vunpack.c.0.s8 %v3931
    %v3933 = vlaneseq
    %v3934 = vshrl.u32 %v3933, 7
    %v3935 = vsub.s32 %v3932, %v3934
    %v3936 = vrot.slane %v3922, %v3935
    %v3937 = vcombine.high %v3929, %v3929
    %v3938 = vcombine.high %v3936, %v3936
    %v3939 = vcombine.high %v3795, %v3795
    %v3941 = vunpack.c.l.s4 1983009808
    %v3942 = vunpack.c.0.s8 %v3941
    %v3943 = vlaneseq
    %v3944 = vshrl.u32 %v3943, 7
    %v3945 = vsub.s32 %v3942, %v3944
    %v3946 = vrot.slane %v3795, %v3945
    %v3948 = vunpack.c.l.s4 1983009808
    %v3949 = vunpack.c.0.s8 %v3948
    %v3950 = vlaneseq
    %v3951 = vshrl.u32 %v3950, 7
    %v3952 = vsub.s32 %v3949, %v3951
    %v3953 = vrot.slane %v3939, %v3952
    %v3954 = vcombine.high %v3946, %v3946
    %v3955 = vcombine.high %v3953, %v3953
    %v3956 = vcombine.high %v3796, %v3796
    %v3958 = vunpack.c.l.s4 1983009808
    %v3959 = vunpack.c.0.s8 %v3958
    %v3960 = vlaneseq
    %v3961 = vshrl.u32 %v3960, 7
    %v3962 = vsub.s32 %v3959, %v3961
    %v3963 = vrot.slane %v3796, %v3962
    %v3965 = vunpack.c.l.s4 1983009808
    %v3966 = vunpack.c.0.s8 %v3965
    %v3967 = vlaneseq
    %v3968 = vshrl.u32 %v3967, 7
    %v3969 = vsub.s32 %v3966, %v3968
    %v3970 = vrot.slane %v3956, %v3969
    %v3971 = vcombine.high %v3963, %v3963
    %v3972 = vcombine.high %v3970, %v3970
    %v3973 = vcombine.high %v3797, %v3797
    %v3975 = vunpack.c.l.s4 1983009808
    %v3976 = vunpack.c.0.s8 %v3975
    %v3977 = vlaneseq
    %v3978 = vshrl.u32 %v3977, 7
    %v3979 = vsub.s32 %v3976, %v3978
    %v3980 = vrot.slane %v3797, %v3979
    %v3982 = vunpack.c.l.s4 1983009808
    %v3983 = vunpack.c.0.s8 %v3982
    %v3984 = vlaneseq
    %v3985 = vshrl.u32 %v3984, 7
    %v3986 = vsub.s32 %v3983, %v3985
    %v3987 = vrot.slane %v3973, %v3986
    %v3988 = vcombine.high %v3980, %v3980
    %v3989 = vcombine.high %v3987, %v3987
    %v3990 = vcombine.high %v3798, %v3798
    %v3992 = vunpack.c.l.s4 1983009808
    %v3993 = vunpack.c.0.s8 %v3992
    %v3994 = vlaneseq
    %v3995 = vshrl.u32 %v3994, 7
    %v3996 = vsub.s32 %v3993, %v3995
    %v3997 = vrot.slane %v3798, %v3996
    %v3999 = vunpack.c.l.s4 1983009808
    %v4000 = vunpack.c.0.s8 %v3999
    %v4001 = vlaneseq
    %v4002 = vshrl.u32 %v4001, 7
    %v4003 = vsub.s32 %v4000, %v4002
    %v4004 = vrot.slane %v3990, %v4003
    %v4005 = vcombine.high %v3997, %v3997
    %v4006 = vcombine.high %v4004, %v4004
    %v4007 = vcombine.high %v3799, %v3799
    %v4009 = vunpack.c.l.s4 1983009808
    %v4010 = vunpack.c.0.s8 %v4009
    %v4011 = vlaneseq
    %v4012 = vshrl.u32 %v4011, 7
    %v4013 = vsub.s32 %v4010, %v4012
    %v4014 = vrot.slane %v3799, %v4013
    %v4016 = vunpack.c.l.s4 1983009808
    %v4017 = vunpack.c.0.s8 %v4016
    %v4018 = vlaneseq
    %v4019 = vshrl.u32 %v4018, 7
    %v4020 = vsub.s32 %v4017, %v4019
    %v4021 = vrot.slane %v4007, %v4020
    %v4022 = vcombine.high %v4014, %v4014
    %v4023 = vcombine.high %v4021, %v4021
    %v4024 = vcombine.high %v3800, %v3800
    %v4026 = vunpack.c.l.s4 1983009808
    %v4027 = vunpack.c.0.s8 %v4026
    %v4028 = vlaneseq
    %v4029 = vshrl.u32 %v4028, 7
    %v4030 = vsub.s32 %v4027, %v4029
    %v4031 = vrot.slane %v3800, %v4030
    %v4033 = vunpack.c.l.s4 1983009808
    %v4034 = vunpack.c.0.s8 %v4033
    %v4035 = vlaneseq
    %v4036 = vshrl.u32 %v4035, 7
    %v4037 = vsub.s32 %v4034, %v4036
    %v4038 = vrot.slane %v4024, %v4037
    %v4039 = vcombine.high %v4031, %v4031
    %v4040 = vcombine.high %v4038, %v4038
    %v4041 = vcombine.high %v3801, %v3801
    %v4043 = vunpack.c.l.s4 1983009808
    %v4044 = vunpack.c.0.s8 %v4043
    %v4045 = vlaneseq
    %v4046 = vshrl.u32 %v4045, 7
    %v4047 = vsub.s32 %v4044, %v4046
    %v4048 = vrot.slane %v3801, %v4047
    %v4050 = vunpack.c.l.s4 1983009808
    %v4051 = vunpack.c.0.s8 %v4050
    %v4052 = vlaneseq
    %v4053 = vshrl.u32 %v4052, 7
    %v4054 = vsub.s32 %v4051, %v4053
    %v4055 = vrot.slane %v4041, %v4054
    %v4056 = vcombine.high %v4048, %v4048
    %v4057 = vcombine.high %v4055, %v4055
    %v4058 = vcombine.high %v3802, %v3802
    %v4060 = vunpack.c.l.s4 1983009808
    %v4061 = vunpack.c.0.s8 %v4060
    %v4062 = vlaneseq
    %v4063 = vshrl.u32 %v4062, 7
    %v4064 = vsub.s32 %v4061, %v4063
    %v4065 = vrot.slane %v3802, %v4064
    %v4067 = vunpack.c.l.s4 1983009808
    %v4068 = vunpack.c.0.s8 %v4067
    %v4069 = vlaneseq
    %v4070 = vshrl.u32 %v4069, 7
    %v4071 = vsub.s32 %v4068, %v4070
    %v4072 = vrot.slane %v4058, %v4071
    %v4073 = vcombine.high %v4065, %v4065
    %v4074 = vcombine.high %v4072, %v4072
    %v4075 = vcombine.high %v3803, %v3803
    %v4077 = vunpack.c.l.s4 1983009808
    %v4078 = vunpack.c.0.s8 %v4077
    %v4079 = vlaneseq
    %v4080 = vshrl.u32 %v4079, 7
    %v4081 = vsub.s32 %v4078, %v4080
    %v4082 = vrot.slane %v3803, %v4081
    %v4084 = vunpack.c.l.s4 1983009808
    %v4085 = vunpack.c.0.s8 %v4084
    %v4086 = vlaneseq
    %v4087 = vshrl.u32 %v4086, 7
    %v4088 = vsub.s32 %v4085, %v4087
    %v4089 = vrot.slane %v4075, %v4088
    %v4090 = vcombine.high %v4082, %v4082
    %v4091 = vcombine.high %v4089, %v4089
    %vm4156 = vcmask 517120
    %v4157 = vsel %vm4156, %v3827, -inf
    %v4158 = vrot.slane %v4157, 4
    %v4159 = vmax.f32 %v4157, %v4158
    %v4160 = vrot.slane %v4159, 2
    %v4161 = vmax.f32 %v4159, %v4160
    %v4162 = vrot.slane %v4161, 1
    %v4163 = vmax.f32 %v4161, %v4162
    %v4164 = vsel %vm4156, %v3835, -inf
    %v4165 = vrot.slane %v4164, 4
    %v4166 = vmax.f32 %v4164, %v4165
    %v4167 = vrot.slane %v4166, 2
    %v4168 = vmax.f32 %v4166, %v4167
    %v4169 = vrot.slane %v4168, 1
    %v4170 = vmax.f32 %v4168, %v4169
    %v4171 = vsel %vm4156, %v3834, -inf
    %v4172 = vrot.slane %v4171, 4
    %v4173 = vmax.f32 %v4171, %v4172
    %v4174 = vrot.slane %v4173, 2
    %v4175 = vmax.f32 %v4173, %v4174
    %v4176 = vrot.slane %v4175, 1
    %v4177 = vmax.f32 %v4175, %v4176
    %v4178 = vsel %vm4156, %v3836, -inf
    %v4179 = vrot.slane %v4178, 4
    %v4180 = vmax.f32 %v4178, %v4179
    %v4181 = vrot.slane %v4180, 2
    %v4182 = vmax.f32 %v4180, %v4181
    %v4183 = vrot.slane %v4182, 1
    %v4184 = vmax.f32 %v4182, %v4183
    %v4185 = vsel %vm4156, %v3844, -inf
    %v4186 = vrot.slane %v4185, 4
    %v4187 = vmax.f32 %v4185, %v4186
    %v4188 = vrot.slane %v4187, 2
    %v4189 = vmax.f32 %v4187, %v4188
    %v4190 = vrot.slane %v4189, 1
    %v4191 = vmax.f32 %v4189, %v4190
    %v4192 = vsel %vm4156, %v3852, -inf
    %v4193 = vrot.slane %v4192, 4
    %v4194 = vmax.f32 %v4192, %v4193
    %v4195 = vrot.slane %v4194, 2
    %v4196 = vmax.f32 %v4194, %v4195
    %v4197 = vrot.slane %v4196, 1
    %v4198 = vmax.f32 %v4196, %v4197
    %v4199 = vsel %vm4156, %v3851, -inf
    %v4200 = vrot.slane %v4199, 4
    %v4201 = vmax.f32 %v4199, %v4200
    %v4202 = vrot.slane %v4201, 2
    %v4203 = vmax.f32 %v4201, %v4202
    %v4204 = vrot.slane %v4203, 1
    %v4205 = vmax.f32 %v4203, %v4204
    %v4206 = vsel %vm4156, %v3853, -inf
    %v4207 = vrot.slane %v4206, 4
    %v4208 = vmax.f32 %v4206, %v4207
    %v4209 = vrot.slane %v4208, 2
    %v4210 = vmax.f32 %v4208, %v4209
    %v4211 = vrot.slane %v4210, 1
    %v4212 = vmax.f32 %v4210, %v4211
    %v4213 = vsel %vm4156, %v3861, -inf
    %v4214 = vrot.slane %v4213, 4
    %v4215 = vmax.f32 %v4213, %v4214
    %v4216 = vrot.slane %v4215, 2
    %v4217 = vmax.f32 %v4215, %v4216
    %v4218 = vrot.slane %v4217, 1
    %v4219 = vmax.f32 %v4217, %v4218
    %v4220 = vsel %vm4156, %v3869, -inf
    %v4221 = vrot.slane %v4220, 4
    %v4222 = vmax.f32 %v4220, %v4221
    %v4223 = vrot.slane %v4222, 2
    %v4224 = vmax.f32 %v4222, %v4223
    %v4225 = vrot.slane %v4224, 1
    %v4226 = vmax.f32 %v4224, %v4225
    %v4227 = vsel %vm4156, %v3868, -inf
    %v4228 = vrot.slane %v4227, 4
    %v4229 = vmax.f32 %v4227, %v4228
    %v4230 = vrot.slane %v4229, 2
    %v4231 = vmax.f32 %v4229, %v4230
    %v4232 = vrot.slane %v4231, 1
    %v4233 = vmax.f32 %v4231, %v4232
    %v4234 = vsel %vm4156, %v3870, -inf
    %v4235 = vrot.slane %v4234, 4
    %v4236 = vmax.f32 %v4234, %v4235
    %v4237 = vrot.slane %v4236, 2
    %v4238 = vmax.f32 %v4236, %v4237
    %v4239 = vrot.slane %v4238, 1
    %v4240 = vmax.f32 %v4238, %v4239
    %v4241 = vsel %vm4156, %v3878, -inf
    %v4242 = vrot.slane %v4241, 4
    %v4243 = vmax.f32 %v4241, %v4242
    %v4244 = vrot.slane %v4243, 2
    %v4245 = vmax.f32 %v4243, %v4244
    %v4246 = vrot.slane %v4245, 1
    %v4247 = vmax.f32 %v4245, %v4246
    %v4248 = vsel %vm4156, %v3886, -inf
    %v4249 = vrot.slane %v4248, 4
    %v4250 = vmax.f32 %v4248, %v4249
    %v4251 = vrot.slane %v4250, 2
    %v4252 = vmax.f32 %v4250, %v4251
    %v4253 = vrot.slane %v4252, 1
    %v4254 = vmax.f32 %v4252, %v4253
    %v4255 = vsel %vm4156, %v3885, -inf
    %v4256 = vrot.slane %v4255, 4
    %v4257 = vmax.f32 %v4255, %v4256
    %v4258 = vrot.slane %v4257, 2
    %v4259 = vmax.f32 %v4257, %v4258
    %v4260 = vrot.slane %v4259, 1
    %v4261 = vmax.f32 %v4259, %v4260
    %v4262 = vsel %vm4156, %v3887, -inf
    %v4263 = vrot.slane %v4262, 4
    %v4264 = vmax.f32 %v4262, %v4263
    %v4265 = vrot.slane %v4264, 2
    %v4266 = vmax.f32 %v4264, %v4265
    %v4267 = vrot.slane %v4266, 1
    %v4268 = vmax.f32 %v4266, %v4267
    %v4269 = vsel %vm4156, %v3895, -inf
    %v4270 = vrot.slane %v4269, 4
    %v4271 = vmax.f32 %v4269, %v4270
    %v4272 = vrot.slane %v4271, 2
    %v4273 = vmax.f32 %v4271, %v4272
    %v4274 = vrot.slane %v4273, 1
    %v4275 = vmax.f32 %v4273, %v4274
    %v4276 = vsel %vm4156, %v3903, -inf
    %v4277 = vrot.slane %v4276, 4
    %v4278 = vmax.f32 %v4276, %v4277
    %v4279 = vrot.slane %v4278, 2
    %v4280 = vmax.f32 %v4278, %v4279
    %v4281 = vrot.slane %v4280, 1
    %v4282 = vmax.f32 %v4280, %v4281
    %v4283 = vsel %vm4156, %v3902, -inf
    %v4284 = vrot.slane %v4283, 4
    %v4285 = vmax.f32 %v4283, %v4284
    %v4286 = vrot.slane %v4285, 2
    %v4287 = vmax.f32 %v4285, %v4286
    %v4288 = vrot.slane %v4287, 1
    %v4289 = vmax.f32 %v4287, %v4288
    %v4290 = vsel %vm4156, %v3904, -inf
    %v4291 = vrot.slane %v4290, 4
    %v4292 = vmax.f32 %v4290, %v4291
    %v4293 = vrot.slane %v4292, 2
    %v4294 = vmax.f32 %v4292, %v4293
    %v4295 = vrot.slane %v4294, 1
    %v4296 = vmax.f32 %v4294, %v4295
    %v4297 = vsel %vm4156, %v3912, -inf
    %v4298 = vrot.slane %v4297, 4
    %v4299 = vmax.f32 %v4297, %v4298
    %v4300 = vrot.slane %v4299, 2
    %v4301 = vmax.f32 %v4299, %v4300
    %v4302 = vrot.slane %v4301, 1
    %v4303 = vmax.f32 %v4301, %v4302
    %v4304 = vsel %vm4156, %v3920, -inf
    %v4305 = vrot.slane %v4304, 4
    %v4306 = vmax.f32 %v4304, %v4305
    %v4307 = vrot.slane %v4306, 2
    %v4308 = vmax.f32 %v4306, %v4307
    %v4309 = vrot.slane %v4308, 1
    %v4310 = vmax.f32 %v4308, %v4309
    %v4311 = vsel %vm4156, %v3919, -inf
    %v4312 = vrot.slane %v4311, 4
    %v4313 = vmax.f32 %v4311, %v4312
    %v4314 = vrot.slane %v4313, 2
    %v4315 = vmax.f32 %v4313, %v4314
    %v4316 = vrot.slane %v4315, 1
    %v4317 = vmax.f32 %v4315, %v4316
    %v4318 = vsel %vm4156, %v3921, -inf
    %v4319 = vrot.slane %v4318, 4
    %v4320 = vmax.f32 %v4318, %v4319
    %v4321 = vrot.slane %v4320, 2
    %v4322 = vmax.f32 %v4320, %v4321
    %v4323 = vrot.slane %v4322, 1
    %v4324 = vmax.f32 %v4322, %v4323
    %v4325 = vsel %vm4156, %v3929, -inf
    %v4326 = vrot.slane %v4325, 4
    %v4327 = vmax.f32 %v4325, %v4326
    %v4328 = vrot.slane %v4327, 2
    %v4329 = vmax.f32 %v4327, %v4328
    %v4330 = vrot.slane %v4329, 1
    %v4331 = vmax.f32 %v4329, %v4330
    %v4332 = vsel %vm4156, %v3937, -inf
    %v4333 = vrot.slane %v4332, 4
    %v4334 = vmax.f32 %v4332, %v4333
    %v4335 = vrot.slane %v4334, 2
    %v4336 = vmax.f32 %v4334, %v4335
    %v4337 = vrot.slane %v4336, 1
    %v4338 = vmax.f32 %v4336, %v4337
    %v4339 = vsel %vm4156, %v3936, -inf
    %v4340 = vrot.slane %v4339, 4
    %v4341 = vmax.f32 %v4339, %v4340
    %v4342 = vrot.slane %v4341, 2
    %v4343 = vmax.f32 %v4341, %v4342
    %v4344 = vrot.slane %v4343, 1
    %v4345 = vmax.f32 %v4343, %v4344
    %v4346 = vsel %vm4156, %v3938, -inf
    %v4347 = vrot.slane %v4346, 4
    %v4348 = vmax.f32 %v4346, %v4347
    %v4349 = vrot.slane %v4348, 2
    %v4350 = vmax.f32 %v4348, %v4349
    %v4351 = vrot.slane %v4350, 1
    %v4352 = vmax.f32 %v4350, %v4351
    %v4353 = vsel %vm4156, %v3946, -inf
    %v4354 = vrot.slane %v4353, 4
    %v4355 = vmax.f32 %v4353, %v4354
    %v4356 = vrot.slane %v4355, 2
    %v4357 = vmax.f32 %v4355, %v4356
    %v4358 = vrot.slane %v4357, 1
    %v4359 = vmax.f32 %v4357, %v4358
    %v4360 = vsel %vm4156, %v3954, -inf
    %v4361 = vrot.slane %v4360, 4
    %v4362 = vmax.f32 %v4360, %v4361
    %v4363 = vrot.slane %v4362, 2
    %v4364 = vmax.f32 %v4362, %v4363
    %v4365 = vrot.slane %v4364, 1
    %v4366 = vmax.f32 %v4364, %v4365
    %v4367 = vsel %vm4156, %v3953, -inf
    %v4368 = vrot.slane %v4367, 4
    %v4369 = vmax.f32 %v4367, %v4368
    %v4370 = vrot.slane %v4369, 2
    %v4371 = vmax.f32 %v4369, %v4370
    %v4372 = vrot.slane %v4371, 1
    %v4373 = vmax.f32 %v4371, %v4372
    %v4374 = vsel %vm4156, %v3955, -inf
    %v4375 = vrot.slane %v4374, 4
    %v4376 = vmax.f32 %v4374, %v4375
    %v4377 = vrot.slane %v4376, 2
    %v4378 = vmax.f32 %v4376, %v4377
    %v4379 = vrot.slane %v4378, 1
    %v4380 = vmax.f32 %v4378, %v4379
    %v4381 = vsel %vm4156, %v3963, -inf
    %v4382 = vrot.slane %v4381, 4
    %v4383 = vmax.f32 %v4381, %v4382
    %v4384 = vrot.slane %v4383, 2
    %v4385 = vmax.f32 %v4383, %v4384
    %v4386 = vrot.slane %v4385, 1
    %v4387 = vmax.f32 %v4385, %v4386
    %v4388 = vsel %vm4156, %v3971, -inf
    %v4389 = vrot.slane %v4388, 4
    %v4390 = vmax.f32 %v4388, %v4389
    %v4391 = vrot.slane %v4390, 2
    %v4392 = vmax.f32 %v4390, %v4391
    %v4393 = vrot.slane %v4392, 1
    %v4394 = vmax.f32 %v4392, %v4393
    %v4395 = vsel %vm4156, %v3970, -inf
    %v4396 = vrot.slane %v4395, 4
    %v4397 = vmax.f32 %v4395, %v4396
    %v4398 = vrot.slane %v4397, 2
    %v4399 = vmax.f32 %v4397, %v4398
    %v4400 = vrot.slane %v4399, 1
    %v4401 = vmax.f32 %v4399, %v4400
    %v4402 = vsel %vm4156, %v3972, -inf
    %v4403 = vrot.slane %v4402, 4
    %v4404 = vmax.f32 %v4402, %v4403
    %v4405 = vrot.slane %v4404, 2
    %v4406 = vmax.f32 %v4404, %v4405
    %v4407 = vrot.slane %v4406, 1
    %v4408 = vmax.f32 %v4406, %v4407
    %v4409 = vsel %vm4156, %v3980, -inf
    %v4410 = vrot.slane %v4409, 4
    %v4411 = vmax.f32 %v4409, %v4410
    %v4412 = vrot.slane %v4411, 2
    %v4413 = vmax.f32 %v4411, %v4412
    %v4414 = vrot.slane %v4413, 1
    %v4415 = vmax.f32 %v4413, %v4414
    %v4416 = vsel %vm4156, %v3988, -inf
    %v4417 = vrot.slane %v4416, 4
    %v4418 = vmax.f32 %v4416, %v4417
    %v4419 = vrot.slane %v4418, 2
    %v4420 = vmax.f32 %v4418, %v4419
    %v4421 = vrot.slane %v4420, 1
    %v4422 = vmax.f32 %v4420, %v4421
    %v4423 = vsel %vm4156, %v3987, -inf
    %v4424 = vrot.slane %v4423, 4
    %v4425 = vmax.f32 %v4423, %v4424
    %v4426 = vrot.slane %v4425, 2
    %v4427 = vmax.f32 %v4425, %v4426
    %v4428 = vrot.slane %v4427, 1
    %v4429 = vmax.f32 %v4427, %v4428
    %v4430 = vsel %vm4156, %v3989, -inf
    %v4431 = vrot.slane %v4430, 4
    %v4432 = vmax.f32 %v4430, %v4431
    %v4433 = vrot.slane %v4432, 2
    %v4434 = vmax.f32 %v4432, %v4433
    %v4435 = vrot.slane %v4434, 1
    %v4436 = vmax.f32 %v4434, %v4435
    %v4437 = vsel %vm4156, %v3997, -inf
    %v4438 = vrot.slane %v4437, 4
    %v4439 = vmax.f32 %v4437, %v4438
    %v4440 = vrot.slane %v4439, 2
    %v4441 = vmax.f32 %v4439, %v4440
    %v4442 = vrot.slane %v4441, 1
    %v4443 = vmax.f32 %v4441, %v4442
    %v4444 = vsel %vm4156, %v4005, -inf
    %v4445 = vrot.slane %v4444, 4
    %v4446 = vmax.f32 %v4444, %v4445
    %v4447 = vrot.slane %v4446, 2
    %v4448 = vmax.f32 %v4446, %v4447
    %v4449 = vrot.slane %v4448, 1
    %v4450 = vmax.f32 %v4448, %v4449
    %v4451 = vsel %vm4156, %v4004, -inf
    %v4452 = vrot.slane %v4451, 4
    %v4453 = vmax.f32 %v4451, %v4452
    %v4454 = vrot.slane %v4453, 2
    %v4455 = vmax.f32 %v4453, %v4454
    %v4456 = vrot.slane %v4455, 1
    %v4457 = vmax.f32 %v4455, %v4456
    %v4458 = vsel %vm4156, %v4006, -inf
    %v4459 = vrot.slane %v4458, 4
    %v4460 = vmax.f32 %v4458, %v4459
    %v4461 = vrot.slane %v4460, 2
    %v4462 = vmax.f32 %v4460, %v4461
    %v4463 = vrot.slane %v4462, 1
    %v4464 = vmax.f32 %v4462, %v4463
    %v4465 = vsel %vm4156, %v4014, -inf
    %v4466 = vrot.slane %v4465, 4
    %v4467 = vmax.f32 %v4465, %v4466
    %v4468 = vrot.slane %v4467, 2
    %v4469 = vmax.f32 %v4467, %v4468
    %v4470 = vrot.slane %v4469, 1
    %v4471 = vmax.f32 %v4469, %v4470
    %v4472 = vsel %vm4156, %v4022, -inf
    %v4473 = vrot.slane %v4472, 4
    %v4474 = vmax.f32 %v4472, %v4473
    %v4475 = vrot.slane %v4474, 2
    %v4476 = vmax.f32 %v4474, %v4475
    %v4477 = vrot.slane %v4476, 1
    %v4478 = vmax.f32 %v4476, %v4477
    %v4479 = vsel %vm4156, %v4021, -inf
    %v4480 = vrot.slane %v4479, 4
    %v4481 = vmax.f32 %v4479, %v4480
    %v4482 = vrot.slane %v4481, 2
    %v4483 = vmax.f32 %v4481, %v4482
    %v4484 = vrot.slane %v4483, 1
    %v4485 = vmax.f32 %v4483, %v4484
    %v4486 = vsel %vm4156, %v4023, -inf
    %v4487 = vrot.slane %v4486, 4
    %v4488 = vmax.f32 %v4486, %v4487
    %v4489 = vrot.slane %v4488, 2
    %v4490 = vmax.f32 %v4488, %v4489
    %v4491 = vrot.slane %v4490, 1
    %v4492 = vmax.f32 %v4490, %v4491
    %v4493 = vsel %vm4156, %v4031, -inf
    %v4494 = vrot.slane %v4493, 4
    %v4495 = vmax.f32 %v4493, %v4494
    %v4496 = vrot.slane %v4495, 2
    %v4497 = vmax.f32 %v4495, %v4496
    %v4498 = vrot.slane %v4497, 1
    %v4499 = vmax.f32 %v4497, %v4498
    %v4500 = vsel %vm4156, %v4039, -inf
    %v4501 = vrot.slane %v4500, 4
    %v4502 = vmax.f32 %v4500, %v4501
    %v4503 = vrot.slane %v4502, 2
    %v4504 = vmax.f32 %v4502, %v4503
    %v4505 = vrot.slane %v4504, 1
    %v4506 = vmax.f32 %v4504, %v4505
    %v4507 = vsel %vm4156, %v4038, -inf
    %v4508 = vrot.slane %v4507, 4
    %v4509 = vmax.f32 %v4507, %v4508
    %v4510 = vrot.slane %v4509, 2
    %v4511 = vmax.f32 %v4509, %v4510
    %v4512 = vrot.slane %v4511, 1
    %v4513 = vmax.f32 %v4511, %v4512
    %v4514 = vsel %vm4156, %v4040, -inf
    %v4515 = vrot.slane %v4514, 4
    %v4516 = vmax.f32 %v4514, %v4515
    %v4517 = vrot.slane %v4516, 2
    %v4518 = vmax.f32 %v4516, %v4517
    %v4519 = vrot.slane %v4518, 1
    %v4520 = vmax.f32 %v4518, %v4519
    %v4521 = vsel %vm4156, %v4048, -inf
    %v4522 = vrot.slane %v4521, 4
    %v4523 = vmax.f32 %v4521, %v4522
    %v4524 = vrot.slane %v4523, 2
    %v4525 = vmax.f32 %v4523, %v4524
    %v4526 = vrot.slane %v4525, 1
    %v4527 = vmax.f32 %v4525, %v4526
    %v4528 = vsel %vm4156, %v4056, -inf
    %v4529 = vrot.slane %v4528, 4
    %v4530 = vmax.f32 %v4528, %v4529
    %v4531 = vrot.slane %v4530, 2
    %v4532 = vmax.f32 %v4530, %v4531
    %v4533 = vrot.slane %v4532, 1
    %v4534 = vmax.f32 %v4532, %v4533
    %v4535 = vsel %vm4156, %v4055, -inf
    %v4536 = vrot.slane %v4535, 4
    %v4537 = vmax.f32 %v4535, %v4536
    %v4538 = vrot.slane %v4537, 2
    %v4539 = vmax.f32 %v4537, %v4538
    %v4540 = vrot.slane %v4539, 1
    %v4541 = vmax.f32 %v4539, %v4540
    %v4542 = vsel %vm4156, %v4057, -inf
    %v4543 = vrot.slane %v4542, 4
    %v4544 = vmax.f32 %v4542, %v4543
    %v4545 = vrot.slane %v4544, 2
    %v4546 = vmax.f32 %v4544, %v4545
    %v4547 = vrot.slane %v4546, 1
    %v4548 = vmax.f32 %v4546, %v4547
    %v4549 = vsel %vm4156, %v4065, -inf
    %v4550 = vrot.slane %v4549, 4
    %v4551 = vmax.f32 %v4549, %v4550
    %v4552 = vrot.slane %v4551, 2
    %v4553 = vmax.f32 %v4551, %v4552
    %v4554 = vrot.slane %v4553, 1
    %v4555 = vmax.f32 %v4553, %v4554
    %v4556 = vsel %vm4156, %v4073, -inf
    %v4557 = vrot.slane %v4556, 4
    %v4558 = vmax.f32 %v4556, %v4557
    %v4559 = vrot.slane %v4558, 2
    %v4560 = vmax.f32 %v4558, %v4559
    %v4561 = vrot.slane %v4560, 1
    %v4562 = vmax.f32 %v4560, %v4561
    %v4563 = vsel %vm4156, %v4072, -inf
    %v4564 = vrot.slane %v4563, 4
    %v4565 = vmax.f32 %v4563, %v4564
    %v4566 = vrot.slane %v4565, 2
    %v4567 = vmax.f32 %v4565, %v4566
    %v4568 = vrot.slane %v4567, 1
    %v4569 = vmax.f32 %v4567, %v4568
    %v4570 = vsel %vm4156, %v4074, -inf
    %v4571 = vrot.slane %v4570, 4
    %v4572 = vmax.f32 %v4570, %v4571
    %v4573 = vrot.slane %v4572, 2
    %v4574 = vmax.f32 %v4572, %v4573
    %v4575 = vrot.slane %v4574, 1
    %v4576 = vmax.f32 %v4574, %v4575
    %v4577 = vsel %vm4156, %v4082, -inf
    %v4578 = vrot.slane %v4577, 4
    %v4579 = vmax.f32 %v4577, %v4578
    %v4580 = vrot.slane %v4579, 2
    %v4581 = vmax.f32 %v4579, %v4580
    %v4582 = vrot.slane %v4581, 1
    %v4583 = vmax.f32 %v4581, %v4582
    %v4584 = vsel %vm4156, %v4090, -inf
    %v4585 = vrot.slane %v4584, 4
    %v4586 = vmax.f32 %v4584, %v4585
    %v4587 = vrot.slane %v4586, 2
    %v4588 = vmax.f32 %v4586, %v4587
    %v4589 = vrot.slane %v4588, 1
    %v4590 = vmax.f32 %v4588, %v4589
    %v4591 = vsel %vm4156, %v4089, -inf
    %v4592 = vrot.slane %v4591, 4
    %v4593 = vmax.f32 %v4591, %v4592
    %v4594 = vrot.slane %v4593, 2
    %v4595 = vmax.f32 %v4593, %v4594
    %v4596 = vrot.slane %v4595, 1
    %v4597 = vmax.f32 %v4595, %v4596
    %v4598 = vsel %vm4156, %v4091, -inf
    %v4599 = vrot.slane %v4598, 4
    %v4600 = vmax.f32 %v4598, %v4599
    %v4601 = vrot.slane %v4600, 2
    %v4602 = vmax.f32 %v4600, %v4601
    %v4603 = vrot.slane %v4602, 1
    %v4604 = vmax.f32 %v4602, %v4603
    %v4605 = vsel %vm3599, %v4163, -inf
    %v4606 = vsel %vm3599, %v4191, -inf
    %v4607 = vmax.f32 %v4605, %v4606
    %v4608 = vsel %vm3599, %v4170, -inf
    %v4609 = vsel %vm3599, %v4198, -inf
    %v4610 = vmax.f32 %v4608, %v4609
    %v4611 = vsel %vm3599, %v4177, -inf
    %v4612 = vsel %vm3599, %v4205, -inf
    %v4613 = vmax.f32 %v4611, %v4612
    %v4614 = vsel %vm3599, %v4184, -inf
    %v4615 = vsel %vm3599, %v4212, -inf
    %v4616 = vmax.f32 %v4614, %v4615
    %v4617 = vsel %vm3599, %v4219, -inf
    %v4618 = vsel %vm3599, %v4247, -inf
    %v4619 = vmax.f32 %v4617, %v4618
    %v4620 = vsel %vm3599, %v4226, -inf
    %v4621 = vsel %vm3599, %v4254, -inf
    %v4622 = vmax.f32 %v4620, %v4621
    %v4623 = vsel %vm3599, %v4233, -inf
    %v4624 = vsel %vm3599, %v4261, -inf
    %v4625 = vmax.f32 %v4623, %v4624
    %v4626 = vsel %vm3599, %v4240, -inf
    %v4627 = vsel %vm3599, %v4268, -inf
    %v4628 = vmax.f32 %v4626, %v4627
    %v4629 = vsel %vm3599, %v4275, -inf
    %v4630 = vsel %vm3599, %v4303, -inf
    %v4631 = vmax.f32 %v4629, %v4630
    %v4632 = vsel %vm3599, %v4282, -inf
    %v4633 = vsel %vm3599, %v4310, -inf
    %v4634 = vmax.f32 %v4632, %v4633
    %v4635 = vsel %vm3599, %v4289, -inf
    %v4636 = vsel %vm3599, %v4317, -inf
    %v4637 = vmax.f32 %v4635, %v4636
    %v4638 = vsel %vm3599, %v4296, -inf
    %v4639 = vsel %vm3599, %v4324, -inf
    %v4640 = vmax.f32 %v4638, %v4639
    %v4641 = vsel %vm3599, %v4331, -inf
    %v4642 = vsel %vm3599, %v4359, -inf
    %v4643 = vmax.f32 %v4641, %v4642
    %v4644 = vsel %vm3599, %v4338, -inf
    %v4645 = vsel %vm3599, %v4366, -inf
    %v4646 = vmax.f32 %v4644, %v4645
    %v4647 = vsel %vm3599, %v4345, -inf
    %v4648 = vsel %vm3599, %v4373, -inf
    %v4649 = vmax.f32 %v4647, %v4648
    %v4650 = vsel %vm3599, %v4352, -inf
    %v4651 = vsel %vm3599, %v4380, -inf
    %v4652 = vmax.f32 %v4650, %v4651
    %v4653 = vsel %vm3599, %v4387, -inf
    %v4654 = vsel %vm3599, %v4415, -inf
    %v4655 = vmax.f32 %v4653, %v4654
    %v4656 = vsel %vm3599, %v4394, -inf
    %v4657 = vsel %vm3599, %v4422, -inf
    %v4658 = vmax.f32 %v4656, %v4657
    %v4659 = vsel %vm3599, %v4401, -inf
    %v4660 = vsel %vm3599, %v4429, -inf
    %v4661 = vmax.f32 %v4659, %v4660
    %v4662 = vsel %vm3599, %v4408, -inf
    %v4663 = vsel %vm3599, %v4436, -inf
    %v4664 = vmax.f32 %v4662, %v4663
    %v4665 = vsel %vm3599, %v4443, -inf
    %v4666 = vsel %vm3599, %v4471, -inf
    %v4667 = vmax.f32 %v4665, %v4666
    %v4668 = vsel %vm3599, %v4450, -inf
    %v4669 = vsel %vm3599, %v4478, -inf
    %v4670 = vmax.f32 %v4668, %v4669
    %v4671 = vsel %vm3599, %v4457, -inf
    %v4672 = vsel %vm3599, %v4485, -inf
    %v4673 = vmax.f32 %v4671, %v4672
    %v4674 = vsel %vm3599, %v4464, -inf
    %v4675 = vsel %vm3599, %v4492, -inf
    %v4676 = vmax.f32 %v4674, %v4675
    %v4677 = vsel %vm3599, %v4499, -inf
    %v4678 = vsel %vm3599, %v4527, -inf
    %v4679 = vmax.f32 %v4677, %v4678
    %v4680 = vsel %vm3599, %v4506, -inf
    %v4681 = vsel %vm3599, %v4534, -inf
    %v4682 = vmax.f32 %v4680, %v4681
    %v4683 = vsel %vm3599, %v4513, -inf
    %v4684 = vsel %vm3599, %v4541, -inf
    %v4685 = vmax.f32 %v4683, %v4684
    %v4686 = vsel %vm3599, %v4520, -inf
    %v4687 = vsel %vm3599, %v4548, -inf
    %v4688 = vmax.f32 %v4686, %v4687
    %v4689 = vsel %vm3599, %v4555, -inf
    %v4690 = vsel %vm3599, %v4583, -inf
    %v4691 = vmax.f32 %v4689, %v4690
    %v4692 = vsel %vm3599, %v4562, -inf
    %v4693 = vsel %vm3599, %v4590, -inf
    %v4694 = vmax.f32 %v4692, %v4693
    %v4695 = vsel %vm3599, %v4569, -inf
    %v4696 = vsel %vm3599, %v4597, -inf
    %v4697 = vmax.f32 %v4695, %v4696
    %v4698 = vsel %vm3599, %v4576, -inf
    %v4699 = vsel %vm3599, %v4604, -inf
    %v4700 = vmax.f32 %v4698, %v4699
    %v4701 = vpack.c.bf16 %v4607, %v4607
    %v4702 = vpack.c.bf16 %v4610, %v4610
    %v4703 = vpack.c.bf16 %v4613, %v4613
    %v4704 = vpack.c.bf16 %v4616, %v4616
    %v4705 = vpack.c.bf16 %v4619, %v4619
    %v4706 = vpack.c.bf16 %v4622, %v4622
    %v4707 = vpack.c.bf16 %v4625, %v4625
    %v4708 = vpack.c.bf16 %v4628, %v4628
    %v4709 = vpack.c.bf16 %v4631, %v4631
    %v4710 = vpack.c.bf16 %v4634, %v4634
    %v4711 = vpack.c.bf16 %v4637, %v4637
    %v4712 = vpack.c.bf16 %v4640, %v4640
    %v4713 = vpack.c.bf16 %v4643, %v4643
    %v4714 = vpack.c.bf16 %v4646, %v4646
    %v4715 = vpack.c.bf16 %v4649, %v4649
    %v4716 = vpack.c.bf16 %v4652, %v4652
    %v4717 = vpack.c.bf16 %v4655, %v4655
    %v4718 = vpack.c.bf16 %v4658, %v4658
    %v4719 = vpack.c.bf16 %v4661, %v4661
    %v4720 = vpack.c.bf16 %v4664, %v4664
    %v4721 = vpack.c.bf16 %v4667, %v4667
    %v4722 = vpack.c.bf16 %v4670, %v4670
    %v4723 = vpack.c.bf16 %v4673, %v4673
    %v4724 = vpack.c.bf16 %v4676, %v4676
    %v4725 = vpack.c.bf16 %v4679, %v4679
    %v4726 = vpack.c.bf16 %v4682, %v4682
    %v4727 = vpack.c.bf16 %v4685, %v4685
    %v4728 = vpack.c.bf16 %v4688, %v4688
    %v4729 = vpack.c.bf16 %v4691, %v4691
    %v4730 = vpack.c.bf16 %v4694, %v4694
    %v4731 = vpack.c.bf16 %v4697, %v4697
    %v4732 = vpack.c.bf16 %v4700, %v4700
    %v4765 = vunpack.c.l.b16 %v4701
    %v4766 = vunpack.c.l.b16 %v4702
    %v4767 = vunpack.c.l.b16 %v4703
    %v4768 = vunpack.c.l.b16 %v4704
    %v4769 = vunpack.c.l.b16 %v4705
    %v4770 = vunpack.c.l.b16 %v4706
    %v4771 = vunpack.c.l.b16 %v4707
    %v4772 = vunpack.c.l.b16 %v4708
    %v4773 = vunpack.c.l.b16 %v4709
    %v4774 = vunpack.c.l.b16 %v4710
    %v4775 = vunpack.c.l.b16 %v4711
    %v4776 = vunpack.c.l.b16 %v4712
    %v4777 = vunpack.c.l.b16 %v4713
    %v4778 = vunpack.c.l.b16 %v4714
    %v4779 = vunpack.c.l.b16 %v4715
    %v4780 = vunpack.c.l.b16 %v4716
    %v4781 = vunpack.c.l.b16 %v4717
    %v4782 = vunpack.c.l.b16 %v4718
    %v4783 = vunpack.c.l.b16 %v4719
    %v4784 = vunpack.c.l.b16 %v4720
    %v4785 = vunpack.c.l.b16 %v4721
    %v4786 = vunpack.c.l.b16 %v4722
    %v4787 = vunpack.c.l.b16 %v4723
    %v4788 = vunpack.c.l.b16 %v4724
    %v4789 = vunpack.c.l.b16 %v4725
    %v4790 = vunpack.c.l.b16 %v4726
    %v4791 = vunpack.c.l.b16 %v4727
    %v4792 = vunpack.c.l.b16 %v4728
    %v4793 = vunpack.c.l.b16 %v4729
    %v4794 = vunpack.c.l.b16 %v4730
    %v4795 = vunpack.c.l.b16 %v4731
    %v4796 = vunpack.c.l.b16 %v4732
    %v4797 = vpack.c.b16 %v4765, %v4765
    %v4798 = vpack.c.b16 %v4766, %v4766
    %v4799 = vpack.c.b16 %v4767, %v4767
    %v4800 = vpack.c.b16 %v4768, %v4768
    %v4801 = vpack.c.b16 %v4769, %v4769
    %v4802 = vpack.c.b16 %v4770, %v4770
    %v4803 = vpack.c.b16 %v4771, %v4771
    %v4804 = vpack.c.b16 %v4772, %v4772
    %v4805 = vpack.c.b16 %v4773, %v4773
    %v4806 = vpack.c.b16 %v4774, %v4774
    %v4807 = vpack.c.b16 %v4775, %v4775
    %v4808 = vpack.c.b16 %v4776, %v4776
    %v4809 = vpack.c.b16 %v4777, %v4777
    %v4810 = vpack.c.b16 %v4778, %v4778
    %v4811 = vpack.c.b16 %v4779, %v4779
    %v4812 = vpack.c.b16 %v4780, %v4780
    %v4813 = vpack.c.b16 %v4781, %v4781
    %v4814 = vpack.c.b16 %v4782, %v4782
    %v4815 = vpack.c.b16 %v4783, %v4783
    %v4816 = vpack.c.b16 %v4784, %v4784
    %v4817 = vpack.c.b16 %v4785, %v4785
    %v4818 = vpack.c.b16 %v4786, %v4786
    %v4819 = vpack.c.b16 %v4787, %v4787
    %v4820 = vpack.c.b16 %v4788, %v4788
    %v4821 = vpack.c.b16 %v4789, %v4789
    %v4822 = vpack.c.b16 %v4790, %v4790
    %v4823 = vpack.c.b16 %v4791, %v4791
    %v4824 = vpack.c.b16 %v4792, %v4792
    %v4825 = vpack.c.b16 %v4793, %v4793
    %v4826 = vpack.c.b16 %v4794, %v4794
    %v4827 = vpack.c.b16 %v4795, %v4795
    %v4828 = vpack.c.b16 %v4796, %v4796
    %v4829 = vunpack.c.l.b16 %v4797
    %v4830 = vunpack.c.l.b16 %v4798
    %v4831 = vunpack.c.l.b16 %v4799
    %v4832 = vunpack.c.l.b16 %v4800
    %v4833 = vunpack.c.l.b16 %v4801
    %v4834 = vunpack.c.l.b16 %v4802
    %v4835 = vunpack.c.l.b16 %v4803
    %v4836 = vunpack.c.l.b16 %v4804
    %v4837 = vunpack.c.l.b16 %v4805
    %v4838 = vunpack.c.l.b16 %v4806
    %v4839 = vunpack.c.l.b16 %v4807
    %v4840 = vunpack.c.l.b16 %v4808
    %v4841 = vunpack.c.l.b16 %v4809
    %v4842 = vunpack.c.l.b16 %v4810
    %v4843 = vunpack.c.l.b16 %v4811
    %v4844 = vunpack.c.l.b16 %v4812
    %v4845 = vunpack.c.l.b16 %v4813
    %v4846 = vunpack.c.l.b16 %v4814
    %v4847 = vunpack.c.l.b16 %v4815
    %v4848 = vunpack.c.l.b16 %v4816
    %v4849 = vunpack.c.l.b16 %v4817
    %v4850 = vunpack.c.l.b16 %v4818
    %v4851 = vunpack.c.l.b16 %v4819
    %v4852 = vunpack.c.l.b16 %v4820
    %v4853 = vunpack.c.l.b16 %v4821
    %v4854 = vunpack.c.l.b16 %v4822
    %v4855 = vunpack.c.l.b16 %v4823
    %v4856 = vunpack.c.l.b16 %v4824
    %v4857 = vunpack.c.l.b16 %v4825
    %v4858 = vunpack.c.l.b16 %v4826
    %v4859 = vunpack.c.l.b16 %v4827
    %v4860 = vunpack.c.l.b16 %v4828
    %vm4861 = vcmask 1042434
    %v4862 = vsel %vm4861, %v4830, %v4829
    %vm4863 = vcmask 1043459
    %v4864 = vsel %vm4863, %v4831, %v4862
    %vm4865 = vcmask 1044484
    %v4866 = vsel %vm4865, %v4832, %v4864
    %v4867 = vsel %vm4861, %v4834, %v4833
    %v4868 = vsel %vm4863, %v4835, %v4867
    %v4869 = vsel %vm4865, %v4836, %v4868
    %v4870 = vsel %vm4861, %v4838, %v4837
    %v4871 = vsel %vm4863, %v4839, %v4870
    %v4872 = vsel %vm4865, %v4840, %v4871
    %v4873 = vsel %vm4861, %v4842, %v4841
    %v4874 = vsel %vm4863, %v4843, %v4873
    %v4875 = vsel %vm4865, %v4844, %v4874
    %v4876 = vsel %vm4861, %v4846, %v4845
    %v4877 = vsel %vm4863, %v4847, %v4876
    %v4878 = vsel %vm4865, %v4848, %v4877
    %v4879 = vsel %vm4861, %v4850, %v4849
    %v4880 = vsel %vm4863, %v4851, %v4879
    %v4881 = vsel %vm4865, %v4852, %v4880
    %v4882 = vsel %vm4861, %v4854, %v4853
    %v4883 = vsel %vm4863, %v4855, %v4882
    %v4884 = vsel %vm4865, %v4856, %v4883
    %v4885 = vsel %vm4861, %v4858, %v4857
    %v4886 = vsel %vm4863, %v4859, %v4885
    %v4887 = vsel %vm4865, %v4860, %v4886
    %v4888 = vpack.c.b16 %v4866, %v4866
    %v4889 = vpack.c.b16 %v4869, %v4869
    %v4890 = vpack.c.b16 %v4872, %v4872
    %v4891 = vpack.c.b16 %v4875, %v4875
    %v4892 = vpack.c.b16 %v4878, %v4878
    %v4893 = vpack.c.b16 %v4881, %v4881
    %v4894 = vpack.c.b16 %v4884, %v4884
    %v4895 = vpack.c.b16 %v4887, %v4887
    %s4904 = scalar_lea.vmem [#allocation3], 4
    %vm4905 = vcmask 518144
    %vm4906 = vsmask.f32 2306
    %vm4907 = vmand %vm4905, %vm4906
    %v4908 = vld [vmem:[%s4904] sm:$0x7]
    %v4909 = vsel %vm4907, %v4888, %v4908
    %4910 = vst [vmem:[%s4904] sm:$0x7] %v4909
    %v4911 = vld [vmem:[%s4904 + $0x4] sm:$0x7]
    %v4912 = vsel %vm4907, %v4889, %v4911
    %4913 = vst [vmem:[%s4904 + $0x4] sm:$0x7] %v4912
    %v4914 = vld [vmem:[%s4904 + $0x8] sm:$0x7]
    %v4915 = vsel %vm4907, %v4890, %v4914
    %4916 = vst [vmem:[%s4904 + $0x8] sm:$0x7] %v4915
    %v4917 = vld [vmem:[%s4904 + $0xc] sm:$0x7]
    %v4918 = vsel %vm4907, %v4891, %v4917
    %4919 = vst [vmem:[%s4904 + $0xc] sm:$0x7] %v4918
    %v4920 = vld [vmem:[%s4904 + $0x18] sm:$0x7]
    %v4921 = vsel %vm4907, %v4892, %v4920
    %4922 = vst [vmem:[%s4904 + $0x18] sm:$0x7] %v4921
    %v4923 = vld [vmem:[%s4904 + $0x1c] sm:$0x7]
    %v4924 = vsel %vm4907, %v4893, %v4923
    %4925 = vst [vmem:[%s4904 + $0x1c] sm:$0x7] %v4924
    %v4926 = vld [vmem:[%s4904 + $0x20] sm:$0x7]
    %v4927 = vsel %vm4907, %v4894, %v4926
    %4928 = vst [vmem:[%s4904 + $0x20] sm:$0x7] %v4927
    %v4929 = vld [vmem:[%s4904 + $0x24] sm:$0x7]
    %v4930 = vsel %vm4907, %v4895, %v4929
    %4931 = vst [vmem:[%s4904 + $0x24] sm:$0x7] %v4930
    %v4932 = vld [vmem:[#allocation3] sm:$0x7]
    %v4933 = vsel %vm4907, %v4889, %v4932
    %4934 = vst [vmem:[#allocation3] sm:$0x7] %v4933
    %v4935 = vld [vmem:[#allocation3 + $0x18] sm:$0x7]
    %v4936 = vsel %vm4907, %v4893, %v4935
    %4937 = vst [vmem:[#allocation3 + $0x18] sm:$0x7] %v4936
    %s4938 = scalar_lea.vmem [#allocation3], 20
    %v4939 = vld [vmem:[%s4938] sm:$0x7]
    %v4940 = vsel %vm4907, %v4890, %v4939
    %4941 = vst [vmem:[%s4938] sm:$0x7] %v4940
    %v4942 = vld [vmem:[%s4938 + $0x18] sm:$0x7]
    %v4943 = vsel %vm4907, %v4894, %v4942
    %4944 = vst [vmem:[%s4938 + $0x18] sm:$0x7] %v4943
    %vm4945 = vcmask 516096
    %vm4946 = vmand %vm4945, %vm212
    %v4947 = vld [vmem:[%s4904] sm:$0x1]
    %v4948 = vsel %vm4946, %v4702, %v4947
    %4949 = vst [vmem:[%s4904] sm:$0x1] %v4948
    %v4950 = vld [vmem:[%s4904 + $0x4] sm:$0x1]
    %v4951 = vsel %vm4946, %v4706, %v4950
    %4952 = vst [vmem:[%s4904 + $0x4] sm:$0x1] %v4951
    %v4953 = vld [vmem:[%s4904 + $0x8] sm:$0x1]
    %v4954 = vsel %vm4946, %v4710, %v4953
    %4955 = vst [vmem:[%s4904 + $0x8] sm:$0x1] %v4954
    %v4956 = vld [vmem:[%s4904 + $0xc] sm:$0x1]
    %v4957 = vsel %vm4946, %v4714, %v4956
    %4958 = vst [vmem:[%s4904 + $0xc] sm:$0x1] %v4957
    %v4959 = vld [vmem:[%s4904 + $0x18] sm:$0x1]
    %v4960 = vsel %vm4946, %v4718, %v4959
    %4961 = vst [vmem:[%s4904 + $0x18] sm:$0x1] %v4960
    %v4962 = vld [vmem:[%s4904 + $0x1c] sm:$0x1]
    %v4963 = vsel %vm4946, %v4722, %v4962
    %4964 = vst [vmem:[%s4904 + $0x1c] sm:$0x1] %v4963
    %v4965 = vld [vmem:[%s4904 + $0x20] sm:$0x1]
    %v4966 = vsel %vm4946, %v4726, %v4965
    %4967 = vst [vmem:[%s4904 + $0x20] sm:$0x1] %v4966
    %v4968 = vld [vmem:[%s4904 + $0x24] sm:$0x1]
    %v4969 = vsel %vm4946, %v4730, %v4968
    %4970 = vst [vmem:[%s4904 + $0x24] sm:$0x1] %v4969
    %vm4971 = vcmask 518146
    %vm4972 = vsmask.f32 7946
    %vm4973 = vmand %vm4971, %vm4972
    %v4974 = vld [vmem:[%s4904] sm:$0x4]
    %v4975 = vsel %vm4973, %v4703, %v4974
    %4976 = vst [vmem:[%s4904] sm:$0x4] %v4975
    %v4977 = vld [vmem:[%s4904 + $0x4] sm:$0x4]
    %v4978 = vsel %vm4973, %v4707, %v4977
    %4979 = vst [vmem:[%s4904 + $0x4] sm:$0x4] %v4978
    %v4980 = vld [vmem:[%s4904 + $0x8] sm:$0x4]
    %v4981 = vsel %vm4973, %v4711, %v4980
    %4982 = vst [vmem:[%s4904 + $0x8] sm:$0x4] %v4981
    %v4983 = vld [vmem:[%s4904 + $0xc] sm:$0x4]
    %v4984 = vsel %vm4973, %v4715, %v4983
    %4985 = vst [vmem:[%s4904 + $0xc] sm:$0x4] %v4984
    %v4986 = vld [vmem:[%s4904 + $0x18] sm:$0x4]
    %v4987 = vsel %vm4973, %v4719, %v4986
    %4988 = vst [vmem:[%s4904 + $0x18] sm:$0x4] %v4987
    %v4989 = vld [vmem:[%s4904 + $0x1c] sm:$0x4]
    %v4990 = vsel %vm4973, %v4723, %v4989
    %4991 = vst [vmem:[%s4904 + $0x1c] sm:$0x4] %v4990
    %v4992 = vld [vmem:[%s4904 + $0x20] sm:$0x4]
    %v4993 = vsel %vm4973, %v4727, %v4992
    %4994 = vst [vmem:[%s4904 + $0x20] sm:$0x4] %v4993
    %v4995 = vld [vmem:[%s4904 + $0x24] sm:$0x4]
    %v4996 = vsel %vm4973, %v4731, %v4995
    %4997 = vst [vmem:[%s4904 + $0x24] sm:$0x4] %v4996
    %v4998 = vld [vmem:[#allocation3] sm:$0x1]
    %v4999 = vsel %vm4946, %v4706, %v4998
    %5000 = vst [vmem:[#allocation3] sm:$0x1] %v4999
    %v5001 = vld [vmem:[#allocation3 + $0x18] sm:$0x1]
    %v5002 = vsel %vm4946, %v4722, %v5001
    %5003 = vst [vmem:[#allocation3 + $0x18] sm:$0x1] %v5002
    %v5004 = vld [vmem:[#allocation3] sm:$0x4]
    %v5005 = vsel %vm4973, %v4707, %v5004
    %5006 = vst [vmem:[#allocation3] sm:$0x4] %v5005
    %v5007 = vld [vmem:[#allocation3 + $0x18] sm:$0x4]
    %v5008 = vsel %vm4973, %v4723, %v5007
    %5009 = vst [vmem:[#allocation3 + $0x18] sm:$0x4] %v5008
    %v5010 = vld [vmem:[%s4938] sm:$0x1]
    %v5011 = vsel %vm4946, %v4710, %v5010
    %5012 = vst [vmem:[%s4938] sm:$0x1] %v5011
    %v5013 = vld [vmem:[%s4938 + $0x18] sm:$0x1]
    %v5014 = vsel %vm4946, %v4726, %v5013
    %5015 = vst [vmem:[%s4938 + $0x18] sm:$0x1] %v5014
    %v5016 = vld [vmem:[%s4938] sm:$0x4]
    %v5017 = vsel %vm4973, %v4711, %v5016
    %5018 = vst [vmem:[%s4938] sm:$0x4] %v5017
    %v5019 = vld [vmem:[%s4938 + $0x18] sm:$0x4]
    %v5020 = vsel %vm4973, %v4727, %v5019
    %5021 = vst [vmem:[%s4938 + $0x18] sm:$0x4] %v5020
    %v5022 = vld [vmem:[#allocation3] sm:$0x3]
    %v5023 = vld [vmem:[#allocation3 + $0x4] sm:$0x3]
    %v5024 = vld [vmem:[#allocation3 + $0x8] sm:$0x3]
    %v5025 = vld [vmem:[#allocation3 + $0xc] sm:$0x3]
    %v5026 = vld [vmem:[#allocation3 + $0x18] sm:$0x3]
    %v5027 = vld [vmem:[#allocation3 + $0x1c] sm:$0x3]
    %v5028 = vld [vmem:[#allocation3 + $0x20] sm:$0x3]
    %v5029 = vld [vmem:[#allocation3 + $0x24] sm:$0x3]
    %v5030 = vld [vmem:[%s2] sm:$0xf]
    %v5031 = vld [vmem:[%s2 + $0x4] sm:$0xf]
    %v5032 = vld [vmem:[%s2 + $0x8] sm:$0xf]
    %v5033 = vld [vmem:[%s2 + $0xc] sm:$0xf]
    %v5034 = vld [vmem:[%s2 + $0x10] sm:$0xf]
    %v5035 = vld [vmem:[%s2 + $0x14] sm:$0xf]
    %v5036 = vld [vmem:[%s2 + $0x18] sm:$0xf]
    %v5037 = vld [vmem:[%s2 + $0x1c] sm:$0xf]
    %v5038 = vld [vmem:[#allocation3] sm:$0x7]
    %v5039 = vld [vmem:[#allocation3 + $0x4] sm:$0x7]
    %v5040 = vld [vmem:[#allocation3 + $0x8] sm:$0x7]
    %v5041 = vld [vmem:[#allocation3 + $0xc] sm:$0x7]
    %v5042 = vld [vmem:[#allocation3 + $0x18] sm:$0x7]
    %v5043 = vld [vmem:[#allocation3 + $0x1c] sm:$0x7]
    %v5044 = vld [vmem:[#allocation3 + $0x20] sm:$0x7]
    %v5045 = vld [vmem:[#allocation3 + $0x24] sm:$0x7]
    %v5055 = vunpack.c.l.s4 1983009808
    %v5056 = vunpack.c.0.s8 %v5055
    %v5057 = vlaneseq
    %v5058 = vshrl.u32 %v5057, 7
    %v5059 = vsub.s32 %v5056, %v5058
    %v5060 = vrot.slane %v5038, %v5059
    %v5061 = vcombine.high %v5060, %v5060
    %v5063 = vunpack.c.l.s4 1983009808
    %v5064 = vunpack.c.0.s8 %v5063
    %v5065 = vlaneseq
    %v5066 = vshrl.u32 %v5065, 7
    %v5067 = vsub.s32 %v5064, %v5066
    %v5068 = vrot.slane %v5039, %v5067
    %v5069 = vcombine.high %v5068, %v5068
    %v5071 = vunpack.c.l.s4 1983009808
    %v5072 = vunpack.c.0.s8 %v5071
    %v5073 = vlaneseq
    %v5074 = vshrl.u32 %v5073, 7
    %v5075 = vsub.s32 %v5072, %v5074
    %v5076 = vrot.slane %v5040, %v5075
    %v5077 = vcombine.high %v5076, %v5076
    %v5079 = vunpack.c.l.s4 1983009808
    %v5080 = vunpack.c.0.s8 %v5079
    %v5081 = vlaneseq
    %v5082 = vshrl.u32 %v5081, 7
    %v5083 = vsub.s32 %v5080, %v5082
    %v5084 = vrot.slane %v5041, %v5083
    %v5085 = vcombine.high %v5084, %v5084
    %v5087 = vunpack.c.l.s4 1983009808
    %v5088 = vunpack.c.0.s8 %v5087
    %v5089 = vlaneseq
    %v5090 = vshrl.u32 %v5089, 7
    %v5091 = vsub.s32 %v5088, %v5090
    %v5092 = vrot.slane %v5042, %v5091
    %v5093 = vcombine.high %v5092, %v5092
    %v5095 = vunpack.c.l.s4 1983009808
    %v5096 = vunpack.c.0.s8 %v5095
    %v5097 = vlaneseq
    %v5098 = vshrl.u32 %v5097, 7
    %v5099 = vsub.s32 %v5096, %v5098
    %v5100 = vrot.slane %v5043, %v5099
    %v5101 = vcombine.high %v5100, %v5100
    %v5103 = vunpack.c.l.s4 1983009808
    %v5104 = vunpack.c.0.s8 %v5103
    %v5105 = vlaneseq
    %v5106 = vshrl.u32 %v5105, 7
    %v5107 = vsub.s32 %v5104, %v5106
    %v5108 = vrot.slane %v5044, %v5107
    %v5109 = vcombine.high %v5108, %v5108
    %v5111 = vunpack.c.l.s4 1983009808
    %v5112 = vunpack.c.0.s8 %v5111
    %v5113 = vlaneseq
    %v5114 = vshrl.u32 %v5113, 7
    %v5115 = vsub.s32 %v5112, %v5114
    %v5116 = vrot.slane %v5045, %v5115
    %v5117 = vcombine.high %v5116, %v5116
    %vm5118 = vsmask.f32 1280
    %vm5119 = vsmask.f32 3336
    %vm5120 = vmor %vm5118, %vm5119
    %vm5121 = vsmask.f32 5392
    %vm5122 = vmor %vm5120, %vm5121
    %vm5123 = vsmask.f32 7448
    %vm5124 = vmor %vm5122, %vm5123
    %v5126 = vshrl.u32 %v5060, 16
    %v5128 = vrot.slane %v5126, 6
    %v5129 = vshll.u32 %v5060, 16
    %v5131 = vrot.slane %v5129, 7
    %v5132 = vor.u32 %v5128, %v5131
    %v5133 = vrot.slane %v5132, 2
    %v5135 = vshll.u32 %v5061, 16
    %v5137 = vrot.slane %v5135, 7
    %v5138 = vsel %vm5124, %v5133, %v5137
    %v5140 = vshrl.u32 %v5068, 16
    %v5142 = vrot.slane %v5140, 6
    %v5143 = vshll.u32 %v5068, 16
    %v5145 = vrot.slane %v5143, 7
    %v5146 = vor.u32 %v5142, %v5145
    %v5147 = vrot.slane %v5146, 2
    %v5149 = vshll.u32 %v5069, 16
    %v5151 = vrot.slane %v5149, 7
    %v5152 = vsel %vm5124, %v5147, %v5151
    %v5154 = vshrl.u32 %v5076, 16
    %v5156 = vrot.slane %v5154, 6
    %v5157 = vshll.u32 %v5076, 16
    %v5159 = vrot.slane %v5157, 7
    %v5160 = vor.u32 %v5156, %v5159
    %v5161 = vrot.slane %v5160, 2
    %v5163 = vshll.u32 %v5077, 16
    %v5165 = vrot.slane %v5163, 7
    %v5166 = vsel %vm5124, %v5161, %v5165
    %v5168 = vshrl.u32 %v5084, 16
    %v5170 = vrot.slane %v5168, 6
    %v5171 = vshll.u32 %v5084, 16
    %v5173 = vrot.slane %v5171, 7
    %v5174 = vor.u32 %v5170, %v5173
    %v5175 = vrot.slane %v5174, 2
    %v5177 = vshll.u32 %v5085, 16
    %v5179 = vrot.slane %v5177, 7
    %v5180 = vsel %vm5124, %v5175, %v5179
    %v5182 = vshrl.u32 %v5092, 16
    %v5184 = vrot.slane %v5182, 6
    %v5185 = vshll.u32 %v5092, 16
    %v5187 = vrot.slane %v5185, 7
    %v5188 = vor.u32 %v5184, %v5187
    %v5189 = vrot.slane %v5188, 2
    %v5191 = vshll.u32 %v5093, 16
    %v5193 = vrot.slane %v5191, 7
    %v5194 = vsel %vm5124, %v5189, %v5193
    %v5196 = vshrl.u32 %v5100, 16
    %v5198 = vrot.slane %v5196, 6
    %v5199 = vshll.u32 %v5100, 16
    %v5201 = vrot.slane %v5199, 7
    %v5202 = vor.u32 %v5198, %v5201
    %v5203 = vrot.slane %v5202, 2
    %v5205 = vshll.u32 %v5101, 16
    %v5207 = vrot.slane %v5205, 7
    %v5208 = vsel %vm5124, %v5203, %v5207
    %v5210 = vshrl.u32 %v5108, 16
    %v5212 = vrot.slane %v5210, 6
    %v5213 = vshll.u32 %v5108, 16
    %v5215 = vrot.slane %v5213, 7
    %v5216 = vor.u32 %v5212, %v5215
    %v5217 = vrot.slane %v5216, 2
    %v5219 = vshll.u32 %v5109, 16
    %v5221 = vrot.slane %v5219, 7
    %v5222 = vsel %vm5124, %v5217, %v5221
    %v5224 = vshrl.u32 %v5116, 16
    %v5226 = vrot.slane %v5224, 6
    %v5227 = vshll.u32 %v5116, 16
    %v5229 = vrot.slane %v5227, 7
    %v5230 = vor.u32 %v5226, %v5229
    %v5231 = vrot.slane %v5230, 2
    %v5233 = vshll.u32 %v5117, 16
    %v5235 = vrot.slane %v5233, 7
    %v5236 = vsel %vm5124, %v5231, %v5235
    %s5237 = scalar_lea.vmem %s2, 32
    %v5238 = vld [vmem:[%s5237] sm:$0xf]
    %v5239 = vld [vmem:[%s5237 + $0x4] sm:$0xf]
    %v5240 = vld [vmem:[%s5237 + $0x8] sm:$0xf]
    %v5241 = vld [vmem:[%s5237 + $0xc] sm:$0xf]
    %v5242 = vld [vmem:[%s5237 + $0x10] sm:$0xf]
    %v5243 = vld [vmem:[%s5237 + $0x14] sm:$0xf]
    %v5244 = vld [vmem:[%s5237 + $0x18] sm:$0xf]
    %v5245 = vld [vmem:[%s5237 + $0x1c] sm:$0xf]
    %v5246 = vcombine.low %v5138, %v5152
    %v5247 = vcombine.low %v5166, %v5180
    %v5249 = vunpack.c.l.s4 1983009808
    %v5250 = vunpack.c.0.s8 %v5249
    %v5251 = vlaneseq
    %v5252 = vshrl.u32 %v5251, 7
    %v5253 = vsub.s32 %v5250, %v5252
    %v5254 = vrot.slane %v5246, %v5253
    %v5256 = vunpack.c.l.s4 1983009808
    %v5257 = vunpack.c.0.s8 %v5256
    %v5258 = vlaneseq
    %v5259 = vshrl.u32 %v5258, 7
    %v5260 = vsub.s32 %v5257, %v5259
    %v5261 = vrot.slane %v5247, %v5260
    %v5262 = vcombine.low %v5254, %v5261
    %v5263 = vcombine.low %v5194, %v5208
    %v5264 = vcombine.low %v5222, %v5236
    %v5266 = vunpack.c.l.s4 1983009808
    %v5267 = vunpack.c.0.s8 %v5266
    %v5268 = vlaneseq
    %v5269 = vshrl.u32 %v5268, 7
    %v5270 = vsub.s32 %v5267, %v5269
    %v5271 = vrot.slane %v5263, %v5270
    %v5273 = vunpack.c.l.s4 1983009808
    %v5274 = vunpack.c.0.s8 %v5273
    %v5275 = vlaneseq
    %v5276 = vshrl.u32 %v5275, 7
    %v5277 = vsub.s32 %v5274, %v5276
    %v5278 = vrot.slane %v5264, %v5277
    %v5279 = vcombine.low %v5271, %v5278
    %v5288 = vunpack.c.l.b16 %v5238
    %v5289 = vunpack.c.l.b16 %v5239
    %v5290 = vunpack.c.l.b16 %v5240
    %v5291 = vunpack.c.l.b16 %v5241
    %v5292 = vunpack.c.l.b16 %v5242
    %v5293 = vunpack.c.l.b16 %v5243
    %v5294 = vunpack.c.l.b16 %v5244
    %v5295 = vunpack.c.l.b16 %v5245
    %v5296 = vpack.c.b16 %v5289, %v5288
    %v5297 = vpack.c.b16 %v5291, %v5290
    %v5298 = vpack.c.b16 %v5293, %v5292
    %v5299 = vpack.c.b16 %v5295, %v5294
    %v5305 = vsel %vm3599, %v5262, 0
    %v5308 = vsel %vm3599, %v5279, 0
    %5310 = vmatprep.subr.bf16.mxu0 0
    %5311 = vmatpush1.bf16.msra.mxu0 0
    %5312 = vmatprep.subr.bf16.mxu0 0
    %5313 = vmatpush1.bf16.msra.mxu0 0
    %5314 = vmatprep.subr.bf16.mxu0 0
    %5315 = vmatpush1.bf16.msra.mxu0 0
    %5316 = vmatprep.subr.bf16.mxu0 0
    %5317 = vmatpush1.bf16.msra.mxu0 0
    %5318 = vmatprep.subr.bf16.mxu0 0
    %5319 = vmatpush1.bf16.msra.mxu0 %v5299
    %5320 = vmatprep.subr.bf16.mxu0 0
    %5321 = vmatpush1.bf16.msra.mxu0 %v5298
    %5322 = vmatprep.subr.bf16.mxu0 0
    %5323 = vmatpush1.bf16.msra.mxu0 %v5297
    %5324 = vmatprep.subr.bf16.mxu0 0
    %5325 = vmatpush1.bf16.msra.mxu0 %v5296
    %5326 = vmatprep.subr.bf16.mxu0 0
    %5327 = vmatpush2.bf16.msra.mxu0 0
    %5328 = vmatprep.subr.bf16.mxu0 0
    %5329 = vmatpush2.bf16.msra.mxu0 0
    %5330 = vmatprep.subr.bf16.mxu0 0
    %5331 = vmatpush2.bf16.msra.mxu0 0
    %5332 = vmatprep.subr.bf16.mxu0 0
    %5333 = vmatpush2.bf16.msra.mxu0 0
    %5334 = vmatprep.subr.bf16.mxu0 0
    %5335 = vmatpush2.bf16.msra.mxu0 0
    %5336 = vmatprep.subr.bf16.mxu0 0
    %5337 = vmatpush2.bf16.msra.mxu0 0
    %5338 = vmatprep.subr.bf16.mxu0 0
    %5339 = vmatpush2.bf16.msra.mxu0 0
    %5340 = vmatprep.subr.bf16.mxu0 0
    %5341 = vmatpush2.bf16.msra.mxu0 0
    %5342 = vmatprep.mubr.bf16.mxu0 0
    %5343 = vmatmul.mubr.bf16.gmra.mxu0 %v5305
    %v5344 = vpop.f32.mrf.mxu0
    %v5345 = vadd.f32 0.0, %v5344
    %v5346 = vpop.f32.mrf.mxu0
    %v5347 = vpop.f32.mrf.mxu0
    %v5348 = vadd.f32 0.0, %v5347
    %v5349 = vpop.f32.mrf.mxu0
    %5350 = vmatprep.mubr.bf16.mxu0 0
    %5351 = vmatmul.mubr.bf16.gmra.mxu0 %v5308
    %v5352 = vpop.f32.mrf.mxu0
    %v5353 = vadd.f32 0.0, %v5352
    %v5354 = vpop.f32.mrf.mxu0
    %v5355 = vpop.f32.mrf.mxu0
    %v5356 = vadd.f32 0.0, %v5355
    %v5357 = vpop.f32.mrf.mxu0
    %5358 = vdwg.mxu0
    %v5367 = vcombine.low %v5022, %v5023
    %v5368 = vcombine.low %v5024, %v5025
    %v5370 = vunpack.c.l.s4 1983009808
    %v5371 = vunpack.c.0.s8 %v5370
    %v5372 = vlaneseq
    %v5373 = vshrl.u32 %v5372, 7
    %v5374 = vsub.s32 %v5371, %v5373
    %v5375 = vrot.slane %v5367, %v5374
    %v5377 = vunpack.c.l.s4 1983009808
    %v5378 = vunpack.c.0.s8 %v5377
    %v5379 = vlaneseq
    %v5380 = vshrl.u32 %v5379, 7
    %v5381 = vsub.s32 %v5378, %v5380
    %v5382 = vrot.slane %v5368, %v5381
    %v5383 = vcombine.low %v5375, %v5382
    %v5384 = vcombine.low %v5026, %v5027
    %v5385 = vcombine.low %v5028, %v5029
    %v5387 = vunpack.c.l.s4 1983009808
    %v5388 = vunpack.c.0.s8 %v5387
    %v5389 = vlaneseq
    %v5390 = vshrl.u32 %v5389, 7
    %v5391 = vsub.s32 %v5388, %v5390
    %v5392 = vrot.slane %v5384, %v5391
    %v5394 = vunpack.c.l.s4 1983009808
    %v5395 = vunpack.c.0.s8 %v5394
    %v5396 = vlaneseq
    %v5397 = vshrl.u32 %v5396, 7
    %v5398 = vsub.s32 %v5395, %v5397
    %v5399 = vrot.slane %v5385, %v5398
    %v5400 = vcombine.low %v5392, %v5399
    %v5409 = vunpack.c.l.b16 %v5030
    %v5410 = vunpack.c.l.b16 %v5031
    %v5411 = vunpack.c.l.b16 %v5032
    %v5412 = vunpack.c.l.b16 %v5033
    %v5413 = vunpack.c.l.b16 %v5034
    %v5414 = vunpack.c.l.b16 %v5035
    %v5415 = vunpack.c.l.b16 %v5036
    %v5416 = vunpack.c.l.b16 %v5037
    %v5417 = vpack.c.b16 %v5410, %v5409
    %v5418 = vpack.c.b16 %v5412, %v5411
    %v5419 = vpack.c.b16 %v5414, %v5413
    %v5420 = vpack.c.b16 %v5416, %v5415
    %v5426 = vsel %vm3599, %v5383, 0
    %v5429 = vsel %vm3599, %v5400, 0
    %5431 = vmatprep.subr.bf16.mxu0 0
    %5432 = vmatpush1.bf16.msra.mxu0 0
    %5433 = vmatprep.subr.bf16.mxu0 0
    %5434 = vmatpush1.bf16.msra.mxu0 0
    %5435 = vmatprep.subr.bf16.mxu0 0
    %5436 = vmatpush1.bf16.msra.mxu0 0
    %5437 = vmatprep.subr.bf16.mxu0 0
    %5438 = vmatpush1.bf16.msra.mxu0 0
    %5439 = vmatprep.subr.bf16.mxu0 0
    %5440 = vmatpush1.bf16.msra.mxu0 %v5420
    %5441 = vmatprep.subr.bf16.mxu0 0
    %5442 = vmatpush1.bf16.msra.mxu0 %v5419
    %5443 = vmatprep.subr.bf16.mxu0 0
    %5444 = vmatpush1.bf16.msra.mxu0 %v5418
    %5445 = vmatprep.subr.bf16.mxu0 0
    %5446 = vmatpush1.bf16.msra.mxu0 %v5417
    %5447 = vmatprep.subr.bf16.mxu0 0
    %5448 = vmatpush2.bf16.msra.mxu0 0
    %5449 = vmatprep.subr.bf16.mxu0 0
    %5450 = vmatpush2.bf16.msra.mxu0 0
    %5451 = vmatprep.subr.bf16.mxu0 0
    %5452 = vmatpush2.bf16.msra.mxu0 0
    %5453 = vmatprep.subr.bf16.mxu0 0
    %5454 = vmatpush2.bf16.msra.mxu0 0
    %5455 = vmatprep.subr.bf16.mxu0 0
    %5456 = vmatpush2.bf16.msra.mxu0 0
    %5457 = vmatprep.subr.bf16.mxu0 0
    %5458 = vmatpush2.bf16.msra.mxu0 0
    %5459 = vmatprep.subr.bf16.mxu0 0
    %5460 = vmatpush2.bf16.msra.mxu0 0
    %5461 = vmatprep.subr.bf16.mxu0 0
    %5462 = vmatpush2.bf16.msra.mxu0 0
    %5463 = vmatprep.mubr.bf16.mxu0 0
    %5464 = vmatmul.mubr.bf16.gmra.mxu0 %v5426
    %v5465 = vpop.f32.mrf.mxu0
    %v5466 = vadd.f32 %v5345, %v5465
    %v5467 = vpop.f32.mrf.mxu0
    %v5468 = vpop.f32.mrf.mxu0
    %v5469 = vadd.f32 %v5348, %v5468
    %v5470 = vpop.f32.mrf.mxu0
    %5471 = vmatprep.mubr.bf16.mxu0 0
    %5472 = vmatmul.mubr.bf16.gmra.mxu0 %v5429
    %v5473 = vpop.f32.mrf.mxu0
    %v5474 = vadd.f32 %v5353, %v5473
    %v5475 = vpop.f32.mrf.mxu0
    %v5476 = vpop.f32.mrf.mxu0
    %v5477 = vadd.f32 %v5356, %v5476
    %v5478 = vpop.f32.mrf.mxu0
    %5479 = vdwg.mxu0
    %v5480 = vld [vmem:[#allocation3] sm:$0x6]
    %v5481 = vld [vmem:[#allocation3 + $0x4] sm:$0x6]
    %v5482 = vld [vmem:[#allocation3 + $0x8] sm:$0x6]
    %v5483 = vld [vmem:[#allocation3 + $0xc] sm:$0x6]
    %v5484 = vld [vmem:[#allocation3 + $0x18] sm:$0x6]
    %v5485 = vld [vmem:[#allocation3 + $0x1c] sm:$0x6]
    %v5486 = vld [vmem:[#allocation3 + $0x20] sm:$0x6]
    %v5487 = vld [vmem:[#allocation3 + $0x24] sm:$0x6]
    %v5497 = vunpack.c.l.s4 1983009808
    %v5498 = vunpack.c.0.s8 %v5497
    %v5499 = vlaneseq
    %v5500 = vshrl.u32 %v5499, 7
    %v5501 = vsub.s32 %v5498, %v5500
    %v5502 = vrot.slane %v5480, %v5501
    %v5503 = vcombine.high %v5502, %v5502
    %v5505 = vunpack.c.l.s4 1983009808
    %v5506 = vunpack.c.0.s8 %v5505
    %v5507 = vlaneseq
    %v5508 = vshrl.u32 %v5507, 7
    %v5509 = vsub.s32 %v5506, %v5508
    %v5510 = vrot.slane %v5481, %v5509
    %v5511 = vcombine.high %v5510, %v5510
    %v5513 = vunpack.c.l.s4 1983009808
    %v5514 = vunpack.c.0.s8 %v5513
    %v5515 = vlaneseq
    %v5516 = vshrl.u32 %v5515, 7
    %v5517 = vsub.s32 %v5514, %v5516
    %v5518 = vrot.slane %v5482, %v5517
    %v5519 = vcombine.high %v5518, %v5518
    %v5521 = vunpack.c.l.s4 1983009808
    %v5522 = vunpack.c.0.s8 %v5521
    %v5523 = vlaneseq
    %v5524 = vshrl.u32 %v5523, 7
    %v5525 = vsub.s32 %v5522, %v5524
    %v5526 = vrot.slane %v5483, %v5525
    %v5527 = vcombine.high %v5526, %v5526
    %v5529 = vunpack.c.l.s4 1983009808
    %v5530 = vunpack.c.0.s8 %v5529
    %v5531 = vlaneseq
    %v5532 = vshrl.u32 %v5531, 7
    %v5533 = vsub.s32 %v5530, %v5532
    %v5534 = vrot.slane %v5484, %v5533
    %v5535 = vcombine.high %v5534, %v5534
    %v5537 = vunpack.c.l.s4 1983009808
    %v5538 = vunpack.c.0.s8 %v5537
    %v5539 = vlaneseq
    %v5540 = vshrl.u32 %v5539, 7
    %v5541 = vsub.s32 %v5538, %v5540
    %v5542 = vrot.slane %v5485, %v5541
    %v5543 = vcombine.high %v5542, %v5542
    %v5545 = vunpack.c.l.s4 1983009808
    %v5546 = vunpack.c.0.s8 %v5545
    %v5547 = vlaneseq
    %v5548 = vshrl.u32 %v5547, 7
    %v5549 = vsub.s32 %v5546, %v5548
    %v5550 = vrot.slane %v5486, %v5549
    %v5551 = vcombine.high %v5550, %v5550
    %v5553 = vunpack.c.l.s4 1983009808
    %v5554 = vunpack.c.0.s8 %v5553
    %v5555 = vlaneseq
    %v5556 = vshrl.u32 %v5555, 7
    %v5557 = vsub.s32 %v5554, %v5556
    %v5558 = vrot.slane %v5487, %v5557
    %v5559 = vcombine.high %v5558, %v5558
    %vm5560 = vcmask 1042434
    %vm5561 = vmor %vm211, %vm5560
    %vm5562 = vcmask 1044484
    %vm5563 = vmor %vm5561, %vm5562
    %vm5564 = vcmask 1046534
    %vm5565 = vmor %vm5563, %vm5564
    %v5566 = vrot.slane %v5502, 7
    %v5567 = vrot.slane %v5566, 2
    %v5568 = vrot.slane %v5503, 7
    %v5569 = vsel %vm5565, %v5567, %v5568
    %v5570 = vrot.slane %v5510, 7
    %v5571 = vrot.slane %v5570, 2
    %v5572 = vrot.slane %v5511, 7
    %v5573 = vsel %vm5565, %v5571, %v5572
    %v5574 = vrot.slane %v5518, 7
    %v5575 = vrot.slane %v5574, 2
    %v5576 = vrot.slane %v5519, 7
    %v5577 = vsel %vm5565, %v5575, %v5576
    %v5578 = vrot.slane %v5526, 7
    %v5579 = vrot.slane %v5578, 2
    %v5580 = vrot.slane %v5527, 7
    %v5581 = vsel %vm5565, %v5579, %v5580
    %v5582 = vrot.slane %v5534, 7
    %v5583 = vrot.slane %v5582, 2
    %v5584 = vrot.slane %v5535, 7
    %v5585 = vsel %vm5565, %v5583, %v5584
    %v5586 = vrot.slane %v5542, 7
    %v5587 = vrot.slane %v5586, 2
    %v5588 = vrot.slane %v5543, 7
    %v5589 = vsel %vm5565, %v5587, %v5588
    %v5590 = vrot.slane %v5550, 7
    %v5591 = vrot.slane %v5590, 2
    %v5592 = vrot.slane %v5551, 7
    %v5593 = vsel %vm5565, %v5591, %v5592
    %v5594 = vrot.slane %v5558, 7
    %v5595 = vrot.slane %v5594, 2
    %v5596 = vrot.slane %v5559, 7
    %v5597 = vsel %vm5565, %v5595, %v5596
    %s5598 = scalar_lea.vmem %s2, 64
    %v5599 = vld [vmem:[%s5598] sm:$0xf]
    %v5600 = vld [vmem:[%s5598 + $0x4] sm:$0xf]
    %v5601 = vld [vmem:[%s5598 + $0x8] sm:$0xf]
    %v5602 = vld [vmem:[%s5598 + $0xc] sm:$0xf]
    %v5603 = vld [vmem:[%s5598 + $0x10] sm:$0xf]
    %v5604 = vld [vmem:[%s5598 + $0x14] sm:$0xf]
    %v5605 = vld [vmem:[%s5598 + $0x18] sm:$0xf]
    %v5606 = vld [vmem:[%s5598 + $0x1c] sm:$0xf]
    %v5607 = vcombine.low %v5569, %v5573
    %v5608 = vcombine.low %v5577, %v5581
    %v5610 = vunpack.c.l.s4 1983009808
    %v5611 = vunpack.c.0.s8 %v5610
    %v5612 = vlaneseq
    %v5613 = vshrl.u32 %v5612, 7
    %v5614 = vsub.s32 %v5611, %v5613
    %v5615 = vrot.slane %v5607, %v5614
    %v5617 = vunpack.c.l.s4 1983009808
    %v5618 = vunpack.c.0.s8 %v5617
    %v5619 = vlaneseq
    %v5620 = vshrl.u32 %v5619, 7
    %v5621 = vsub.s32 %v5618, %v5620
    %v5622 = vrot.slane %v5608, %v5621
    %v5623 = vcombine.low %v5615, %v5622
    %v5624 = vcombine.low %v5585, %v5589
    %v5625 = vcombine.low %v5593, %v5597
    %v5627 = vunpack.c.l.s4 1983009808
    %v5628 = vunpack.c.0.s8 %v5627
    %v5629 = vlaneseq
    %v5630 = vshrl.u32 %v5629, 7
    %v5631 = vsub.s32 %v5628, %v5630
    %v5632 = vrot.slane %v5624, %v5631
    %v5634 = vunpack.c.l.s4 1983009808
    %v5635 = vunpack.c.0.s8 %v5634
    %v5636 = vlaneseq
    %v5637 = vshrl.u32 %v5636, 7
    %v5638 = vsub.s32 %v5635, %v5637
    %v5639 = vrot.slane %v5625, %v5638
    %v5640 = vcombine.low %v5632, %v5639
    %v5649 = vunpack.c.l.b16 %v5599
    %v5650 = vunpack.c.l.b16 %v5600
    %v5651 = vunpack.c.l.b16 %v5601
    %v5652 = vunpack.c.l.b16 %v5602
    %v5653 = vunpack.c.l.b16 %v5603
    %v5654 = vunpack.c.l.b16 %v5604
    %v5655 = vunpack.c.l.b16 %v5605
    %v5656 = vunpack.c.l.b16 %v5606
    %v5657 = vpack.c.b16 %v5650, %v5649
    %v5658 = vpack.c.b16 %v5652, %v5651
    %v5659 = vpack.c.b16 %v5654, %v5653
    %v5660 = vpack.c.b16 %v5656, %v5655
    %v5666 = vsel %vm3599, %v5623, 0
    %v5669 = vsel %vm3599, %v5640, 0
    %5671 = vmatprep.subr.bf16.mxu0 0
    %5672 = vmatpush1.bf16.msra.mxu0 0
    %5673 = vmatprep.subr.bf16.mxu0 0
    %5674 = vmatpush1.bf16.msra.mxu0 0
    %5675 = vmatprep.subr.bf16.mxu0 0
    %5676 = vmatpush1.bf16.msra.mxu0 0
    %5677 = vmatprep.subr.bf16.mxu0 0
    %5678 = vmatpush1.bf16.msra.mxu0 0
    %5679 = vmatprep.subr.bf16.mxu0 0
    %5680 = vmatpush1.bf16.msra.mxu0 %v5660
    %5681 = vmatprep.subr.bf16.mxu0 0
    %5682 = vmatpush1.bf16.msra.mxu0 %v5659
    %5683 = vmatprep.subr.bf16.mxu0 0
    %5684 = vmatpush1.bf16.msra.mxu0 %v5658
    %5685 = vmatprep.subr.bf16.mxu0 0
    %5686 = vmatpush1.bf16.msra.mxu0 %v5657
    %5687 = vmatprep.subr.bf16.mxu0 0
    %5688 = vmatpush2.bf16.msra.mxu0 0
    %5689 = vmatprep.subr.bf16.mxu0 0
    %5690 = vmatpush2.bf16.msra.mxu0 0
    %5691 = vmatprep.subr.bf16.mxu0 0
    %5692 = vmatpush2.bf16.msra.mxu0 0
    %5693 = vmatprep.subr.bf16.mxu0 0
    %5694 = vmatpush2.bf16.msra.mxu0 0
    %5695 = vmatprep.subr.bf16.mxu0 0
    %5696 = vmatpush2.bf16.msra.mxu0 0
    %5697 = vmatprep.subr.bf16.mxu0 0
    %5698 = vmatpush2.bf16.msra.mxu0 0
    %5699 = vmatprep.subr.bf16.mxu0 0
    %5700 = vmatpush2.bf16.msra.mxu0 0
    %5701 = vmatprep.subr.bf16.mxu0 0
    %5702 = vmatpush2.bf16.msra.mxu0 0
    %5703 = vmatprep.mubr.bf16.mxu0 0
    %5704 = vmatmul.mubr.bf16.gmra.mxu0 %v5666
    %v5705 = vpop.f32.mrf.mxu0
    %v5706 = vadd.f32 0.0, %v5705
    %v5707 = vpop.f32.mrf.mxu0
    %v5708 = vpop.f32.mrf.mxu0
    %v5709 = vadd.f32 0.0, %v5708
    %v5710 = vpop.f32.mrf.mxu0
    %5711 = vmatprep.mubr.bf16.mxu0 0
    %5712 = vmatmul.mubr.bf16.gmra.mxu0 %v5669
    %v5713 = vpop.f32.mrf.mxu0
    %v5714 = vadd.f32 0.0, %v5713
    %v5715 = vpop.f32.mrf.mxu0
    %v5716 = vpop.f32.mrf.mxu0
    %v5717 = vadd.f32 0.0, %v5716
    %v5718 = vpop.f32.mrf.mxu0
    %5719 = vdwg.mxu0
    %v5720 = vadd.f32 %v5466, %v5706
    %v5721 = vadd.f32 %v5469, %v5709
    %v5722 = vadd.f32 %v5474, %v5714
    %v5723 = vadd.f32 %v5477, %v5717
    %v5724 = vld [vmem:[%s4904] sm:$0x3]
    %v5725 = vld [vmem:[%s4904 + $0x4] sm:$0x3]
    %v5726 = vld [vmem:[%s4904 + $0x8] sm:$0x3]
    %v5727 = vld [vmem:[%s4904 + $0xc] sm:$0x3]
    %v5728 = vld [vmem:[%s4904 + $0x18] sm:$0x3]
    %v5729 = vld [vmem:[%s4904 + $0x1c] sm:$0x3]
    %v5730 = vld [vmem:[%s4904 + $0x20] sm:$0x3]
    %v5731 = vld [vmem:[%s4904 + $0x24] sm:$0x3]
    %s5732 = scalar_lea.vmem %s2, 96
    %v5733 = vld [vmem:[%s5732] sm:$0xf]
    %v5734 = vld [vmem:[%s5732 + $0x4] sm:$0xf]
    %v5735 = vld [vmem:[%s5732 + $0x8] sm:$0xf]
    %v5736 = vld [vmem:[%s5732 + $0xc] sm:$0xf]
    %v5737 = vld [vmem:[%s5732 + $0x10] sm:$0xf]
    %v5738 = vld [vmem:[%s5732 + $0x14] sm:$0xf]
    %v5739 = vld [vmem:[%s5732 + $0x18] sm:$0xf]
    %v5740 = vld [vmem:[%s5732 + $0x1c] sm:$0xf]
    %v5749 = vcombine.low %v5724, %v5725
    %v5750 = vcombine.low %v5726, %v5727
    %v5752 = vunpack.c.l.s4 1983009808
    %v5753 = vunpack.c.0.s8 %v5752
    %v5754 = vlaneseq
    %v5755 = vshrl.u32 %v5754, 7
    %v5756 = vsub.s32 %v5753, %v5755
    %v5757 = vrot.slane %v5749, %v5756
    %v5759 = vunpack.c.l.s4 1983009808
    %v5760 = vunpack.c.0.s8 %v5759
    %v5761 = vlaneseq
    %v5762 = vshrl.u32 %v5761, 7
    %v5763 = vsub.s32 %v5760, %v5762
    %v5764 = vrot.slane %v5750, %v5763
    %v5765 = vcombine.low %v5757, %v5764
    %v5766 = vcombine.low %v5728, %v5729
    %v5767 = vcombine.low %v5730, %v5731
    %v5769 = vunpack.c.l.s4 1983009808
    %v5770 = vunpack.c.0.s8 %v5769
    %v5771 = vlaneseq
    %v5772 = vshrl.u32 %v5771, 7
    %v5773 = vsub.s32 %v5770, %v5772
    %v5774 = vrot.slane %v5766, %v5773
    %v5776 = vunpack.c.l.s4 1983009808
    %v5777 = vunpack.c.0.s8 %v5776
    %v5778 = vlaneseq
    %v5779 = vshrl.u32 %v5778, 7
    %v5780 = vsub.s32 %v5777, %v5779
    %v5781 = vrot.slane %v5767, %v5780
    %v5782 = vcombine.low %v5774, %v5781
    %v5791 = vunpack.c.l.b16 %v5733
    %v5792 = vunpack.c.l.b16 %v5734
    %v5793 = vunpack.c.l.b16 %v5735
    %v5794 = vunpack.c.l.b16 %v5736
    %v5795 = vunpack.c.l.b16 %v5737
    %v5796 = vunpack.c.l.b16 %v5738
    %v5797 = vunpack.c.l.b16 %v5739
    %v5798 = vunpack.c.l.b16 %v5740
    %v5799 = vpack.c.b16 %v5792, %v5791
    %v5800 = vpack.c.b16 %v5794, %v5793
    %v5801 = vpack.c.b16 %v5796, %v5795
    %v5802 = vpack.c.b16 %v5798, %v5797
    %v5808 = vsel %vm3599, %v5765, 0
    %v5811 = vsel %vm3599, %v5782, 0
    %5813 = vmatprep.subr.bf16.mxu0 0
    %5814 = vmatpush1.bf16.msra.mxu0 0
    %5815 = vmatprep.subr.bf16.mxu0 0
    %5816 = vmatpush1.bf16.msra.mxu0 0
    %5817 = vmatprep.subr.bf16.mxu0 0
    %5818 = vmatpush1.bf16.msra.mxu0 0
    %5819 = vmatprep.subr.bf16.mxu0 0
    %5820 = vmatpush1.bf16.msra.mxu0 0
    %5821 = vmatprep.subr.bf16.mxu0 0
    %5822 = vmatpush1.bf16.msra.mxu0 %v5802
    %5823 = vmatprep.subr.bf16.mxu0 0
    %5824 = vmatpush1.bf16.msra.mxu0 %v5801
    %5825 = vmatprep.subr.bf16.mxu0 0
    %5826 = vmatpush1.bf16.msra.mxu0 %v5800
    %5827 = vmatprep.subr.bf16.mxu0 0
    %5828 = vmatpush1.bf16.msra.mxu0 %v5799
    %5829 = vmatprep.subr.bf16.mxu0 0
    %5830 = vmatpush2.bf16.msra.mxu0 0
    %5831 = vmatprep.subr.bf16.mxu0 0
    %5832 = vmatpush2.bf16.msra.mxu0 0
    %5833 = vmatprep.subr.bf16.mxu0 0
    %5834 = vmatpush2.bf16.msra.mxu0 0
    %5835 = vmatprep.subr.bf16.mxu0 0
    %5836 = vmatpush2.bf16.msra.mxu0 0
    %5837 = vmatprep.subr.bf16.mxu0 0
    %5838 = vmatpush2.bf16.msra.mxu0 0
    %5839 = vmatprep.subr.bf16.mxu0 0
    %5840 = vmatpush2.bf16.msra.mxu0 0
    %5841 = vmatprep.subr.bf16.mxu0 0
    %5842 = vmatpush2.bf16.msra.mxu0 0
    %5843 = vmatprep.subr.bf16.mxu0 0
    %5844 = vmatpush2.bf16.msra.mxu0 0
    %5845 = vmatprep.mubr.bf16.mxu0 0
    %5846 = vmatmul.mubr.bf16.gmra.mxu0 %v5808
    %v5847 = vpop.f32.mrf.mxu0
    %v5848 = vadd.f32 0.0, %v5847
    %v5849 = vpop.f32.mrf.mxu0
    %v5850 = vpop.f32.mrf.mxu0
    %v5851 = vadd.f32 0.0, %v5850
    %v5852 = vpop.f32.mrf.mxu0
    %5853 = vmatprep.mubr.bf16.mxu0 0
    %5854 = vmatmul.mubr.bf16.gmra.mxu0 %v5811
    %v5855 = vpop.f32.mrf.mxu0
    %v5856 = vadd.f32 0.0, %v5855
    %v5857 = vpop.f32.mrf.mxu0
    %v5858 = vpop.f32.mrf.mxu0
    %v5859 = vadd.f32 0.0, %v5858
    %v5860 = vpop.f32.mrf.mxu0
    %5861 = vdwg.mxu0
    %v5862 = vadd.f32 %v5720, %v5848
    %v5863 = vadd.f32 %v5721, %v5851
    %v5864 = vadd.f32 %v5722, %v5856
    %v5865 = vadd.f32 %v5723, %v5859
    %v5866 = vld [vmem:[%s4904] sm:$0x7]
    %v5867 = vld [vmem:[%s4904 + $0x4] sm:$0x7]
    %v5868 = vld [vmem:[%s4904 + $0x8] sm:$0x7]
    %v5869 = vld [vmem:[%s4904 + $0xc] sm:$0x7]
    %v5870 = vld [vmem:[%s4904 + $0x18] sm:$0x7]
    %v5871 = vld [vmem:[%s4904 + $0x1c] sm:$0x7]
    %v5872 = vld [vmem:[%s4904 + $0x20] sm:$0x7]
    %v5873 = vld [vmem:[%s4904 + $0x24] sm:$0x7]
    %v5883 = vunpack.c.l.s4 1983009808
    %v5884 = vunpack.c.0.s8 %v5883
    %v5885 = vlaneseq
    %v5886 = vshrl.u32 %v5885, 7
    %v5887 = vsub.s32 %v5884, %v5886
    %v5888 = vrot.slane %v5866, %v5887
    %v5889 = vcombine.high %v5888, %v5888
    %v5891 = vunpack.c.l.s4 1983009808
    %v5892 = vunpack.c.0.s8 %v5891
    %v5893 = vlaneseq
    %v5894 = vshrl.u32 %v5893, 7
    %v5895 = vsub.s32 %v5892, %v5894
    %v5896 = vrot.slane %v5867, %v5895
    %v5897 = vcombine.high %v5896, %v5896
    %v5899 = vunpack.c.l.s4 1983009808
    %v5900 = vunpack.c.0.s8 %v5899
    %v5901 = vlaneseq
    %v5902 = vshrl.u32 %v5901, 7
    %v5903 = vsub.s32 %v5900, %v5902
    %v5904 = vrot.slane %v5868, %v5903
    %v5905 = vcombine.high %v5904, %v5904
    %v5907 = vunpack.c.l.s4 1983009808
    %v5908 = vunpack.c.0.s8 %v5907
    %v5909 = vlaneseq
    %v5910 = vshrl.u32 %v5909, 7
    %v5911 = vsub.s32 %v5908, %v5910
    %v5912 = vrot.slane %v5869, %v5911
    %v5913 = vcombine.high %v5912, %v5912
    %v5915 = vunpack.c.l.s4 1983009808
    %v5916 = vunpack.c.0.s8 %v5915
    %v5917 = vlaneseq
    %v5918 = vshrl.u32 %v5917, 7
    %v5919 = vsub.s32 %v5916, %v5918
    %v5920 = vrot.slane %v5870, %v5919
    %v5921 = vcombine.high %v5920, %v5920
    %v5923 = vunpack.c.l.s4 1983009808
    %v5924 = vunpack.c.0.s8 %v5923
    %v5925 = vlaneseq
    %v5926 = vshrl.u32 %v5925, 7
    %v5927 = vsub.s32 %v5924, %v5926
    %v5928 = vrot.slane %v5871, %v5927
    %v5929 = vcombine.high %v5928, %v5928
    %v5931 = vunpack.c.l.s4 1983009808
    %v5932 = vunpack.c.0.s8 %v5931
    %v5933 = vlaneseq
    %v5934 = vshrl.u32 %v5933, 7
    %v5935 = vsub.s32 %v5932, %v5934
    %v5936 = vrot.slane %v5872, %v5935
    %v5937 = vcombine.high %v5936, %v5936
    %v5939 = vunpack.c.l.s4 1983009808
    %v5940 = vunpack.c.0.s8 %v5939
    %v5941 = vlaneseq
    %v5942 = vshrl.u32 %v5941, 7
    %v5943 = vsub.s32 %v5940, %v5942
    %v5944 = vrot.slane %v5873, %v5943
    %v5945 = vcombine.high %v5944, %v5944
    %v5947 = vshrl.u32 %v5888, 16
    %v5949 = vrot.slane %v5947, 6
    %v5950 = vshll.u32 %v5888, 16
    %v5952 = vrot.slane %v5950, 7
    %v5953 = vor.u32 %v5949, %v5952
    %v5954 = vrot.slane %v5953, 2
    %v5956 = vshll.u32 %v5889, 16
    %v5958 = vrot.slane %v5956, 7
    %v5959 = vsel %vm5124, %v5954, %v5958
    %v5961 = vshrl.u32 %v5896, 16
    %v5963 = vrot.slane %v5961, 6
    %v5964 = vshll.u32 %v5896, 16
    %v5966 = vrot.slane %v5964, 7
    %v5967 = vor.u32 %v5963, %v5966
    %v5968 = vrot.slane %v5967, 2
    %v5970 = vshll.u32 %v5897, 16
    %v5972 = vrot.slane %v5970, 7
    %v5973 = vsel %vm5124, %v5968, %v5972
    %v5975 = vshrl.u32 %v5904, 16
    %v5977 = vrot.slane %v5975, 6
    %v5978 = vshll.u32 %v5904, 16
    %v5980 = vrot.slane %v5978, 7
    %v5981 = vor.u32 %v5977, %v5980
    %v5982 = vrot.slane %v5981, 2
    %v5984 = vshll.u32 %v5905, 16
    %v5986 = vrot.slane %v5984, 7
    %v5987 = vsel %vm5124, %v5982, %v5986
    %v5989 = vshrl.u32 %v5912, 16
    %v5991 = vrot.slane %v5989, 6
    %v5992 = vshll.u32 %v5912, 16
    %v5994 = vrot.slane %v5992, 7
    %v5995 = vor.u32 %v5991, %v5994
    %v5996 = vrot.slane %v5995, 2
    %v5998 = vshll.u32 %v5913, 16
    %v6000 = vrot.slane %v5998, 7
    %v6001 = vsel %vm5124, %v5996, %v6000
    %v6003 = vshrl.u32 %v5920, 16
    %v6005 = vrot.slane %v6003, 6
    %v6006 = vshll.u32 %v5920, 16
    %v6008 = vrot.slane %v6006, 7
    %v6009 = vor.u32 %v6005, %v6008
    %v6010 = vrot.slane %v6009, 2
    %v6012 = vshll.u32 %v5921, 16
    %v6014 = vrot.slane %v6012, 7
    %v6015 = vsel %vm5124, %v6010, %v6014
    %v6017 = vshrl.u32 %v5928, 16
    %v6019 = vrot.slane %v6017, 6
    %v6020 = vshll.u32 %v5928, 16
    %v6022 = vrot.slane %v6020, 7
    %v6023 = vor.u32 %v6019, %v6022
    %v6024 = vrot.slane %v6023, 2
    %v6026 = vshll.u32 %v5929, 16
    %v6028 = vrot.slane %v6026, 7
    %v6029 = vsel %vm5124, %v6024, %v6028
    %v6031 = vshrl.u32 %v5936, 16
    %v6033 = vrot.slane %v6031, 6
    %v6034 = vshll.u32 %v5936, 16
    %v6036 = vrot.slane %v6034, 7
    %v6037 = vor.u32 %v6033, %v6036
    %v6038 = vrot.slane %v6037, 2
    %v6040 = vshll.u32 %v5937, 16
    %v6042 = vrot.slane %v6040, 7
    %v6043 = vsel %vm5124, %v6038, %v6042
    %v6045 = vshrl.u32 %v5944, 16
    %v6047 = vrot.slane %v6045, 6
    %v6048 = vshll.u32 %v5944, 16
    %v6050 = vrot.slane %v6048, 7
    %v6051 = vor.u32 %v6047, %v6050
    %v6052 = vrot.slane %v6051, 2
    %v6054 = vshll.u32 %v5945, 16
    %v6056 = vrot.slane %v6054, 7
    %v6057 = vsel %vm5124, %v6052, %v6056
    %s6058 = scalar_lea.vmem %s2, 128
    %v6059 = vld [vmem:[%s6058] sm:$0xf]
    %v6060 = vld [vmem:[%s6058 + $0x4] sm:$0xf]
    %v6061 = vld [vmem:[%s6058 + $0x8] sm:$0xf]
    %v6062 = vld [vmem:[%s6058 + $0xc] sm:$0xf]
    %v6063 = vld [vmem:[%s6058 + $0x10] sm:$0xf]
    %v6064 = vld [vmem:[%s6058 + $0x14] sm:$0xf]
    %v6065 = vld [vmem:[%s6058 + $0x18] sm:$0xf]
    %v6066 = vld [vmem:[%s6058 + $0x1c] sm:$0xf]
    %v6067 = vcombine.low %v5959, %v5973
    %v6068 = vcombine.low %v5987, %v6001
    %v6070 = vunpack.c.l.s4 1983009808
    %v6071 = vunpack.c.0.s8 %v6070
    %v6072 = vlaneseq
    %v6073 = vshrl.u32 %v6072, 7
    %v6074 = vsub.s32 %v6071, %v6073
    %v6075 = vrot.slane %v6067, %v6074
    %v6077 = vunpack.c.l.s4 1983009808
    %v6078 = vunpack.c.0.s8 %v6077
    %v6079 = vlaneseq
    %v6080 = vshrl.u32 %v6079, 7
    %v6081 = vsub.s32 %v6078, %v6080
    %v6082 = vrot.slane %v6068, %v6081
    %v6083 = vcombine.low %v6075, %v6082
    %v6084 = vcombine.low %v6015, %v6029
    %v6085 = vcombine.low %v6043, %v6057
    %v6087 = vunpack.c.l.s4 1983009808
    %v6088 = vunpack.c.0.s8 %v6087
    %v6089 = vlaneseq
    %v6090 = vshrl.u32 %v6089, 7
    %v6091 = vsub.s32 %v6088, %v6090
    %v6092 = vrot.slane %v6084, %v6091
    %v6094 = vunpack.c.l.s4 1983009808
    %v6095 = vunpack.c.0.s8 %v6094
    %v6096 = vlaneseq
    %v6097 = vshrl.u32 %v6096, 7
    %v6098 = vsub.s32 %v6095, %v6097
    %v6099 = vrot.slane %v6085, %v6098
    %v6100 = vcombine.low %v6092, %v6099
    %v6109 = vunpack.c.l.b16 %v6059
    %v6110 = vunpack.c.l.b16 %v6060
    %v6111 = vunpack.c.l.b16 %v6061
    %v6112 = vunpack.c.l.b16 %v6062
    %v6113 = vunpack.c.l.b16 %v6063
    %v6114 = vunpack.c.l.b16 %v6064
    %v6115 = vunpack.c.l.b16 %v6065
    %v6116 = vunpack.c.l.b16 %v6066
    %v6117 = vpack.c.b16 %v6110, %v6109
    %v6118 = vpack.c.b16 %v6112, %v6111
    %v6119 = vpack.c.b16 %v6114, %v6113
    %v6120 = vpack.c.b16 %v6116, %v6115
    %v6126 = vsel %vm3599, %v6083, 0
    %v6129 = vsel %vm3599, %v6100, 0
    %6131 = vmatprep.subr.bf16.mxu0 0
    %6132 = vmatpush1.bf16.msra.mxu0 0
    %6133 = vmatprep.subr.bf16.mxu0 0
    %6134 = vmatpush1.bf16.msra.mxu0 0
    %6135 = vmatprep.subr.bf16.mxu0 0
    %6136 = vmatpush1.bf16.msra.mxu0 0
    %6137 = vmatprep.subr.bf16.mxu0 0
    %6138 = vmatpush1.bf16.msra.mxu0 0
    %6139 = vmatprep.subr.bf16.mxu0 0
    %6140 = vmatpush1.bf16.msra.mxu0 %v6120
    %6141 = vmatprep.subr.bf16.mxu0 0
    %6142 = vmatpush1.bf16.msra.mxu0 %v6119
    %6143 = vmatprep.subr.bf16.mxu0 0
    %6144 = vmatpush1.bf16.msra.mxu0 %v6118
    %6145 = vmatprep.subr.bf16.mxu0 0
    %6146 = vmatpush1.bf16.msra.mxu0 %v6117
    %6147 = vmatprep.subr.bf16.mxu0 0
    %6148 = vmatpush2.bf16.msra.mxu0 0
    %6149 = vmatprep.subr.bf16.mxu0 0
    %6150 = vmatpush2.bf16.msra.mxu0 0
    %6151 = vmatprep.subr.bf16.mxu0 0
    %6152 = vmatpush2.bf16.msra.mxu0 0
    %6153 = vmatprep.subr.bf16.mxu0 0
    %6154 = vmatpush2.bf16.msra.mxu0 0
    %6155 = vmatprep.subr.bf16.mxu0 0
    %6156 = vmatpush2.bf16.msra.mxu0 0
    %6157 = vmatprep.subr.bf16.mxu0 0
    %6158 = vmatpush2.bf16.msra.mxu0 0
    %6159 = vmatprep.subr.bf16.mxu0 0
    %6160 = vmatpush2.bf16.msra.mxu0 0
    %6161 = vmatprep.subr.bf16.mxu0 0
    %6162 = vmatpush2.bf16.msra.mxu0 0
    %6163 = vmatprep.mubr.bf16.mxu0 0
    %6164 = vmatmul.mubr.bf16.gmra.mxu0 %v6126
    %v6165 = vpop.f32.mrf.mxu0
    %v6166 = vadd.f32 0.0, %v6165
    %v6167 = vpop.f32.mrf.mxu0
    %v6168 = vpop.f32.mrf.mxu0
    %v6169 = vadd.f32 0.0, %v6168
    %v6170 = vpop.f32.mrf.mxu0
    %6171 = vmatprep.mubr.bf16.mxu0 0
    %6172 = vmatmul.mubr.bf16.gmra.mxu0 %v6129
    %v6173 = vpop.f32.mrf.mxu0
    %v6174 = vadd.f32 0.0, %v6173
    %v6175 = vpop.f32.mrf.mxu0
    %v6176 = vpop.f32.mrf.mxu0
    %v6177 = vadd.f32 0.0, %v6176
    %v6178 = vpop.f32.mrf.mxu0
    %6179 = vdwg.mxu0
    %v6180 = vadd.f32 %v5862, %v6166
    %v6181 = vadd.f32 %v5863, %v6169
    %v6182 = vadd.f32 %v5864, %v6174
    %v6183 = vadd.f32 %v5865, %v6177
    %v6184 = vld [vmem:[%s4904] sm:$0x6]
    %v6185 = vld [vmem:[%s4904 + $0x4] sm:$0x6]
    %v6186 = vld [vmem:[%s4904 + $0x8] sm:$0x6]
    %v6187 = vld [vmem:[%s4904 + $0xc] sm:$0x6]
    %v6188 = vld [vmem:[%s4904 + $0x18] sm:$0x6]
    %v6189 = vld [vmem:[%s4904 + $0x1c] sm:$0x6]
    %v6190 = vld [vmem:[%s4904 + $0x20] sm:$0x6]
    %v6191 = vld [vmem:[%s4904 + $0x24] sm:$0x6]
    %v6201 = vunpack.c.l.s4 1983009808
    %v6202 = vunpack.c.0.s8 %v6201
    %v6203 = vlaneseq
    %v6204 = vshrl.u32 %v6203, 7
    %v6205 = vsub.s32 %v6202, %v6204
    %v6206 = vrot.slane %v6184, %v6205
    %v6207 = vcombine.high %v6206, %v6206
    %v6209 = vunpack.c.l.s4 1983009808
    %v6210 = vunpack.c.0.s8 %v6209
    %v6211 = vlaneseq
    %v6212 = vshrl.u32 %v6211, 7
    %v6213 = vsub.s32 %v6210, %v6212
    %v6214 = vrot.slane %v6185, %v6213
    %v6215 = vcombine.high %v6214, %v6214
    %v6217 = vunpack.c.l.s4 1983009808
    %v6218 = vunpack.c.0.s8 %v6217
    %v6219 = vlaneseq
    %v6220 = vshrl.u32 %v6219, 7
    %v6221 = vsub.s32 %v6218, %v6220
    %v6222 = vrot.slane %v6186, %v6221
    %v6223 = vcombine.high %v6222, %v6222
    %v6225 = vunpack.c.l.s4 1983009808
    %v6226 = vunpack.c.0.s8 %v6225
    %v6227 = vlaneseq
    %v6228 = vshrl.u32 %v6227, 7
    %v6229 = vsub.s32 %v6226, %v6228
    %v6230 = vrot.slane %v6187, %v6229
    %v6231 = vcombine.high %v6230, %v6230
    %v6233 = vunpack.c.l.s4 1983009808
    %v6234 = vunpack.c.0.s8 %v6233
    %v6235 = vlaneseq
    %v6236 = vshrl.u32 %v6235, 7
    %v6237 = vsub.s32 %v6234, %v6236
    %v6238 = vrot.slane %v6188, %v6237
    %v6239 = vcombine.high %v6238, %v6238
    %v6241 = vunpack.c.l.s4 1983009808
    %v6242 = vunpack.c.0.s8 %v6241
    %v6243 = vlaneseq
    %v6244 = vshrl.u32 %v6243, 7
    %v6245 = vsub.s32 %v6242, %v6244
    %v6246 = vrot.slane %v6189, %v6245
    %v6247 = vcombine.high %v6246, %v6246
    %v6249 = vunpack.c.l.s4 1983009808
    %v6250 = vunpack.c.0.s8 %v6249
    %v6251 = vlaneseq
    %v6252 = vshrl.u32 %v6251, 7
    %v6253 = vsub.s32 %v6250, %v6252
    %v6254 = vrot.slane %v6190, %v6253
    %v6255 = vcombine.high %v6254, %v6254
    %v6257 = vunpack.c.l.s4 1983009808
    %v6258 = vunpack.c.0.s8 %v6257
    %v6259 = vlaneseq
    %v6260 = vshrl.u32 %v6259, 7
    %v6261 = vsub.s32 %v6258, %v6260
    %v6262 = vrot.slane %v6191, %v6261
    %v6263 = vcombine.high %v6262, %v6262
    %v6264 = vrot.slane %v6206, 7
    %v6265 = vrot.slane %v6264, 2
    %v6266 = vrot.slane %v6207, 7
    %v6267 = vsel %vm5565, %v6265, %v6266
    %v6268 = vrot.slane %v6214, 7
    %v6269 = vrot.slane %v6268, 2
    %v6270 = vrot.slane %v6215, 7
    %v6271 = vsel %vm5565, %v6269, %v6270
    %v6272 = vrot.slane %v6222, 7
    %v6273 = vrot.slane %v6272, 2
    %v6274 = vrot.slane %v6223, 7
    %v6275 = vsel %vm5565, %v6273, %v6274
    %v6276 = vrot.slane %v6230, 7
    %v6277 = vrot.slane %v6276, 2
    %v6278 = vrot.slane %v6231, 7
    %v6279 = vsel %vm5565, %v6277, %v6278
    %v6280 = vrot.slane %v6238, 7
    %v6281 = vrot.slane %v6280, 2
    %v6282 = vrot.slane %v6239, 7
    %v6283 = vsel %vm5565, %v6281, %v6282
    %v6284 = vrot.slane %v6246, 7
    %v6285 = vrot.slane %v6284, 2
    %v6286 = vrot.slane %v6247, 7
    %v6287 = vsel %vm5565, %v6285, %v6286
    %v6288 = vrot.slane %v6254, 7
    %v6289 = vrot.slane %v6288, 2
    %v6290 = vrot.slane %v6255, 7
    %v6291 = vsel %vm5565, %v6289, %v6290
    %v6292 = vrot.slane %v6262, 7
    %v6293 = vrot.slane %v6292, 2
    %v6294 = vrot.slane %v6263, 7
    %v6295 = vsel %vm5565, %v6293, %v6294
    %s6296 = scalar_lea.vmem %s2, 160
    %v6297 = vld [vmem:[%s6296] sm:$0xf]
    %v6298 = vld [vmem:[%s6296 + $0x4] sm:$0xf]
    %v6299 = vld [vmem:[%s6296 + $0x8] sm:$0xf]
    %v6300 = vld [vmem:[%s6296 + $0xc] sm:$0xf]
    %v6301 = vld [vmem:[%s6296 + $0x10] sm:$0xf]
    %v6302 = vld [vmem:[%s6296 + $0x14] sm:$0xf]
    %v6303 = vld [vmem:[%s6296 + $0x18] sm:$0xf]
    %v6304 = vld [vmem:[%s6296 + $0x1c] sm:$0xf]
    %v6305 = vcombine.low %v6267, %v6271
    %v6306 = vcombine.low %v6275, %v6279
    %v6308 = vunpack.c.l.s4 1983009808
    %v6309 = vunpack.c.0.s8 %v6308
    %v6310 = vlaneseq
    %v6311 = vshrl.u32 %v6310, 7
    %v6312 = vsub.s32 %v6309, %v6311
    %v6313 = vrot.slane %v6305, %v6312
    %v6315 = vunpack.c.l.s4 1983009808
    %v6316 = vunpack.c.0.s8 %v6315
    %v6317 = vlaneseq
    %v6318 = vshrl.u32 %v6317, 7
    %v6319 = vsub.s32 %v6316, %v6318
    %v6320 = vrot.slane %v6306, %v6319
    %v6321 = vcombine.low %v6313, %v6320
    %v6322 = vcombine.low %v6283, %v6287
    %v6323 = vcombine.low %v6291, %v6295
    %v6325 = vunpack.c.l.s4 1983009808
    %v6326 = vunpack.c.0.s8 %v6325
    %v6327 = vlaneseq
    %v6328 = vshrl.u32 %v6327, 7
    %v6329 = vsub.s32 %v6326, %v6328
    %v6330 = vrot.slane %v6322, %v6329
    %v6332 = vunpack.c.l.s4 1983009808
    %v6333 = vunpack.c.0.s8 %v6332
    %v6334 = vlaneseq
    %v6335 = vshrl.u32 %v6334, 7
    %v6336 = vsub.s32 %v6333, %v6335
    %v6337 = vrot.slane %v6323, %v6336
    %v6338 = vcombine.low %v6330, %v6337
    %v6347 = vunpack.c.l.b16 %v6297
    %v6348 = vunpack.c.l.b16 %v6298
    %v6349 = vunpack.c.l.b16 %v6299
    %v6350 = vunpack.c.l.b16 %v6300
    %v6351 = vunpack.c.l.b16 %v6301
    %v6352 = vunpack.c.l.b16 %v6302
    %v6353 = vunpack.c.l.b16 %v6303
    %v6354 = vunpack.c.l.b16 %v6304
    %v6355 = vpack.c.b16 %v6348, %v6347
    %v6356 = vpack.c.b16 %v6350, %v6349
    %v6357 = vpack.c.b16 %v6352, %v6351
    %v6358 = vpack.c.b16 %v6354, %v6353
    %v6364 = vsel %vm3599, %v6321, 0
    %v6367 = vsel %vm3599, %v6338, 0
    %6369 = vmatprep.subr.bf16.mxu0 0
    %6370 = vmatpush1.bf16.msra.mxu0 0
    %6371 = vmatprep.subr.bf16.mxu0 0
    %6372 = vmatpush1.bf16.msra.mxu0 0
    %6373 = vmatprep.subr.bf16.mxu0 0
    %6374 = vmatpush1.bf16.msra.mxu0 0
    %6375 = vmatprep.subr.bf16.mxu0 0
    %6376 = vmatpush1.bf16.msra.mxu0 0
    %6377 = vmatprep.subr.bf16.mxu0 0
    %6378 = vmatpush1.bf16.msra.mxu0 %v6358
    %6379 = vmatprep.subr.bf16.mxu0 0
    %6380 = vmatpush1.bf16.msra.mxu0 %v6357
    %6381 = vmatprep.subr.bf16.mxu0 0
    %6382 = vmatpush1.bf16.msra.mxu0 %v6356
    %6383 = vmatprep.subr.bf16.mxu0 0
    %6384 = vmatpush1.bf16.msra.mxu0 %v6355
    %6385 = vmatprep.subr.bf16.mxu0 0
    %6386 = vmatpush2.bf16.msra.mxu0 0
    %6387 = vmatprep.subr.bf16.mxu0 0
    %6388 = vmatpush2.bf16.msra.mxu0 0
    %6389 = vmatprep.subr.bf16.mxu0 0
    %6390 = vmatpush2.bf16.msra.mxu0 0
    %6391 = vmatprep.subr.bf16.mxu0 0
    %6392 = vmatpush2.bf16.msra.mxu0 0
    %6393 = vmatprep.subr.bf16.mxu0 0
    %6394 = vmatpush2.bf16.msra.mxu0 0
    %6395 = vmatprep.subr.bf16.mxu0 0
    %6396 = vmatpush2.bf16.msra.mxu0 0
    %6397 = vmatprep.subr.bf16.mxu0 0
    %6398 = vmatpush2.bf16.msra.mxu0 0
    %6399 = vmatprep.subr.bf16.mxu0 0
    %6400 = vmatpush2.bf16.msra.mxu0 0
    %6401 = vmatprep.mubr.bf16.mxu0 0
    %6402 = vmatmul.mubr.bf16.gmra.mxu0 %v6364
    %v6403 = vpop.f32.mrf.mxu0
    %v6404 = vadd.f32 0.0, %v6403
    %v6405 = vpop.f32.mrf.mxu0
    %v6406 = vpop.f32.mrf.mxu0
    %v6407 = vadd.f32 0.0, %v6406
    %v6408 = vpop.f32.mrf.mxu0
    %6409 = vmatprep.mubr.bf16.mxu0 0
    %6410 = vmatmul.mubr.bf16.gmra.mxu0 %v6367
    %v6411 = vpop.f32.mrf.mxu0
    %v6412 = vadd.f32 0.0, %v6411
    %v6413 = vpop.f32.mrf.mxu0
    %v6414 = vpop.f32.mrf.mxu0
    %v6415 = vadd.f32 0.0, %v6414
    %v6416 = vpop.f32.mrf.mxu0
    %6417 = vdwg.mxu0
    %v6418 = vadd.f32 %v6180, %v6404
    %v6419 = vadd.f32 %v6181, %v6407
    %v6420 = vadd.f32 %v6182, %v6412
    %v6421 = vadd.f32 %v6183, %v6415
    %s6422 = scalar_lea.vmem [#allocation3], 8
    %v6423 = vld [vmem:[%s6422] sm:$0x3]
    %v6424 = vld [vmem:[%s6422 + $0x4] sm:$0x3]
    %v6425 = vld [vmem:[%s6422 + $0x8] sm:$0x3]
    %v6426 = vld [vmem:[%s6422 + $0xc] sm:$0x3]
    %v6427 = vld [vmem:[%s6422 + $0x18] sm:$0x3]
    %v6428 = vld [vmem:[%s6422 + $0x1c] sm:$0x3]
    %v6429 = vld [vmem:[%s6422 + $0x20] sm:$0x3]
    %v6430 = vld [vmem:[%s6422 + $0x24] sm:$0x3]
    %s6431 = scalar_lea.vmem %s2, 192
    %v6432 = vld [vmem:[%s6431] sm:$0xf]
    %v6433 = vld [vmem:[%s6431 + $0x4] sm:$0xf]
    %v6434 = vld [vmem:[%s6431 + $0x8] sm:$0xf]
    %v6435 = vld [vmem:[%s6431 + $0xc] sm:$0xf]
    %v6436 = vld [vmem:[%s6431 + $0x10] sm:$0xf]
    %v6437 = vld [vmem:[%s6431 + $0x14] sm:$0xf]
    %v6438 = vld [vmem:[%s6431 + $0x18] sm:$0xf]
    %v6439 = vld [vmem:[%s6431 + $0x1c] sm:$0xf]
    %v6448 = vcombine.low %v6423, %v6424
    %v6449 = vcombine.low %v6425, %v6426
    %v6451 = vunpack.c.l.s4 1983009808
    %v6452 = vunpack.c.0.s8 %v6451
    %v6453 = vlaneseq
    %v6454 = vshrl.u32 %v6453, 7
    %v6455 = vsub.s32 %v6452, %v6454
    %v6456 = vrot.slane %v6448, %v6455
    %v6458 = vunpack.c.l.s4 1983009808
    %v6459 = vunpack.c.0.s8 %v6458
    %v6460 = vlaneseq
    %v6461 = vshrl.u32 %v6460, 7
    %v6462 = vsub.s32 %v6459, %v6461
    %v6463 = vrot.slane %v6449, %v6462
    %v6464 = vcombine.low %v6456, %v6463
    %v6465 = vcombine.low %v6427, %v6428
    %v6466 = vcombine.low %v6429, %v6430
    %v6468 = vunpack.c.l.s4 1983009808
    %v6469 = vunpack.c.0.s8 %v6468
    %v6470 = vlaneseq
    %v6471 = vshrl.u32 %v6470, 7
    %v6472 = vsub.s32 %v6469, %v6471
    %v6473 = vrot.slane %v6465, %v6472
    %v6475 = vunpack.c.l.s4 1983009808
    %v6476 = vunpack.c.0.s8 %v6475
    %v6477 = vlaneseq
    %v6478 = vshrl.u32 %v6477, 7
    %v6479 = vsub.s32 %v6476, %v6478
    %v6480 = vrot.slane %v6466, %v6479
    %v6481 = vcombine.low %v6473, %v6480
    %v6490 = vunpack.c.l.b16 %v6432
    %v6491 = vunpack.c.l.b16 %v6433
    %v6492 = vunpack.c.l.b16 %v6434
    %v6493 = vunpack.c.l.b16 %v6435
    %v6494 = vunpack.c.l.b16 %v6436
    %v6495 = vunpack.c.l.b16 %v6437
    %v6496 = vunpack.c.l.b16 %v6438
    %v6497 = vunpack.c.l.b16 %v6439
    %v6498 = vpack.c.b16 %v6491, %v6490
    %v6499 = vpack.c.b16 %v6493, %v6492
    %v6500 = vpack.c.b16 %v6495, %v6494
    %v6501 = vpack.c.b16 %v6497, %v6496
    %v6507 = vsel %vm3599, %v6464, 0
    %v6510 = vsel %vm3599, %v6481, 0
    %6512 = vmatprep.subr.bf16.mxu0 0
    %6513 = vmatpush1.bf16.msra.mxu0 0
    %6514 = vmatprep.subr.bf16.mxu0 0
    %6515 = vmatpush1.bf16.msra.mxu0 0
    %6516 = vmatprep.subr.bf16.mxu0 0
    %6517 = vmatpush1.bf16.msra.mxu0 0
    %6518 = vmatprep.subr.bf16.mxu0 0
    %6519 = vmatpush1.bf16.msra.mxu0 0
    %6520 = vmatprep.subr.bf16.mxu0 0
    %6521 = vmatpush1.bf16.msra.mxu0 %v6501
    %6522 = vmatprep.subr.bf16.mxu0 0
    %6523 = vmatpush1.bf16.msra.mxu0 %v6500
    %6524 = vmatprep.subr.bf16.mxu0 0
    %6525 = vmatpush1.bf16.msra.mxu0 %v6499
    %6526 = vmatprep.subr.bf16.mxu0 0
    %6527 = vmatpush1.bf16.msra.mxu0 %v6498
    %6528 = vmatprep.subr.bf16.mxu0 0
    %6529 = vmatpush2.bf16.msra.mxu0 0
    %6530 = vmatprep.subr.bf16.mxu0 0
    %6531 = vmatpush2.bf16.msra.mxu0 0
    %6532 = vmatprep.subr.bf16.mxu0 0
    %6533 = vmatpush2.bf16.msra.mxu0 0
    %6534 = vmatprep.subr.bf16.mxu0 0
    %6535 = vmatpush2.bf16.msra.mxu0 0
    %6536 = vmatprep.subr.bf16.mxu0 0
    %6537 = vmatpush2.bf16.msra.mxu0 0
    %6538 = vmatprep.subr.bf16.mxu0 0
    %6539 = vmatpush2.bf16.msra.mxu0 0
    %6540 = vmatprep.subr.bf16.mxu0 0
    %6541 = vmatpush2.bf16.msra.mxu0 0
    %6542 = vmatprep.subr.bf16.mxu0 0
    %6543 = vmatpush2.bf16.msra.mxu0 0
    %6544 = vmatprep.mubr.bf16.mxu0 0
    %6545 = vmatmul.mubr.bf16.gmra.mxu0 %v6507
    %v6546 = vpop.f32.mrf.mxu0
    %v6547 = vadd.f32 0.0, %v6546
    %v6548 = vpop.f32.mrf.mxu0
    %v6549 = vpop.f32.mrf.mxu0
    %v6550 = vadd.f32 0.0, %v6549
    %v6551 = vpop.f32.mrf.mxu0
    %6552 = vmatprep.mubr.bf16.mxu0 0
    %6553 = vmatmul.mubr.bf16.gmra.mxu0 %v6510
    %v6554 = vpop.f32.mrf.mxu0
    %v6555 = vadd.f32 0.0, %v6554
    %v6556 = vpop.f32.mrf.mxu0
    %v6557 = vpop.f32.mrf.mxu0
    %v6558 = vadd.f32 0.0, %v6557
    %v6559 = vpop.f32.mrf.mxu0
    %6560 = vdwg.mxu0
    %v6561 = vadd.f32 %v6418, %v6547
    %v6562 = vadd.f32 %v6419, %v6550
    %v6563 = vadd.f32 %v6420, %v6555
    %v6564 = vadd.f32 %v6421, %v6558
    %v6565 = vld [vmem:[%s6422] sm:$0x7]
    %v6566 = vld [vmem:[%s6422 + $0x4] sm:$0x7]
    %v6567 = vld [vmem:[%s6422 + $0x8] sm:$0x7]
    %v6568 = vld [vmem:[%s6422 + $0xc] sm:$0x7]
    %v6569 = vld [vmem:[%s6422 + $0x18] sm:$0x7]
    %v6570 = vld [vmem:[%s6422 + $0x1c] sm:$0x7]
    %v6571 = vld [vmem:[%s6422 + $0x20] sm:$0x7]
    %v6572 = vld [vmem:[%s6422 + $0x24] sm:$0x7]
    %v6582 = vunpack.c.l.s4 1983009808
    %v6583 = vunpack.c.0.s8 %v6582
    %v6584 = vlaneseq
    %v6585 = vshrl.u32 %v6584, 7
    %v6586 = vsub.s32 %v6583, %v6585
    %v6587 = vrot.slane %v6565, %v6586
    %v6588 = vcombine.high %v6587, %v6587
    %v6590 = vunpack.c.l.s4 1983009808
    %v6591 = vunpack.c.0.s8 %v6590
    %v6592 = vlaneseq
    %v6593 = vshrl.u32 %v6592, 7
    %v6594 = vsub.s32 %v6591, %v6593
    %v6595 = vrot.slane %v6566, %v6594
    %v6596 = vcombine.high %v6595, %v6595
    %v6598 = vunpack.c.l.s4 1983009808
    %v6599 = vunpack.c.0.s8 %v6598
    %v6600 = vlaneseq
    %v6601 = vshrl.u32 %v6600, 7
    %v6602 = vsub.s32 %v6599, %v6601
    %v6603 = vrot.slane %v6567, %v6602
    %v6604 = vcombine.high %v6603, %v6603
    %v6606 = vunpack.c.l.s4 1983009808
    %v6607 = vunpack.c.0.s8 %v6606
    %v6608 = vlaneseq
    %v6609 = vshrl.u32 %v6608, 7
    %v6610 = vsub.s32 %v6607, %v6609
    %v6611 = vrot.slane %v6568, %v6610
    %v6612 = vcombine.high %v6611, %v6611
    %v6614 = vunpack.c.l.s4 1983009808
    %v6615 = vunpack.c.0.s8 %v6614
    %v6616 = vlaneseq
    %v6617 = vshrl.u32 %v6616, 7
    %v6618 = vsub.s32 %v6615, %v6617
    %v6619 = vrot.slane %v6569, %v6618
    %v6620 = vcombine.high %v6619, %v6619
    %v6622 = vunpack.c.l.s4 1983009808
    %v6623 = vunpack.c.0.s8 %v6622
    %v6624 = vlaneseq
    %v6625 = vshrl.u32 %v6624, 7
    %v6626 = vsub.s32 %v6623, %v6625
    %v6627 = vrot.slane %v6570, %v6626
    %v6628 = vcombine.high %v6627, %v6627
    %v6630 = vunpack.c.l.s4 1983009808
    %v6631 = vunpack.c.0.s8 %v6630
    %v6632 = vlaneseq
    %v6633 = vshrl.u32 %v6632, 7
    %v6634 = vsub.s32 %v6631, %v6633
    %v6635 = vrot.slane %v6571, %v6634
    %v6636 = vcombine.high %v6635, %v6635
    %v6638 = vunpack.c.l.s4 1983009808
    %v6639 = vunpack.c.0.s8 %v6638
    %v6640 = vlaneseq
    %v6641 = vshrl.u32 %v6640, 7
    %v6642 = vsub.s32 %v6639, %v6641
    %v6643 = vrot.slane %v6572, %v6642
    %v6644 = vcombine.high %v6643, %v6643
    %v6646 = vshrl.u32 %v6587, 16
    %v6648 = vrot.slane %v6646, 6
    %v6649 = vshll.u32 %v6587, 16
    %v6651 = vrot.slane %v6649, 7
    %v6652 = vor.u32 %v6648, %v6651
    %v6653 = vrot.slane %v6652, 2
    %v6655 = vshll.u32 %v6588, 16
    %v6657 = vrot.slane %v6655, 7
    %v6658 = vsel %vm5124, %v6653, %v6657
    %v6660 = vshrl.u32 %v6595, 16
    %v6662 = vrot.slane %v6660, 6
    %v6663 = vshll.u32 %v6595, 16
    %v6665 = vrot.slane %v6663, 7
    %v6666 = vor.u32 %v6662, %v6665
    %v6667 = vrot.slane %v6666, 2
    %v6669 = vshll.u32 %v6596, 16
    %v6671 = vrot.slane %v6669, 7
    %v6672 = vsel %vm5124, %v6667, %v6671
    %v6674 = vshrl.u32 %v6603, 16
    %v6676 = vrot.slane %v6674, 6
    %v6677 = vshll.u32 %v6603, 16
    %v6679 = vrot.slane %v6677, 7
    %v6680 = vor.u32 %v6676, %v6679
    %v6681 = vrot.slane %v6680, 2
    %v6683 = vshll.u32 %v6604, 16
    %v6685 = vrot.slane %v6683, 7
    %v6686 = vsel %vm5124, %v6681, %v6685
    %v6688 = vshrl.u32 %v6611, 16
    %v6690 = vrot.slane %v6688, 6
    %v6691 = vshll.u32 %v6611, 16
    %v6693 = vrot.slane %v6691, 7
    %v6694 = vor.u32 %v6690, %v6693
    %v6695 = vrot.slane %v6694, 2
    %v6697 = vshll.u32 %v6612, 16
    %v6699 = vrot.slane %v6697, 7
    %v6700 = vsel %vm5124, %v6695, %v6699
    %v6702 = vshrl.u32 %v6619, 16
    %v6704 = vrot.slane %v6702, 6
    %v6705 = vshll.u32 %v6619, 16
    %v6707 = vrot.slane %v6705, 7
    %v6708 = vor.u32 %v6704, %v6707
    %v6709 = vrot.slane %v6708, 2
    %v6711 = vshll.u32 %v6620, 16
    %v6713 = vrot.slane %v6711, 7
    %v6714 = vsel %vm5124, %v6709, %v6713
    %v6716 = vshrl.u32 %v6627, 16
    %v6718 = vrot.slane %v6716, 6
    %v6719 = vshll.u32 %v6627, 16
    %v6721 = vrot.slane %v6719, 7
    %v6722 = vor.u32 %v6718, %v6721
    %v6723 = vrot.slane %v6722, 2
    %v6725 = vshll.u32 %v6628, 16
    %v6727 = vrot.slane %v6725, 7
    %v6728 = vsel %vm5124, %v6723, %v6727
    %v6730 = vshrl.u32 %v6635, 16
    %v6732 = vrot.slane %v6730, 6
    %v6733 = vshll.u32 %v6635, 16
    %v6735 = vrot.slane %v6733, 7
    %v6736 = vor.u32 %v6732, %v6735
    %v6737 = vrot.slane %v6736, 2
    %v6739 = vshll.u32 %v6636, 16
    %v6741 = vrot.slane %v6739, 7
    %v6742 = vsel %vm5124, %v6737, %v6741
    %v6744 = vshrl.u32 %v6643, 16
    %v6746 = vrot.slane %v6744, 6
    %v6747 = vshll.u32 %v6643, 16
    %v6749 = vrot.slane %v6747, 7
    %v6750 = vor.u32 %v6746, %v6749
    %v6751 = vrot.slane %v6750, 2
    %v6753 = vshll.u32 %v6644, 16
    %v6755 = vrot.slane %v6753, 7
    %v6756 = vsel %vm5124, %v6751, %v6755
    %s6757 = scalar_lea.vmem %s2, 224
    %v6758 = vld [vmem:[%s6757] sm:$0xf]
    %v6759 = vld [vmem:[%s6757 + $0x4] sm:$0xf]
    %v6760 = vld [vmem:[%s6757 + $0x8] sm:$0xf]
    %v6761 = vld [vmem:[%s6757 + $0xc] sm:$0xf]
    %v6762 = vld [vmem:[%s6757 + $0x10] sm:$0xf]
    %v6763 = vld [vmem:[%s6757 + $0x14] sm:$0xf]
    %v6764 = vld [vmem:[%s6757 + $0x18] sm:$0xf]
    %v6765 = vld [vmem:[%s6757 + $0x1c] sm:$0xf]
    %v6766 = vcombine.low %v6658, %v6672
    %v6767 = vcombine.low %v6686, %v6700
    %v6769 = vunpack.c.l.s4 1983009808
    %v6770 = vunpack.c.0.s8 %v6769
    %v6771 = vlaneseq
    %v6772 = vshrl.u32 %v6771, 7
    %v6773 = vsub.s32 %v6770, %v6772
    %v6774 = vrot.slane %v6766, %v6773
    %v6776 = vunpack.c.l.s4 1983009808
    %v6777 = vunpack.c.0.s8 %v6776
    %v6778 = vlaneseq
    %v6779 = vshrl.u32 %v6778, 7
    %v6780 = vsub.s32 %v6777, %v6779
    %v6781 = vrot.slane %v6767, %v6780
    %v6782 = vcombine.low %v6774, %v6781
    %v6783 = vcombine.low %v6714, %v6728
    %v6784 = vcombine.low %v6742, %v6756
    %v6786 = vunpack.c.l.s4 1983009808
    %v6787 = vunpack.c.0.s8 %v6786
    %v6788 = vlaneseq
    %v6789 = vshrl.u32 %v6788, 7
    %v6790 = vsub.s32 %v6787, %v6789
    %v6791 = vrot.slane %v6783, %v6790
    %v6793 = vunpack.c.l.s4 1983009808
    %v6794 = vunpack.c.0.s8 %v6793
    %v6795 = vlaneseq
    %v6796 = vshrl.u32 %v6795, 7
    %v6797 = vsub.s32 %v6794, %v6796
    %v6798 = vrot.slane %v6784, %v6797
    %v6799 = vcombine.low %v6791, %v6798
    %v6808 = vunpack.c.l.b16 %v6758
    %v6809 = vunpack.c.l.b16 %v6759
    %v6810 = vunpack.c.l.b16 %v6760
    %v6811 = vunpack.c.l.b16 %v6761
    %v6812 = vunpack.c.l.b16 %v6762
    %v6813 = vunpack.c.l.b16 %v6763
    %v6814 = vunpack.c.l.b16 %v6764
    %v6815 = vunpack.c.l.b16 %v6765
    %v6816 = vpack.c.b16 %v6809, %v6808
    %v6817 = vpack.c.b16 %v6811, %v6810
    %v6818 = vpack.c.b16 %v6813, %v6812
    %v6819 = vpack.c.b16 %v6815, %v6814
    %v6825 = vsel %vm3599, %v6782, 0
    %v6828 = vsel %vm3599, %v6799, 0
    %6830 = vmatprep.subr.bf16.mxu0 0
    %6831 = vmatpush1.bf16.msra.mxu0 0
    %6832 = vmatprep.subr.bf16.mxu0 0
    %6833 = vmatpush1.bf16.msra.mxu0 0
    %6834 = vmatprep.subr.bf16.mxu0 0
    %6835 = vmatpush1.bf16.msra.mxu0 0
    %6836 = vmatprep.subr.bf16.mxu0 0
    %6837 = vmatpush1.bf16.msra.mxu0 0
    %6838 = vmatprep.subr.bf16.mxu0 0
    %6839 = vmatpush1.bf16.msra.mxu0 %v6819
    %6840 = vmatprep.subr.bf16.mxu0 0
    %6841 = vmatpush1.bf16.msra.mxu0 %v6818
    %6842 = vmatprep.subr.bf16.mxu0 0
    %6843 = vmatpush1.bf16.msra.mxu0 %v6817
    %6844 = vmatprep.subr.bf16.mxu0 0
    %6845 = vmatpush1.bf16.msra.mxu0 %v6816
    %6846 = vmatprep.subr.bf16.mxu0 0
    %6847 = vmatpush2.bf16.msra.mxu0 0
    %6848 = vmatprep.subr.bf16.mxu0 0
    %6849 = vmatpush2.bf16.msra.mxu0 0
    %6850 = vmatprep.subr.bf16.mxu0 0
    %6851 = vmatpush2.bf16.msra.mxu0 0
    %6852 = vmatprep.subr.bf16.mxu0 0
    %6853 = vmatpush2.bf16.msra.mxu0 0
    %6854 = vmatprep.subr.bf16.mxu0 0
    %6855 = vmatpush2.bf16.msra.mxu0 0
    %6856 = vmatprep.subr.bf16.mxu0 0
    %6857 = vmatpush2.bf16.msra.mxu0 0
    %6858 = vmatprep.subr.bf16.mxu0 0
    %6859 = vmatpush2.bf16.msra.mxu0 0
    %6860 = vmatprep.subr.bf16.mxu0 0
    %6861 = vmatpush2.bf16.msra.mxu0 0
    %6862 = vmatprep.mubr.bf16.mxu0 0
    %6863 = vmatmul.mubr.bf16.gmra.mxu0 %v6825
    %v6864 = vpop.f32.mrf.mxu0
    %v6865 = vadd.f32 0.0, %v6864
    %v6866 = vpop.f32.mrf.mxu0
    %v6867 = vpop.f32.mrf.mxu0
    %v6868 = vadd.f32 0.0, %v6867
    %v6869 = vpop.f32.mrf.mxu0
    %6870 = vmatprep.mubr.bf16.mxu0 0
    %6871 = vmatmul.mubr.bf16.gmra.mxu0 %v6828
    %v6872 = vpop.f32.mrf.mxu0
    %v6873 = vadd.f32 0.0, %v6872
    %v6874 = vpop.f32.mrf.mxu0
    %v6875 = vpop.f32.mrf.mxu0
    %v6876 = vadd.f32 0.0, %v6875
    %v6877 = vpop.f32.mrf.mxu0
    %6878 = vdwg.mxu0
    %v6879 = vadd.f32 %v6561, %v6865
    %v6880 = vadd.f32 %v6562, %v6868
    %v6881 = vadd.f32 %v6563, %v6873
    %v6882 = vadd.f32 %v6564, %v6876
    %v6883 = vld [vmem:[%s6422] sm:$0x6]
    %v6884 = vld [vmem:[%s6422 + $0x4] sm:$0x6]
    %v6885 = vld [vmem:[%s6422 + $0x8] sm:$0x6]
    %v6886 = vld [vmem:[%s6422 + $0xc] sm:$0x6]
    %v6887 = vld [vmem:[%s6422 + $0x18] sm:$0x6]
    %v6888 = vld [vmem:[%s6422 + $0x1c] sm:$0x6]
    %v6889 = vld [vmem:[%s6422 + $0x20] sm:$0x6]
    %v6890 = vld [vmem:[%s6422 + $0x24] sm:$0x6]
    %v6900 = vunpack.c.l.s4 1983009808
    %v6901 = vunpack.c.0.s8 %v6900
    %v6902 = vlaneseq
    %v6903 = vshrl.u32 %v6902, 7
    %v6904 = vsub.s32 %v6901, %v6903
    %v6905 = vrot.slane %v6883, %v6904
    %v6906 = vcombine.high %v6905, %v6905
    %v6908 = vunpack.c.l.s4 1983009808
    %v6909 = vunpack.c.0.s8 %v6908
    %v6910 = vlaneseq
    %v6911 = vshrl.u32 %v6910, 7
    %v6912 = vsub.s32 %v6909, %v6911
    %v6913 = vrot.slane %v6884, %v6912
    %v6914 = vcombine.high %v6913, %v6913
    %v6916 = vunpack.c.l.s4 1983009808
    %v6917 = vunpack.c.0.s8 %v6916
    %v6918 = vlaneseq
    %v6919 = vshrl.u32 %v6918, 7
    %v6920 = vsub.s32 %v6917, %v6919
    %v6921 = vrot.slane %v6885, %v6920
    %v6922 = vcombine.high %v6921, %v6921
    %v6924 = vunpack.c.l.s4 1983009808
    %v6925 = vunpack.c.0.s8 %v6924
    %v6926 = vlaneseq
    %v6927 = vshrl.u32 %v6926, 7
    %v6928 = vsub.s32 %v6925, %v6927
    %v6929 = vrot.slane %v6886, %v6928
    %v6930 = vcombine.high %v6929, %v6929
    %v6932 = vunpack.c.l.s4 1983009808
    %v6933 = vunpack.c.0.s8 %v6932
    %v6934 = vlaneseq
    %v6935 = vshrl.u32 %v6934, 7
    %v6936 = vsub.s32 %v6933, %v6935
    %v6937 = vrot.slane %v6887, %v6936
    %v6938 = vcombine.high %v6937, %v6937
    %v6940 = vunpack.c.l.s4 1983009808
    %v6941 = vunpack.c.0.s8 %v6940
    %v6942 = vlaneseq
    %v6943 = vshrl.u32 %v6942, 7
    %v6944 = vsub.s32 %v6941, %v6943
    %v6945 = vrot.slane %v6888, %v6944
    %v6946 = vcombine.high %v6945, %v6945
    %v6948 = vunpack.c.l.s4 1983009808
    %v6949 = vunpack.c.0.s8 %v6948
    %v6950 = vlaneseq
    %v6951 = vshrl.u32 %v6950, 7
    %v6952 = vsub.s32 %v6949, %v6951
    %v6953 = vrot.slane %v6889, %v6952
    %v6954 = vcombine.high %v6953, %v6953
    %v6956 = vunpack.c.l.s4 1983009808
    %v6957 = vunpack.c.0.s8 %v6956
    %v6958 = vlaneseq
    %v6959 = vshrl.u32 %v6958, 7
    %v6960 = vsub.s32 %v6957, %v6959
    %v6961 = vrot.slane %v6890, %v6960
    %v6962 = vcombine.high %v6961, %v6961
    %v6963 = vrot.slane %v6905, 7
    %v6964 = vrot.slane %v6963, 2
    %v6965 = vrot.slane %v6906, 7
    %v6966 = vsel %vm5565, %v6964, %v6965
    %v6967 = vrot.slane %v6913, 7
    %v6968 = vrot.slane %v6967, 2
    %v6969 = vrot.slane %v6914, 7
    %v6970 = vsel %vm5565, %v6968, %v6969
    %v6971 = vrot.slane %v6921, 7
    %v6972 = vrot.slane %v6971, 2
    %v6973 = vrot.slane %v6922, 7
    %v6974 = vsel %vm5565, %v6972, %v6973
    %v6975 = vrot.slane %v6929, 7
    %v6976 = vrot.slane %v6975, 2
    %v6977 = vrot.slane %v6930, 7
    %v6978 = vsel %vm5565, %v6976, %v6977
    %v6979 = vrot.slane %v6937, 7
    %v6980 = vrot.slane %v6979, 2
    %v6981 = vrot.slane %v6938, 7
    %v6982 = vsel %vm5565, %v6980, %v6981
    %v6983 = vrot.slane %v6945, 7
    %v6984 = vrot.slane %v6983, 2
    %v6985 = vrot.slane %v6946, 7
    %v6986 = vsel %vm5565, %v6984, %v6985
    %v6987 = vrot.slane %v6953, 7
    %v6988 = vrot.slane %v6987, 2
    %v6989 = vrot.slane %v6954, 7
    %v6990 = vsel %vm5565, %v6988, %v6989
    %v6991 = vrot.slane %v6961, 7
    %v6992 = vrot.slane %v6991, 2
    %v6993 = vrot.slane %v6962, 7
    %v6994 = vsel %vm5565, %v6992, %v6993
    %s6995 = scalar_lea.vmem %s2, 256
    %v6996 = vld [vmem:[%s6995] sm:$0xf]
    %v6997 = vld [vmem:[%s6995 + $0x4] sm:$0xf]
    %v6998 = vld [vmem:[%s6995 + $0x8] sm:$0xf]
    %v6999 = vld [vmem:[%s6995 + $0xc] sm:$0xf]
    %v7000 = vld [vmem:[%s6995 + $0x10] sm:$0xf]
    %v7001 = vld [vmem:[%s6995 + $0x14] sm:$0xf]
    %v7002 = vld [vmem:[%s6995 + $0x18] sm:$0xf]
    %v7003 = vld [vmem:[%s6995 + $0x1c] sm:$0xf]
    %v7004 = vcombine.low %v6966, %v6970
    %v7005 = vcombine.low %v6974, %v6978
    %v7007 = vunpack.c.l.s4 1983009808
    %v7008 = vunpack.c.0.s8 %v7007
    %v7009 = vlaneseq
    %v7010 = vshrl.u32 %v7009, 7
    %v7011 = vsub.s32 %v7008, %v7010
    %v7012 = vrot.slane %v7004, %v7011
    %v7014 = vunpack.c.l.s4 1983009808
    %v7015 = vunpack.c.0.s8 %v7014
    %v7016 = vlaneseq
    %v7017 = vshrl.u32 %v7016, 7
    %v7018 = vsub.s32 %v7015, %v7017
    %v7019 = vrot.slane %v7005, %v7018
    %v7020 = vcombine.low %v7012, %v7019
    %v7021 = vcombine.low %v6982, %v6986
    %v7022 = vcombine.low %v6990, %v6994
    %v7024 = vunpack.c.l.s4 1983009808
    %v7025 = vunpack.c.0.s8 %v7024
    %v7026 = vlaneseq
    %v7027 = vshrl.u32 %v7026, 7
    %v7028 = vsub.s32 %v7025, %v7027
    %v7029 = vrot.slane %v7021, %v7028
    %v7031 = vunpack.c.l.s4 1983009808
    %v7032 = vunpack.c.0.s8 %v7031
    %v7033 = vlaneseq
    %v7034 = vshrl.u32 %v7033, 7
    %v7035 = vsub.s32 %v7032, %v7034
    %v7036 = vrot.slane %v7022, %v7035
    %v7037 = vcombine.low %v7029, %v7036
    %v7046 = vunpack.c.l.b16 %v6996
    %v7047 = vunpack.c.l.b16 %v6997
    %v7048 = vunpack.c.l.b16 %v6998
    %v7049 = vunpack.c.l.b16 %v6999
    %v7050 = vunpack.c.l.b16 %v7000
    %v7051 = vunpack.c.l.b16 %v7001
    %v7052 = vunpack.c.l.b16 %v7002
    %v7053 = vunpack.c.l.b16 %v7003
    %v7054 = vpack.c.b16 %v7047, %v7046
    %v7055 = vpack.c.b16 %v7049, %v7048
    %v7056 = vpack.c.b16 %v7051, %v7050
    %v7057 = vpack.c.b16 %v7053, %v7052
    %v7063 = vsel %vm3599, %v7020, 0
    %v7066 = vsel %vm3599, %v7037, 0
    %7068 = vmatprep.subr.bf16.mxu0 0
    %7069 = vmatpush1.bf16.msra.mxu0 0
    %7070 = vmatprep.subr.bf16.mxu0 0
    %7071 = vmatpush1.bf16.msra.mxu0 0
    %7072 = vmatprep.subr.bf16.mxu0 0
    %7073 = vmatpush1.bf16.msra.mxu0 0
    %7074 = vmatprep.subr.bf16.mxu0 0
    %7075 = vmatpush1.bf16.msra.mxu0 0
    %7076 = vmatprep.subr.bf16.mxu0 0
    %7077 = vmatpush1.bf16.msra.mxu0 %v7057
    %7078 = vmatprep.subr.bf16.mxu0 0
    %7079 = vmatpush1.bf16.msra.mxu0 %v7056
    %7080 = vmatprep.subr.bf16.mxu0 0
    %7081 = vmatpush1.bf16.msra.mxu0 %v7055
    %7082 = vmatprep.subr.bf16.mxu0 0
    %7083 = vmatpush1.bf16.msra.mxu0 %v7054
    %7084 = vmatprep.subr.bf16.mxu0 0
    %7085 = vmatpush2.bf16.msra.mxu0 0
    %7086 = vmatprep.subr.bf16.mxu0 0
    %7087 = vmatpush2.bf16.msra.mxu0 0
    %7088 = vmatprep.subr.bf16.mxu0 0
    %7089 = vmatpush2.bf16.msra.mxu0 0
    %7090 = vmatprep.subr.bf16.mxu0 0
    %7091 = vmatpush2.bf16.msra.mxu0 0
    %7092 = vmatprep.subr.bf16.mxu0 0
    %7093 = vmatpush2.bf16.msra.mxu0 0
    %7094 = vmatprep.subr.bf16.mxu0 0
    %7095 = vmatpush2.bf16.msra.mxu0 0
    %7096 = vmatprep.subr.bf16.mxu0 0
    %7097 = vmatpush2.bf16.msra.mxu0 0
    %7098 = vmatprep.subr.bf16.mxu0 0
    %7099 = vmatpush2.bf16.msra.mxu0 0
    %7100 = vmatprep.mubr.bf16.mxu0 0
    %7101 = vmatmul.mubr.bf16.gmra.mxu0 %v7063
    %v7102 = vpop.f32.mrf.mxu0
    %v7103 = vadd.f32 0.0, %v7102
    %v7104 = vpop.f32.mrf.mxu0
    %v7105 = vpop.f32.mrf.mxu0
    %v7106 = vadd.f32 0.0, %v7105
    %v7107 = vpop.f32.mrf.mxu0
    %7108 = vmatprep.mubr.bf16.mxu0 0
    %7109 = vmatmul.mubr.bf16.gmra.mxu0 %v7066
    %v7110 = vpop.f32.mrf.mxu0
    %v7111 = vadd.f32 0.0, %v7110
    %v7112 = vpop.f32.mrf.mxu0
    %v7113 = vpop.f32.mrf.mxu0
    %v7114 = vadd.f32 0.0, %v7113
    %v7115 = vpop.f32.mrf.mxu0
    %7116 = vdwg.mxu0
    %v7117 = vadd.f32 %v6879, %v7103
    %v7118 = vadd.f32 %v6880, %v7106
    %v7119 = vadd.f32 %v6881, %v7111
    %v7120 = vadd.f32 %v6882, %v7114
    %v7121 = vld [vmem:[%s5] sm:$0x1]
    %v7122 = vld [vmem:[%s6] sm:$0x1]
    %vm7123 = vcmask 261120
    %v7124 = vsel %vm7123, %v7117, 0.0
    %v7125 = vsel %vm7123, %v7118, 0.0
    %v7126 = vadd.f32 %v7124, %v7125
    %v7127 = vsel %vm7123, %v7119, 0.0
    %v7128 = vadd.f32 %v7126, %v7127
    %v7129 = vsel %vm7123, %v7120, 0.0
    %v7130 = vadd.f32 %v7128, %v7129
    %v7131 = vrot.slane %v7130, 4
    %v7132 = vadd.f32 %v7130, %v7131
    %v7133 = vrot.slane %v7132, 2
    %v7134 = vadd.f32 %v7132, %v7133
    %v7135 = vrot.slane %v7134, 1
    %v7136 = vadd.f32 %v7134, %v7135
    %v7137 = vrcp.pop 32.0
    %v7138 = vmul.f32 %v7136, %v7137
    %v7139 = vsub.f32 %v7117, %v7138
    %v7140 = vsub.f32 %v7118, %v7138
    %v7141 = vsub.f32 %v7119, %v7138
    %v7142 = vsub.f32 %v7120, %v7138
    %v7143 = vmul.f32 %v7139, %v7139
    %v7144 = vmul.f32 %v7140, %v7140
    %v7145 = vmul.f32 %v7141, %v7141
    %v7146 = vmul.f32 %v7142, %v7142
    %v7147 = vsel %vm7123, %v7143, 0.0
    %v7148 = vsel %vm7123, %v7144, 0.0
    %v7149 = vadd.f32 %v7147, %v7148
    %v7150 = vsel %vm7123, %v7145, 0.0
    %v7151 = vadd.f32 %v7149, %v7150
    %v7152 = vsel %vm7123, %v7146, 0.0
    %v7153 = vadd.f32 %v7151, %v7152
    %v7154 = vrot.slane %v7153, 4
    %v7155 = vadd.f32 %v7153, %v7154
    %v7156 = vrot.slane %v7155, 2
    %v7157 = vadd.f32 %v7155, %v7156
    %v7158 = vrot.slane %v7157, 1
    %v7159 = vadd.f32 %v7157, %v7158
    %v7160 = vmul.f32 %v7159, %v7137
    %v7161 = vadd.f32 %v7160, 1e-05
    %v7162 = vrsqrt.pop %v7161
    %v7163 = vmul.f32 %v7121, %v7162
    %v7165 = vlaneseq
    %v7166 = vshrl.u32 %v7165, 7
    %v7167 = vsub.s32 0, %v7166
    %v7168 = vrot.slane %v7163, %v7167
    %v7170 = vmul.f32 %v7139, %v7168
    %v7171 = vmul.f32 %v7140, %v7168
    %v7172 = vmul.f32 %v7141, %v7168
    %v7173 = vmul.f32 %v7142, %v7168
    %v7175 = vlaneseq
    %v7176 = vshrl.u32 %v7175, 7
    %v7177 = vsub.s32 0, %v7176
    %v7178 = vrot.slane %v7122, %v7177
    %v7180 = vadd.f32 %v7170, %v7178
    %v7181 = vadd.f32 %v7171, %v7178
    %v7182 = vadd.f32 %v7172, %v7178
    %v7183 = vadd.f32 %v7173, %v7178
    %vm7184 = vcmp.ge.f32.partialorder %v7180, 0.0
    %vm7185 = vcmp.ge.f32.partialorder %v7181, 0.0
    %vm7186 = vcmp.ge.f32.partialorder %v7182, 0.0
    %vm7187 = vcmp.ge.f32.partialorder %v7183, 0.0
    %v7188 = vmul.f32 %v7180, 0.2
    %v7189 = vmul.f32 %v7181, 0.2
    %v7190 = vmul.f32 %v7182, 0.2
    %v7191 = vmul.f32 %v7183, 0.2
    %v7192 = vsel %vm7184, %v7180, %v7188
    %v7193 = vsel %vm7185, %v7181, %v7189
    %v7194 = vsel %vm7186, %v7182, %v7190
    %v7195 = vsel %vm7187, %v7183, %v7191
    %v7200 = vcombine.high %v7192, %v7192
    %v7201 = vcombine.high %v7193, %v7193
    %v7202 = vcombine.high %v7194, %v7194
    %v7203 = vcombine.high %v7195, %v7195
    %vm7208 = vcmask 257024
    %7209 = vst.msk [vmem:[#allocation4] sm:$0xf] %vm7208, %v7192
    %7210 = vst.msk [vmem:[#allocation4 + $0x4] sm:$0xf] %vm7208, %v7200
    %7211 = vst.msk [vmem:[#allocation4 + $0x8] sm:$0xf] %vm7208, %v7193
    %7212 = vst.msk [vmem:[#allocation4 + $0xc] sm:$0xf] %vm7208, %v7201
    %7213 = vst.msk [vmem:[#allocation4 + $0x10] sm:$0xf] %vm7208, %v7194
    %7214 = vst.msk [vmem:[#allocation4 + $0x14] sm:$0xf] %vm7208, %v7202
    %7215 = vst.msk [vmem:[#allocation4 + $0x18] sm:$0xf] %vm7208, %v7195
    %7216 = vst.msk [vmem:[#allocation4 + $0x1c] sm:$0xf] %vm7208, %v7203
    // Predicated region
    $region30: #{changenet_forward.1} parent=1 // pred_check
      _
    $region31: #{changenet_forward.1} parent=1 // pred_check_branch
      %7218 = sbr.rel (0) target = $region33
    $region32: #{changenet_forward.1} parent=1 // pred_region
      %s7220 = ssub.s32 512, 512
      %7221 = vsyncadd [#allocation5], %s7220
      %s7222 = sshll.u32 [#allocation4], 4
      %s7223 = int_to_ptr.vmem [resolvable:$true] %s7222
      %7228 = dma.vmem_to_hbm [thread:$0]  %s7223, 512, %s7, [#allocation5], 64, 64, 4
    $region33: #{changenet_forward.1} parent=1 // pred_fallthru
      _
    // Predicated region
    $region34: #{changenet_forward.1} parent=1 // pred_check
      _
    $region35: #{changenet_forward.1} parent=1 // pred_check_branch
      %7230 = sbr.rel (0) target = $region37
    $region36: #{changenet_forward.1} parent=1 // pred_region
      %7231 = dma.done [#allocation5], 512
    $region37: #{changenet_forward.1} parent=1 // pred_fallthru
      _
    %7232 = vsyncpa [#allocation5], 1

</llo_original>
